<compile_context>
chip_gen: v7x
topology: tpu7x:2x2x1
jax: 0.10.0
libtpu: 0.0.40
codegen_flags: <defaults>
</compile_context>

<pallas_src>
import jax
import jax.numpy as jnp
import numpy as np
from jax.experimental import pallas as pl
from jax.experimental.pallas import tpu as pltpu

BN_EPS = 1e-5
ATT1, ATT2, ATT3 = 64, 16, 8      # attention 1x1 conv widths: 2048 -> 64 -> 16 -> 8 -> 1
DENSE_H = 256                     # Linear(2048, 256)
NPAD = 128                        # lane-dense padded class dimension


def kenet_v2_kernel(x_ref, w1t_ref, wd1t_ref, wd2t_ref, pt_ref, pk_ref, out_ref):
    f32 = jnp.float32
    bf16 = jnp.bfloat16
    Bt, C, HW = x_ref.shape

    # --- unpack the coalesced small parameters (static slices, VMEM-resident) ---
    bd1c = pk_ref[0:DENSE_H, 0:1]                                   # (256, 1)
    bd2c = pk_ref[0:NPAD, 1:2]                                      # (128, 1), 0 past classes
    b1c = pk_ref[0:ATT1, 2:3]                                       # (64, 1), BN shift folded
    b2c = pk_ref[0:ATT2, 3:4]                                       # (16, 1)
    b3c = pk_ref[0:ATT3, 4:5]                                       # (8, 1)
    b4s = pk_ref[0:1, 5:6]                                          # (1, 1)
    w2t = pk_ref[0:ATT2, 64:64 + ATT1]                              # (16, 64)
    w3t = pk_ref[ATT2:ATT2 + ATT3, 64:64 + ATT2]                    # (8, 16)
    w4t = pk_ref[ATT2 + ATT3:ATT2 + ATT3 + 1, 64:64 + ATT3]         # (1, 8)

    w1t = w1t_ref[...]                                              # (64, C) bf16, BN scale folded
    pt = pt_ref[...]                                                # (HW, HW) constant 0/1

    lane = jax.lax.broadcasted_iota(jnp.int32, (1, Bt), 1)

    gap_num = jnp.zeros((C, Bt), f32)                               # weighted pixel sums
    den = jnp.zeros((1, Bt), f32)                                   # sum of attention per image

    # Per-image attention chain (1x1 convs == channel matmuls on the (C, HW)
    # slab) plus this image's GAP contribution.  Static unroll over Bt.
    for b in range(Bt):
        xb = x_ref[b].astype(bf16)                                  # (C, HW)
        h = jnp.dot(w1t, xb, preferred_element_type=f32) + b1c      # (64, HW)
        h = jnp.maximum(h, 0.0)
        h = jnp.maximum(jnp.dot(w2t, h, preferred_element_type=f32) + b2c, 0.0)   # (16, HW)
        h = jnp.maximum(jnp.dot(w3t, h, preferred_element_type=f32) + b3c, 0.0)   # (8, HW)
        a = jax.nn.sigmoid(jnp.dot(w4t, h, preferred_element_type=f32) + b4s)     # (1, HW)

        sel = (lane == b).astype(f32)                               # (1, Bt) one-hot
        den = den + jnp.sum(a, axis=1, keepdims=True) * sel
        # wpix[q] = sum_i a[i, q // W]  (column sums of the attention map,
        # broadcast across width), built via the tiny constant P^T matrix.
        wcol = jnp.dot(pt, jnp.transpose(a), preferred_element_type=f32)   # (HW, 1)
        wwide = (wcol * sel).astype(bf16)                           # (HW, Bt): only col b live
        # torch.matmul(atten, x) + avg_pool factorize exactly into this
        # weighted pixel sum of the RAW features; N = Bt lanes costs the same
        # number of vmatmuls as N = 1.
        gap_num = gap_num + jnp.dot(xb, wwide, preferred_element_type=f32)  # (C, Bt)

    gap = gap_num / den                                             # (C, Bt); 1/HW cancels

    # denses: Linear(2048, 256) -> Dropout(eval: identity) -> Linear(256, classes)
    d1 = jnp.dot(wd1t_ref[...], gap.astype(bf16), preferred_element_type=f32) + bd1c  # (256, Bt)
    oc = jnp.dot(wd2t_ref[...], d1, preferred_element_type=f32) + bd2c                # (128, Bt)
    out_ref[0] = jnp.transpose(oc)                                  # (Bt, 128) lane-dense store


def _build_pt(H, W):
    """P^T[q, p] = 1 iff (p % W) == (q // W):  wpix = P^T @ a^T."""
    HW = H * W
    q = np.arange(HW)[:, None]
    p = np.arange(HW)[None, :]
    return ((p % W) == (q // W)).astype(np.float32)


def kenet_v2_forward(feat_nchw, params, batch_tile=None,
                     target_block_bytes=4 << 20, vmem_stream_budget=16 << 20):
    """feat_nchw: (B, C=2048, H, W) float32 feature map (ResNet101 trunk output)."""
    B, C, H, W = feat_nchw.shape
    assert H == W, "torch.matmul(atten, x) of (H,W)@(H,W) requires square feature maps"
    HW = H * W
    classes = params["wd2"].shape[1]
    assert classes <= NPAD

    # --- batch tile: largest divisor of B within the HBM-block / VMEM budgets ---
    itemsize = feat_nchw.dtype.itemsize
    per_image_hbm = C * HW * itemsize
    lanes = ((HW + 127) // 128) * 128                 # VMEM lane padding when HW < 128
    per_image_vmem = C * lanes * itemsize
    cap = max(1, min(target_block_bytes // per_image_hbm,
                     vmem_stream_budget // (2 * per_image_vmem)))
    if batch_tile is None:
        batch_tile = 1
        for bt in range(1, B + 1):
            if B % bt == 0 and bt <= cap:
                batch_tile = bt
    assert B % batch_tile == 0
    n_steps = B // batch_tile

    # Native NCHW streaming: (B, C, H*W) is a free reshape, no HBM pre-pass.
    x3 = feat_nchw.reshape(B, C, HW)

    # --- fold eval-mode BatchNorm2d(2048) into the first 1x1 conv (f32 fold) ---
    scale = params["gamma"] * jax.lax.rsqrt(params["rvar"] + BN_EPS)      # (1, C)
    shift = params["beta"] - params["rmean"] * scale                      # (1, C)
    w1t = (params["w1"] * scale.reshape(C, 1)).T.astype(jnp.bfloat16)     # (64, C)
    b1f = (params["b1"] + shift @ params["w1"]).reshape(-1)               # (64,) f32

    wd1t = params["wd1"].T.astype(jnp.bfloat16)                           # (256, C)
    wd2t = jnp.zeros((NPAD, DENSE_H), jnp.float32).at[:classes].set(params["wd2"].T)

    pt = jnp.asarray(_build_pt(H, W))                                     # (HW, HW)

    # --- one packed VMEM-resident array for every small bias / weight ---
    pk = jnp.zeros((DENSE_H, NPAD), jnp.float32)
    pk = pk.at[0:DENSE_H, 0].set(params["bd1"].reshape(-1))
    pk = pk.at[0:classes, 1].set(params["bd2"].reshape(-1))
    pk = pk.at[0:ATT1, 2].set(b1f)
    pk = pk.at[0:ATT2, 3].set(params["b2"].reshape(-1))
    pk = pk.at[0:ATT3, 4].set(params["b3"].reshape(-1))
    pk = pk.at[0:1, 5].set(params["b4"].reshape(-1))
    pk = pk.at[0:ATT2, 64:64 + ATT1].set(params["w2"].T)
    pk = pk.at[ATT2:ATT2 + ATT3, 64:64 + ATT2].set(params["w3"].T)
    pk = pk.at[ATT2 + ATT3:ATT2 + ATT3 + 1, 64:64 + ATT3].set(params["w4"])

    residents = [w1t, wd1t, wd2t, pt, pk]

    def resident_spec(arr):
        nd = arr.ndim
        return pl.BlockSpec(arr.shape, lambda i, _nd=nd: (0,) * _nd)

    out = pl.pallas_call(
        kenet_v2_kernel,
        out_shape=jax.ShapeDtypeStruct((n_steps, batch_tile, NPAD), jnp.float32),
        grid_spec=pltpu.PrefetchScalarGridSpec(
            num_scalar_prefetch=0,
            grid=(n_steps,),
            in_specs=[pl.BlockSpec((batch_tile, C, HW), lambda i: (i, 0, 0))]
                     + [resident_spec(p) for p in residents],
            out_specs=pl.BlockSpec((1, batch_tile, NPAD), lambda i: (i, 0, 0)),
        ),
        compiler_params=pltpu.CompilerParams(
            dimension_semantics=("parallel",),
            vmem_limit_bytes=32 * 1024 * 1024,
        ),
    )(x3, *residents)
    return out.reshape(B, NPAD)[:, :classes]


def init_params(key, C=2048, classes=10):
    ks = jax.random.split(key, 12)

    def w(k, shape, fan_in):
        return (jax.random.normal(k, shape, jnp.float32) / np.sqrt(fan_in)).astype(jnp.float32)

    return dict(
        # BatchNorm2d(2048) eval-mode parameters / running stats
        gamma=(1.0 + 0.1 * jax.random.normal(ks[0], (1, C), jnp.float32)),
        beta=(0.1 * jax.random.normal(ks[1], (1, C), jnp.float32)),
        rmean=(0.1 * jax.random.normal(ks[2], (1, C), jnp.float32)),
        rvar=(1.0 + 0.1 * jax.random.uniform(ks[3], (1, C), jnp.float32)),
        # attention 1x1 convs: 2048 -> 64 -> 16 -> 8 -> 1 (weights stored (Cin, Cout))
        w1=w(ks[4], (C, ATT1), C),        b1=jnp.full((1, ATT1), 0.01, jnp.float32),
        w2=w(ks[5], (ATT1, ATT2), ATT1),  b2=jnp.full((1, ATT2), 0.01, jnp.float32),
        w3=w(ks[6], (ATT2, ATT3), ATT2),  b3=jnp.full((1, ATT3), 0.01, jnp.float32),
        w4=w(ks[7], (1, ATT3), ATT3),     b4=jnp.zeros((1, 1), jnp.float32),
        # denses: Linear(2048, 256) -> Linear(256, classes)
        wd1=w(ks[8], (C, DENSE_H), C),    bd1=0.01 * jax.random.normal(ks[9], (1, DENSE_H), jnp.float32),
        wd2=w(ks[10], (DENSE_H, classes), DENSE_H),
        bd2=0.01 * jax.random.normal(ks[11], (1, classes), jnp.float32),
    )


def reference_forward(feat_nchw, p):
    """Plain-JAX f32 reference mirroring the PyTorch (NCHW) forward."""
    B, C, H, W = feat_nchw.shape
    g = p["gamma"].reshape(1, C, 1, 1)
    be = p["beta"].reshape(1, C, 1, 1)
    rm = p["rmean"].reshape(1, C, 1, 1)
    rv = p["rvar"].reshape(1, C, 1, 1)
    xb = (feat_nchw - rm) / jnp.sqrt(rv + BN_EPS) * g + be

    def conv1x1(t, wmat, b):  # wmat: (Cin, Cout)
        return jnp.einsum('bchw,cd->bdhw', t, wmat) + b.reshape(1, -1, 1, 1)

    h = jax.nn.relu(conv1x1(xb, p["w1"], p["b1"]))
    h = jax.nn.relu(conv1x1(h, p["w2"], p["b2"]))
    h = jax.nn.relu(conv1x1(h, p["w3"], p["b3"]))
    a = jax.nn.sigmoid(conv1x1(h, p["w4"].T, p["b4"]))              # (B, 1, H, W)
    atten = jnp.broadcast_to(a, (B, C, H, W))                       # up_c2: all-ones 1x1 conv
    mask = jnp.einsum('bcik,bckj->bcij', atten, feat_nchw)          # torch.matmul(atten, x)
    gap_feat = mask.mean(axis=(2, 3))
    gap_mask = atten.mean(axis=(2, 3))
    gap = gap_feat / gap_mask
    d1 = gap @ p["wd1"] + p["bd1"]
    return d1 @ p["wd2"] + p["bd2"]


if __name__ == "__main__":
    B, C, H, W, classes = 2, 2048, 8, 8, 10
    key = jax.random.PRNGKey(0)
    kx, kp = jax.random.split(key)
    feat = jax.random.normal(kx, (B, C, H, W), jnp.float32)   # stand-in ResNet101 feature map
    params = init_params(kp, C=C, classes=classes)

    out = kenet_v2_forward(feat, params)
    out = jax.block_until_ready(out)

    ref = jax.block_until_ready(reference_forward(feat, params))
    assert out.shape == (B, classes)
    err = float(jnp.max(jnp.abs(out - ref)))
    scale = float(jnp.max(jnp.abs(ref))) + 1.0
    assert err <= 5e-2 * scale, f"mismatch: max abs err {err} vs ref scale {scale}"
    print("KERNEL_OK")
</pallas_src>

<mosaic_0001>
module attributes {stable_mosaic.version = 11 : i64} {
  func.func @kenet_v2_kernel(%arg0: i32, %arg1: memref<2x2048x64xf32, #tpu.memory_space<vmem>>, %arg2: memref<64x2048xbf16, #tpu.memory_space<vmem>>, %arg3: memref<256x2048xbf16, #tpu.memory_space<vmem>>, %arg4: memref<128x256xf32, #tpu.memory_space<vmem>>, %arg5: memref<64x64xf32, #tpu.memory_space<vmem>>, %arg6: memref<256x128xf32, #tpu.memory_space<vmem>>, %arg7: memref<1x2x128xf32, #tpu.memory_space<vmem>>) attributes {dimension_semantics = [#tpu.dimension_semantics<parallel>], iteration_bounds = array<i64: 1>, scalar_prefetch = 0 : i64, scratch_operands = 0 : i64, tpu.core_type = #tpu.core_type<tc>, window_params = [{transform_indices = @transform_0, window_bounds = array<i64: 2, 2048, 64>}, {pipeline_mode = #tpu.pipeline_mode<synchronous>, transform_indices = @transform_1, window_bounds = array<i64: 64, 2048>}, {pipeline_mode = #tpu.pipeline_mode<synchronous>, transform_indices = @transform_2, window_bounds = array<i64: 256, 2048>}, {pipeline_mode = #tpu.pipeline_mode<synchronous>, transform_indices = @transform_3, window_bounds = array<i64: 128, 256>}, {pipeline_mode = #tpu.pipeline_mode<synchronous>, transform_indices = @transform_4, window_bounds = array<i64: 64, 64>}, {pipeline_mode = #tpu.pipeline_mode<synchronous>, transform_indices = @transform_5, window_bounds = array<i64: 256, 128>}, {transform_indices = @transform_6, window_bounds = array<i64: 1, 2, 128>}]} {
    %c0 = arith.constant 0 : index
    %c0_0 = arith.constant 0 : index
    %0 = vector.load %arg6[%c0, %c0_0] : memref<256x128xf32, #tpu.memory_space<vmem>>, vector<256x1xf32>
    %c0_1 = arith.constant 0 : index
    %c1 = arith.constant 1 : index
    %1 = vector.load %arg6[%c0_1, %c1] : memref<256x128xf32, #tpu.memory_space<vmem>>, vector<128x1xf32>
    %c0_2 = arith.constant 0 : index
    %c2 = arith.constant 2 : index
    %2 = vector.load %arg6[%c0_2, %c2] : memref<256x128xf32, #tpu.memory_space<vmem>>, vector<64x1xf32>
    %c0_3 = arith.constant 0 : index
    %c3 = arith.constant 3 : index
    %3 = vector.load %arg6[%c0_3, %c3] : memref<256x128xf32, #tpu.memory_space<vmem>>, vector<16x1xf32>
    %c0_4 = arith.constant 0 : index
    %c4 = arith.constant 4 : index
    %4 = vector.load %arg6[%c0_4, %c4] : memref<256x128xf32, #tpu.memory_space<vmem>>, vector<8x1xf32>
    %c0_5 = arith.constant 0 : index
    %c5 = arith.constant 5 : index
    %5 = vector.load %arg6[%c0_5, %c5] : memref<256x128xf32, #tpu.memory_space<vmem>>, vector<1x1xf32>
    %c0_6 = arith.constant 0 : index
    %c64 = arith.constant 64 : index
    %6 = vector.load %arg6[%c0_6, %c64] : memref<256x128xf32, #tpu.memory_space<vmem>>, vector<16x64xf32>
    %c16 = arith.constant 16 : index
    %c64_7 = arith.constant 64 : index
    %7 = vector.load %arg6[%c16, %c64_7] : memref<256x128xf32, #tpu.memory_space<vmem>>, vector<8x16xf32>
    %c24 = arith.constant 24 : index
    %c64_8 = arith.constant 64 : index
    %8 = vector.load %arg6[%c24, %c64_8] : memref<256x128xf32, #tpu.memory_space<vmem>>, vector<1x8xf32>
    %c0_9 = arith.constant 0 : index
    %c0_10 = arith.constant 0 : index
    %9 = vector.load %arg2[%c0_9, %c0_10] : memref<64x2048xbf16, #tpu.memory_space<vmem>>, vector<64x2048xbf16>
    %c0_11 = arith.constant 0 : index
    %c0_12 = arith.constant 0 : index
    %10 = vector.load %arg5[%c0_11, %c0_12] : memref<64x64xf32, #tpu.memory_space<vmem>>, vector<64x64xf32>
    %11 = tpu.iota {dimensions = array<i32: 1>} : vector<1x2xi32>
    %cst = arith.constant 0.000000e+00 : f32
    %12 = vector.broadcast %cst : f32 to vector<2048x2xf32>
    %cst_13 = arith.constant 0.000000e+00 : f32
    %13 = vector.broadcast %cst_13 : f32 to vector<1x2xf32>
    %c0_14 = arith.constant 0 : index
    %c0_15 = arith.constant 0 : index
    %c0_16 = arith.constant 0 : index
    %14 = vector.load %arg1[%c0_14, %c0_15, %c0_16] : memref<2x2048x64xf32, #tpu.memory_space<vmem>>, vector<1x2048x64xf32>
    %15 = vector.shape_cast %14 : vector<1x2048x64xf32> to vector<2048x64xf32>
    %16 = arith.truncf %15 : vector<2048x64xf32> to vector<2048x64xbf16>
    %cst_17 = arith.constant dense<0.000000e+00> : vector<64x64xf32>
    %17 = tpu.matmul %9, %16, %cst_17 {dimension_numbers = #tpu.dot_dimension_numbers<[1], [0], [0], [1], [0, 0, 1, 1], [], []>} : vector<64x2048xbf16>, vector<2048x64xbf16>, vector<64x64xf32> -> vector<64x64xf32>
    %18 = vector.broadcast %2 : vector<64x1xf32> to vector<64x64xf32>
    %19 = arith.addf %17, %18 : vector<64x64xf32>
    %cst_18 = arith.constant 0.000000e+00 : f32
    %20 = vector.broadcast %cst_18 : f32 to vector<64x64xf32>
    %21 = arith.maximumf %19, %20 : vector<64x64xf32>
    %cst_19 = arith.constant dense<0.000000e+00> : vector<16x64xf32>
    %22 = tpu.matmul %6, %21, %cst_19 {dimension_numbers = #tpu.dot_dimension_numbers<[1], [0], [0], [1], [0, 0, 1, 1], [], []>} : vector<16x64xf32>, vector<64x64xf32>, vector<16x64xf32> -> vector<16x64xf32>
    %23 = vector.broadcast %3 : vector<16x1xf32> to vector<16x64xf32>
    %24 = arith.addf %22, %23 : vector<16x64xf32>
    %cst_20 = arith.constant 0.000000e+00 : f32
    %25 = vector.broadcast %cst_20 : f32 to vector<16x64xf32>
    %26 = arith.maximumf %24, %25 : vector<16x64xf32>
    %cst_21 = arith.constant dense<0.000000e+00> : vector<8x64xf32>
    %27 = tpu.matmul %7, %26, %cst_21 {dimension_numbers = #tpu.dot_dimension_numbers<[1], [0], [0], [1], [0, 0, 1, 1], [], []>} : vector<8x16xf32>, vector<16x64xf32>, vector<8x64xf32> -> vector<8x64xf32>
    %28 = vector.broadcast %4 : vector<8x1xf32> to vector<8x64xf32>
    %29 = arith.addf %27, %28 : vector<8x64xf32>
    %cst_22 = arith.constant 0.000000e+00 : f32
    %30 = vector.broadcast %cst_22 : f32 to vector<8x64xf32>
    %31 = arith.maximumf %29, %30 : vector<8x64xf32>
    %cst_23 = arith.constant dense<0.000000e+00> : vector<1x64xf32>
    %32 = tpu.matmul %8, %31, %cst_23 {dimension_numbers = #tpu.dot_dimension_numbers<[1], [0], [0], [1], [0, 0, 1, 1], [], []>} : vector<1x8xf32>, vector<8x64xf32>, vector<1x64xf32> -> vector<1x64xf32>
    %33 = vector.broadcast %5 : vector<1x1xf32> to vector<1x64xf32>
    %34 = arith.addf %32, %33 : vector<1x64xf32>
    %35 = arith.negf %34 : vector<1x64xf32>
    %36 = math.exp %35 : vector<1x64xf32>
    %cst_24 = arith.constant 1.000000e+00 : f32
    %37 = vector.broadcast %cst_24 : f32 to vector<1x64xf32>
    %38 = arith.addf %37, %36 : vector<1x64xf32>
    %39 = arith.divf %37, %38 : vector<1x64xf32>
    %c0_i32 = arith.constant 0 : i32
    %40 = vector.broadcast %c0_i32 : i32 to vector<1x2xi32>
    %41 = arith.cmpi eq, %11, %40 : vector<1x2xi32>
    %42 = arith.extui %41 : vector<1x2xi1> to vector<1x2xi32>
    %43 = arith.sitofp %42 : vector<1x2xi32> to vector<1x2xf32>
    %cst_25 = arith.constant dense<0.000000e+00> : vector<1xf32>
    %44 = vector.multi_reduction <add>, %39, %cst_25 [1] : vector<1x64xf32> to vector<1xf32>
    %45 = vector.shape_cast %44 : vector<1xf32> to vector<1x1xf32>
    %46 = vector.broadcast %45 : vector<1x1xf32> to vector<1x2xf32>
    %47 = arith.mulf %46, %43 : vector<1x2xf32>
    %48 = arith.addf %13, %47 : vector<1x2xf32>
    %49 = tpu.transpose %39, [1, 0] : vector<1x64xf32> -> vector<64x1xf32>
    %cst_26 = arith.constant dense<0.000000e+00> : vector<64x1xf32>
    %50 = tpu.matmul %10, %49, %cst_26 {dimension_numbers = #tpu.dot_dimension_numbers<[1], [0], [0], [1], [0, 0, 1, 1], [], []>} : vector<64x64xf32>, vector<64x1xf32>, vector<64x1xf32> -> vector<64x1xf32>
    %51 = vector.broadcast %50 : vector<64x1xf32> to vector<64x2xf32>
    %52 = vector.broadcast %43 : vector<1x2xf32> to vector<64x2xf32>
    %53 = arith.mulf %51, %52 : vector<64x2xf32>
    %54 = arith.truncf %53 : vector<64x2xf32> to vector<64x2xbf16>
    %cst_27 = arith.constant dense<0.000000e+00> : vector<2048x2xf32>
    %55 = tpu.matmul %16, %54, %cst_27 {dimension_numbers = #tpu.dot_dimension_numbers<[1], [0], [0], [1], [0, 0, 1, 1], [], []>} : vector<2048x64xbf16>, vector<64x2xbf16>, vector<2048x2xf32> -> vector<2048x2xf32>
    %56 = arith.addf %12, %55 : vector<2048x2xf32>
    %c1_28 = arith.constant 1 : index
    %c0_29 = arith.constant 0 : index
    %c0_30 = arith.constant 0 : index
    %57 = vector.load %arg1[%c1_28, %c0_29, %c0_30] : memref<2x2048x64xf32, #tpu.memory_space<vmem>>, vector<1x2048x64xf32>
    %58 = vector.shape_cast %57 : vector<1x2048x64xf32> to vector<2048x64xf32>
    %59 = arith.truncf %58 : vector<2048x64xf32> to vector<2048x64xbf16>
    %cst_31 = arith.constant dense<0.000000e+00> : vector<64x64xf32>
    %60 = tpu.matmul %9, %59, %cst_31 {dimension_numbers = #tpu.dot_dimension_numbers<[1], [0], [0], [1], [0, 0, 1, 1], [], []>} : vector<64x2048xbf16>, vector<2048x64xbf16>, vector<64x64xf32> -> vector<64x64xf32>
    %61 = vector.broadcast %2 : vector<64x1xf32> to vector<64x64xf32>
    %62 = arith.addf %60, %61 : vector<64x64xf32>
    %cst_32 = arith.constant 0.000000e+00 : f32
    %63 = vector.broadcast %cst_32 : f32 to vector<64x64xf32>
    %64 = arith.maximumf %62, %63 : vector<64x64xf32>
    %cst_33 = arith.constant dense<0.000000e+00> : vector<16x64xf32>
    %65 = tpu.matmul %6, %64, %cst_33 {dimension_numbers = #tpu.dot_dimension_numbers<[1], [0], [0], [1], [0, 0, 1, 1], [], []>} : vector<16x64xf32>, vector<64x64xf32>, vector<16x64xf32> -> vector<16x64xf32>
    %66 = vector.broadcast %3 : vector<16x1xf32> to vector<16x64xf32>
    %67 = arith.addf %65, %66 : vector<16x64xf32>
    %cst_34 = arith.constant 0.000000e+00 : f32
    %68 = vector.broadcast %cst_34 : f32 to vector<16x64xf32>
    %69 = arith.maximumf %67, %68 : vector<16x64xf32>
    %cst_35 = arith.constant dense<0.000000e+00> : vector<8x64xf32>
    %70 = tpu.matmul %7, %69, %cst_35 {dimension_numbers = #tpu.dot_dimension_numbers<[1], [0], [0], [1], [0, 0, 1, 1], [], []>} : vector<8x16xf32>, vector<16x64xf32>, vector<8x64xf32> -> vector<8x64xf32>
    %71 = vector.broadcast %4 : vector<8x1xf32> to vector<8x64xf32>
    %72 = arith.addf %70, %71 : vector<8x64xf32>
    %cst_36 = arith.constant 0.000000e+00 : f32
    %73 = vector.broadcast %cst_36 : f32 to vector<8x64xf32>
    %74 = arith.maximumf %72, %73 : vector<8x64xf32>
    %cst_37 = arith.constant dense<0.000000e+00> : vector<1x64xf32>
    %75 = tpu.matmul %8, %74, %cst_37 {dimension_numbers = #tpu.dot_dimension_numbers<[1], [0], [0], [1], [0, 0, 1, 1], [], []>} : vector<1x8xf32>, vector<8x64xf32>, vector<1x64xf32> -> vector<1x64xf32>
    %76 = vector.broadcast %5 : vector<1x1xf32> to vector<1x64xf32>
    %77 = arith.addf %75, %76 : vector<1x64xf32>
    %78 = arith.negf %77 : vector<1x64xf32>
    %79 = math.exp %78 : vector<1x64xf32>
    %cst_38 = arith.constant 1.000000e+00 : f32
    %80 = vector.broadcast %cst_38 : f32 to vector<1x64xf32>
    %81 = arith.addf %80, %79 : vector<1x64xf32>
    %82 = arith.divf %80, %81 : vector<1x64xf32>
    %c1_i32 = arith.constant 1 : i32
    %83 = vector.broadcast %c1_i32 : i32 to vector<1x2xi32>
    %84 = arith.cmpi eq, %11, %83 : vector<1x2xi32>
    %85 = arith.extui %84 : vector<1x2xi1> to vector<1x2xi32>
    %86 = arith.sitofp %85 : vector<1x2xi32> to vector<1x2xf32>
    %cst_39 = arith.constant dense<0.000000e+00> : vector<1xf32>
    %87 = vector.multi_reduction <add>, %82, %cst_39 [1] : vector<1x64xf32> to vector<1xf32>
    %88 = vector.shape_cast %87 : vector<1xf32> to vector<1x1xf32>
    %89 = vector.broadcast %88 : vector<1x1xf32> to vector<1x2xf32>
    %90 = arith.mulf %89, %86 : vector<1x2xf32>
    %91 = arith.addf %48, %90 : vector<1x2xf32>
    %92 = tpu.transpose %82, [1, 0] : vector<1x64xf32> -> vector<64x1xf32>
    %cst_40 = arith.constant dense<0.000000e+00> : vector<64x1xf32>
    %93 = tpu.matmul %10, %92, %cst_40 {dimension_numbers = #tpu.dot_dimension_numbers<[1], [0], [0], [1], [0, 0, 1, 1], [], []>} : vector<64x64xf32>, vector<64x1xf32>, vector<64x1xf32> -> vector<64x1xf32>
    %94 = vector.broadcast %93 : vector<64x1xf32> to vector<64x2xf32>
    %95 = vector.broadcast %86 : vector<1x2xf32> to vector<64x2xf32>
    %96 = arith.mulf %94, %95 : vector<64x2xf32>
    %97 = arith.truncf %96 : vector<64x2xf32> to vector<64x2xbf16>
    %cst_41 = arith.constant dense<0.000000e+00> : vector<2048x2xf32>
    %98 = tpu.matmul %59, %97, %cst_41 {dimension_numbers = #tpu.dot_dimension_numbers<[1], [0], [0], [1], [0, 0, 1, 1], [], []>} : vector<2048x64xbf16>, vector<64x2xbf16>, vector<2048x2xf32> -> vector<2048x2xf32>
    %99 = arith.addf %56, %98 : vector<2048x2xf32>
    %100 = vector.broadcast %91 : vector<1x2xf32> to vector<2048x2xf32>
    %101 = arith.divf %99, %100 : vector<2048x2xf32>
    %c0_42 = arith.constant 0 : index
    %c0_43 = arith.constant 0 : index
    %102 = vector.load %arg3[%c0_42, %c0_43] : memref<256x2048xbf16, #tpu.memory_space<vmem>>, vector<256x2048xbf16>
    %103 = arith.truncf %101 : vector<2048x2xf32> to vector<2048x2xbf16>
    %cst_44 = arith.constant dense<0.000000e+00> : vector<256x2xf32>
    %104 = tpu.matmul %102, %103, %cst_44 {dimension_numbers = #tpu.dot_dimension_numbers<[1], [0], [0], [1], [0, 0, 1, 1], [], []>} : vector<256x2048xbf16>, vector<2048x2xbf16>, vector<256x2xf32> -> vector<256x2xf32>
    %105 = vector.broadcast %0 : vector<256x1xf32> to vector<256x2xf32>
    %106 = arith.addf %104, %105 : vector<256x2xf32>
    %c0_45 = arith.constant 0 : index
    %c0_46 = arith.constant 0 : index
    %107 = vector.load %arg4[%c0_45, %c0_46] : memref<128x256xf32, #tpu.memory_space<vmem>>, vector<128x256xf32>
    %cst_47 = arith.constant dense<0.000000e+00> : vector<128x2xf32>
    %108 = tpu.matmul %107, %106, %cst_47 {dimension_numbers = #tpu.dot_dimension_numbers<[1], [0], [0], [1], [0, 0, 1, 1], [], []>} : vector<128x256xf32>, vector<256x2xf32>, vector<128x2xf32> -> vector<128x2xf32>
    %109 = vector.broadcast %1 : vector<128x1xf32> to vector<128x2xf32>
    %110 = arith.addf %108, %109 : vector<128x2xf32>
    %111 = tpu.transpose %110, [1, 0] : vector<128x2xf32> -> vector<2x128xf32>
    %c0_48 = arith.constant 0 : index
    %c0_49 = arith.constant 0 : index
    %c0_50 = arith.constant 0 : index
    %112 = vector.load %arg7[%c0_48, %c0_49, %c0_50] : memref<1x2x128xf32, #tpu.memory_space<vmem>>, vector<1x2x128xf32>
    %113 = vector.shape_cast %112 : vector<1x2x128xf32> to vector<2x128xf32>
    %114 = vector.shape_cast %111 : vector<2x128xf32> to vector<1x2x128xf32>
    tpu.vector_store %arg7[%c0_48, %c0_49, %c0_50], %114 {strides = array<i32>} : memref<1x2x128xf32, #tpu.memory_space<vmem>>, vector<1x2x128xf32>,
    return
  }
  func.func @transform_0(%arg0: i32) -> (i32, i32, i32) {
    %c0_i32 = arith.constant 0 : i32
    %c0_i32_0 = arith.constant 0 : i32
    %c0_i32_1 = arith.constant 0 : i32
    return %arg0, %c0_i32, %c0_i32_0 : i32, i32, i32
  }
  func.func @transform_1(%arg0: i32) -> (i32, i32) {
    %c0_i32 = arith.constant 0 : i32
    %c0_i32_0 = arith.constant 0 : i32
    %c0_i32_1 = arith.constant 0 : i32
    return %c0_i32, %c0_i32_0 : i32, i32
  }
  func.func @transform_2(%arg0: i32) -> (i32, i32) {
    %c0_i32 = arith.constant 0 : i32
    %c0_i32_0 = arith.constant 0 : i32
    %c0_i32_1 = arith.constant 0 : i32
    return %c0_i32, %c0_i32_0 : i32, i32
  }
  func.func @transform_3(%arg0: i32) -> (i32, i32) {
    %c0_i32 = arith.constant 0 : i32
    %c0_i32_0 = arith.constant 0 : i32
    %c0_i32_1 = arith.constant 0 : i32
    return %c0_i32, %c0_i32_0 : i32, i32
  }
  func.func @transform_4(%arg0: i32) -> (i32, i32) {
    %c0_i32 = arith.constant 0 : i32
    %c0_i32_0 = arith.constant 0 : i32
    %c0_i32_1 = arith.constant 0 : i32
    return %c0_i32, %c0_i32_0 : i32, i32
  }
  func.func @transform_5(%arg0: i32) -> (i32, i32) {
    %c0_i32 = arith.constant 0 : i32
    %c0_i32_0 = arith.constant 0 : i32
    %c0_i32_1 = arith.constant 0 : i32
    return %c0_i32, %c0_i32_0 : i32, i32
  }
  func.func @transform_6(%arg0: i32) -> (i32, i32, i32) {
    %c0_i32 = arith.constant 0 : i32
    %c0_i32_0 = arith.constant 0 : i32
    %c0_i32_1 = arith.constant 0 : i32
    return %arg0, %c0_i32, %c0_i32_0 : i32, i32, i32
  }
}

</mosaic_0001>

<llo_original>
// kernel: tpu_custom_call.1
$region0: #{tpu_custom_call.1}
  #allocation0 [shape = 'u32[]', space=smem, size = 0x4, offset = 0x4, fixed_abs, tag = 'smem constant byte address 0x4 - core index']
  #allocation1 [shape = 'u32[144,128]{1,0:T(1,128)}', space=vmem, size = 0x12000, scoped, tag = 'internal scratch']
  %s0 = inlined_call_operand.vmem [shape: f32[2,2048,64], index: 0, kind: input, shape index: {}]
  %s1 = inlined_call_operand.vmem [shape: bf16[64,2048], index: 1, kind: input, shape index: {}]
  %s2 = inlined_call_operand.vmem [shape: bf16[256,2048], index: 2, kind: input, shape index: {}]
  %s3 = inlined_call_operand.vmem [shape: f32[128,256], index: 3, kind: input, shape index: {}]
  %s4 = inlined_call_operand.vmem [shape: f32[64,64], index: 4, kind: input, shape index: {}]
  %s5 = inlined_call_operand.vmem [shape: f32[256,128], index: 5, kind: input, shape index: {}]
  %s6 = inlined_call_operand.hbm [shape: f32[1,2,128], index: 6, kind: output, shape index: {}]
  %s7 = sld [smem:[#allocation0]]
  $region34: #{tpu_custom_call.1} parent=0
    _
  %s9 = ssub.s32 1, %s7
  %s10 = scalar_select 0, %s9, %s7
  $region1: #{tpu_custom_call.1} parent=0
    #allocation2 [shape = 'u8[1024]{0}', space=vmem, size = 0x400, scoped, tag = 'output window, operand 0, single buffered']
    #allocation3 [shape = 's32[1]{0}', space=sflag, size = 0x4, scoped, tag = 'scoped memory for tpu_custom_call.1']
    %11 = vsyncpa [#allocation3], 0
    // Predicated region
    $region2: #{tpu_custom_call.1} parent=1 // pred_check
      _
    $region3: #{tpu_custom_call.1} parent=1 // pred_check_branch
      %13 = sbr.rel (0) target = $region5
    $region4: #{tpu_custom_call.1} parent=1 // pred_region
      _
    $region5: #{tpu_custom_call.1} parent=1 // pred_fallthru
      _
    // Predicated region
    $region6: #{tpu_custom_call.1} parent=1 // pred_check
      _
    $region7: #{tpu_custom_call.1} parent=1 // pred_check_branch
      %15 = sbr.rel (0) target = $region9
    $region8: #{tpu_custom_call.1} parent=1 // pred_region
      _
    $region9: #{tpu_custom_call.1} parent=1 // pred_fallthru
      _
    // Predicated region
    $region10: #{tpu_custom_call.1} parent=1 // pred_check
      _
    $region11: #{tpu_custom_call.1} parent=1 // pred_check_branch
      %17 = sbr.rel (0) target = $region13
    $region12: #{tpu_custom_call.1} parent=1 // pred_region
      _
    $region13: #{tpu_custom_call.1} parent=1 // pred_fallthru
      _
    // Predicated region
    $region14: #{tpu_custom_call.1} parent=1 // pred_check
      _
    $region15: #{tpu_custom_call.1} parent=1 // pred_check_branch
      %19 = sbr.rel (0) target = $region17
    $region16: #{tpu_custom_call.1} parent=1 // pred_region
      _
    $region17: #{tpu_custom_call.1} parent=1 // pred_fallthru
      _
    // Predicated region
    $region18: #{tpu_custom_call.1} parent=1 // pred_check
      _
    $region19: #{tpu_custom_call.1} parent=1 // pred_check_branch
      %21 = sbr.rel (0) target = $region21
    $region20: #{tpu_custom_call.1} parent=1 // pred_region
      _
    $region21: #{tpu_custom_call.1} parent=1 // pred_fallthru
      _
    // Predicated region
    $region22: #{tpu_custom_call.1} parent=1 // pred_check
      _
    $region23: #{tpu_custom_call.1} parent=1 // pred_check_branch
      %23 = sbr.rel (0) target = $region25
    $region24: #{tpu_custom_call.1} parent=1 // pred_region
      _
    $region25: #{tpu_custom_call.1} parent=1 // pred_fallthru
      _
    %v25 = vld [vmem:[%s5] sm:$0xff]
    %v26 = vld [vmem:[%s5 + $0x8] sm:$0xff]
    %v27 = vld [vmem:[%s5 + $0x10] sm:$0xff]
    %v28 = vld [vmem:[%s5 + $0x18] sm:$0xff]
    %v29 = vld [vmem:[%s5 + $0x20] sm:$0xff]
    %v30 = vld [vmem:[%s5 + $0x28] sm:$0xff]
    %v31 = vld [vmem:[%s5 + $0x30] sm:$0xff]
    %v32 = vld [vmem:[%s5 + $0x38] sm:$0xff]
    %v33 = vld [vmem:[%s5 + $0x40] sm:$0xff]
    %v34 = vld [vmem:[%s5 + $0x48] sm:$0xff]
    %v35 = vld [vmem:[%s5 + $0x50] sm:$0xff]
    %v36 = vld [vmem:[%s5 + $0x58] sm:$0xff]
    %v37 = vld [vmem:[%s5 + $0x60] sm:$0xff]
    %v38 = vld [vmem:[%s5 + $0x68] sm:$0xff]
    %v39 = vld [vmem:[%s5 + $0x70] sm:$0xff]
    %v40 = vld [vmem:[%s5 + $0x78] sm:$0xff]
    %v41 = vld [vmem:[%s5 + $0x80] sm:$0xff]
    %v42 = vld [vmem:[%s5 + $0x88] sm:$0xff]
    %v43 = vld [vmem:[%s5 + $0x90] sm:$0xff]
    %v44 = vld [vmem:[%s5 + $0x98] sm:$0xff]
    %v45 = vld [vmem:[%s5 + $0xa0] sm:$0xff]
    %v46 = vld [vmem:[%s5 + $0xa8] sm:$0xff]
    %v47 = vld [vmem:[%s5 + $0xb0] sm:$0xff]
    %v48 = vld [vmem:[%s5 + $0xb8] sm:$0xff]
    %v49 = vld [vmem:[%s5 + $0xc0] sm:$0xff]
    %v50 = vld [vmem:[%s5 + $0xc8] sm:$0xff]
    %v51 = vld [vmem:[%s5 + $0xd0] sm:$0xff]
    %v52 = vld [vmem:[%s5 + $0xd8] sm:$0xff]
    %v53 = vld [vmem:[%s5 + $0xe0] sm:$0xff]
    %v54 = vld [vmem:[%s5 + $0xe8] sm:$0xff]
    %v55 = vld [vmem:[%s5 + $0xf0] sm:$0xff]
    %v56 = vld [vmem:[%s5 + $0xf8] sm:$0xff]
    %v57 = vld [vmem:[%s5] sm:$0xff]
    %v58 = vld [vmem:[%s5 + $0x8] sm:$0xff]
    %v59 = vld [vmem:[%s5 + $0x10] sm:$0xff]
    %v60 = vld [vmem:[%s5 + $0x18] sm:$0xff]
    %v61 = vld [vmem:[%s5 + $0x20] sm:$0xff]
    %v62 = vld [vmem:[%s5 + $0x28] sm:$0xff]
    %v63 = vld [vmem:[%s5 + $0x30] sm:$0xff]
    %v64 = vld [vmem:[%s5 + $0x38] sm:$0xff]
    %v65 = vld [vmem:[%s5 + $0x40] sm:$0xff]
    %v66 = vld [vmem:[%s5 + $0x48] sm:$0xff]
    %v67 = vld [vmem:[%s5 + $0x50] sm:$0xff]
    %v68 = vld [vmem:[%s5 + $0x58] sm:$0xff]
    %v69 = vld [vmem:[%s5 + $0x60] sm:$0xff]
    %v70 = vld [vmem:[%s5 + $0x68] sm:$0xff]
    %v71 = vld [vmem:[%s5 + $0x70] sm:$0xff]
    %v72 = vld [vmem:[%s5 + $0x78] sm:$0xff]
    %v73 = vld [vmem:[%s5] sm:$0x1]
    %v74 = vld [vmem:[%s5 + $0x18] sm:$0x1]
    %v75 = vld [vmem:[%s1] sm:$0xff]
    %v76 = vld [vmem:[%s1 + $0x8] sm:$0xff]
    %v77 = vld [vmem:[%s1 + $0x10] sm:$0xff]
    %v78 = vld [vmem:[%s1 + $0x18] sm:$0xff]
    %v79 = vld [vmem:[%s1 + $0x20] sm:$0xff]
    %v80 = vld [vmem:[%s1 + $0x28] sm:$0xff]
    %v81 = vld [vmem:[%s1 + $0x30] sm:$0xff]
    %v82 = vld [vmem:[%s1 + $0x38] sm:$0xff]
    %v83 = vld [vmem:[%s1 + $0x40] sm:$0xff]
    %v84 = vld [vmem:[%s1 + $0x48] sm:$0xff]
    %v85 = vld [vmem:[%s1 + $0x50] sm:$0xff]
    %v86 = vld [vmem:[%s1 + $0x58] sm:$0xff]
    %v87 = vld [vmem:[%s1 + $0x60] sm:$0xff]
    %v88 = vld [vmem:[%s1 + $0x68] sm:$0xff]
    %v89 = vld [vmem:[%s1 + $0x70] sm:$0xff]
    %v90 = vld [vmem:[%s1 + $0x78] sm:$0xff]
    %v91 = vld [vmem:[%s1 + $0x80] sm:$0xff]
    %v92 = vld [vmem:[%s1 + $0x88] sm:$0xff]
    %v93 = vld [vmem:[%s1 + $0x90] sm:$0xff]
    %v94 = vld [vmem:[%s1 + $0x98] sm:$0xff]
    %v95 = vld [vmem:[%s1 + $0xa0] sm:$0xff]
    %v96 = vld [vmem:[%s1 + $0xa8] sm:$0xff]
    %v97 = vld [vmem:[%s1 + $0xb0] sm:$0xff]
    %v98 = vld [vmem:[%s1 + $0xb8] sm:$0xff]
    %v99 = vld [vmem:[%s1 + $0xc0] sm:$0xff]
    %v100 = vld [vmem:[%s1 + $0xc8] sm:$0xff]
    %v101 = vld [vmem:[%s1 + $0xd0] sm:$0xff]
    %v102 = vld [vmem:[%s1 + $0xd8] sm:$0xff]
    %v103 = vld [vmem:[%s1 + $0xe0] sm:$0xff]
    %v104 = vld [vmem:[%s1 + $0xe8] sm:$0xff]
    %v105 = vld [vmem:[%s1 + $0xf0] sm:$0xff]
    %v106 = vld [vmem:[%s1 + $0xf8] sm:$0xff]
    %v107 = vld [vmem:[%s1 + $0x100] sm:$0xff]
    %v108 = vld [vmem:[%s1 + $0x108] sm:$0xff]
    %v109 = vld [vmem:[%s1 + $0x110] sm:$0xff]
    %v110 = vld [vmem:[%s1 + $0x118] sm:$0xff]
    %v111 = vld [vmem:[%s1 + $0x120] sm:$0xff]
    %v112 = vld [vmem:[%s1 + $0x128] sm:$0xff]
    %v113 = vld [vmem:[%s1 + $0x130] sm:$0xff]
    %v114 = vld [vmem:[%s1 + $0x138] sm:$0xff]
    %v115 = vld [vmem:[%s1 + $0x140] sm:$0xff]
    %v116 = vld [vmem:[%s1 + $0x148] sm:$0xff]
    %v117 = vld [vmem:[%s1 + $0x150] sm:$0xff]
    %v118 = vld [vmem:[%s1 + $0x158] sm:$0xff]
    %v119 = vld [vmem:[%s1 + $0x160] sm:$0xff]
    %v120 = vld [vmem:[%s1 + $0x168] sm:$0xff]
    %v121 = vld [vmem:[%s1 + $0x170] sm:$0xff]
    %v122 = vld [vmem:[%s1 + $0x178] sm:$0xff]
    %v123 = vld [vmem:[%s1 + $0x180] sm:$0xff]
    %v124 = vld [vmem:[%s1 + $0x188] sm:$0xff]
    %v125 = vld [vmem:[%s1 + $0x190] sm:$0xff]
    %v126 = vld [vmem:[%s1 + $0x198] sm:$0xff]
    %v127 = vld [vmem:[%s1 + $0x1a0] sm:$0xff]
    %v128 = vld [vmem:[%s1 + $0x1a8] sm:$0xff]
    %v129 = vld [vmem:[%s1 + $0x1b0] sm:$0xff]
    %v130 = vld [vmem:[%s1 + $0x1b8] sm:$0xff]
    %v131 = vld [vmem:[%s1 + $0x1c0] sm:$0xff]
    %v132 = vld [vmem:[%s1 + $0x1c8] sm:$0xff]
    %v133 = vld [vmem:[%s1 + $0x1d0] sm:$0xff]
    %v134 = vld [vmem:[%s1 + $0x1d8] sm:$0xff]
    %v135 = vld [vmem:[%s1 + $0x1e0] sm:$0xff]
    %v136 = vld [vmem:[%s1 + $0x1e8] sm:$0xff]
    %v137 = vld [vmem:[%s1 + $0x1f0] sm:$0xff]
    %v138 = vld [vmem:[%s1 + $0x1f8] sm:$0xff]
    %v139 = vld [vmem:[%s4] sm:$0xff]
    %v140 = vld [vmem:[%s4 + $0x8] sm:$0xff]
    %v141 = vld [vmem:[%s4 + $0x10] sm:$0xff]
    %v142 = vld [vmem:[%s4 + $0x18] sm:$0xff]
    %v143 = vld [vmem:[%s4 + $0x20] sm:$0xff]
    %v144 = vld [vmem:[%s4 + $0x28] sm:$0xff]
    %v145 = vld [vmem:[%s4 + $0x30] sm:$0xff]
    %v146 = vld [vmem:[%s4 + $0x38] sm:$0xff]
    %v147 = vlaneseq
    %v148 = vand.u32 %v147, 127
    %v149 = vld [vmem:[%s0] sm:$0xff]
    %v150 = vld [vmem:[%s0 + $0x8] sm:$0xff]
    %v151 = vld [vmem:[%s0 + $0x10] sm:$0xff]
    %v152 = vld [vmem:[%s0 + $0x18] sm:$0xff]
    %v153 = vld [vmem:[%s0 + $0x20] sm:$0xff]
    %v154 = vld [vmem:[%s0 + $0x28] sm:$0xff]
    %v155 = vld [vmem:[%s0 + $0x30] sm:$0xff]
    %v156 = vld [vmem:[%s0 + $0x38] sm:$0xff]
    %v157 = vld [vmem:[%s0 + $0x40] sm:$0xff]
    %v158 = vld [vmem:[%s0 + $0x48] sm:$0xff]
    %v159 = vld [vmem:[%s0 + $0x50] sm:$0xff]
    %v160 = vld [vmem:[%s0 + $0x58] sm:$0xff]
    %v161 = vld [vmem:[%s0 + $0x60] sm:$0xff]
    %v162 = vld [vmem:[%s0 + $0x68] sm:$0xff]
    %v163 = vld [vmem:[%s0 + $0x70] sm:$0xff]
    %v164 = vld [vmem:[%s0 + $0x78] sm:$0xff]
    %v165 = vld [vmem:[%s0 + $0x80] sm:$0xff]
    %v166 = vld [vmem:[%s0 + $0x88] sm:$0xff]
    %v167 = vld [vmem:[%s0 + $0x90] sm:$0xff]
    %v168 = vld [vmem:[%s0 + $0x98] sm:$0xff]
    %v169 = vld [vmem:[%s0 + $0xa0] sm:$0xff]
    %v170 = vld [vmem:[%s0 + $0xa8] sm:$0xff]
    %v171 = vld [vmem:[%s0 + $0xb0] sm:$0xff]
    %v172 = vld [vmem:[%s0 + $0xb8] sm:$0xff]
    %v173 = vld [vmem:[%s0 + $0xc0] sm:$0xff]
    %v174 = vld [vmem:[%s0 + $0xc8] sm:$0xff]
    %v175 = vld [vmem:[%s0 + $0xd0] sm:$0xff]
    %v176 = vld [vmem:[%s0 + $0xd8] sm:$0xff]
    %v177 = vld [vmem:[%s0 + $0xe0] sm:$0xff]
    %v178 = vld [vmem:[%s0 + $0xe8] sm:$0xff]
    %v179 = vld [vmem:[%s0 + $0xf0] sm:$0xff]
    %v180 = vld [vmem:[%s0 + $0xf8] sm:$0xff]
    %v181 = vld [vmem:[%s0 + $0x100] sm:$0xff]
    %v182 = vld [vmem:[%s0 + $0x108] sm:$0xff]
    %v183 = vld [vmem:[%s0 + $0x110] sm:$0xff]
    %v184 = vld [vmem:[%s0 + $0x118] sm:$0xff]
    %v185 = vld [vmem:[%s0 + $0x120] sm:$0xff]
    %v186 = vld [vmem:[%s0 + $0x128] sm:$0xff]
    %v187 = vld [vmem:[%s0 + $0x130] sm:$0xff]
    %v188 = vld [vmem:[%s0 + $0x138] sm:$0xff]
    %v189 = vld [vmem:[%s0 + $0x140] sm:$0xff]
    %v190 = vld [vmem:[%s0 + $0x148] sm:$0xff]
    %v191 = vld [vmem:[%s0 + $0x150] sm:$0xff]
    %v192 = vld [vmem:[%s0 + $0x158] sm:$0xff]
    %v193 = vld [vmem:[%s0 + $0x160] sm:$0xff]
    %v194 = vld [vmem:[%s0 + $0x168] sm:$0xff]
    %v195 = vld [vmem:[%s0 + $0x170] sm:$0xff]
    %v196 = vld [vmem:[%s0 + $0x178] sm:$0xff]
    %v197 = vld [vmem:[%s0 + $0x180] sm:$0xff]
    %v198 = vld [vmem:[%s0 + $0x188] sm:$0xff]
    %v199 = vld [vmem:[%s0 + $0x190] sm:$0xff]
    %v200 = vld [vmem:[%s0 + $0x198] sm:$0xff]
    %v201 = vld [vmem:[%s0 + $0x1a0] sm:$0xff]
    %v202 = vld [vmem:[%s0 + $0x1a8] sm:$0xff]
    %v203 = vld [vmem:[%s0 + $0x1b0] sm:$0xff]
    %v204 = vld [vmem:[%s0 + $0x1b8] sm:$0xff]
    %v205 = vld [vmem:[%s0 + $0x1c0] sm:$0xff]
    %v206 = vld [vmem:[%s0 + $0x1c8] sm:$0xff]
    %v207 = vld [vmem:[%s0 + $0x1d0] sm:$0xff]
    %v208 = vld [vmem:[%s0 + $0x1d8] sm:$0xff]
    %v209 = vld [vmem:[%s0 + $0x1e0] sm:$0xff]
    %v210 = vld [vmem:[%s0 + $0x1e8] sm:$0xff]
    %v211 = vld [vmem:[%s0 + $0x1f0] sm:$0xff]
    %v212 = vld [vmem:[%s0 + $0x1f8] sm:$0xff]
    %v213 = vld [vmem:[%s0 + $0x200] sm:$0xff]
    %v214 = vld [vmem:[%s0 + $0x208] sm:$0xff]
    %v215 = vld [vmem:[%s0 + $0x210] sm:$0xff]
    %v216 = vld [vmem:[%s0 + $0x218] sm:$0xff]
    %v217 = vld [vmem:[%s0 + $0x220] sm:$0xff]
    %v218 = vld [vmem:[%s0 + $0x228] sm:$0xff]
    %v219 = vld [vmem:[%s0 + $0x230] sm:$0xff]
    %v220 = vld [vmem:[%s0 + $0x238] sm:$0xff]
    %v221 = vld [vmem:[%s0 + $0x240] sm:$0xff]
    %v222 = vld [vmem:[%s0 + $0x248] sm:$0xff]
    %v223 = vld [vmem:[%s0 + $0x250] sm:$0xff]
    %v224 = vld [vmem:[%s0 + $0x258] sm:$0xff]
    %v225 = vld [vmem:[%s0 + $0x260] sm:$0xff]
    %v226 = vld [vmem:[%s0 + $0x268] sm:$0xff]
    %v227 = vld [vmem:[%s0 + $0x270] sm:$0xff]
    %v228 = vld [vmem:[%s0 + $0x278] sm:$0xff]
    %v229 = vld [vmem:[%s0 + $0x280] sm:$0xff]
    %v230 = vld [vmem:[%s0 + $0x288] sm:$0xff]
    %v231 = vld [vmem:[%s0 + $0x290] sm:$0xff]
    %v232 = vld [vmem:[%s0 + $0x298] sm:$0xff]
    %v233 = vld [vmem:[%s0 + $0x2a0] sm:$0xff]
    %v234 = vld [vmem:[%s0 + $0x2a8] sm:$0xff]
    %v235 = vld [vmem:[%s0 + $0x2b0] sm:$0xff]
    %v236 = vld [vmem:[%s0 + $0x2b8] sm:$0xff]
    %v237 = vld [vmem:[%s0 + $0x2c0] sm:$0xff]
    %v238 = vld [vmem:[%s0 + $0x2c8] sm:$0xff]
    %v239 = vld [vmem:[%s0 + $0x2d0] sm:$0xff]
    %v240 = vld [vmem:[%s0 + $0x2d8] sm:$0xff]
    %v241 = vld [vmem:[%s0 + $0x2e0] sm:$0xff]
    %v242 = vld [vmem:[%s0 + $0x2e8] sm:$0xff]
    %v243 = vld [vmem:[%s0 + $0x2f0] sm:$0xff]
    %v244 = vld [vmem:[%s0 + $0x2f8] sm:$0xff]
    %v245 = vld [vmem:[%s0 + $0x300] sm:$0xff]
    %v246 = vld [vmem:[%s0 + $0x308] sm:$0xff]
    %v247 = vld [vmem:[%s0 + $0x310] sm:$0xff]
    %v248 = vld [vmem:[%s0 + $0x318] sm:$0xff]
    %v249 = vld [vmem:[%s0 + $0x320] sm:$0xff]
    %v250 = vld [vmem:[%s0 + $0x328] sm:$0xff]
    %v251 = vld [vmem:[%s0 + $0x330] sm:$0xff]
    %v252 = vld [vmem:[%s0 + $0x338] sm:$0xff]
    %v253 = vld [vmem:[%s0 + $0x340] sm:$0xff]
    %v254 = vld [vmem:[%s0 + $0x348] sm:$0xff]
    %v255 = vld [vmem:[%s0 + $0x350] sm:$0xff]
    %v256 = vld [vmem:[%s0 + $0x358] sm:$0xff]
    %v257 = vld [vmem:[%s0 + $0x360] sm:$0xff]
    %v258 = vld [vmem:[%s0 + $0x368] sm:$0xff]
    %v259 = vld [vmem:[%s0 + $0x370] sm:$0xff]
    %v260 = vld [vmem:[%s0 + $0x378] sm:$0xff]
    %v261 = vld [vmem:[%s0 + $0x380] sm:$0xff]
    %v262 = vld [vmem:[%s0 + $0x388] sm:$0xff]
    %v263 = vld [vmem:[%s0 + $0x390] sm:$0xff]
    %v264 = vld [vmem:[%s0 + $0x398] sm:$0xff]
    %v265 = vld [vmem:[%s0 + $0x3a0] sm:$0xff]
    %v266 = vld [vmem:[%s0 + $0x3a8] sm:$0xff]
    %v267 = vld [vmem:[%s0 + $0x3b0] sm:$0xff]
    %v268 = vld [vmem:[%s0 + $0x3b8] sm:$0xff]
    %v269 = vld [vmem:[%s0 + $0x3c0] sm:$0xff]
    %v270 = vld [vmem:[%s0 + $0x3c8] sm:$0xff]
    %v271 = vld [vmem:[%s0 + $0x3d0] sm:$0xff]
    %v272 = vld [vmem:[%s0 + $0x3d8] sm:$0xff]
    %v273 = vld [vmem:[%s0 + $0x3e0] sm:$0xff]
    %v274 = vld [vmem:[%s0 + $0x3e8] sm:$0xff]
    %v275 = vld [vmem:[%s0 + $0x3f0] sm:$0xff]
    %v276 = vld [vmem:[%s0 + $0x3f8] sm:$0xff]
    %v277 = vld [vmem:[%s0 + $0x400] sm:$0xff]
    %v278 = vld [vmem:[%s0 + $0x408] sm:$0xff]
    %v279 = vld [vmem:[%s0 + $0x410] sm:$0xff]
    %v280 = vld [vmem:[%s0 + $0x418] sm:$0xff]
    %v281 = vld [vmem:[%s0 + $0x420] sm:$0xff]
    %v282 = vld [vmem:[%s0 + $0x428] sm:$0xff]
    %v283 = vld [vmem:[%s0 + $0x430] sm:$0xff]
    %v284 = vld [vmem:[%s0 + $0x438] sm:$0xff]
    %v285 = vld [vmem:[%s0 + $0x440] sm:$0xff]
    %v286 = vld [vmem:[%s0 + $0x448] sm:$0xff]
    %v287 = vld [vmem:[%s0 + $0x450] sm:$0xff]
    %v288 = vld [vmem:[%s0 + $0x458] sm:$0xff]
    %v289 = vld [vmem:[%s0 + $0x460] sm:$0xff]
    %v290 = vld [vmem:[%s0 + $0x468] sm:$0xff]
    %v291 = vld [vmem:[%s0 + $0x470] sm:$0xff]
    %v292 = vld [vmem:[%s0 + $0x478] sm:$0xff]
    %v293 = vld [vmem:[%s0 + $0x480] sm:$0xff]
    %v294 = vld [vmem:[%s0 + $0x488] sm:$0xff]
    %v295 = vld [vmem:[%s0 + $0x490] sm:$0xff]
    %v296 = vld [vmem:[%s0 + $0x498] sm:$0xff]
    %v297 = vld [vmem:[%s0 + $0x4a0] sm:$0xff]
    %v298 = vld [vmem:[%s0 + $0x4a8] sm:$0xff]
    %v299 = vld [vmem:[%s0 + $0x4b0] sm:$0xff]
    %v300 = vld [vmem:[%s0 + $0x4b8] sm:$0xff]
    %v301 = vld [vmem:[%s0 + $0x4c0] sm:$0xff]
    %v302 = vld [vmem:[%s0 + $0x4c8] sm:$0xff]
    %v303 = vld [vmem:[%s0 + $0x4d0] sm:$0xff]
    %v304 = vld [vmem:[%s0 + $0x4d8] sm:$0xff]
    %v305 = vld [vmem:[%s0 + $0x4e0] sm:$0xff]
    %v306 = vld [vmem:[%s0 + $0x4e8] sm:$0xff]
    %v307 = vld [vmem:[%s0 + $0x4f0] sm:$0xff]
    %v308 = vld [vmem:[%s0 + $0x4f8] sm:$0xff]
    %v309 = vld [vmem:[%s0 + $0x500] sm:$0xff]
    %v310 = vld [vmem:[%s0 + $0x508] sm:$0xff]
    %v311 = vld [vmem:[%s0 + $0x510] sm:$0xff]
    %v312 = vld [vmem:[%s0 + $0x518] sm:$0xff]
    %v313 = vld [vmem:[%s0 + $0x520] sm:$0xff]
    %v314 = vld [vmem:[%s0 + $0x528] sm:$0xff]
    %v315 = vld [vmem:[%s0 + $0x530] sm:$0xff]
    %v316 = vld [vmem:[%s0 + $0x538] sm:$0xff]
    %v317 = vld [vmem:[%s0 + $0x540] sm:$0xff]
    %v318 = vld [vmem:[%s0 + $0x548] sm:$0xff]
    %v319 = vld [vmem:[%s0 + $0x550] sm:$0xff]
    %v320 = vld [vmem:[%s0 + $0x558] sm:$0xff]
    %v321 = vld [vmem:[%s0 + $0x560] sm:$0xff]
    %v322 = vld [vmem:[%s0 + $0x568] sm:$0xff]
    %v323 = vld [vmem:[%s0 + $0x570] sm:$0xff]
    %v324 = vld [vmem:[%s0 + $0x578] sm:$0xff]
    %v325 = vld [vmem:[%s0 + $0x580] sm:$0xff]
    %v326 = vld [vmem:[%s0 + $0x588] sm:$0xff]
    %v327 = vld [vmem:[%s0 + $0x590] sm:$0xff]
    %v328 = vld [vmem:[%s0 + $0x598] sm:$0xff]
    %v329 = vld [vmem:[%s0 + $0x5a0] sm:$0xff]
    %v330 = vld [vmem:[%s0 + $0x5a8] sm:$0xff]
    %v331 = vld [vmem:[%s0 + $0x5b0] sm:$0xff]
    %v332 = vld [vmem:[%s0 + $0x5b8] sm:$0xff]
    %v333 = vld [vmem:[%s0 + $0x5c0] sm:$0xff]
    %v334 = vld [vmem:[%s0 + $0x5c8] sm:$0xff]
    %v335 = vld [vmem:[%s0 + $0x5d0] sm:$0xff]
    %v336 = vld [vmem:[%s0 + $0x5d8] sm:$0xff]
    %v337 = vld [vmem:[%s0 + $0x5e0] sm:$0xff]
    %v338 = vld [vmem:[%s0 + $0x5e8] sm:$0xff]
    %v339 = vld [vmem:[%s0 + $0x5f0] sm:$0xff]
    %v340 = vld [vmem:[%s0 + $0x5f8] sm:$0xff]
    %v341 = vld [vmem:[%s0 + $0x600] sm:$0xff]
    %v342 = vld [vmem:[%s0 + $0x608] sm:$0xff]
    %v343 = vld [vmem:[%s0 + $0x610] sm:$0xff]
    %v344 = vld [vmem:[%s0 + $0x618] sm:$0xff]
    %v345 = vld [vmem:[%s0 + $0x620] sm:$0xff]
    %v346 = vld [vmem:[%s0 + $0x628] sm:$0xff]
    %v347 = vld [vmem:[%s0 + $0x630] sm:$0xff]
    %v348 = vld [vmem:[%s0 + $0x638] sm:$0xff]
    %v349 = vld [vmem:[%s0 + $0x640] sm:$0xff]
    %v350 = vld [vmem:[%s0 + $0x648] sm:$0xff]
    %v351 = vld [vmem:[%s0 + $0x650] sm:$0xff]
    %v352 = vld [vmem:[%s0 + $0x658] sm:$0xff]
    %v353 = vld [vmem:[%s0 + $0x660] sm:$0xff]
    %v354 = vld [vmem:[%s0 + $0x668] sm:$0xff]
    %v355 = vld [vmem:[%s0 + $0x670] sm:$0xff]
    %v356 = vld [vmem:[%s0 + $0x678] sm:$0xff]
    %v357 = vld [vmem:[%s0 + $0x680] sm:$0xff]
    %v358 = vld [vmem:[%s0 + $0x688] sm:$0xff]
    %v359 = vld [vmem:[%s0 + $0x690] sm:$0xff]
    %v360 = vld [vmem:[%s0 + $0x698] sm:$0xff]
    %v361 = vld [vmem:[%s0 + $0x6a0] sm:$0xff]
    %v362 = vld [vmem:[%s0 + $0x6a8] sm:$0xff]
    %v363 = vld [vmem:[%s0 + $0x6b0] sm:$0xff]
    %v364 = vld [vmem:[%s0 + $0x6b8] sm:$0xff]
    %v365 = vld [vmem:[%s0 + $0x6c0] sm:$0xff]
    %v366 = vld [vmem:[%s0 + $0x6c8] sm:$0xff]
    %v367 = vld [vmem:[%s0 + $0x6d0] sm:$0xff]
    %v368 = vld [vmem:[%s0 + $0x6d8] sm:$0xff]
    %v369 = vld [vmem:[%s0 + $0x6e0] sm:$0xff]
    %v370 = vld [vmem:[%s0 + $0x6e8] sm:$0xff]
    %v371 = vld [vmem:[%s0 + $0x6f0] sm:$0xff]
    %v372 = vld [vmem:[%s0 + $0x6f8] sm:$0xff]
    %v373 = vld [vmem:[%s0 + $0x700] sm:$0xff]
    %v374 = vld [vmem:[%s0 + $0x708] sm:$0xff]
    %v375 = vld [vmem:[%s0 + $0x710] sm:$0xff]
    %v376 = vld [vmem:[%s0 + $0x718] sm:$0xff]
    %v377 = vld [vmem:[%s0 + $0x720] sm:$0xff]
    %v378 = vld [vmem:[%s0 + $0x728] sm:$0xff]
    %v379 = vld [vmem:[%s0 + $0x730] sm:$0xff]
    %v380 = vld [vmem:[%s0 + $0x738] sm:$0xff]
    %v381 = vld [vmem:[%s0 + $0x740] sm:$0xff]
    %v382 = vld [vmem:[%s0 + $0x748] sm:$0xff]
    %v383 = vld [vmem:[%s0 + $0x750] sm:$0xff]
    %v384 = vld [vmem:[%s0 + $0x758] sm:$0xff]
    %v385 = vld [vmem:[%s0 + $0x760] sm:$0xff]
    %v386 = vld [vmem:[%s0 + $0x768] sm:$0xff]
    %v387 = vld [vmem:[%s0 + $0x770] sm:$0xff]
    %v388 = vld [vmem:[%s0 + $0x778] sm:$0xff]
    %v389 = vld [vmem:[%s0 + $0x780] sm:$0xff]
    %v390 = vld [vmem:[%s0 + $0x788] sm:$0xff]
    %v391 = vld [vmem:[%s0 + $0x790] sm:$0xff]
    %v392 = vld [vmem:[%s0 + $0x798] sm:$0xff]
    %v393 = vld [vmem:[%s0 + $0x7a0] sm:$0xff]
    %v394 = vld [vmem:[%s0 + $0x7a8] sm:$0xff]
    %v395 = vld [vmem:[%s0 + $0x7b0] sm:$0xff]
    %v396 = vld [vmem:[%s0 + $0x7b8] sm:$0xff]
    %v397 = vld [vmem:[%s0 + $0x7c0] sm:$0xff]
    %v398 = vld [vmem:[%s0 + $0x7c8] sm:$0xff]
    %v399 = vld [vmem:[%s0 + $0x7d0] sm:$0xff]
    %v400 = vld [vmem:[%s0 + $0x7d8] sm:$0xff]
    %v401 = vld [vmem:[%s0 + $0x7e0] sm:$0xff]
    %v402 = vld [vmem:[%s0 + $0x7e8] sm:$0xff]
    %v403 = vld [vmem:[%s0 + $0x7f0] sm:$0xff]
    %v404 = vld [vmem:[%s0 + $0x7f8] sm:$0xff]
    %v405 = vpack.c.bf16 %v150, %v149
    %v406 = vpack.c.bf16 %v152, %v151
    %v407 = vpack.c.bf16 %v154, %v153
    %v408 = vpack.c.bf16 %v156, %v155
    %v409 = vpack.c.bf16 %v158, %v157
    %v410 = vpack.c.bf16 %v160, %v159
    %v411 = vpack.c.bf16 %v162, %v161
    %v412 = vpack.c.bf16 %v164, %v163
    %v413 = vpack.c.bf16 %v166, %v165
    %v414 = vpack.c.bf16 %v168, %v167
    %v415 = vpack.c.bf16 %v170, %v169
    %v416 = vpack.c.bf16 %v172, %v171
    %v417 = vpack.c.bf16 %v174, %v173
    %v418 = vpack.c.bf16 %v176, %v175
    %v419 = vpack.c.bf16 %v178, %v177
    %v420 = vpack.c.bf16 %v180, %v179
    %v421 = vpack.c.bf16 %v182, %v181
    %v422 = vpack.c.bf16 %v184, %v183
    %v423 = vpack.c.bf16 %v186, %v185
    %v424 = vpack.c.bf16 %v188, %v187
    %v425 = vpack.c.bf16 %v190, %v189
    %v426 = vpack.c.bf16 %v192, %v191
    %v427 = vpack.c.bf16 %v194, %v193
    %v428 = vpack.c.bf16 %v196, %v195
    %v429 = vpack.c.bf16 %v198, %v197
    %v430 = vpack.c.bf16 %v200, %v199
    %v431 = vpack.c.bf16 %v202, %v201
    %v432 = vpack.c.bf16 %v204, %v203
    %v433 = vpack.c.bf16 %v206, %v205
    %v434 = vpack.c.bf16 %v208, %v207
    %v435 = vpack.c.bf16 %v210, %v209
    %v436 = vpack.c.bf16 %v212, %v211
    %v437 = vpack.c.bf16 %v214, %v213
    %v438 = vpack.c.bf16 %v216, %v215
    %v439 = vpack.c.bf16 %v218, %v217
    %v440 = vpack.c.bf16 %v220, %v219
    %v441 = vpack.c.bf16 %v222, %v221
    %v442 = vpack.c.bf16 %v224, %v223
    %v443 = vpack.c.bf16 %v226, %v225
    %v444 = vpack.c.bf16 %v228, %v227
    %v445 = vpack.c.bf16 %v230, %v229
    %v446 = vpack.c.bf16 %v232, %v231
    %v447 = vpack.c.bf16 %v234, %v233
    %v448 = vpack.c.bf16 %v236, %v235
    %v449 = vpack.c.bf16 %v238, %v237
    %v450 = vpack.c.bf16 %v240, %v239
    %v451 = vpack.c.bf16 %v242, %v241
    %v452 = vpack.c.bf16 %v244, %v243
    %v453 = vpack.c.bf16 %v246, %v245
    %v454 = vpack.c.bf16 %v248, %v247
    %v455 = vpack.c.bf16 %v250, %v249
    %v456 = vpack.c.bf16 %v252, %v251
    %v457 = vpack.c.bf16 %v254, %v253
    %v458 = vpack.c.bf16 %v256, %v255
    %v459 = vpack.c.bf16 %v258, %v257
    %v460 = vpack.c.bf16 %v260, %v259
    %v461 = vpack.c.bf16 %v262, %v261
    %v462 = vpack.c.bf16 %v264, %v263
    %v463 = vpack.c.bf16 %v266, %v265
    %v464 = vpack.c.bf16 %v268, %v267
    %v465 = vpack.c.bf16 %v270, %v269
    %v466 = vpack.c.bf16 %v272, %v271
    %v467 = vpack.c.bf16 %v274, %v273
    %v468 = vpack.c.bf16 %v276, %v275
    %v469 = vpack.c.bf16 %v278, %v277
    %v470 = vpack.c.bf16 %v280, %v279
    %v471 = vpack.c.bf16 %v282, %v281
    %v472 = vpack.c.bf16 %v284, %v283
    %v473 = vpack.c.bf16 %v286, %v285
    %v474 = vpack.c.bf16 %v288, %v287
    %v475 = vpack.c.bf16 %v290, %v289
    %v476 = vpack.c.bf16 %v292, %v291
    %v477 = vpack.c.bf16 %v294, %v293
    %v478 = vpack.c.bf16 %v296, %v295
    %v479 = vpack.c.bf16 %v298, %v297
    %v480 = vpack.c.bf16 %v300, %v299
    %v481 = vpack.c.bf16 %v302, %v301
    %v482 = vpack.c.bf16 %v304, %v303
    %v483 = vpack.c.bf16 %v306, %v305
    %v484 = vpack.c.bf16 %v308, %v307
    %v485 = vpack.c.bf16 %v310, %v309
    %v486 = vpack.c.bf16 %v312, %v311
    %v487 = vpack.c.bf16 %v314, %v313
    %v488 = vpack.c.bf16 %v316, %v315
    %v489 = vpack.c.bf16 %v318, %v317
    %v490 = vpack.c.bf16 %v320, %v319
    %v491 = vpack.c.bf16 %v322, %v321
    %v492 = vpack.c.bf16 %v324, %v323
    %v493 = vpack.c.bf16 %v326, %v325
    %v494 = vpack.c.bf16 %v328, %v327
    %v495 = vpack.c.bf16 %v330, %v329
    %v496 = vpack.c.bf16 %v332, %v331
    %v497 = vpack.c.bf16 %v334, %v333
    %v498 = vpack.c.bf16 %v336, %v335
    %v499 = vpack.c.bf16 %v338, %v337
    %v500 = vpack.c.bf16 %v340, %v339
    %v501 = vpack.c.bf16 %v342, %v341
    %v502 = vpack.c.bf16 %v344, %v343
    %v503 = vpack.c.bf16 %v346, %v345
    %v504 = vpack.c.bf16 %v348, %v347
    %v505 = vpack.c.bf16 %v350, %v349
    %v506 = vpack.c.bf16 %v352, %v351
    %v507 = vpack.c.bf16 %v354, %v353
    %v508 = vpack.c.bf16 %v356, %v355
    %v509 = vpack.c.bf16 %v358, %v357
    %v510 = vpack.c.bf16 %v360, %v359
    %v511 = vpack.c.bf16 %v362, %v361
    %v512 = vpack.c.bf16 %v364, %v363
    %v513 = vpack.c.bf16 %v366, %v365
    %v514 = vpack.c.bf16 %v368, %v367
    %v515 = vpack.c.bf16 %v370, %v369
    %v516 = vpack.c.bf16 %v372, %v371
    %v517 = vpack.c.bf16 %v374, %v373
    %v518 = vpack.c.bf16 %v376, %v375
    %v519 = vpack.c.bf16 %v378, %v377
    %v520 = vpack.c.bf16 %v380, %v379
    %v521 = vpack.c.bf16 %v382, %v381
    %v522 = vpack.c.bf16 %v384, %v383
    %v523 = vpack.c.bf16 %v386, %v385
    %v524 = vpack.c.bf16 %v388, %v387
    %v525 = vpack.c.bf16 %v390, %v389
    %v526 = vpack.c.bf16 %v392, %v391
    %v527 = vpack.c.bf16 %v394, %v393
    %v528 = vpack.c.bf16 %v396, %v395
    %v529 = vpack.c.bf16 %v398, %v397
    %v530 = vpack.c.bf16 %v400, %v399
    %v531 = vpack.c.bf16 %v402, %v401
    %v532 = vpack.c.bf16 %v404, %v403
    %534 = vset.pattern.permute.xlu0 2
    %535 = vperm.xlu0 %534, %v57
    %v536 = vpop.permute.xlu0 %535
    %539 = vset.pattern.permute.xlu0 2
    %540 = vperm.xlu0 %539, %v58
    %v541 = vpop.permute.xlu0 %540
    %544 = vset.pattern.permute.xlu0 2
    %545 = vperm.xlu0 %544, %v59
    %v546 = vpop.permute.xlu0 %545
    %549 = vset.pattern.permute.xlu0 2
    %550 = vperm.xlu0 %549, %v60
    %v551 = vpop.permute.xlu0 %550
    %554 = vset.pattern.permute.xlu0 2
    %555 = vperm.xlu0 %554, %v61
    %v556 = vpop.permute.xlu0 %555
    %559 = vset.pattern.permute.xlu0 2
    %560 = vperm.xlu0 %559, %v62
    %v561 = vpop.permute.xlu0 %560
    %564 = vset.pattern.permute.xlu0 2
    %565 = vperm.xlu0 %564, %v63
    %v566 = vpop.permute.xlu0 %565
    %569 = vset.pattern.permute.xlu0 2
    %570 = vperm.xlu0 %569, %v64
    %v571 = vpop.permute.xlu0 %570
    %v637 = vunpack.c.l.b16 %v75
    %v638 = vunpack.c.h.b16 %v75
    %v639 = vunpack.c.l.b16 %v76
    %v640 = vunpack.c.h.b16 %v76
    %v641 = vunpack.c.l.b16 %v77
    %v642 = vunpack.c.h.b16 %v77
    %v643 = vunpack.c.l.b16 %v78
    %v644 = vunpack.c.h.b16 %v78
    %v645 = vunpack.c.l.b16 %v79
    %v646 = vunpack.c.h.b16 %v79
    %v647 = vunpack.c.l.b16 %v80
    %v648 = vunpack.c.h.b16 %v80
    %v649 = vunpack.c.l.b16 %v81
    %v650 = vunpack.c.h.b16 %v81
    %v651 = vunpack.c.l.b16 %v82
    %v652 = vunpack.c.h.b16 %v82
    %v653 = vunpack.c.l.b16 %v83
    %v654 = vunpack.c.h.b16 %v83
    %v655 = vunpack.c.l.b16 %v84
    %v656 = vunpack.c.h.b16 %v84
    %v657 = vunpack.c.l.b16 %v85
    %v658 = vunpack.c.h.b16 %v85
    %v659 = vunpack.c.l.b16 %v86
    %v660 = vunpack.c.h.b16 %v86
    %v661 = vunpack.c.l.b16 %v87
    %v662 = vunpack.c.h.b16 %v87
    %v663 = vunpack.c.l.b16 %v88
    %v664 = vunpack.c.h.b16 %v88
    %v665 = vunpack.c.l.b16 %v89
    %v666 = vunpack.c.h.b16 %v89
    %v667 = vunpack.c.l.b16 %v90
    %v668 = vunpack.c.h.b16 %v90
    %v669 = vunpack.c.l.b16 %v91
    %v670 = vunpack.c.h.b16 %v91
    %v671 = vunpack.c.l.b16 %v92
    %v672 = vunpack.c.h.b16 %v92
    %v673 = vunpack.c.l.b16 %v93
    %v674 = vunpack.c.h.b16 %v93
    %v675 = vunpack.c.l.b16 %v94
    %v676 = vunpack.c.h.b16 %v94
    %v677 = vunpack.c.l.b16 %v95
    %v678 = vunpack.c.h.b16 %v95
    %v679 = vunpack.c.l.b16 %v96
    %v680 = vunpack.c.h.b16 %v96
    %v681 = vunpack.c.l.b16 %v97
    %v682 = vunpack.c.h.b16 %v97
    %v683 = vunpack.c.l.b16 %v98
    %v684 = vunpack.c.h.b16 %v98
    %v685 = vunpack.c.l.b16 %v99
    %v686 = vunpack.c.h.b16 %v99
    %v687 = vunpack.c.l.b16 %v100
    %v688 = vunpack.c.h.b16 %v100
    %v689 = vunpack.c.l.b16 %v101
    %v690 = vunpack.c.h.b16 %v101
    %v691 = vunpack.c.l.b16 %v102
    %v692 = vunpack.c.h.b16 %v102
    %v693 = vunpack.c.l.b16 %v103
    %v694 = vunpack.c.h.b16 %v103
    %v695 = vunpack.c.l.b16 %v104
    %v696 = vunpack.c.h.b16 %v104
    %v697 = vunpack.c.l.b16 %v105
    %v698 = vunpack.c.h.b16 %v105
    %v699 = vunpack.c.l.b16 %v106
    %v700 = vunpack.c.h.b16 %v106
    %v701 = vunpack.c.l.b16 %v107
    %v702 = vunpack.c.h.b16 %v107
    %v703 = vunpack.c.l.b16 %v108
    %v704 = vunpack.c.h.b16 %v108
    %v705 = vunpack.c.l.b16 %v109
    %v706 = vunpack.c.h.b16 %v109
    %v707 = vunpack.c.l.b16 %v110
    %v708 = vunpack.c.h.b16 %v110
    %v709 = vunpack.c.l.b16 %v111
    %v710 = vunpack.c.h.b16 %v111
    %v711 = vunpack.c.l.b16 %v112
    %v712 = vunpack.c.h.b16 %v112
    %v713 = vunpack.c.l.b16 %v113
    %v714 = vunpack.c.h.b16 %v113
    %v715 = vunpack.c.l.b16 %v114
    %v716 = vunpack.c.h.b16 %v114
    %v717 = vunpack.c.l.b16 %v115
    %v718 = vunpack.c.h.b16 %v115
    %v719 = vunpack.c.l.b16 %v116
    %v720 = vunpack.c.h.b16 %v116
    %v721 = vunpack.c.l.b16 %v117
    %v722 = vunpack.c.h.b16 %v117
    %v723 = vunpack.c.l.b16 %v118
    %v724 = vunpack.c.h.b16 %v118
    %v725 = vunpack.c.l.b16 %v119
    %v726 = vunpack.c.h.b16 %v119
    %v727 = vunpack.c.l.b16 %v120
    %v728 = vunpack.c.h.b16 %v120
    %v729 = vunpack.c.l.b16 %v121
    %v730 = vunpack.c.h.b16 %v121
    %v731 = vunpack.c.l.b16 %v122
    %v732 = vunpack.c.h.b16 %v122
    %v733 = vunpack.c.l.b16 %v123
    %v734 = vunpack.c.h.b16 %v123
    %v735 = vunpack.c.l.b16 %v124
    %v736 = vunpack.c.h.b16 %v124
    %v737 = vunpack.c.l.b16 %v125
    %v738 = vunpack.c.h.b16 %v125
    %v739 = vunpack.c.l.b16 %v126
    %v740 = vunpack.c.h.b16 %v126
    %v741 = vunpack.c.l.b16 %v127
    %v742 = vunpack.c.h.b16 %v127
    %v743 = vunpack.c.l.b16 %v128
    %v744 = vunpack.c.h.b16 %v128
    %v745 = vunpack.c.l.b16 %v129
    %v746 = vunpack.c.h.b16 %v129
    %v747 = vunpack.c.l.b16 %v130
    %v748 = vunpack.c.h.b16 %v130
    %v749 = vunpack.c.l.b16 %v131
    %v750 = vunpack.c.h.b16 %v131
    %v751 = vunpack.c.l.b16 %v132
    %v752 = vunpack.c.h.b16 %v132
    %v753 = vunpack.c.l.b16 %v133
    %v754 = vunpack.c.h.b16 %v133
    %v755 = vunpack.c.l.b16 %v134
    %v756 = vunpack.c.h.b16 %v134
    %v757 = vunpack.c.l.b16 %v135
    %v758 = vunpack.c.h.b16 %v135
    %v759 = vunpack.c.l.b16 %v136
    %v760 = vunpack.c.h.b16 %v136
    %v761 = vunpack.c.l.b16 %v137
    %v762 = vunpack.c.h.b16 %v137
    %v763 = vunpack.c.l.b16 %v138
    %v764 = vunpack.c.h.b16 %v138
    %v765 = vpack.c.b16 %v653, %v637
    %v766 = vpack.c.b16 %v654, %v638
    %v767 = vpack.c.b16 %v655, %v639
    %v768 = vpack.c.b16 %v656, %v640
    %v769 = vpack.c.b16 %v657, %v641
    %v770 = vpack.c.b16 %v658, %v642
    %v771 = vpack.c.b16 %v659, %v643
    %v772 = vpack.c.b16 %v660, %v644
    %v773 = vpack.c.b16 %v661, %v645
    %v774 = vpack.c.b16 %v662, %v646
    %v775 = vpack.c.b16 %v663, %v647
    %v776 = vpack.c.b16 %v664, %v648
    %v777 = vpack.c.b16 %v665, %v649
    %v778 = vpack.c.b16 %v666, %v650
    %v779 = vpack.c.b16 %v667, %v651
    %v780 = vpack.c.b16 %v668, %v652
    %v781 = vpack.c.b16 %v685, %v669
    %v782 = vpack.c.b16 %v686, %v670
    %v783 = vpack.c.b16 %v687, %v671
    %v784 = vpack.c.b16 %v688, %v672
    %v785 = vpack.c.b16 %v689, %v673
    %v786 = vpack.c.b16 %v690, %v674
    %v787 = vpack.c.b16 %v691, %v675
    %v788 = vpack.c.b16 %v692, %v676
    %v789 = vpack.c.b16 %v693, %v677
    %v790 = vpack.c.b16 %v694, %v678
    %v791 = vpack.c.b16 %v695, %v679
    %v792 = vpack.c.b16 %v696, %v680
    %v793 = vpack.c.b16 %v697, %v681
    %v794 = vpack.c.b16 %v698, %v682
    %v795 = vpack.c.b16 %v699, %v683
    %v796 = vpack.c.b16 %v700, %v684
    %v797 = vpack.c.b16 %v717, %v701
    %v798 = vpack.c.b16 %v718, %v702
    %v799 = vpack.c.b16 %v719, %v703
    %v800 = vpack.c.b16 %v720, %v704
    %v801 = vpack.c.b16 %v721, %v705
    %v802 = vpack.c.b16 %v722, %v706
    %v803 = vpack.c.b16 %v723, %v707
    %v804 = vpack.c.b16 %v724, %v708
    %v805 = vpack.c.b16 %v725, %v709
    %v806 = vpack.c.b16 %v726, %v710
    %v807 = vpack.c.b16 %v727, %v711
    %v808 = vpack.c.b16 %v728, %v712
    %v809 = vpack.c.b16 %v729, %v713
    %v810 = vpack.c.b16 %v730, %v714
    %v811 = vpack.c.b16 %v731, %v715
    %v812 = vpack.c.b16 %v732, %v716
    %v813 = vpack.c.b16 %v749, %v733
    %v814 = vpack.c.b16 %v750, %v734
    %v815 = vpack.c.b16 %v751, %v735
    %v816 = vpack.c.b16 %v752, %v736
    %v817 = vpack.c.b16 %v753, %v737
    %v818 = vpack.c.b16 %v754, %v738
    %v819 = vpack.c.b16 %v755, %v739
    %v820 = vpack.c.b16 %v756, %v740
    %v821 = vpack.c.b16 %v757, %v741
    %v822 = vpack.c.b16 %v758, %v742
    %v823 = vpack.c.b16 %v759, %v743
    %v824 = vpack.c.b16 %v760, %v744
    %v825 = vpack.c.b16 %v761, %v745
    %v826 = vpack.c.b16 %v762, %v746
    %v827 = vpack.c.b16 %v763, %v747
    %v828 = vpack.c.b16 %v764, %v748
    %893 = vmatprep.subr.bf16.mxu0 0
    %894 = vmatpush1.bf16.msra.mxu0 %v405
    %895 = vmatprep.subr.bf16.mxu0 0
    %896 = vmatpush1.bf16.msra.mxu0 %v406
    %897 = vmatprep.subr.bf16.mxu0 0
    %898 = vmatpush1.bf16.msra.mxu0 %v407
    %899 = vmatprep.subr.bf16.mxu0 0
    %900 = vmatpush1.bf16.msra.mxu0 %v408
    %901 = vmatprep.subr.bf16.mxu0 0
    %902 = vmatpush1.bf16.msra.mxu0 %v409
    %903 = vmatprep.subr.bf16.mxu0 0
    %904 = vmatpush1.bf16.msra.mxu0 %v410
    %905 = vmatprep.subr.bf16.mxu0 0
    %906 = vmatpush1.bf16.msra.mxu0 %v411
    %907 = vmatprep.subr.bf16.mxu0 0
    %908 = vmatpush1.bf16.msra.mxu0 %v412
    %909 = vmatprep.subr.bf16.mxu0 0
    %910 = vmatpush1.bf16.msra.mxu0 %v413
    %911 = vmatprep.subr.bf16.mxu0 0
    %912 = vmatpush1.bf16.msra.mxu0 %v414
    %913 = vmatprep.subr.bf16.mxu0 0
    %914 = vmatpush1.bf16.msra.mxu0 %v415
    %915 = vmatprep.subr.bf16.mxu0 0
    %916 = vmatpush1.bf16.msra.mxu0 %v416
    %917 = vmatprep.subr.bf16.mxu0 0
    %918 = vmatpush1.bf16.msra.mxu0 %v417
    %919 = vmatprep.subr.bf16.mxu0 0
    %920 = vmatpush1.bf16.msra.mxu0 %v418
    %921 = vmatprep.subr.bf16.mxu0 0
    %922 = vmatpush1.bf16.msra.mxu0 %v419
    %923 = vmatprep.subr.bf16.mxu0 0
    %924 = vmatpush1.bf16.msra.mxu0 %v420
    %925 = vmatprep.mubr.bf16.mxu0 %v766
    %926 = vmatmul.mubr.bf16.gmra.mrb[0].mxu0 %v765
    %v927 = vpop.f32.mrb[0].mxu0
    %v928 = vadd.f32 %v536, %v927
    %v929 = vpop.f32.mrb[0].mxu0
    %v930 = vpop.f32.mrb[0].mxu0
    %v931 = vadd.f32 %v541, %v930
    %v932 = vpop.f32.mrb[0].mxu0
    %933 = vmatprep.mubr.bf16.mxu0 %v782
    %934 = vmatmul.mubr.bf16.gmra.mrb[0].mxu0 %v781
    %v935 = vpop.f32.mrb[0].mxu0
    %v936 = vadd.f32 %v546, %v935
    %v937 = vpop.f32.mrb[0].mxu0
    %v938 = vpop.f32.mrb[0].mxu0
    %v939 = vadd.f32 %v551, %v938
    %v940 = vpop.f32.mrb[0].mxu0
    %941 = vmatprep.mubr.bf16.mxu0 %v798
    %942 = vmatmul.mubr.bf16.gmra.mrb[0].mxu0 %v797
    %v943 = vpop.f32.mrb[0].mxu0
    %v944 = vadd.f32 %v556, %v943
    %v945 = vpop.f32.mrb[0].mxu0
    %v946 = vpop.f32.mrb[0].mxu0
    %v947 = vadd.f32 %v561, %v946
    %v948 = vpop.f32.mrb[0].mxu0
    %949 = vmatprep.mubr.bf16.mxu0 %v814
    %950 = vmatmul.mubr.bf16.gmra.mrb[0].mxu0 %v813
    %v951 = vpop.f32.mrb[0].mxu0
    %v952 = vadd.f32 %v566, %v951
    %v953 = vpop.f32.mrb[0].mxu0
    %v954 = vpop.f32.mrb[0].mxu0
    %v955 = vadd.f32 %v571, %v954
    %v956 = vpop.f32.mrb[0].mxu0
    %957 = vdwg.mxu0
    %958 = vmatprep.subr.bf16.mxu0 0
    %959 = vmatpush1.bf16.msra.mxu0 %v421
    %960 = vmatprep.subr.bf16.mxu0 0
    %961 = vmatpush1.bf16.msra.mxu0 %v422
    %962 = vmatprep.subr.bf16.mxu0 0
    %963 = vmatpush1.bf16.msra.mxu0 %v423
    %964 = vmatprep.subr.bf16.mxu0 0
    %965 = vmatpush1.bf16.msra.mxu0 %v424
    %966 = vmatprep.subr.bf16.mxu0 0
    %967 = vmatpush1.bf16.msra.mxu0 %v425
    %968 = vmatprep.subr.bf16.mxu0 0
    %969 = vmatpush1.bf16.msra.mxu0 %v426
    %970 = vmatprep.subr.bf16.mxu0 0
    %971 = vmatpush1.bf16.msra.mxu0 %v427
    %972 = vmatprep.subr.bf16.mxu0 0
    %973 = vmatpush1.bf16.msra.mxu0 %v428
    %974 = vmatprep.subr.bf16.mxu0 0
    %975 = vmatpush1.bf16.msra.mxu0 %v429
    %976 = vmatprep.subr.bf16.mxu0 0
    %977 = vmatpush1.bf16.msra.mxu0 %v430
    %978 = vmatprep.subr.bf16.mxu0 0
    %979 = vmatpush1.bf16.msra.mxu0 %v431
    %980 = vmatprep.subr.bf16.mxu0 0
    %981 = vmatpush1.bf16.msra.mxu0 %v432
    %982 = vmatprep.subr.bf16.mxu0 0
    %983 = vmatpush1.bf16.msra.mxu0 %v433
    %984 = vmatprep.subr.bf16.mxu0 0
    %985 = vmatpush1.bf16.msra.mxu0 %v434
    %986 = vmatprep.subr.bf16.mxu0 0
    %987 = vmatpush1.bf16.msra.mxu0 %v435
    %988 = vmatprep.subr.bf16.mxu0 0
    %989 = vmatpush1.bf16.msra.mxu0 %v436
    %990 = vmatprep.mubr.bf16.mxu0 %v768
    %991 = vmatmul.mubr.bf16.gmra.mrb[0].mxu0 %v767
    %v992 = vpop.f32.mrb[0].mxu0
    %v993 = vadd.f32 %v928, %v992
    %v994 = vpop.f32.mrb[0].mxu0
    %v995 = vpop.f32.mrb[0].mxu0
    %v996 = vadd.f32 %v931, %v995
    %v997 = vpop.f32.mrb[0].mxu0
    %998 = vmatprep.mubr.bf16.mxu0 %v784
    %999 = vmatmul.mubr.bf16.gmra.mrb[0].mxu0 %v783
    %v1000 = vpop.f32.mrb[0].mxu0
    %v1001 = vadd.f32 %v936, %v1000
    %v1002 = vpop.f32.mrb[0].mxu0
    %v1003 = vpop.f32.mrb[0].mxu0
    %v1004 = vadd.f32 %v939, %v1003
    %v1005 = vpop.f32.mrb[0].mxu0
    %1006 = vmatprep.mubr.bf16.mxu0 %v800
    %1007 = vmatmul.mubr.bf16.gmra.mrb[0].mxu0 %v799
    %v1008 = vpop.f32.mrb[0].mxu0
    %v1009 = vadd.f32 %v944, %v1008
    %v1010 = vpop.f32.mrb[0].mxu0
    %v1011 = vpop.f32.mrb[0].mxu0
    %v1012 = vadd.f32 %v947, %v1011
    %v1013 = vpop.f32.mrb[0].mxu0
    %1014 = vmatprep.mubr.bf16.mxu0 %v816
    %1015 = vmatmul.mubr.bf16.gmra.mrb[0].mxu0 %v815
    %v1016 = vpop.f32.mrb[0].mxu0
    %v1017 = vadd.f32 %v952, %v1016
    %v1018 = vpop.f32.mrb[0].mxu0
    %v1019 = vpop.f32.mrb[0].mxu0
    %v1020 = vadd.f32 %v955, %v1019
    %v1021 = vpop.f32.mrb[0].mxu0
    %1022 = vdwg.mxu0
    %1023 = vmatprep.subr.bf16.mxu0 0
    %1024 = vmatpush1.bf16.msra.mxu0 %v437
    %1025 = vmatprep.subr.bf16.mxu0 0
    %1026 = vmatpush1.bf16.msra.mxu0 %v438
    %1027 = vmatprep.subr.bf16.mxu0 0
    %1028 = vmatpush1.bf16.msra.mxu0 %v439
    %1029 = vmatprep.subr.bf16.mxu0 0
    %1030 = vmatpush1.bf16.msra.mxu0 %v440
    %1031 = vmatprep.subr.bf16.mxu0 0
    %1032 = vmatpush1.bf16.msra.mxu0 %v441
    %1033 = vmatprep.subr.bf16.mxu0 0
    %1034 = vmatpush1.bf16.msra.mxu0 %v442
    %1035 = vmatprep.subr.bf16.mxu0 0
    %1036 = vmatpush1.bf16.msra.mxu0 %v443
    %1037 = vmatprep.subr.bf16.mxu0 0
    %1038 = vmatpush1.bf16.msra.mxu0 %v444
    %1039 = vmatprep.subr.bf16.mxu0 0
    %1040 = vmatpush1.bf16.msra.mxu0 %v445
    %1041 = vmatprep.subr.bf16.mxu0 0
    %1042 = vmatpush1.bf16.msra.mxu0 %v446
    %1043 = vmatprep.subr.bf16.mxu0 0
    %1044 = vmatpush1.bf16.msra.mxu0 %v447
    %1045 = vmatprep.subr.bf16.mxu0 0
    %1046 = vmatpush1.bf16.msra.mxu0 %v448
    %1047 = vmatprep.subr.bf16.mxu0 0
    %1048 = vmatpush1.bf16.msra.mxu0 %v449
    %1049 = vmatprep.subr.bf16.mxu0 0
    %1050 = vmatpush1.bf16.msra.mxu0 %v450
    %1051 = vmatprep.subr.bf16.mxu0 0
    %1052 = vmatpush1.bf16.msra.mxu0 %v451
    %1053 = vmatprep.subr.bf16.mxu0 0
    %1054 = vmatpush1.bf16.msra.mxu0 %v452
    %1055 = vmatprep.mubr.bf16.mxu0 %v770
    %1056 = vmatmul.mubr.bf16.gmra.mrb[0].mxu0 %v769
    %v1057 = vpop.f32.mrb[0].mxu0
    %v1058 = vadd.f32 %v993, %v1057
    %v1059 = vpop.f32.mrb[0].mxu0
    %v1060 = vpop.f32.mrb[0].mxu0
    %v1061 = vadd.f32 %v996, %v1060
    %v1062 = vpop.f32.mrb[0].mxu0
    %1063 = vmatprep.mubr.bf16.mxu0 %v786
    %1064 = vmatmul.mubr.bf16.gmra.mrb[0].mxu0 %v785
    %v1065 = vpop.f32.mrb[0].mxu0
    %v1066 = vadd.f32 %v1001, %v1065
    %v1067 = vpop.f32.mrb[0].mxu0
    %v1068 = vpop.f32.mrb[0].mxu0
    %v1069 = vadd.f32 %v1004, %v1068
    %v1070 = vpop.f32.mrb[0].mxu0
    %1071 = vmatprep.mubr.bf16.mxu0 %v802
    %1072 = vmatmul.mubr.bf16.gmra.mrb[0].mxu0 %v801
    %v1073 = vpop.f32.mrb[0].mxu0
    %v1074 = vadd.f32 %v1009, %v1073
    %v1075 = vpop.f32.mrb[0].mxu0
    %v1076 = vpop.f32.mrb[0].mxu0
    %v1077 = vadd.f32 %v1012, %v1076
    %v1078 = vpop.f32.mrb[0].mxu0
    %1079 = vmatprep.mubr.bf16.mxu0 %v818
    %1080 = vmatmul.mubr.bf16.gmra.mrb[0].mxu0 %v817
    %v1081 = vpop.f32.mrb[0].mxu0
    %v1082 = vadd.f32 %v1017, %v1081
    %v1083 = vpop.f32.mrb[0].mxu0
    %v1084 = vpop.f32.mrb[0].mxu0
    %v1085 = vadd.f32 %v1020, %v1084
    %v1086 = vpop.f32.mrb[0].mxu0
    %1087 = vdwg.mxu0
    %1088 = vmatprep.subr.bf16.mxu0 0
    %1089 = vmatpush1.bf16.msra.mxu0 %v453
    %1090 = vmatprep.subr.bf16.mxu0 0
    %1091 = vmatpush1.bf16.msra.mxu0 %v454
    %1092 = vmatprep.subr.bf16.mxu0 0
    %1093 = vmatpush1.bf16.msra.mxu0 %v455
    %1094 = vmatprep.subr.bf16.mxu0 0
    %1095 = vmatpush1.bf16.msra.mxu0 %v456
    %1096 = vmatprep.subr.bf16.mxu0 0
    %1097 = vmatpush1.bf16.msra.mxu0 %v457
    %1098 = vmatprep.subr.bf16.mxu0 0
    %1099 = vmatpush1.bf16.msra.mxu0 %v458
    %1100 = vmatprep.subr.bf16.mxu0 0
    %1101 = vmatpush1.bf16.msra.mxu0 %v459
    %1102 = vmatprep.subr.bf16.mxu0 0
    %1103 = vmatpush1.bf16.msra.mxu0 %v460
    %1104 = vmatprep.subr.bf16.mxu0 0
    %1105 = vmatpush1.bf16.msra.mxu0 %v461
    %1106 = vmatprep.subr.bf16.mxu0 0
    %1107 = vmatpush1.bf16.msra.mxu0 %v462
    %1108 = vmatprep.subr.bf16.mxu0 0
    %1109 = vmatpush1.bf16.msra.mxu0 %v463
    %1110 = vmatprep.subr.bf16.mxu0 0
    %1111 = vmatpush1.bf16.msra.mxu0 %v464
    %1112 = vmatprep.subr.bf16.mxu0 0
    %1113 = vmatpush1.bf16.msra.mxu0 %v465
    %1114 = vmatprep.subr.bf16.mxu0 0
    %1115 = vmatpush1.bf16.msra.mxu0 %v466
    %1116 = vmatprep.subr.bf16.mxu0 0
    %1117 = vmatpush1.bf16.msra.mxu0 %v467
    %1118 = vmatprep.subr.bf16.mxu0 0
    %1119 = vmatpush1.bf16.msra.mxu0 %v468
    %1120 = vmatprep.mubr.bf16.mxu0 %v772
    %1121 = vmatmul.mubr.bf16.gmra.mrb[0].mxu0 %v771
    %v1122 = vpop.f32.mrb[0].mxu0
    %v1123 = vadd.f32 %v1058, %v1122
    %v1124 = vpop.f32.mrb[0].mxu0
    %v1125 = vpop.f32.mrb[0].mxu0
    %v1126 = vadd.f32 %v1061, %v1125
    %v1127 = vpop.f32.mrb[0].mxu0
    %1128 = vmatprep.mubr.bf16.mxu0 %v788
    %1129 = vmatmul.mubr.bf16.gmra.mrb[0].mxu0 %v787
    %v1130 = vpop.f32.mrb[0].mxu0
    %v1131 = vadd.f32 %v1066, %v1130
    %v1132 = vpop.f32.mrb[0].mxu0
    %v1133 = vpop.f32.mrb[0].mxu0
    %v1134 = vadd.f32 %v1069, %v1133
    %v1135 = vpop.f32.mrb[0].mxu0
    %1136 = vmatprep.mubr.bf16.mxu0 %v804
    %1137 = vmatmul.mubr.bf16.gmra.mrb[0].mxu0 %v803
    %v1138 = vpop.f32.mrb[0].mxu0
    %v1139 = vadd.f32 %v1074, %v1138
    %v1140 = vpop.f32.mrb[0].mxu0
    %v1141 = vpop.f32.mrb[0].mxu0
    %v1142 = vadd.f32 %v1077, %v1141
    %v1143 = vpop.f32.mrb[0].mxu0
    %1144 = vmatprep.mubr.bf16.mxu0 %v820
    %1145 = vmatmul.mubr.bf16.gmra.mrb[0].mxu0 %v819
    %v1146 = vpop.f32.mrb[0].mxu0
    %v1147 = vadd.f32 %v1082, %v1146
    %v1148 = vpop.f32.mrb[0].mxu0
    %v1149 = vpop.f32.mrb[0].mxu0
    %v1150 = vadd.f32 %v1085, %v1149
    %v1151 = vpop.f32.mrb[0].mxu0
    %1152 = vdwg.mxu0
    %1153 = vmatprep.subr.bf16.mxu0 0
    %1154 = vmatpush1.bf16.msra.mxu0 %v469
    %1155 = vmatprep.subr.bf16.mxu0 0
    %1156 = vmatpush1.bf16.msra.mxu0 %v470
    %1157 = vmatprep.subr.bf16.mxu0 0
    %1158 = vmatpush1.bf16.msra.mxu0 %v471
    %1159 = vmatprep.subr.bf16.mxu0 0
    %1160 = vmatpush1.bf16.msra.mxu0 %v472
    %1161 = vmatprep.subr.bf16.mxu0 0
    %1162 = vmatpush1.bf16.msra.mxu0 %v473
    %1163 = vmatprep.subr.bf16.mxu0 0
    %1164 = vmatpush1.bf16.msra.mxu0 %v474
    %1165 = vmatprep.subr.bf16.mxu0 0
    %1166 = vmatpush1.bf16.msra.mxu0 %v475
    %1167 = vmatprep.subr.bf16.mxu0 0
    %1168 = vmatpush1.bf16.msra.mxu0 %v476
    %1169 = vmatprep.subr.bf16.mxu0 0
    %1170 = vmatpush1.bf16.msra.mxu0 %v477
    %1171 = vmatprep.subr.bf16.mxu0 0
    %1172 = vmatpush1.bf16.msra.mxu0 %v478
    %1173 = vmatprep.subr.bf16.mxu0 0
    %1174 = vmatpush1.bf16.msra.mxu0 %v479
    %1175 = vmatprep.subr.bf16.mxu0 0
    %1176 = vmatpush1.bf16.msra.mxu0 %v480
    %1177 = vmatprep.subr.bf16.mxu0 0
    %1178 = vmatpush1.bf16.msra.mxu0 %v481
    %1179 = vmatprep.subr.bf16.mxu0 0
    %1180 = vmatpush1.bf16.msra.mxu0 %v482
    %1181 = vmatprep.subr.bf16.mxu0 0
    %1182 = vmatpush1.bf16.msra.mxu0 %v483
    %1183 = vmatprep.subr.bf16.mxu0 0
    %1184 = vmatpush1.bf16.msra.mxu0 %v484
    %1185 = vmatprep.mubr.bf16.mxu0 %v774
    %1186 = vmatmul.mubr.bf16.gmra.mrb[0].mxu0 %v773
    %v1187 = vpop.f32.mrb[0].mxu0
    %v1188 = vadd.f32 %v1123, %v1187
    %v1189 = vpop.f32.mrb[0].mxu0
    %v1190 = vpop.f32.mrb[0].mxu0
    %v1191 = vadd.f32 %v1126, %v1190
    %v1192 = vpop.f32.mrb[0].mxu0
    %1193 = vmatprep.mubr.bf16.mxu0 %v790
    %1194 = vmatmul.mubr.bf16.gmra.mrb[0].mxu0 %v789
    %v1195 = vpop.f32.mrb[0].mxu0
    %v1196 = vadd.f32 %v1131, %v1195
    %v1197 = vpop.f32.mrb[0].mxu0
    %v1198 = vpop.f32.mrb[0].mxu0
    %v1199 = vadd.f32 %v1134, %v1198
    %v1200 = vpop.f32.mrb[0].mxu0
    %1201 = vmatprep.mubr.bf16.mxu0 %v806
    %1202 = vmatmul.mubr.bf16.gmra.mrb[0].mxu0 %v805
    %v1203 = vpop.f32.mrb[0].mxu0
    %v1204 = vadd.f32 %v1139, %v1203
    %v1205 = vpop.f32.mrb[0].mxu0
    %v1206 = vpop.f32.mrb[0].mxu0
    %v1207 = vadd.f32 %v1142, %v1206
    %v1208 = vpop.f32.mrb[0].mxu0
    %1209 = vmatprep.mubr.bf16.mxu0 %v822
    %1210 = vmatmul.mubr.bf16.gmra.mrb[0].mxu0 %v821
    %v1211 = vpop.f32.mrb[0].mxu0
    %v1212 = vadd.f32 %v1147, %v1211
    %v1213 = vpop.f32.mrb[0].mxu0
    %v1214 = vpop.f32.mrb[0].mxu0
    %v1215 = vadd.f32 %v1150, %v1214
    %v1216 = vpop.f32.mrb[0].mxu0
    %1217 = vdwg.mxu0
    %1218 = vmatprep.subr.bf16.mxu0 0
    %1219 = vmatpush1.bf16.msra.mxu0 %v485
    %1220 = vmatprep.subr.bf16.mxu0 0
    %1221 = vmatpush1.bf16.msra.mxu0 %v486
    %1222 = vmatprep.subr.bf16.mxu0 0
    %1223 = vmatpush1.bf16.msra.mxu0 %v487
    %1224 = vmatprep.subr.bf16.mxu0 0
    %1225 = vmatpush1.bf16.msra.mxu0 %v488
    %1226 = vmatprep.subr.bf16.mxu0 0
    %1227 = vmatpush1.bf16.msra.mxu0 %v489
    %1228 = vmatprep.subr.bf16.mxu0 0
    %1229 = vmatpush1.bf16.msra.mxu0 %v490
    %1230 = vmatprep.subr.bf16.mxu0 0
    %1231 = vmatpush1.bf16.msra.mxu0 %v491
    %1232 = vmatprep.subr.bf16.mxu0 0
    %1233 = vmatpush1.bf16.msra.mxu0 %v492
    %1234 = vmatprep.subr.bf16.mxu0 0
    %1235 = vmatpush1.bf16.msra.mxu0 %v493
    %1236 = vmatprep.subr.bf16.mxu0 0
    %1237 = vmatpush1.bf16.msra.mxu0 %v494
    %1238 = vmatprep.subr.bf16.mxu0 0
    %1239 = vmatpush1.bf16.msra.mxu0 %v495
    %1240 = vmatprep.subr.bf16.mxu0 0
    %1241 = vmatpush1.bf16.msra.mxu0 %v496
    %1242 = vmatprep.subr.bf16.mxu0 0
    %1243 = vmatpush1.bf16.msra.mxu0 %v497
    %1244 = vmatprep.subr.bf16.mxu0 0
    %1245 = vmatpush1.bf16.msra.mxu0 %v498
    %1246 = vmatprep.subr.bf16.mxu0 0
    %1247 = vmatpush1.bf16.msra.mxu0 %v499
    %1248 = vmatprep.subr.bf16.mxu0 0
    %1249 = vmatpush1.bf16.msra.mxu0 %v500
    %1250 = vmatprep.mubr.bf16.mxu0 %v776
    %1251 = vmatmul.mubr.bf16.gmra.mrb[0].mxu0 %v775
    %v1252 = vpop.f32.mrb[0].mxu0
    %v1253 = vadd.f32 %v1188, %v1252
    %v1254 = vpop.f32.mrb[0].mxu0
    %v1255 = vpop.f32.mrb[0].mxu0
    %v1256 = vadd.f32 %v1191, %v1255
    %v1257 = vpop.f32.mrb[0].mxu0
    %1258 = vmatprep.mubr.bf16.mxu0 %v792
    %1259 = vmatmul.mubr.bf16.gmra.mrb[0].mxu0 %v791
    %v1260 = vpop.f32.mrb[0].mxu0
    %v1261 = vadd.f32 %v1196, %v1260
    %v1262 = vpop.f32.mrb[0].mxu0
    %v1263 = vpop.f32.mrb[0].mxu0
    %v1264 = vadd.f32 %v1199, %v1263
    %v1265 = vpop.f32.mrb[0].mxu0
    %1266 = vmatprep.mubr.bf16.mxu0 %v808
    %1267 = vmatmul.mubr.bf16.gmra.mrb[0].mxu0 %v807
    %v1268 = vpop.f32.mrb[0].mxu0
    %v1269 = vadd.f32 %v1204, %v1268
    %v1270 = vpop.f32.mrb[0].mxu0
    %v1271 = vpop.f32.mrb[0].mxu0
    %v1272 = vadd.f32 %v1207, %v1271
    %v1273 = vpop.f32.mrb[0].mxu0
    %1274 = vmatprep.mubr.bf16.mxu0 %v824
    %1275 = vmatmul.mubr.bf16.gmra.mrb[0].mxu0 %v823
    %v1276 = vpop.f32.mrb[0].mxu0
    %v1277 = vadd.f32 %v1212, %v1276
    %v1278 = vpop.f32.mrb[0].mxu0
    %v1279 = vpop.f32.mrb[0].mxu0
    %v1280 = vadd.f32 %v1215, %v1279
    %v1281 = vpop.f32.mrb[0].mxu0
    %1282 = vdwg.mxu0
    %1283 = vmatprep.subr.bf16.mxu0 0
    %1284 = vmatpush1.bf16.msra.mxu0 %v501
    %1285 = vmatprep.subr.bf16.mxu0 0
    %1286 = vmatpush1.bf16.msra.mxu0 %v502
    %1287 = vmatprep.subr.bf16.mxu0 0
    %1288 = vmatpush1.bf16.msra.mxu0 %v503
    %1289 = vmatprep.subr.bf16.mxu0 0
    %1290 = vmatpush1.bf16.msra.mxu0 %v504
    %1291 = vmatprep.subr.bf16.mxu0 0
    %1292 = vmatpush1.bf16.msra.mxu0 %v505
    %1293 = vmatprep.subr.bf16.mxu0 0
    %1294 = vmatpush1.bf16.msra.mxu0 %v506
    %1295 = vmatprep.subr.bf16.mxu0 0
    %1296 = vmatpush1.bf16.msra.mxu0 %v507
    %1297 = vmatprep.subr.bf16.mxu0 0
    %1298 = vmatpush1.bf16.msra.mxu0 %v508
    %1299 = vmatprep.subr.bf16.mxu0 0
    %1300 = vmatpush1.bf16.msra.mxu0 %v509
    %1301 = vmatprep.subr.bf16.mxu0 0
    %1302 = vmatpush1.bf16.msra.mxu0 %v510
    %1303 = vmatprep.subr.bf16.mxu0 0
    %1304 = vmatpush1.bf16.msra.mxu0 %v511
    %1305 = vmatprep.subr.bf16.mxu0 0
    %1306 = vmatpush1.bf16.msra.mxu0 %v512
    %1307 = vmatprep.subr.bf16.mxu0 0
    %1308 = vmatpush1.bf16.msra.mxu0 %v513
    %1309 = vmatprep.subr.bf16.mxu0 0
    %1310 = vmatpush1.bf16.msra.mxu0 %v514
    %1311 = vmatprep.subr.bf16.mxu0 0
    %1312 = vmatpush1.bf16.msra.mxu0 %v515
    %1313 = vmatprep.subr.bf16.mxu0 0
    %1314 = vmatpush1.bf16.msra.mxu0 %v516
    %1315 = vmatprep.mubr.bf16.mxu0 %v778
    %1316 = vmatmul.mubr.bf16.gmra.mrb[0].mxu0 %v777
    %v1317 = vpop.f32.mrb[0].mxu0
    %v1318 = vadd.f32 %v1253, %v1317
    %v1319 = vpop.f32.mrb[0].mxu0
    %v1320 = vpop.f32.mrb[0].mxu0
    %v1321 = vadd.f32 %v1256, %v1320
    %v1322 = vpop.f32.mrb[0].mxu0
    %1323 = vmatprep.mubr.bf16.mxu0 %v794
    %1324 = vmatmul.mubr.bf16.gmra.mrb[0].mxu0 %v793
    %v1325 = vpop.f32.mrb[0].mxu0
    %v1326 = vadd.f32 %v1261, %v1325
    %v1327 = vpop.f32.mrb[0].mxu0
    %v1328 = vpop.f32.mrb[0].mxu0
    %v1329 = vadd.f32 %v1264, %v1328
    %v1330 = vpop.f32.mrb[0].mxu0
    %1331 = vmatprep.mubr.bf16.mxu0 %v810
    %1332 = vmatmul.mubr.bf16.gmra.mrb[0].mxu0 %v809
    %v1333 = vpop.f32.mrb[0].mxu0
    %v1334 = vadd.f32 %v1269, %v1333
    %v1335 = vpop.f32.mrb[0].mxu0
    %v1336 = vpop.f32.mrb[0].mxu0
    %v1337 = vadd.f32 %v1272, %v1336
    %v1338 = vpop.f32.mrb[0].mxu0
    %1339 = vmatprep.mubr.bf16.mxu0 %v826
    %1340 = vmatmul.mubr.bf16.gmra.mrb[0].mxu0 %v825
    %v1341 = vpop.f32.mrb[0].mxu0
    %v1342 = vadd.f32 %v1277, %v1341
    %v1343 = vpop.f32.mrb[0].mxu0
    %v1344 = vpop.f32.mrb[0].mxu0
    %v1345 = vadd.f32 %v1280, %v1344
    %v1346 = vpop.f32.mrb[0].mxu0
    %1347 = vdwg.mxu0
    %1348 = vmatprep.subr.bf16.mxu0 0
    %1349 = vmatpush1.bf16.msra.mxu0 %v517
    %1350 = vmatprep.subr.bf16.mxu0 0
    %1351 = vmatpush1.bf16.msra.mxu0 %v518
    %1352 = vmatprep.subr.bf16.mxu0 0
    %1353 = vmatpush1.bf16.msra.mxu0 %v519
    %1354 = vmatprep.subr.bf16.mxu0 0
    %1355 = vmatpush1.bf16.msra.mxu0 %v520
    %1356 = vmatprep.subr.bf16.mxu0 0
    %1357 = vmatpush1.bf16.msra.mxu0 %v521
    %1358 = vmatprep.subr.bf16.mxu0 0
    %1359 = vmatpush1.bf16.msra.mxu0 %v522
    %1360 = vmatprep.subr.bf16.mxu0 0
    %1361 = vmatpush1.bf16.msra.mxu0 %v523
    %1362 = vmatprep.subr.bf16.mxu0 0
    %1363 = vmatpush1.bf16.msra.mxu0 %v524
    %1364 = vmatprep.subr.bf16.mxu0 0
    %1365 = vmatpush1.bf16.msra.mxu0 %v525
    %1366 = vmatprep.subr.bf16.mxu0 0
    %1367 = vmatpush1.bf16.msra.mxu0 %v526
    %1368 = vmatprep.subr.bf16.mxu0 0
    %1369 = vmatpush1.bf16.msra.mxu0 %v527
    %1370 = vmatprep.subr.bf16.mxu0 0
    %1371 = vmatpush1.bf16.msra.mxu0 %v528
    %1372 = vmatprep.subr.bf16.mxu0 0
    %1373 = vmatpush1.bf16.msra.mxu0 %v529
    %1374 = vmatprep.subr.bf16.mxu0 0
    %1375 = vmatpush1.bf16.msra.mxu0 %v530
    %1376 = vmatprep.subr.bf16.mxu0 0
    %1377 = vmatpush1.bf16.msra.mxu0 %v531
    %1378 = vmatprep.subr.bf16.mxu0 0
    %1379 = vmatpush1.bf16.msra.mxu0 %v532
    %1380 = vmatprep.mubr.bf16.mxu0 %v780
    %1381 = vmatmul.mubr.bf16.gmra.mrb[0].mxu0 %v779
    %v1382 = vpop.f32.mrb[0].mxu0
    %v1383 = vadd.f32 %v1318, %v1382
    %v1384 = vpop.f32.mrb[0].mxu0
    %v1385 = vpop.f32.mrb[0].mxu0
    %v1386 = vadd.f32 %v1321, %v1385
    %v1387 = vpop.f32.mrb[0].mxu0
    %1388 = vmatprep.mubr.bf16.mxu0 %v796
    %1389 = vmatmul.mubr.bf16.gmra.mrb[0].mxu0 %v795
    %v1390 = vpop.f32.mrb[0].mxu0
    %v1391 = vadd.f32 %v1326, %v1390
    %v1392 = vpop.f32.mrb[0].mxu0
    %v1393 = vpop.f32.mrb[0].mxu0
    %v1394 = vadd.f32 %v1329, %v1393
    %v1395 = vpop.f32.mrb[0].mxu0
    %1396 = vmatprep.mubr.bf16.mxu0 %v812
    %1397 = vmatmul.mubr.bf16.gmra.mrb[0].mxu0 %v811
    %v1398 = vpop.f32.mrb[0].mxu0
    %v1399 = vadd.f32 %v1334, %v1398
    %v1400 = vpop.f32.mrb[0].mxu0
    %v1401 = vpop.f32.mrb[0].mxu0
    %v1402 = vadd.f32 %v1337, %v1401
    %v1403 = vpop.f32.mrb[0].mxu0
    %1404 = vmatprep.mubr.bf16.mxu0 %v828
    %1405 = vmatmul.mubr.bf16.gmra.mrb[0].mxu0 %v827
    %v1406 = vpop.f32.mrb[0].mxu0
    %v1407 = vadd.f32 %v1342, %v1406
    %v1408 = vpop.f32.mrb[0].mxu0
    %v1409 = vpop.f32.mrb[0].mxu0
    %v1410 = vadd.f32 %v1345, %v1409
    %v1411 = vpop.f32.mrb[0].mxu0
    %1412 = vdwg.mxu0
    %v1413 = vmax.f32 %v1383, 0.0
    %v1414 = vmax.f32 %v1386, 0.0
    %v1415 = vmax.f32 %v1391, 0.0
    %v1416 = vmax.f32 %v1394, 0.0
    %v1417 = vmax.f32 %v1399, 0.0
    %v1418 = vmax.f32 %v1402, 0.0
    %v1419 = vmax.f32 %v1407, 0.0
    %v1420 = vmax.f32 %v1410, 0.0
    %1421 = vset.pattern.permute.xlu0 3
    %1422 = vperm.xlu0 %1421, %v57
    %v1423 = vpop.permute.xlu0 %1422
    %1425 = vset.pattern.permute.xlu0 3
    %1426 = vperm.xlu0 %1425, %v58
    %v1427 = vpop.permute.xlu0 %1426
    %1429 = vrot.lane.b32.xlu0 %v57, 64
    %v1430 = vpop.permute.xlu0 %1429
    %1431 = vrot.lane.b32.xlu0 %v58, 64
    %v1432 = vpop.permute.xlu0 %1431
    %vm1433 = vcmask 523264
    %v1434 = vsel %vm1433, %v1430, 0
    %v1436 = vsel %vm1433, %v1432, 0
    %1438 = vmatprep.subr.mxu0 0.0
    %1439 = vmatpush1.msra.mxu0 %v1413
    %1440 = vmatprep.subr.mxu0 0.0
    %1441 = vmatpush1.msra.mxu0 %v1414
    %1442 = vmatprep.subr.mxu0 0.0
    %1443 = vmatpush1.msra.mxu0 %v1415
    %1444 = vmatprep.subr.mxu0 0.0
    %1445 = vmatpush1.msra.mxu0 %v1416
    %1446 = vmatprep.subr.mxu0 0.0
    %1447 = vmatpush1.msra.mxu0 %v1417
    %1448 = vmatprep.subr.mxu0 0.0
    %1449 = vmatpush1.msra.mxu0 %v1418
    %1450 = vmatprep.subr.mxu0 0.0
    %1451 = vmatpush1.msra.mxu0 %v1419
    %1452 = vmatprep.subr.mxu0 0.0
    %1453 = vmatpush1.msra.mxu0 %v1420
    %1454 = vmatprep.subr.mxu0 0.0
    %1455 = vmatpush1.msra.mxu0 0.0
    %1456 = vmatprep.subr.mxu0 0.0
    %1457 = vmatpush1.msra.mxu0 0.0
    %1458 = vmatprep.subr.mxu0 0.0
    %1459 = vmatpush1.msra.mxu0 0.0
    %1460 = vmatprep.subr.mxu0 0.0
    %1461 = vmatpush1.msra.mxu0 0.0
    %1462 = vmatprep.subr.mxu0 0.0
    %1463 = vmatpush1.msra.mxu0 0.0
    %1464 = vmatprep.subr.mxu0 0.0
    %1465 = vmatpush1.msra.mxu0 0.0
    %1466 = vmatprep.subr.mxu0 0.0
    %1467 = vmatpush1.msra.mxu0 0.0
    %1468 = vmatprep.subr.mxu0 0.0
    %1469 = vmatpush1.msra.mxu0 0.0
    %1470 = vmatprep.subr.mxu0 0.0
    %1471 = vmatpush1.msra.mxu0 0.0
    %1472 = vmatprep.subr.mxu0 0.0
    %1473 = vmatpush1.msra.mxu0 0.0
    %1474 = vmatprep.subr.mxu0 0.0
    %1475 = vmatpush1.msra.mxu0 0.0
    %1476 = vmatprep.subr.mxu0 0.0
    %1477 = vmatpush1.msra.mxu0 0.0
    %1478 = vmatprep.subr.mxu0 0.0
    %1479 = vmatpush1.msra.mxu0 0.0
    %1480 = vmatprep.subr.mxu0 0.0
    %1481 = vmatpush1.msra.mxu0 0.0
    %1482 = vmatprep.subr.mxu0 0.0
    %1483 = vmatpush1.msra.mxu0 0.0
    %1484 = vmatprep.subr.mxu0 0.0
    %1485 = vmatpush1.msra.mxu0 0.0
    %1486 = vmatprep.subr.mxu0 0.0
    %1487 = vmatpush1.msra.mxu0 0.0
    %1488 = vmatprep.subr.mxu0 0.0
    %1489 = vmatpush1.msra.mxu0 0.0
    %1490 = vmatprep.subr.mxu0 0.0
    %1491 = vmatpush1.msra.mxu0 0.0
    %1492 = vmatprep.subr.mxu0 0.0
    %1493 = vmatpush1.msra.mxu0 0.0
    %1494 = vmatprep.subr.mxu0 0.0
    %1495 = vmatpush1.msra.mxu0 0.0
    %1496 = vmatprep.subr.mxu0 0.0
    %1497 = vmatpush1.msra.mxu0 0.0
    %1498 = vmatprep.subr.mxu0 0.0
    %1499 = vmatpush1.msra.mxu0 0.0
    %1500 = vmatprep.subr.mxu0 0.0
    %1501 = vmatpush1.msra.mxu0 0.0
    %1502 = vmatprep.mubr.f32.mxu0 0.0
    %1503 = vmatmul.mubr.f32.gmra.mrb[0].mxu0 %v1434
    %v1504 = vpop.f32.mrb[0].mxu0
    %v1505 = vadd.f32 %v1423, %v1504
    %v1506 = vpop.f32.mrb[0].mxu0
    %1507 = vmatprep.mubr.f32.mxu0 0.0
    %1508 = vmatmul.mubr.f32.gmra.mrb[0].mxu0 %v1436
    %v1509 = vpop.f32.mrb[0].mxu0
    %v1510 = vadd.f32 %v1427, %v1509
    %v1511 = vpop.f32.mrb[0].mxu0
    %1512 = vdwg.mxu0
    %v1513 = vmax.f32 %v1505, 0.0
    %v1514 = vmax.f32 %v1510, 0.0
    %1515 = vset.pattern.permute.xlu0 4
    %1516 = vperm.xlu0 %1515, %v57
    %v1517 = vpop.permute.xlu0 %1516
    %1519 = vrot.lane.b32.xlu0 %v59, 64
    %v1520 = vpop.permute.xlu0 %1519
    %vm1521 = vcmask 130048
    %v1522 = vsel %vm1521, %v1520, 0
    %1524 = vmatprep.subr.mxu0 0.0
    %1525 = vmatpush1.msra.mxu0 %v1513
    %1526 = vmatprep.subr.mxu0 0.0
    %1527 = vmatpush1.msra.mxu0 %v1514
    %1528 = vmatprep.subr.mxu0 0.0
    %1529 = vmatpush1.msra.mxu0 0.0
    %1530 = vmatprep.subr.mxu0 0.0
    %1531 = vmatpush1.msra.mxu0 0.0
    %1532 = vmatprep.subr.mxu0 0.0
    %1533 = vmatpush1.msra.mxu0 0.0
    %1534 = vmatprep.subr.mxu0 0.0
    %1535 = vmatpush1.msra.mxu0 0.0
    %1536 = vmatprep.subr.mxu0 0.0
    %1537 = vmatpush1.msra.mxu0 0.0
    %1538 = vmatprep.subr.mxu0 0.0
    %1539 = vmatpush1.msra.mxu0 0.0
    %1540 = vmatprep.subr.mxu0 0.0
    %1541 = vmatpush1.msra.mxu0 0.0
    %1542 = vmatprep.subr.mxu0 0.0
    %1543 = vmatpush1.msra.mxu0 0.0
    %1544 = vmatprep.subr.mxu0 0.0
    %1545 = vmatpush1.msra.mxu0 0.0
    %1546 = vmatprep.subr.mxu0 0.0
    %1547 = vmatpush1.msra.mxu0 0.0
    %1548 = vmatprep.subr.mxu0 0.0
    %1549 = vmatpush1.msra.mxu0 0.0
    %1550 = vmatprep.subr.mxu0 0.0
    %1551 = vmatpush1.msra.mxu0 0.0
    %1552 = vmatprep.subr.mxu0 0.0
    %1553 = vmatpush1.msra.mxu0 0.0
    %1554 = vmatprep.subr.mxu0 0.0
    %1555 = vmatpush1.msra.mxu0 0.0
    %1556 = vmatprep.subr.mxu0 0.0
    %1557 = vmatpush1.msra.mxu0 0.0
    %1558 = vmatprep.subr.mxu0 0.0
    %1559 = vmatpush1.msra.mxu0 0.0
    %1560 = vmatprep.subr.mxu0 0.0
    %1561 = vmatpush1.msra.mxu0 0.0
    %1562 = vmatprep.subr.mxu0 0.0
    %1563 = vmatpush1.msra.mxu0 0.0
    %1564 = vmatprep.subr.mxu0 0.0
    %1565 = vmatpush1.msra.mxu0 0.0
    %1566 = vmatprep.subr.mxu0 0.0
    %1567 = vmatpush1.msra.mxu0 0.0
    %1568 = vmatprep.subr.mxu0 0.0
    %1569 = vmatpush1.msra.mxu0 0.0
    %1570 = vmatprep.subr.mxu0 0.0
    %1571 = vmatpush1.msra.mxu0 0.0
    %1572 = vmatprep.subr.mxu0 0.0
    %1573 = vmatpush1.msra.mxu0 0.0
    %1574 = vmatprep.subr.mxu0 0.0
    %1575 = vmatpush1.msra.mxu0 0.0
    %1576 = vmatprep.subr.mxu0 0.0
    %1577 = vmatpush1.msra.mxu0 0.0
    %1578 = vmatprep.subr.mxu0 0.0
    %1579 = vmatpush1.msra.mxu0 0.0
    %1580 = vmatprep.subr.mxu0 0.0
    %1581 = vmatpush1.msra.mxu0 0.0
    %1582 = vmatprep.subr.mxu0 0.0
    %1583 = vmatpush1.msra.mxu0 0.0
    %1584 = vmatprep.subr.mxu0 0.0
    %1585 = vmatpush1.msra.mxu0 0.0
    %1586 = vmatprep.subr.mxu0 0.0
    %1587 = vmatpush1.msra.mxu0 0.0
    %1588 = vmatprep.mubr.f32.mxu0 0.0
    %1589 = vmatmul.mubr.f32.gmra.mrb[0].mxu0 %v1522
    %v1590 = vpop.f32.mrb[0].mxu0
    %v1591 = vadd.f32 %v1517, %v1590
    %v1592 = vpop.f32.mrb[0].mxu0
    %1593 = vdwg.mxu0
    %v1594 = vmax.f32 %v1591, 0.0
    %1596 = vset.pattern.permute.xlu0 5
    %1597 = vperm.xlu0 %1596, %v73
    %v1598 = vpop.permute.xlu0 %1597
    %1601 = vrot.lane.b32.xlu0 %v74, 64
    %v1602 = vpop.permute.xlu0 %1601
    %vm1603 = vcmask 64512
    %v1604 = vsel %vm1603, %v1602, 0
    %1606 = vmatprep.subr.mxu0 0.0
    %1607 = vmatpush1.msra.mxu0 %v1594
    %1608 = vmatprep.subr.mxu0 0.0
    %1609 = vmatpush1.msra.mxu0 0.0
    %1610 = vmatprep.subr.mxu0 0.0
    %1611 = vmatpush1.msra.mxu0 0.0
    %1612 = vmatprep.subr.mxu0 0.0
    %1613 = vmatpush1.msra.mxu0 0.0
    %1614 = vmatprep.subr.mxu0 0.0
    %1615 = vmatpush1.msra.mxu0 0.0
    %1616 = vmatprep.subr.mxu0 0.0
    %1617 = vmatpush1.msra.mxu0 0.0
    %1618 = vmatprep.subr.mxu0 0.0
    %1619 = vmatpush1.msra.mxu0 0.0
    %1620 = vmatprep.subr.mxu0 0.0
    %1621 = vmatpush1.msra.mxu0 0.0
    %1622 = vmatprep.subr.mxu0 0.0
    %1623 = vmatpush1.msra.mxu0 0.0
    %1624 = vmatprep.subr.mxu0 0.0
    %1625 = vmatpush1.msra.mxu0 0.0
    %1626 = vmatprep.subr.mxu0 0.0
    %1627 = vmatpush1.msra.mxu0 0.0
    %1628 = vmatprep.subr.mxu0 0.0
    %1629 = vmatpush1.msra.mxu0 0.0
    %1630 = vmatprep.subr.mxu0 0.0
    %1631 = vmatpush1.msra.mxu0 0.0
    %1632 = vmatprep.subr.mxu0 0.0
    %1633 = vmatpush1.msra.mxu0 0.0
    %1634 = vmatprep.subr.mxu0 0.0
    %1635 = vmatpush1.msra.mxu0 0.0
    %1636 = vmatprep.subr.mxu0 0.0
    %1637 = vmatpush1.msra.mxu0 0.0
    %1638 = vmatprep.subr.mxu0 0.0
    %1639 = vmatpush1.msra.mxu0 0.0
    %1640 = vmatprep.subr.mxu0 0.0
    %1641 = vmatpush1.msra.mxu0 0.0
    %1642 = vmatprep.subr.mxu0 0.0
    %1643 = vmatpush1.msra.mxu0 0.0
    %1644 = vmatprep.subr.mxu0 0.0
    %1645 = vmatpush1.msra.mxu0 0.0
    %1646 = vmatprep.subr.mxu0 0.0
    %1647 = vmatpush1.msra.mxu0 0.0
    %1648 = vmatprep.subr.mxu0 0.0
    %1649 = vmatpush1.msra.mxu0 0.0
    %1650 = vmatprep.subr.mxu0 0.0
    %1651 = vmatpush1.msra.mxu0 0.0
    %1652 = vmatprep.subr.mxu0 0.0
    %1653 = vmatpush1.msra.mxu0 0.0
    %1654 = vmatprep.subr.mxu0 0.0
    %1655 = vmatpush1.msra.mxu0 0.0
    %1656 = vmatprep.subr.mxu0 0.0
    %1657 = vmatpush1.msra.mxu0 0.0
    %1658 = vmatprep.subr.mxu0 0.0
    %1659 = vmatpush1.msra.mxu0 0.0
    %1660 = vmatprep.subr.mxu0 0.0
    %1661 = vmatpush1.msra.mxu0 0.0
    %1662 = vmatprep.subr.mxu0 0.0
    %1663 = vmatpush1.msra.mxu0 0.0
    %1664 = vmatprep.subr.mxu0 0.0
    %1665 = vmatpush1.msra.mxu0 0.0
    %1666 = vmatprep.subr.mxu0 0.0
    %1667 = vmatpush1.msra.mxu0 0.0
    %1668 = vmatprep.subr.mxu0 0.0
    %1669 = vmatpush1.msra.mxu0 0.0
    %1670 = vmatprep.mubr.f32.mxu0 0.0
    %1671 = vmatmul.mubr.f32.gmra.mrb[0].mxu0 %v1604
    %v1672 = vpop.f32.mrb[0].mxu0
    %v1673 = vadd.f32 %v1598, %v1672
    %v1674 = vpop.f32.mrb[0].mxu0
    %1675 = vdwg.mxu0
    %v1676 = vxor.u32 %v1673, 2147483648
    %v1677 = vmul.f32 %v1676, 1.442695
    %v1678 = vpow.pop %v1677
    %v1679 = vadd.f32 %v1678, 1.0
    %v1680 = vrcp.pop %v1679
    %v1681 = vmul.f32 1.0, %v1680
    %vm1682 = vcmp.eq.s32.totalorder %v148, 0
    %v1683 = vsel %vm1682, 1, 0
    %v1684 = vcvt.s32.f32 %v1683
    %vm1685 = vcmask 516096
    %v1686 = vsel %vm1685, %v1681, 0.0
    %1687 = vadd.xlane.f32.xlu0 %v1686
    %v1688 = vpop.xlane.xlu0 %1687
    %v1689 = vmul.f32 %v1688, %v1684
    %v1690 = vadd.f32 %v1689, 0.0
    %v1691 = vlaneseq
    %v1692 = vshrl.u32 %v1691, 7
    %v1693 = vsub.s32 0, %v1692
    %v1694 = vrot.slane %v1681, %v1693
    %v1695 = vmul.f32 %v139, %v1694
    %v1696 = vmul.f32 %v140, %v1694
    %v1697 = vmul.f32 %v141, %v1694
    %v1698 = vmul.f32 %v142, %v1694
    %v1699 = vmul.f32 %v143, %v1694
    %v1700 = vmul.f32 %v144, %v1694
    %v1701 = vmul.f32 %v145, %v1694
    %v1702 = vmul.f32 %v146, %v1694
    %v1703 = vsel %vm1433, %v1695, 0.0
    %1704 = vadd.xlane.f32.xlu0 %v1703
    %v1705 = vpop.xlane.xlu0 %1704
    %v1706 = vsel %vm1433, %v1696, 0.0
    %1707 = vadd.xlane.f32.xlu0 %v1706
    %v1708 = vpop.xlane.xlu0 %1707
    %v1709 = vsel %vm1433, %v1697, 0.0
    %1710 = vadd.xlane.f32.xlu0 %v1709
    %v1711 = vpop.xlane.xlu0 %1710
    %v1712 = vsel %vm1433, %v1698, 0.0
    %1713 = vadd.xlane.f32.xlu0 %v1712
    %v1714 = vpop.xlane.xlu0 %1713
    %v1715 = vsel %vm1433, %v1699, 0.0
    %1716 = vadd.xlane.f32.xlu0 %v1715
    %v1717 = vpop.xlane.xlu0 %1716
    %v1718 = vsel %vm1433, %v1700, 0.0
    %1719 = vadd.xlane.f32.xlu0 %v1718
    %v1720 = vpop.xlane.xlu0 %1719
    %v1721 = vsel %vm1433, %v1701, 0.0
    %1722 = vadd.xlane.f32.xlu0 %v1721
    %v1723 = vpop.xlane.xlu0 %1722
    %v1724 = vsel %vm1433, %v1702, 0.0
    %1725 = vadd.xlane.f32.xlu0 %v1724
    %v1726 = vpop.xlane.xlu0 %1725
    %v1727 = vmul.f32 %v1705, %v1684
    %v1728 = vmul.f32 %v1708, %v1684
    %v1729 = vmul.f32 %v1711, %v1684
    %v1730 = vmul.f32 %v1714, %v1684
    %v1731 = vmul.f32 %v1717, %v1684
    %v1732 = vmul.f32 %v1720, %v1684
    %v1733 = vmul.f32 %v1723, %v1684
    %v1734 = vmul.f32 %v1726, %v1684
    %v1735 = vpack.c.bf16 %v1728, %v1727
    %v1736 = vpack.c.bf16 %v1730, %v1729
    %v1737 = vpack.c.bf16 %v1732, %v1731
    %v1738 = vpack.c.bf16 %v1734, %v1733
    %s1739 = scalar_lea.vmem %s0, 2048
    %v1740 = vld [vmem:[%s1739] sm:$0xff]
    %v1741 = vld [vmem:[%s1739 + $0x8] sm:$0xff]
    %v1742 = vld [vmem:[%s1739 + $0x10] sm:$0xff]
    %v1743 = vld [vmem:[%s1739 + $0x18] sm:$0xff]
    %v1744 = vld [vmem:[%s1739 + $0x20] sm:$0xff]
    %v1745 = vld [vmem:[%s1739 + $0x28] sm:$0xff]
    %v1746 = vld [vmem:[%s1739 + $0x30] sm:$0xff]
    %v1747 = vld [vmem:[%s1739 + $0x38] sm:$0xff]
    %v1748 = vld [vmem:[%s1739 + $0x40] sm:$0xff]
    %v1749 = vld [vmem:[%s1739 + $0x48] sm:$0xff]
    %v1750 = vld [vmem:[%s1739 + $0x50] sm:$0xff]
    %v1751 = vld [vmem:[%s1739 + $0x58] sm:$0xff]
    %v1752 = vld [vmem:[%s1739 + $0x60] sm:$0xff]
    %v1753 = vld [vmem:[%s1739 + $0x68] sm:$0xff]
    %v1754 = vld [vmem:[%s1739 + $0x70] sm:$0xff]
    %v1755 = vld [vmem:[%s1739 + $0x78] sm:$0xff]
    %v1756 = vld [vmem:[%s1739 + $0x80] sm:$0xff]
    %v1757 = vld [vmem:[%s1739 + $0x88] sm:$0xff]
    %v1758 = vld [vmem:[%s1739 + $0x90] sm:$0xff]
    %v1759 = vld [vmem:[%s1739 + $0x98] sm:$0xff]
    %v1760 = vld [vmem:[%s1739 + $0xa0] sm:$0xff]
    %v1761 = vld [vmem:[%s1739 + $0xa8] sm:$0xff]
    %v1762 = vld [vmem:[%s1739 + $0xb0] sm:$0xff]
    %v1763 = vld [vmem:[%s1739 + $0xb8] sm:$0xff]
    %v1764 = vld [vmem:[%s1739 + $0xc0] sm:$0xff]
    %v1765 = vld [vmem:[%s1739 + $0xc8] sm:$0xff]
    %v1766 = vld [vmem:[%s1739 + $0xd0] sm:$0xff]
    %v1767 = vld [vmem:[%s1739 + $0xd8] sm:$0xff]
    %v1768 = vld [vmem:[%s1739 + $0xe0] sm:$0xff]
    %v1769 = vld [vmem:[%s1739 + $0xe8] sm:$0xff]
    %v1770 = vld [vmem:[%s1739 + $0xf0] sm:$0xff]
    %v1771 = vld [vmem:[%s1739 + $0xf8] sm:$0xff]
    %v1772 = vld [vmem:[%s1739 + $0x100] sm:$0xff]
    %v1773 = vld [vmem:[%s1739 + $0x108] sm:$0xff]
    %v1774 = vld [vmem:[%s1739 + $0x110] sm:$0xff]
    %v1775 = vld [vmem:[%s1739 + $0x118] sm:$0xff]
    %v1776 = vld [vmem:[%s1739 + $0x120] sm:$0xff]
    %v1777 = vld [vmem:[%s1739 + $0x128] sm:$0xff]
    %v1778 = vld [vmem:[%s1739 + $0x130] sm:$0xff]
    %v1779 = vld [vmem:[%s1739 + $0x138] sm:$0xff]
    %v1780 = vld [vmem:[%s1739 + $0x140] sm:$0xff]
    %v1781 = vld [vmem:[%s1739 + $0x148] sm:$0xff]
    %v1782 = vld [vmem:[%s1739 + $0x150] sm:$0xff]
    %v1783 = vld [vmem:[%s1739 + $0x158] sm:$0xff]
    %v1784 = vld [vmem:[%s1739 + $0x160] sm:$0xff]
    %v1785 = vld [vmem:[%s1739 + $0x168] sm:$0xff]
    %v1786 = vld [vmem:[%s1739 + $0x170] sm:$0xff]
    %v1787 = vld [vmem:[%s1739 + $0x178] sm:$0xff]
    %v1788 = vld [vmem:[%s1739 + $0x180] sm:$0xff]
    %v1789 = vld [vmem:[%s1739 + $0x188] sm:$0xff]
    %v1790 = vld [vmem:[%s1739 + $0x190] sm:$0xff]
    %v1791 = vld [vmem:[%s1739 + $0x198] sm:$0xff]
    %v1792 = vld [vmem:[%s1739 + $0x1a0] sm:$0xff]
    %v1793 = vld [vmem:[%s1739 + $0x1a8] sm:$0xff]
    %v1794 = vld [vmem:[%s1739 + $0x1b0] sm:$0xff]
    %v1795 = vld [vmem:[%s1739 + $0x1b8] sm:$0xff]
    %v1796 = vld [vmem:[%s1739 + $0x1c0] sm:$0xff]
    %v1797 = vld [vmem:[%s1739 + $0x1c8] sm:$0xff]
    %v1798 = vld [vmem:[%s1739 + $0x1d0] sm:$0xff]
    %v1799 = vld [vmem:[%s1739 + $0x1d8] sm:$0xff]
    %v1800 = vld [vmem:[%s1739 + $0x1e0] sm:$0xff]
    %v1801 = vld [vmem:[%s1739 + $0x1e8] sm:$0xff]
    %v1802 = vld [vmem:[%s1739 + $0x1f0] sm:$0xff]
    %v1803 = vld [vmem:[%s1739 + $0x1f8] sm:$0xff]
    %v1804 = vld [vmem:[%s1739 + $0x200] sm:$0xff]
    %v1805 = vld [vmem:[%s1739 + $0x208] sm:$0xff]
    %v1806 = vld [vmem:[%s1739 + $0x210] sm:$0xff]
    %v1807 = vld [vmem:[%s1739 + $0x218] sm:$0xff]
    %v1808 = vld [vmem:[%s1739 + $0x220] sm:$0xff]
    %v1809 = vld [vmem:[%s1739 + $0x228] sm:$0xff]
    %v1810 = vld [vmem:[%s1739 + $0x230] sm:$0xff]
    %v1811 = vld [vmem:[%s1739 + $0x238] sm:$0xff]
    %v1812 = vld [vmem:[%s1739 + $0x240] sm:$0xff]
    %v1813 = vld [vmem:[%s1739 + $0x248] sm:$0xff]
    %v1814 = vld [vmem:[%s1739 + $0x250] sm:$0xff]
    %v1815 = vld [vmem:[%s1739 + $0x258] sm:$0xff]
    %v1816 = vld [vmem:[%s1739 + $0x260] sm:$0xff]
    %v1817 = vld [vmem:[%s1739 + $0x268] sm:$0xff]
    %v1818 = vld [vmem:[%s1739 + $0x270] sm:$0xff]
    %v1819 = vld [vmem:[%s1739 + $0x278] sm:$0xff]
    %v1820 = vld [vmem:[%s1739 + $0x280] sm:$0xff]
    %v1821 = vld [vmem:[%s1739 + $0x288] sm:$0xff]
    %v1822 = vld [vmem:[%s1739 + $0x290] sm:$0xff]
    %v1823 = vld [vmem:[%s1739 + $0x298] sm:$0xff]
    %v1824 = vld [vmem:[%s1739 + $0x2a0] sm:$0xff]
    %v1825 = vld [vmem:[%s1739 + $0x2a8] sm:$0xff]
    %v1826 = vld [vmem:[%s1739 + $0x2b0] sm:$0xff]
    %v1827 = vld [vmem:[%s1739 + $0x2b8] sm:$0xff]
    %v1828 = vld [vmem:[%s1739 + $0x2c0] sm:$0xff]
    %v1829 = vld [vmem:[%s1739 + $0x2c8] sm:$0xff]
    %v1830 = vld [vmem:[%s1739 + $0x2d0] sm:$0xff]
    %v1831 = vld [vmem:[%s1739 + $0x2d8] sm:$0xff]
    %v1832 = vld [vmem:[%s1739 + $0x2e0] sm:$0xff]
    %v1833 = vld [vmem:[%s1739 + $0x2e8] sm:$0xff]
    %v1834 = vld [vmem:[%s1739 + $0x2f0] sm:$0xff]
    %v1835 = vld [vmem:[%s1739 + $0x2f8] sm:$0xff]
    %v1836 = vld [vmem:[%s1739 + $0x300] sm:$0xff]
    %v1837 = vld [vmem:[%s1739 + $0x308] sm:$0xff]
    %v1838 = vld [vmem:[%s1739 + $0x310] sm:$0xff]
    %v1839 = vld [vmem:[%s1739 + $0x318] sm:$0xff]
    %v1840 = vld [vmem:[%s1739 + $0x320] sm:$0xff]
    %v1841 = vld [vmem:[%s1739 + $0x328] sm:$0xff]
    %v1842 = vld [vmem:[%s1739 + $0x330] sm:$0xff]
    %v1843 = vld [vmem:[%s1739 + $0x338] sm:$0xff]
    %v1844 = vld [vmem:[%s1739 + $0x340] sm:$0xff]
    %v1845 = vld [vmem:[%s1739 + $0x348] sm:$0xff]
    %v1846 = vld [vmem:[%s1739 + $0x350] sm:$0xff]
    %v1847 = vld [vmem:[%s1739 + $0x358] sm:$0xff]
    %v1848 = vld [vmem:[%s1739 + $0x360] sm:$0xff]
    %v1849 = vld [vmem:[%s1739 + $0x368] sm:$0xff]
    %v1850 = vld [vmem:[%s1739 + $0x370] sm:$0xff]
    %v1851 = vld [vmem:[%s1739 + $0x378] sm:$0xff]
    %v1852 = vld [vmem:[%s1739 + $0x380] sm:$0xff]
    %v1853 = vld [vmem:[%s1739 + $0x388] sm:$0xff]
    %v1854 = vld [vmem:[%s1739 + $0x390] sm:$0xff]
    %v1855 = vld [vmem:[%s1739 + $0x398] sm:$0xff]
    %v1856 = vld [vmem:[%s1739 + $0x3a0] sm:$0xff]
    %v1857 = vld [vmem:[%s1739 + $0x3a8] sm:$0xff]
    %v1858 = vld [vmem:[%s1739 + $0x3b0] sm:$0xff]
    %v1859 = vld [vmem:[%s1739 + $0x3b8] sm:$0xff]
    %v1860 = vld [vmem:[%s1739 + $0x3c0] sm:$0xff]
    %v1861 = vld [vmem:[%s1739 + $0x3c8] sm:$0xff]
    %v1862 = vld [vmem:[%s1739 + $0x3d0] sm:$0xff]
    %v1863 = vld [vmem:[%s1739 + $0x3d8] sm:$0xff]
    %v1864 = vld [vmem:[%s1739 + $0x3e0] sm:$0xff]
    %v1865 = vld [vmem:[%s1739 + $0x3e8] sm:$0xff]
    %v1866 = vld [vmem:[%s1739 + $0x3f0] sm:$0xff]
    %v1867 = vld [vmem:[%s1739 + $0x3f8] sm:$0xff]
    %v1868 = vld [vmem:[%s1739 + $0x400] sm:$0xff]
    %v1869 = vld [vmem:[%s1739 + $0x408] sm:$0xff]
    %v1870 = vld [vmem:[%s1739 + $0x410] sm:$0xff]
    %v1871 = vld [vmem:[%s1739 + $0x418] sm:$0xff]
    %v1872 = vld [vmem:[%s1739 + $0x420] sm:$0xff]
    %v1873 = vld [vmem:[%s1739 + $0x428] sm:$0xff]
    %v1874 = vld [vmem:[%s1739 + $0x430] sm:$0xff]
    %v1875 = vld [vmem:[%s1739 + $0x438] sm:$0xff]
    %v1876 = vld [vmem:[%s1739 + $0x440] sm:$0xff]
    %v1877 = vld [vmem:[%s1739 + $0x448] sm:$0xff]
    %v1878 = vld [vmem:[%s1739 + $0x450] sm:$0xff]
    %v1879 = vld [vmem:[%s1739 + $0x458] sm:$0xff]
    %v1880 = vld [vmem:[%s1739 + $0x460] sm:$0xff]
    %v1881 = vld [vmem:[%s1739 + $0x468] sm:$0xff]
    %v1882 = vld [vmem:[%s1739 + $0x470] sm:$0xff]
    %v1883 = vld [vmem:[%s1739 + $0x478] sm:$0xff]
    %v1884 = vld [vmem:[%s1739 + $0x480] sm:$0xff]
    %v1885 = vld [vmem:[%s1739 + $0x488] sm:$0xff]
    %v1886 = vld [vmem:[%s1739 + $0x490] sm:$0xff]
    %v1887 = vld [vmem:[%s1739 + $0x498] sm:$0xff]
    %v1888 = vld [vmem:[%s1739 + $0x4a0] sm:$0xff]
    %v1889 = vld [vmem:[%s1739 + $0x4a8] sm:$0xff]
    %v1890 = vld [vmem:[%s1739 + $0x4b0] sm:$0xff]
    %v1891 = vld [vmem:[%s1739 + $0x4b8] sm:$0xff]
    %v1892 = vld [vmem:[%s1739 + $0x4c0] sm:$0xff]
    %v1893 = vld [vmem:[%s1739 + $0x4c8] sm:$0xff]
    %v1894 = vld [vmem:[%s1739 + $0x4d0] sm:$0xff]
    %v1895 = vld [vmem:[%s1739 + $0x4d8] sm:$0xff]
    %v1896 = vld [vmem:[%s1739 + $0x4e0] sm:$0xff]
    %v1897 = vld [vmem:[%s1739 + $0x4e8] sm:$0xff]
    %v1898 = vld [vmem:[%s1739 + $0x4f0] sm:$0xff]
    %v1899 = vld [vmem:[%s1739 + $0x4f8] sm:$0xff]
    %v1900 = vld [vmem:[%s1739 + $0x500] sm:$0xff]
    %v1901 = vld [vmem:[%s1739 + $0x508] sm:$0xff]
    %v1902 = vld [vmem:[%s1739 + $0x510] sm:$0xff]
    %v1903 = vld [vmem:[%s1739 + $0x518] sm:$0xff]
    %v1904 = vld [vmem:[%s1739 + $0x520] sm:$0xff]
    %v1905 = vld [vmem:[%s1739 + $0x528] sm:$0xff]
    %v1906 = vld [vmem:[%s1739 + $0x530] sm:$0xff]
    %v1907 = vld [vmem:[%s1739 + $0x538] sm:$0xff]
    %v1908 = vld [vmem:[%s1739 + $0x540] sm:$0xff]
    %v1909 = vld [vmem:[%s1739 + $0x548] sm:$0xff]
    %v1910 = vld [vmem:[%s1739 + $0x550] sm:$0xff]
    %v1911 = vld [vmem:[%s1739 + $0x558] sm:$0xff]
    %v1912 = vld [vmem:[%s1739 + $0x560] sm:$0xff]
    %v1913 = vld [vmem:[%s1739 + $0x568] sm:$0xff]
    %v1914 = vld [vmem:[%s1739 + $0x570] sm:$0xff]
    %v1915 = vld [vmem:[%s1739 + $0x578] sm:$0xff]
    %v1916 = vld [vmem:[%s1739 + $0x580] sm:$0xff]
    %v1917 = vld [vmem:[%s1739 + $0x588] sm:$0xff]
    %v1918 = vld [vmem:[%s1739 + $0x590] sm:$0xff]
    %v1919 = vld [vmem:[%s1739 + $0x598] sm:$0xff]
    %v1920 = vld [vmem:[%s1739 + $0x5a0] sm:$0xff]
    %v1921 = vld [vmem:[%s1739 + $0x5a8] sm:$0xff]
    %v1922 = vld [vmem:[%s1739 + $0x5b0] sm:$0xff]
    %v1923 = vld [vmem:[%s1739 + $0x5b8] sm:$0xff]
    %v1924 = vld [vmem:[%s1739 + $0x5c0] sm:$0xff]
    %v1925 = vld [vmem:[%s1739 + $0x5c8] sm:$0xff]
    %v1926 = vld [vmem:[%s1739 + $0x5d0] sm:$0xff]
    %v1927 = vld [vmem:[%s1739 + $0x5d8] sm:$0xff]
    %v1928 = vld [vmem:[%s1739 + $0x5e0] sm:$0xff]
    %v1929 = vld [vmem:[%s1739 + $0x5e8] sm:$0xff]
    %v1930 = vld [vmem:[%s1739 + $0x5f0] sm:$0xff]
    %v1931 = vld [vmem:[%s1739 + $0x5f8] sm:$0xff]
    %v1932 = vld [vmem:[%s1739 + $0x600] sm:$0xff]
    %v1933 = vld [vmem:[%s1739 + $0x608] sm:$0xff]
    %v1934 = vld [vmem:[%s1739 + $0x610] sm:$0xff]
    %v1935 = vld [vmem:[%s1739 + $0x618] sm:$0xff]
    %v1936 = vld [vmem:[%s1739 + $0x620] sm:$0xff]
    %v1937 = vld [vmem:[%s1739 + $0x628] sm:$0xff]
    %v1938 = vld [vmem:[%s1739 + $0x630] sm:$0xff]
    %v1939 = vld [vmem:[%s1739 + $0x638] sm:$0xff]
    %v1940 = vld [vmem:[%s1739 + $0x640] sm:$0xff]
    %v1941 = vld [vmem:[%s1739 + $0x648] sm:$0xff]
    %v1942 = vld [vmem:[%s1739 + $0x650] sm:$0xff]
    %v1943 = vld [vmem:[%s1739 + $0x658] sm:$0xff]
    %v1944 = vld [vmem:[%s1739 + $0x660] sm:$0xff]
    %v1945 = vld [vmem:[%s1739 + $0x668] sm:$0xff]
    %v1946 = vld [vmem:[%s1739 + $0x670] sm:$0xff]
    %v1947 = vld [vmem:[%s1739 + $0x678] sm:$0xff]
    %v1948 = vld [vmem:[%s1739 + $0x680] sm:$0xff]
    %v1949 = vld [vmem:[%s1739 + $0x688] sm:$0xff]
    %v1950 = vld [vmem:[%s1739 + $0x690] sm:$0xff]
    %v1951 = vld [vmem:[%s1739 + $0x698] sm:$0xff]
    %v1952 = vld [vmem:[%s1739 + $0x6a0] sm:$0xff]
    %v1953 = vld [vmem:[%s1739 + $0x6a8] sm:$0xff]
    %v1954 = vld [vmem:[%s1739 + $0x6b0] sm:$0xff]
    %v1955 = vld [vmem:[%s1739 + $0x6b8] sm:$0xff]
    %v1956 = vld [vmem:[%s1739 + $0x6c0] sm:$0xff]
    %v1957 = vld [vmem:[%s1739 + $0x6c8] sm:$0xff]
    %v1958 = vld [vmem:[%s1739 + $0x6d0] sm:$0xff]
    %v1959 = vld [vmem:[%s1739 + $0x6d8] sm:$0xff]
    %v1960 = vld [vmem:[%s1739 + $0x6e0] sm:$0xff]
    %v1961 = vld [vmem:[%s1739 + $0x6e8] sm:$0xff]
    %v1962 = vld [vmem:[%s1739 + $0x6f0] sm:$0xff]
    %v1963 = vld [vmem:[%s1739 + $0x6f8] sm:$0xff]
    %v1964 = vld [vmem:[%s1739 + $0x700] sm:$0xff]
    %v1965 = vld [vmem:[%s1739 + $0x708] sm:$0xff]
    %v1966 = vld [vmem:[%s1739 + $0x710] sm:$0xff]
    %v1967 = vld [vmem:[%s1739 + $0x718] sm:$0xff]
    %v1968 = vld [vmem:[%s1739 + $0x720] sm:$0xff]
    %v1969 = vld [vmem:[%s1739 + $0x728] sm:$0xff]
    %v1970 = vld [vmem:[%s1739 + $0x730] sm:$0xff]
    %v1971 = vld [vmem:[%s1739 + $0x738] sm:$0xff]
    %v1972 = vld [vmem:[%s1739 + $0x740] sm:$0xff]
    %v1973 = vld [vmem:[%s1739 + $0x748] sm:$0xff]
    %v1974 = vld [vmem:[%s1739 + $0x750] sm:$0xff]
    %v1975 = vld [vmem:[%s1739 + $0x758] sm:$0xff]
    %v1976 = vld [vmem:[%s1739 + $0x760] sm:$0xff]
    %v1977 = vld [vmem:[%s1739 + $0x768] sm:$0xff]
    %v1978 = vld [vmem:[%s1739 + $0x770] sm:$0xff]
    %v1979 = vld [vmem:[%s1739 + $0x778] sm:$0xff]
    %v1980 = vld [vmem:[%s1739 + $0x780] sm:$0xff]
    %v1981 = vld [vmem:[%s1739 + $0x788] sm:$0xff]
    %v1982 = vld [vmem:[%s1739 + $0x790] sm:$0xff]
    %v1983 = vld [vmem:[%s1739 + $0x798] sm:$0xff]
    %v1984 = vld [vmem:[%s1739 + $0x7a0] sm:$0xff]
    %v1985 = vld [vmem:[%s1739 + $0x7a8] sm:$0xff]
    %v1986 = vld [vmem:[%s1739 + $0x7b0] sm:$0xff]
    %v1987 = vld [vmem:[%s1739 + $0x7b8] sm:$0xff]
    %v1988 = vld [vmem:[%s1739 + $0x7c0] sm:$0xff]
    %v1989 = vld [vmem:[%s1739 + $0x7c8] sm:$0xff]
    %v1990 = vld [vmem:[%s1739 + $0x7d0] sm:$0xff]
    %v1991 = vld [vmem:[%s1739 + $0x7d8] sm:$0xff]
    %v1992 = vld [vmem:[%s1739 + $0x7e0] sm:$0xff]
    %v1993 = vld [vmem:[%s1739 + $0x7e8] sm:$0xff]
    %v1994 = vld [vmem:[%s1739 + $0x7f0] sm:$0xff]
    %v1995 = vld [vmem:[%s1739 + $0x7f8] sm:$0xff]
    %v1996 = vpack.c.bf16 %v1741, %v1740
    %v1997 = vpack.c.bf16 %v1743, %v1742
    %v1998 = vpack.c.bf16 %v1745, %v1744
    %v1999 = vpack.c.bf16 %v1747, %v1746
    %v2000 = vpack.c.bf16 %v1749, %v1748
    %v2001 = vpack.c.bf16 %v1751, %v1750
    %v2002 = vpack.c.bf16 %v1753, %v1752
    %v2003 = vpack.c.bf16 %v1755, %v1754
    %v2004 = vpack.c.bf16 %v1757, %v1756
    %v2005 = vpack.c.bf16 %v1759, %v1758
    %v2006 = vpack.c.bf16 %v1761, %v1760
    %v2007 = vpack.c.bf16 %v1763, %v1762
    %v2008 = vpack.c.bf16 %v1765, %v1764
    %v2009 = vpack.c.bf16 %v1767, %v1766
    %v2010 = vpack.c.bf16 %v1769, %v1768
    %v2011 = vpack.c.bf16 %v1771, %v1770
    %v2012 = vpack.c.bf16 %v1773, %v1772
    %v2013 = vpack.c.bf16 %v1775, %v1774
    %v2014 = vpack.c.bf16 %v1777, %v1776
    %v2015 = vpack.c.bf16 %v1779, %v1778
    %v2016 = vpack.c.bf16 %v1781, %v1780
    %v2017 = vpack.c.bf16 %v1783, %v1782
    %v2018 = vpack.c.bf16 %v1785, %v1784
    %v2019 = vpack.c.bf16 %v1787, %v1786
    %v2020 = vpack.c.bf16 %v1789, %v1788
    %v2021 = vpack.c.bf16 %v1791, %v1790
    %v2022 = vpack.c.bf16 %v1793, %v1792
    %v2023 = vpack.c.bf16 %v1795, %v1794
    %v2024 = vpack.c.bf16 %v1797, %v1796
    %v2025 = vpack.c.bf16 %v1799, %v1798
    %v2026 = vpack.c.bf16 %v1801, %v1800
    %v2027 = vpack.c.bf16 %v1803, %v1802
    %v2028 = vpack.c.bf16 %v1805, %v1804
    %v2029 = vpack.c.bf16 %v1807, %v1806
    %v2030 = vpack.c.bf16 %v1809, %v1808
    %v2031 = vpack.c.bf16 %v1811, %v1810
    %v2032 = vpack.c.bf16 %v1813, %v1812
    %v2033 = vpack.c.bf16 %v1815, %v1814
    %v2034 = vpack.c.bf16 %v1817, %v1816
    %v2035 = vpack.c.bf16 %v1819, %v1818
    %v2036 = vpack.c.bf16 %v1821, %v1820
    %v2037 = vpack.c.bf16 %v1823, %v1822
    %v2038 = vpack.c.bf16 %v1825, %v1824
    %v2039 = vpack.c.bf16 %v1827, %v1826
    %v2040 = vpack.c.bf16 %v1829, %v1828
    %v2041 = vpack.c.bf16 %v1831, %v1830
    %v2042 = vpack.c.bf16 %v1833, %v1832
    %v2043 = vpack.c.bf16 %v1835, %v1834
    %v2044 = vpack.c.bf16 %v1837, %v1836
    %v2045 = vpack.c.bf16 %v1839, %v1838
    %v2046 = vpack.c.bf16 %v1841, %v1840
    %v2047 = vpack.c.bf16 %v1843, %v1842
    %v2048 = vpack.c.bf16 %v1845, %v1844
    %v2049 = vpack.c.bf16 %v1847, %v1846
    %v2050 = vpack.c.bf16 %v1849, %v1848
    %v2051 = vpack.c.bf16 %v1851, %v1850
    %v2052 = vpack.c.bf16 %v1853, %v1852
    %v2053 = vpack.c.bf16 %v1855, %v1854
    %v2054 = vpack.c.bf16 %v1857, %v1856
    %v2055 = vpack.c.bf16 %v1859, %v1858
    %v2056 = vpack.c.bf16 %v1861, %v1860
    %v2057 = vpack.c.bf16 %v1863, %v1862
    %v2058 = vpack.c.bf16 %v1865, %v1864
    %v2059 = vpack.c.bf16 %v1867, %v1866
    %v2060 = vpack.c.bf16 %v1869, %v1868
    %v2061 = vpack.c.bf16 %v1871, %v1870
    %v2062 = vpack.c.bf16 %v1873, %v1872
    %v2063 = vpack.c.bf16 %v1875, %v1874
    %v2064 = vpack.c.bf16 %v1877, %v1876
    %v2065 = vpack.c.bf16 %v1879, %v1878
    %v2066 = vpack.c.bf16 %v1881, %v1880
    %v2067 = vpack.c.bf16 %v1883, %v1882
    %v2068 = vpack.c.bf16 %v1885, %v1884
    %v2069 = vpack.c.bf16 %v1887, %v1886
    %v2070 = vpack.c.bf16 %v1889, %v1888
    %v2071 = vpack.c.bf16 %v1891, %v1890
    %v2072 = vpack.c.bf16 %v1893, %v1892
    %v2073 = vpack.c.bf16 %v1895, %v1894
    %v2074 = vpack.c.bf16 %v1897, %v1896
    %v2075 = vpack.c.bf16 %v1899, %v1898
    %v2076 = vpack.c.bf16 %v1901, %v1900
    %v2077 = vpack.c.bf16 %v1903, %v1902
    %v2078 = vpack.c.bf16 %v1905, %v1904
    %v2079 = vpack.c.bf16 %v1907, %v1906
    %v2080 = vpack.c.bf16 %v1909, %v1908
    %v2081 = vpack.c.bf16 %v1911, %v1910
    %v2082 = vpack.c.bf16 %v1913, %v1912
    %v2083 = vpack.c.bf16 %v1915, %v1914
    %v2084 = vpack.c.bf16 %v1917, %v1916
    %v2085 = vpack.c.bf16 %v1919, %v1918
    %v2086 = vpack.c.bf16 %v1921, %v1920
    %v2087 = vpack.c.bf16 %v1923, %v1922
    %v2088 = vpack.c.bf16 %v1925, %v1924
    %v2089 = vpack.c.bf16 %v1927, %v1926
    %v2090 = vpack.c.bf16 %v1929, %v1928
    %v2091 = vpack.c.bf16 %v1931, %v1930
    %v2092 = vpack.c.bf16 %v1933, %v1932
    %v2093 = vpack.c.bf16 %v1935, %v1934
    %v2094 = vpack.c.bf16 %v1937, %v1936
    %v2095 = vpack.c.bf16 %v1939, %v1938
    %v2096 = vpack.c.bf16 %v1941, %v1940
    %v2097 = vpack.c.bf16 %v1943, %v1942
    %v2098 = vpack.c.bf16 %v1945, %v1944
    %v2099 = vpack.c.bf16 %v1947, %v1946
    %v2100 = vpack.c.bf16 %v1949, %v1948
    %v2101 = vpack.c.bf16 %v1951, %v1950
    %v2102 = vpack.c.bf16 %v1953, %v1952
    %v2103 = vpack.c.bf16 %v1955, %v1954
    %v2104 = vpack.c.bf16 %v1957, %v1956
    %v2105 = vpack.c.bf16 %v1959, %v1958
    %v2106 = vpack.c.bf16 %v1961, %v1960
    %v2107 = vpack.c.bf16 %v1963, %v1962
    %v2108 = vpack.c.bf16 %v1965, %v1964
    %v2109 = vpack.c.bf16 %v1967, %v1966
    %v2110 = vpack.c.bf16 %v1969, %v1968
    %v2111 = vpack.c.bf16 %v1971, %v1970
    %v2112 = vpack.c.bf16 %v1973, %v1972
    %v2113 = vpack.c.bf16 %v1975, %v1974
    %v2114 = vpack.c.bf16 %v1977, %v1976
    %v2115 = vpack.c.bf16 %v1979, %v1978
    %v2116 = vpack.c.bf16 %v1981, %v1980
    %v2117 = vpack.c.bf16 %v1983, %v1982
    %v2118 = vpack.c.bf16 %v1985, %v1984
    %v2119 = vpack.c.bf16 %v1987, %v1986
    %v2120 = vpack.c.bf16 %v1989, %v1988
    %v2121 = vpack.c.bf16 %v1991, %v1990
    %v2122 = vpack.c.bf16 %v1993, %v1992
    %v2123 = vpack.c.bf16 %v1995, %v1994
    %2124 = vmatprep.subr.bf16.mxu0 0
    %2125 = vmatpush1.bf16.msra.mxu0 %v1996
    %2126 = vmatprep.subr.bf16.mxu0 0
    %2127 = vmatpush1.bf16.msra.mxu0 %v1997
    %2128 = vmatprep.subr.bf16.mxu0 0
    %2129 = vmatpush1.bf16.msra.mxu0 %v1998
    %2130 = vmatprep.subr.bf16.mxu0 0
    %2131 = vmatpush1.bf16.msra.mxu0 %v1999
    %2132 = vmatprep.subr.bf16.mxu0 0
    %2133 = vmatpush1.bf16.msra.mxu0 %v2000
    %2134 = vmatprep.subr.bf16.mxu0 0
    %2135 = vmatpush1.bf16.msra.mxu0 %v2001
    %2136 = vmatprep.subr.bf16.mxu0 0
    %2137 = vmatpush1.bf16.msra.mxu0 %v2002
    %2138 = vmatprep.subr.bf16.mxu0 0
    %2139 = vmatpush1.bf16.msra.mxu0 %v2003
    %2140 = vmatprep.subr.bf16.mxu0 0
    %2141 = vmatpush1.bf16.msra.mxu0 %v2004
    %2142 = vmatprep.subr.bf16.mxu0 0
    %2143 = vmatpush1.bf16.msra.mxu0 %v2005
    %2144 = vmatprep.subr.bf16.mxu0 0
    %2145 = vmatpush1.bf16.msra.mxu0 %v2006
    %2146 = vmatprep.subr.bf16.mxu0 0
    %2147 = vmatpush1.bf16.msra.mxu0 %v2007
    %2148 = vmatprep.subr.bf16.mxu0 0
    %2149 = vmatpush1.bf16.msra.mxu0 %v2008
    %2150 = vmatprep.subr.bf16.mxu0 0
    %2151 = vmatpush1.bf16.msra.mxu0 %v2009
    %2152 = vmatprep.subr.bf16.mxu0 0
    %2153 = vmatpush1.bf16.msra.mxu0 %v2010
    %2154 = vmatprep.subr.bf16.mxu0 0
    %2155 = vmatpush1.bf16.msra.mxu0 %v2011
    %2156 = vmatprep.mubr.bf16.mxu0 %v766
    %2157 = vmatmul.mubr.bf16.gmra.mrb[0].mxu0 %v765
    %v2158 = vpop.f32.mrb[0].mxu0
    %v2159 = vadd.f32 %v536, %v2158
    %v2160 = vpop.f32.mrb[0].mxu0
    %v2161 = vpop.f32.mrb[0].mxu0
    %v2162 = vadd.f32 %v541, %v2161
    %v2163 = vpop.f32.mrb[0].mxu0
    %2164 = vmatprep.mubr.bf16.mxu0 %v782
    %2165 = vmatmul.mubr.bf16.gmra.mrb[0].mxu0 %v781
    %v2166 = vpop.f32.mrb[0].mxu0
    %v2167 = vadd.f32 %v546, %v2166
    %v2168 = vpop.f32.mrb[0].mxu0
    %v2169 = vpop.f32.mrb[0].mxu0
    %v2170 = vadd.f32 %v551, %v2169
    %v2171 = vpop.f32.mrb[0].mxu0
    %2172 = vmatprep.mubr.bf16.mxu0 %v798
    %2173 = vmatmul.mubr.bf16.gmra.mrb[0].mxu0 %v797
    %v2174 = vpop.f32.mrb[0].mxu0
    %v2175 = vadd.f32 %v556, %v2174
    %v2176 = vpop.f32.mrb[0].mxu0
    %v2177 = vpop.f32.mrb[0].mxu0
    %v2178 = vadd.f32 %v561, %v2177
    %v2179 = vpop.f32.mrb[0].mxu0
    %2180 = vmatprep.mubr.bf16.mxu0 %v814
    %2181 = vmatmul.mubr.bf16.gmra.mrb[0].mxu0 %v813
    %v2182 = vpop.f32.mrb[0].mxu0
    %v2183 = vadd.f32 %v566, %v2182
    %v2184 = vpop.f32.mrb[0].mxu0
    %v2185 = vpop.f32.mrb[0].mxu0
    %v2186 = vadd.f32 %v571, %v2185
    %v2187 = vpop.f32.mrb[0].mxu0
    %2188 = vdwg.mxu0
    %2189 = vmatprep.subr.bf16.mxu0 0
    %2190 = vmatpush1.bf16.msra.mxu0 %v2012
    %2191 = vmatprep.subr.bf16.mxu0 0
    %2192 = vmatpush1.bf16.msra.mxu0 %v2013
    %2193 = vmatprep.subr.bf16.mxu0 0
    %2194 = vmatpush1.bf16.msra.mxu0 %v2014
    %2195 = vmatprep.subr.bf16.mxu0 0
    %2196 = vmatpush1.bf16.msra.mxu0 %v2015
    %2197 = vmatprep.subr.bf16.mxu0 0
    %2198 = vmatpush1.bf16.msra.mxu0 %v2016
    %2199 = vmatprep.subr.bf16.mxu0 0
    %2200 = vmatpush1.bf16.msra.mxu0 %v2017
    %2201 = vmatprep.subr.bf16.mxu0 0
    %2202 = vmatpush1.bf16.msra.mxu0 %v2018
    %2203 = vmatprep.subr.bf16.mxu0 0
    %2204 = vmatpush1.bf16.msra.mxu0 %v2019
    %2205 = vmatprep.subr.bf16.mxu0 0
    %2206 = vmatpush1.bf16.msra.mxu0 %v2020
    %2207 = vmatprep.subr.bf16.mxu0 0
    %2208 = vmatpush1.bf16.msra.mxu0 %v2021
    %2209 = vmatprep.subr.bf16.mxu0 0
    %2210 = vmatpush1.bf16.msra.mxu0 %v2022
    %2211 = vmatprep.subr.bf16.mxu0 0
    %2212 = vmatpush1.bf16.msra.mxu0 %v2023
    %2213 = vmatprep.subr.bf16.mxu0 0
    %2214 = vmatpush1.bf16.msra.mxu0 %v2024
    %2215 = vmatprep.subr.bf16.mxu0 0
    %2216 = vmatpush1.bf16.msra.mxu0 %v2025
    %2217 = vmatprep.subr.bf16.mxu0 0
    %2218 = vmatpush1.bf16.msra.mxu0 %v2026
    %2219 = vmatprep.subr.bf16.mxu0 0
    %2220 = vmatpush1.bf16.msra.mxu0 %v2027
    %2221 = vmatprep.mubr.bf16.mxu0 %v768
    %2222 = vmatmul.mubr.bf16.gmra.mrb[0].mxu0 %v767
    %v2223 = vpop.f32.mrb[0].mxu0
    %v2224 = vadd.f32 %v2159, %v2223
    %v2225 = vpop.f32.mrb[0].mxu0
    %v2226 = vpop.f32.mrb[0].mxu0
    %v2227 = vadd.f32 %v2162, %v2226
    %v2228 = vpop.f32.mrb[0].mxu0
    %2229 = vmatprep.mubr.bf16.mxu0 %v784
    %2230 = vmatmul.mubr.bf16.gmra.mrb[0].mxu0 %v783
    %v2231 = vpop.f32.mrb[0].mxu0
    %v2232 = vadd.f32 %v2167, %v2231
    %v2233 = vpop.f32.mrb[0].mxu0
    %v2234 = vpop.f32.mrb[0].mxu0
    %v2235 = vadd.f32 %v2170, %v2234
    %v2236 = vpop.f32.mrb[0].mxu0
    %2237 = vmatprep.mubr.bf16.mxu0 %v800
    %2238 = vmatmul.mubr.bf16.gmra.mrb[0].mxu0 %v799
    %v2239 = vpop.f32.mrb[0].mxu0
    %v2240 = vadd.f32 %v2175, %v2239
    %v2241 = vpop.f32.mrb[0].mxu0
    %v2242 = vpop.f32.mrb[0].mxu0
    %v2243 = vadd.f32 %v2178, %v2242
    %v2244 = vpop.f32.mrb[0].mxu0
    %2245 = vmatprep.mubr.bf16.mxu0 %v816
    %2246 = vmatmul.mubr.bf16.gmra.mrb[0].mxu0 %v815
    %v2247 = vpop.f32.mrb[0].mxu0
    %v2248 = vadd.f32 %v2183, %v2247
    %v2249 = vpop.f32.mrb[0].mxu0
    %v2250 = vpop.f32.mrb[0].mxu0
    %v2251 = vadd.f32 %v2186, %v2250
    %v2252 = vpop.f32.mrb[0].mxu0
    %2253 = vdwg.mxu0
    %2254 = vmatprep.subr.bf16.mxu0 0
    %2255 = vmatpush1.bf16.msra.mxu0 %v2028
    %2256 = vmatprep.subr.bf16.mxu0 0
    %2257 = vmatpush1.bf16.msra.mxu0 %v2029
    %2258 = vmatprep.subr.bf16.mxu0 0
    %2259 = vmatpush1.bf16.msra.mxu0 %v2030
    %2260 = vmatprep.subr.bf16.mxu0 0
    %2261 = vmatpush1.bf16.msra.mxu0 %v2031
    %2262 = vmatprep.subr.bf16.mxu0 0
    %2263 = vmatpush1.bf16.msra.mxu0 %v2032
    %2264 = vmatprep.subr.bf16.mxu0 0
    %2265 = vmatpush1.bf16.msra.mxu0 %v2033
    %2266 = vmatprep.subr.bf16.mxu0 0
    %2267 = vmatpush1.bf16.msra.mxu0 %v2034
    %2268 = vmatprep.subr.bf16.mxu0 0
    %2269 = vmatpush1.bf16.msra.mxu0 %v2035
    %2270 = vmatprep.subr.bf16.mxu0 0
    %2271 = vmatpush1.bf16.msra.mxu0 %v2036
    %2272 = vmatprep.subr.bf16.mxu0 0
    %2273 = vmatpush1.bf16.msra.mxu0 %v2037
    %2274 = vmatprep.subr.bf16.mxu0 0
    %2275 = vmatpush1.bf16.msra.mxu0 %v2038
    %2276 = vmatprep.subr.bf16.mxu0 0
    %2277 = vmatpush1.bf16.msra.mxu0 %v2039
    %2278 = vmatprep.subr.bf16.mxu0 0
    %2279 = vmatpush1.bf16.msra.mxu0 %v2040
    %2280 = vmatprep.subr.bf16.mxu0 0
    %2281 = vmatpush1.bf16.msra.mxu0 %v2041
    %2282 = vmatprep.subr.bf16.mxu0 0
    %2283 = vmatpush1.bf16.msra.mxu0 %v2042
    %2284 = vmatprep.subr.bf16.mxu0 0
    %2285 = vmatpush1.bf16.msra.mxu0 %v2043
    %2286 = vmatprep.mubr.bf16.mxu0 %v770
    %2287 = vmatmul.mubr.bf16.gmra.mrb[0].mxu0 %v769
    %v2288 = vpop.f32.mrb[0].mxu0
    %v2289 = vadd.f32 %v2224, %v2288
    %v2290 = vpop.f32.mrb[0].mxu0
    %v2291 = vpop.f32.mrb[0].mxu0
    %v2292 = vadd.f32 %v2227, %v2291
    %v2293 = vpop.f32.mrb[0].mxu0
    %2294 = vmatprep.mubr.bf16.mxu0 %v786
    %2295 = vmatmul.mubr.bf16.gmra.mrb[0].mxu0 %v785
    %v2296 = vpop.f32.mrb[0].mxu0
    %v2297 = vadd.f32 %v2232, %v2296
    %v2298 = vpop.f32.mrb[0].mxu0
    %v2299 = vpop.f32.mrb[0].mxu0
    %v2300 = vadd.f32 %v2235, %v2299
    %v2301 = vpop.f32.mrb[0].mxu0
    %2302 = vmatprep.mubr.bf16.mxu0 %v802
    %2303 = vmatmul.mubr.bf16.gmra.mrb[0].mxu0 %v801
    %v2304 = vpop.f32.mrb[0].mxu0
    %v2305 = vadd.f32 %v2240, %v2304
    %v2306 = vpop.f32.mrb[0].mxu0
    %v2307 = vpop.f32.mrb[0].mxu0
    %v2308 = vadd.f32 %v2243, %v2307
    %v2309 = vpop.f32.mrb[0].mxu0
    %2310 = vmatprep.mubr.bf16.mxu0 %v818
    %2311 = vmatmul.mubr.bf16.gmra.mrb[0].mxu0 %v817
    %v2312 = vpop.f32.mrb[0].mxu0
    %v2313 = vadd.f32 %v2248, %v2312
    %v2314 = vpop.f32.mrb[0].mxu0
    %v2315 = vpop.f32.mrb[0].mxu0
    %v2316 = vadd.f32 %v2251, %v2315
    %v2317 = vpop.f32.mrb[0].mxu0
    %2318 = vdwg.mxu0
    %2319 = vmatprep.subr.bf16.mxu0 0
    %2320 = vmatpush1.bf16.msra.mxu0 %v2044
    %2321 = vmatprep.subr.bf16.mxu0 0
    %2322 = vmatpush1.bf16.msra.mxu0 %v2045
    %2323 = vmatprep.subr.bf16.mxu0 0
    %2324 = vmatpush1.bf16.msra.mxu0 %v2046
    %2325 = vmatprep.subr.bf16.mxu0 0
    %2326 = vmatpush1.bf16.msra.mxu0 %v2047
    %2327 = vmatprep.subr.bf16.mxu0 0
    %2328 = vmatpush1.bf16.msra.mxu0 %v2048
    %2329 = vmatprep.subr.bf16.mxu0 0
    %2330 = vmatpush1.bf16.msra.mxu0 %v2049
    %2331 = vmatprep.subr.bf16.mxu0 0
    %2332 = vmatpush1.bf16.msra.mxu0 %v2050
    %2333 = vmatprep.subr.bf16.mxu0 0
    %2334 = vmatpush1.bf16.msra.mxu0 %v2051
    %2335 = vmatprep.subr.bf16.mxu0 0
    %2336 = vmatpush1.bf16.msra.mxu0 %v2052
    %2337 = vmatprep.subr.bf16.mxu0 0
    %2338 = vmatpush1.bf16.msra.mxu0 %v2053
    %2339 = vmatprep.subr.bf16.mxu0 0
    %2340 = vmatpush1.bf16.msra.mxu0 %v2054
    %2341 = vmatprep.subr.bf16.mxu0 0
    %2342 = vmatpush1.bf16.msra.mxu0 %v2055
    %2343 = vmatprep.subr.bf16.mxu0 0
    %2344 = vmatpush1.bf16.msra.mxu0 %v2056
    %2345 = vmatprep.subr.bf16.mxu0 0
    %2346 = vmatpush1.bf16.msra.mxu0 %v2057
    %2347 = vmatprep.subr.bf16.mxu0 0
    %2348 = vmatpush1.bf16.msra.mxu0 %v2058
    %2349 = vmatprep.subr.bf16.mxu0 0
    %2350 = vmatpush1.bf16.msra.mxu0 %v2059
    %2351 = vmatprep.mubr.bf16.mxu0 %v772
    %2352 = vmatmul.mubr.bf16.gmra.mrb[0].mxu0 %v771
    %v2353 = vpop.f32.mrb[0].mxu0
    %v2354 = vadd.f32 %v2289, %v2353
    %v2355 = vpop.f32.mrb[0].mxu0
    %v2356 = vpop.f32.mrb[0].mxu0
    %v2357 = vadd.f32 %v2292, %v2356
    %v2358 = vpop.f32.mrb[0].mxu0
    %2359 = vmatprep.mubr.bf16.mxu0 %v788
    %2360 = vmatmul.mubr.bf16.gmra.mrb[0].mxu0 %v787
    %v2361 = vpop.f32.mrb[0].mxu0
    %v2362 = vadd.f32 %v2297, %v2361
    %v2363 = vpop.f32.mrb[0].mxu0
    %v2364 = vpop.f32.mrb[0].mxu0
    %v2365 = vadd.f32 %v2300, %v2364
    %v2366 = vpop.f32.mrb[0].mxu0
    %2367 = vmatprep.mubr.bf16.mxu0 %v804
    %2368 = vmatmul.mubr.bf16.gmra.mrb[0].mxu0 %v803
    %v2369 = vpop.f32.mrb[0].mxu0
    %v2370 = vadd.f32 %v2305, %v2369
    %v2371 = vpop.f32.mrb[0].mxu0
    %v2372 = vpop.f32.mrb[0].mxu0
    %v2373 = vadd.f32 %v2308, %v2372
    %v2374 = vpop.f32.mrb[0].mxu0
    %2375 = vmatprep.mubr.bf16.mxu0 %v820
    %2376 = vmatmul.mubr.bf16.gmra.mrb[0].mxu0 %v819
    %v2377 = vpop.f32.mrb[0].mxu0
    %v2378 = vadd.f32 %v2313, %v2377
    %v2379 = vpop.f32.mrb[0].mxu0
    %v2380 = vpop.f32.mrb[0].mxu0
    %v2381 = vadd.f32 %v2316, %v2380
    %v2382 = vpop.f32.mrb[0].mxu0
    %2383 = vdwg.mxu0
    %2384 = vmatprep.subr.bf16.mxu0 0
    %2385 = vmatpush1.bf16.msra.mxu0 %v2060
    %2386 = vmatprep.subr.bf16.mxu0 0
    %2387 = vmatpush1.bf16.msra.mxu0 %v2061
    %2388 = vmatprep.subr.bf16.mxu0 0
    %2389 = vmatpush1.bf16.msra.mxu0 %v2062
    %2390 = vmatprep.subr.bf16.mxu0 0
    %2391 = vmatpush1.bf16.msra.mxu0 %v2063
    %2392 = vmatprep.subr.bf16.mxu0 0
    %2393 = vmatpush1.bf16.msra.mxu0 %v2064
    %2394 = vmatprep.subr.bf16.mxu0 0
    %2395 = vmatpush1.bf16.msra.mxu0 %v2065
    %2396 = vmatprep.subr.bf16.mxu0 0
    %2397 = vmatpush1.bf16.msra.mxu0 %v2066
    %2398 = vmatprep.subr.bf16.mxu0 0
    %2399 = vmatpush1.bf16.msra.mxu0 %v2067
    %2400 = vmatprep.subr.bf16.mxu0 0
    %2401 = vmatpush1.bf16.msra.mxu0 %v2068
    %2402 = vmatprep.subr.bf16.mxu0 0
    %2403 = vmatpush1.bf16.msra.mxu0 %v2069
    %2404 = vmatprep.subr.bf16.mxu0 0
    %2405 = vmatpush1.bf16.msra.mxu0 %v2070
    %2406 = vmatprep.subr.bf16.mxu0 0
    %2407 = vmatpush1.bf16.msra.mxu0 %v2071
    %2408 = vmatprep.subr.bf16.mxu0 0
    %2409 = vmatpush1.bf16.msra.mxu0 %v2072
    %2410 = vmatprep.subr.bf16.mxu0 0
    %2411 = vmatpush1.bf16.msra.mxu0 %v2073
    %2412 = vmatprep.subr.bf16.mxu0 0
    %2413 = vmatpush1.bf16.msra.mxu0 %v2074
    %2414 = vmatprep.subr.bf16.mxu0 0
    %2415 = vmatpush1.bf16.msra.mxu0 %v2075
    %2416 = vmatprep.mubr.bf16.mxu0 %v774
    %2417 = vmatmul.mubr.bf16.gmra.mrb[0].mxu0 %v773
    %v2418 = vpop.f32.mrb[0].mxu0
    %v2419 = vadd.f32 %v2354, %v2418
    %v2420 = vpop.f32.mrb[0].mxu0
    %v2421 = vpop.f32.mrb[0].mxu0
    %v2422 = vadd.f32 %v2357, %v2421
    %v2423 = vpop.f32.mrb[0].mxu0
    %2424 = vmatprep.mubr.bf16.mxu0 %v790
    %2425 = vmatmul.mubr.bf16.gmra.mrb[0].mxu0 %v789
    %v2426 = vpop.f32.mrb[0].mxu0
    %v2427 = vadd.f32 %v2362, %v2426
    %v2428 = vpop.f32.mrb[0].mxu0
    %v2429 = vpop.f32.mrb[0].mxu0
    %v2430 = vadd.f32 %v2365, %v2429
    %v2431 = vpop.f32.mrb[0].mxu0
    %2432 = vmatprep.mubr.bf16.mxu0 %v806
    %2433 = vmatmul.mubr.bf16.gmra.mrb[0].mxu0 %v805
    %v2434 = vpop.f32.mrb[0].mxu0
    %v2435 = vadd.f32 %v2370, %v2434
    %v2436 = vpop.f32.mrb[0].mxu0
    %v2437 = vpop.f32.mrb[0].mxu0
    %v2438 = vadd.f32 %v2373, %v2437
    %v2439 = vpop.f32.mrb[0].mxu0
    %2440 = vmatprep.mubr.bf16.mxu0 %v822
    %2441 = vmatmul.mubr.bf16.gmra.mrb[0].mxu0 %v821
    %v2442 = vpop.f32.mrb[0].mxu0
    %v2443 = vadd.f32 %v2378, %v2442
    %v2444 = vpop.f32.mrb[0].mxu0
    %v2445 = vpop.f32.mrb[0].mxu0
    %v2446 = vadd.f32 %v2381, %v2445
    %v2447 = vpop.f32.mrb[0].mxu0
    %2448 = vdwg.mxu0
    %2449 = vmatprep.subr.bf16.mxu0 0
    %2450 = vmatpush1.bf16.msra.mxu0 %v2076
    %2451 = vmatprep.subr.bf16.mxu0 0
    %2452 = vmatpush1.bf16.msra.mxu0 %v2077
    %2453 = vmatprep.subr.bf16.mxu0 0
    %2454 = vmatpush1.bf16.msra.mxu0 %v2078
    %2455 = vmatprep.subr.bf16.mxu0 0
    %2456 = vmatpush1.bf16.msra.mxu0 %v2079
    %2457 = vmatprep.subr.bf16.mxu0 0
    %2458 = vmatpush1.bf16.msra.mxu0 %v2080
    %2459 = vmatprep.subr.bf16.mxu0 0
    %2460 = vmatpush1.bf16.msra.mxu0 %v2081
    %2461 = vmatprep.subr.bf16.mxu0 0
    %2462 = vmatpush1.bf16.msra.mxu0 %v2082
    %2463 = vmatprep.subr.bf16.mxu0 0
    %2464 = vmatpush1.bf16.msra.mxu0 %v2083
    %2465 = vmatprep.subr.bf16.mxu0 0
    %2466 = vmatpush1.bf16.msra.mxu0 %v2084
    %2467 = vmatprep.subr.bf16.mxu0 0
    %2468 = vmatpush1.bf16.msra.mxu0 %v2085
    %2469 = vmatprep.subr.bf16.mxu0 0
    %2470 = vmatpush1.bf16.msra.mxu0 %v2086
    %2471 = vmatprep.subr.bf16.mxu0 0
    %2472 = vmatpush1.bf16.msra.mxu0 %v2087
    %2473 = vmatprep.subr.bf16.mxu0 0
    %2474 = vmatpush1.bf16.msra.mxu0 %v2088
    %2475 = vmatprep.subr.bf16.mxu0 0
    %2476 = vmatpush1.bf16.msra.mxu0 %v2089
    %2477 = vmatprep.subr.bf16.mxu0 0
    %2478 = vmatpush1.bf16.msra.mxu0 %v2090
    %2479 = vmatprep.subr.bf16.mxu0 0
    %2480 = vmatpush1.bf16.msra.mxu0 %v2091
    %2481 = vmatprep.mubr.bf16.mxu0 %v776
    %2482 = vmatmul.mubr.bf16.gmra.mrb[0].mxu0 %v775
    %v2483 = vpop.f32.mrb[0].mxu0
    %v2484 = vadd.f32 %v2419, %v2483
    %v2485 = vpop.f32.mrb[0].mxu0
    %v2486 = vpop.f32.mrb[0].mxu0
    %v2487 = vadd.f32 %v2422, %v2486
    %v2488 = vpop.f32.mrb[0].mxu0
    %2489 = vmatprep.mubr.bf16.mxu0 %v792
    %2490 = vmatmul.mubr.bf16.gmra.mrb[0].mxu0 %v791
    %v2491 = vpop.f32.mrb[0].mxu0
    %v2492 = vadd.f32 %v2427, %v2491
    %v2493 = vpop.f32.mrb[0].mxu0
    %v2494 = vpop.f32.mrb[0].mxu0
    %v2495 = vadd.f32 %v2430, %v2494
    %v2496 = vpop.f32.mrb[0].mxu0
    %2497 = vmatprep.mubr.bf16.mxu0 %v808
    %2498 = vmatmul.mubr.bf16.gmra.mrb[0].mxu0 %v807
    %v2499 = vpop.f32.mrb[0].mxu0
    %v2500 = vadd.f32 %v2435, %v2499
    %v2501 = vpop.f32.mrb[0].mxu0
    %v2502 = vpop.f32.mrb[0].mxu0
    %v2503 = vadd.f32 %v2438, %v2502
    %v2504 = vpop.f32.mrb[0].mxu0
    %2505 = vmatprep.mubr.bf16.mxu0 %v824
    %2506 = vmatmul.mubr.bf16.gmra.mrb[0].mxu0 %v823
    %v2507 = vpop.f32.mrb[0].mxu0
    %v2508 = vadd.f32 %v2443, %v2507
    %v2509 = vpop.f32.mrb[0].mxu0
    %v2510 = vpop.f32.mrb[0].mxu0
    %v2511 = vadd.f32 %v2446, %v2510
    %v2512 = vpop.f32.mrb[0].mxu0
    %2513 = vdwg.mxu0
    %2514 = vmatprep.subr.bf16.mxu0 0
    %2515 = vmatpush1.bf16.msra.mxu0 %v2092
    %2516 = vmatprep.subr.bf16.mxu0 0
    %2517 = vmatpush1.bf16.msra.mxu0 %v2093
    %2518 = vmatprep.subr.bf16.mxu0 0
    %2519 = vmatpush1.bf16.msra.mxu0 %v2094
    %2520 = vmatprep.subr.bf16.mxu0 0
    %2521 = vmatpush1.bf16.msra.mxu0 %v2095
    %2522 = vmatprep.subr.bf16.mxu0 0
    %2523 = vmatpush1.bf16.msra.mxu0 %v2096
    %2524 = vmatprep.subr.bf16.mxu0 0
    %2525 = vmatpush1.bf16.msra.mxu0 %v2097
    %2526 = vmatprep.subr.bf16.mxu0 0
    %2527 = vmatpush1.bf16.msra.mxu0 %v2098
    %2528 = vmatprep.subr.bf16.mxu0 0
    %2529 = vmatpush1.bf16.msra.mxu0 %v2099
    %2530 = vmatprep.subr.bf16.mxu0 0
    %2531 = vmatpush1.bf16.msra.mxu0 %v2100
    %2532 = vmatprep.subr.bf16.mxu0 0
    %2533 = vmatpush1.bf16.msra.mxu0 %v2101
    %2534 = vmatprep.subr.bf16.mxu0 0
    %2535 = vmatpush1.bf16.msra.mxu0 %v2102
    %2536 = vmatprep.subr.bf16.mxu0 0
    %2537 = vmatpush1.bf16.msra.mxu0 %v2103
    %2538 = vmatprep.subr.bf16.mxu0 0
    %2539 = vmatpush1.bf16.msra.mxu0 %v2104
    %2540 = vmatprep.subr.bf16.mxu0 0
    %2541 = vmatpush1.bf16.msra.mxu0 %v2105
    %2542 = vmatprep.subr.bf16.mxu0 0
    %2543 = vmatpush1.bf16.msra.mxu0 %v2106
    %2544 = vmatprep.subr.bf16.mxu0 0
    %2545 = vmatpush1.bf16.msra.mxu0 %v2107
    %2546 = vmatprep.mubr.bf16.mxu0 %v778
    %2547 = vmatmul.mubr.bf16.gmra.mrb[0].mxu0 %v777
    %v2548 = vpop.f32.mrb[0].mxu0
    %v2549 = vadd.f32 %v2484, %v2548
    %v2550 = vpop.f32.mrb[0].mxu0
    %v2551 = vpop.f32.mrb[0].mxu0
    %v2552 = vadd.f32 %v2487, %v2551
    %v2553 = vpop.f32.mrb[0].mxu0
    %2554 = vmatprep.mubr.bf16.mxu0 %v794
    %2555 = vmatmul.mubr.bf16.gmra.mrb[0].mxu0 %v793
    %v2556 = vpop.f32.mrb[0].mxu0
    %v2557 = vadd.f32 %v2492, %v2556
    %v2558 = vpop.f32.mrb[0].mxu0
    %v2559 = vpop.f32.mrb[0].mxu0
    %v2560 = vadd.f32 %v2495, %v2559
    %v2561 = vpop.f32.mrb[0].mxu0
    %2562 = vmatprep.mubr.bf16.mxu0 %v810
    %2563 = vmatmul.mubr.bf16.gmra.mrb[0].mxu0 %v809
    %v2564 = vpop.f32.mrb[0].mxu0
    %v2565 = vadd.f32 %v2500, %v2564
    %v2566 = vpop.f32.mrb[0].mxu0
    %v2567 = vpop.f32.mrb[0].mxu0
    %v2568 = vadd.f32 %v2503, %v2567
    %v2569 = vpop.f32.mrb[0].mxu0
    %2570 = vmatprep.mubr.bf16.mxu0 %v826
    %2571 = vmatmul.mubr.bf16.gmra.mrb[0].mxu0 %v825
    %v2572 = vpop.f32.mrb[0].mxu0
    %v2573 = vadd.f32 %v2508, %v2572
    %v2574 = vpop.f32.mrb[0].mxu0
    %v2575 = vpop.f32.mrb[0].mxu0
    %v2576 = vadd.f32 %v2511, %v2575
    %v2577 = vpop.f32.mrb[0].mxu0
    %2578 = vdwg.mxu0
    %2579 = vmatprep.subr.bf16.mxu0 0
    %2580 = vmatpush1.bf16.msra.mxu0 %v2108
    %2581 = vmatprep.subr.bf16.mxu0 0
    %2582 = vmatpush1.bf16.msra.mxu0 %v2109
    %2583 = vmatprep.subr.bf16.mxu0 0
    %2584 = vmatpush1.bf16.msra.mxu0 %v2110
    %2585 = vmatprep.subr.bf16.mxu0 0
    %2586 = vmatpush1.bf16.msra.mxu0 %v2111
    %2587 = vmatprep.subr.bf16.mxu0 0
    %2588 = vmatpush1.bf16.msra.mxu0 %v2112
    %2589 = vmatprep.subr.bf16.mxu0 0
    %2590 = vmatpush1.bf16.msra.mxu0 %v2113
    %2591 = vmatprep.subr.bf16.mxu0 0
    %2592 = vmatpush1.bf16.msra.mxu0 %v2114
    %2593 = vmatprep.subr.bf16.mxu0 0
    %2594 = vmatpush1.bf16.msra.mxu0 %v2115
    %2595 = vmatprep.subr.bf16.mxu0 0
    %2596 = vmatpush1.bf16.msra.mxu0 %v2116
    %2597 = vmatprep.subr.bf16.mxu0 0
    %2598 = vmatpush1.bf16.msra.mxu0 %v2117
    %2599 = vmatprep.subr.bf16.mxu0 0
    %2600 = vmatpush1.bf16.msra.mxu0 %v2118
    %2601 = vmatprep.subr.bf16.mxu0 0
    %2602 = vmatpush1.bf16.msra.mxu0 %v2119
    %2603 = vmatprep.subr.bf16.mxu0 0
    %2604 = vmatpush1.bf16.msra.mxu0 %v2120
    %2605 = vmatprep.subr.bf16.mxu0 0
    %2606 = vmatpush1.bf16.msra.mxu0 %v2121
    %2607 = vmatprep.subr.bf16.mxu0 0
    %2608 = vmatpush1.bf16.msra.mxu0 %v2122
    %2609 = vmatprep.subr.bf16.mxu0 0
    %2610 = vmatpush1.bf16.msra.mxu0 %v2123
    %2611 = vmatprep.mubr.bf16.mxu0 %v780
    %2612 = vmatmul.mubr.bf16.gmra.mrb[0].mxu0 %v779
    %v2613 = vpop.f32.mrb[0].mxu0
    %v2614 = vadd.f32 %v2549, %v2613
    %v2615 = vpop.f32.mrb[0].mxu0
    %v2616 = vpop.f32.mrb[0].mxu0
    %v2617 = vadd.f32 %v2552, %v2616
    %v2618 = vpop.f32.mrb[0].mxu0
    %2619 = vmatprep.mubr.bf16.mxu0 %v796
    %2620 = vmatmul.mubr.bf16.gmra.mrb[0].mxu0 %v795
    %v2621 = vpop.f32.mrb[0].mxu0
    %v2622 = vadd.f32 %v2557, %v2621
    %v2623 = vpop.f32.mrb[0].mxu0
    %v2624 = vpop.f32.mrb[0].mxu0
    %v2625 = vadd.f32 %v2560, %v2624
    %v2626 = vpop.f32.mrb[0].mxu0
    %2627 = vmatprep.mubr.bf16.mxu0 %v812
    %2628 = vmatmul.mubr.bf16.gmra.mrb[0].mxu0 %v811
    %v2629 = vpop.f32.mrb[0].mxu0
    %v2630 = vadd.f32 %v2565, %v2629
    %v2631 = vpop.f32.mrb[0].mxu0
    %v2632 = vpop.f32.mrb[0].mxu0
    %v2633 = vadd.f32 %v2568, %v2632
    %v2634 = vpop.f32.mrb[0].mxu0
    %2635 = vmatprep.mubr.bf16.mxu0 %v828
    %2636 = vmatmul.mubr.bf16.gmra.mrb[0].mxu0 %v827
    %v2637 = vpop.f32.mrb[0].mxu0
    %v2638 = vadd.f32 %v2573, %v2637
    %v2639 = vpop.f32.mrb[0].mxu0
    %v2640 = vpop.f32.mrb[0].mxu0
    %v2641 = vadd.f32 %v2576, %v2640
    %v2642 = vpop.f32.mrb[0].mxu0
    %2643 = vdwg.mxu0
    %v2644 = vmax.f32 %v2614, 0.0
    %v2645 = vmax.f32 %v2617, 0.0
    %v2646 = vmax.f32 %v2622, 0.0
    %v2647 = vmax.f32 %v2625, 0.0
    %v2648 = vmax.f32 %v2630, 0.0
    %v2649 = vmax.f32 %v2633, 0.0
    %v2650 = vmax.f32 %v2638, 0.0
    %v2651 = vmax.f32 %v2641, 0.0
    %2652 = vmatprep.subr.mxu0 0.0
    %2653 = vmatpush1.msra.mxu0 %v2644
    %2654 = vmatprep.subr.mxu0 0.0
    %2655 = vmatpush1.msra.mxu0 %v2645
    %2656 = vmatprep.subr.mxu0 0.0
    %2657 = vmatpush1.msra.mxu0 %v2646
    %2658 = vmatprep.subr.mxu0 0.0
    %2659 = vmatpush1.msra.mxu0 %v2647
    %2660 = vmatprep.subr.mxu0 0.0
    %2661 = vmatpush1.msra.mxu0 %v2648
    %2662 = vmatprep.subr.mxu0 0.0
    %2663 = vmatpush1.msra.mxu0 %v2649
    %2664 = vmatprep.subr.mxu0 0.0
    %2665 = vmatpush1.msra.mxu0 %v2650
    %2666 = vmatprep.subr.mxu0 0.0
    %2667 = vmatpush1.msra.mxu0 %v2651
    %2668 = vmatprep.subr.mxu0 0.0
    %2669 = vmatpush1.msra.mxu0 0.0
    %2670 = vmatprep.subr.mxu0 0.0
    %2671 = vmatpush1.msra.mxu0 0.0
    %2672 = vmatprep.subr.mxu0 0.0
    %2673 = vmatpush1.msra.mxu0 0.0
    %2674 = vmatprep.subr.mxu0 0.0
    %2675 = vmatpush1.msra.mxu0 0.0
    %2676 = vmatprep.subr.mxu0 0.0
    %2677 = vmatpush1.msra.mxu0 0.0
    %2678 = vmatprep.subr.mxu0 0.0
    %2679 = vmatpush1.msra.mxu0 0.0
    %2680 = vmatprep.subr.mxu0 0.0
    %2681 = vmatpush1.msra.mxu0 0.0
    %2682 = vmatprep.subr.mxu0 0.0
    %2683 = vmatpush1.msra.mxu0 0.0
    %2684 = vmatprep.subr.mxu0 0.0
    %2685 = vmatpush1.msra.mxu0 0.0
    %2686 = vmatprep.subr.mxu0 0.0
    %2687 = vmatpush1.msra.mxu0 0.0
    %2688 = vmatprep.subr.mxu0 0.0
    %2689 = vmatpush1.msra.mxu0 0.0
    %2690 = vmatprep.subr.mxu0 0.0
    %2691 = vmatpush1.msra.mxu0 0.0
    %2692 = vmatprep.subr.mxu0 0.0
    %2693 = vmatpush1.msra.mxu0 0.0
    %2694 = vmatprep.subr.mxu0 0.0
    %2695 = vmatpush1.msra.mxu0 0.0
    %2696 = vmatprep.subr.mxu0 0.0
    %2697 = vmatpush1.msra.mxu0 0.0
    %2698 = vmatprep.subr.mxu0 0.0
    %2699 = vmatpush1.msra.mxu0 0.0
    %2700 = vmatprep.subr.mxu0 0.0
    %2701 = vmatpush1.msra.mxu0 0.0
    %2702 = vmatprep.subr.mxu0 0.0
    %2703 = vmatpush1.msra.mxu0 0.0
    %2704 = vmatprep.subr.mxu0 0.0
    %2705 = vmatpush1.msra.mxu0 0.0
    %2706 = vmatprep.subr.mxu0 0.0
    %2707 = vmatpush1.msra.mxu0 0.0
    %2708 = vmatprep.subr.mxu0 0.0
    %2709 = vmatpush1.msra.mxu0 0.0
    %2710 = vmatprep.subr.mxu0 0.0
    %2711 = vmatpush1.msra.mxu0 0.0
    %2712 = vmatprep.subr.mxu0 0.0
    %2713 = vmatpush1.msra.mxu0 0.0
    %2714 = vmatprep.subr.mxu0 0.0
    %2715 = vmatpush1.msra.mxu0 0.0
    %2716 = vmatprep.mubr.f32.mxu0 0.0
    %2717 = vmatmul.mubr.f32.gmra.mrb[0].mxu0 %v1434
    %v2718 = vpop.f32.mrb[0].mxu0
    %v2719 = vadd.f32 %v1423, %v2718
    %v2720 = vpop.f32.mrb[0].mxu0
    %2721 = vmatprep.mubr.f32.mxu0 0.0
    %2722 = vmatmul.mubr.f32.gmra.mrb[0].mxu0 %v1436
    %v2723 = vpop.f32.mrb[0].mxu0
    %v2724 = vadd.f32 %v1427, %v2723
    %v2725 = vpop.f32.mrb[0].mxu0
    %2726 = vdwg.mxu0
    %v2727 = vmax.f32 %v2719, 0.0
    %v2728 = vmax.f32 %v2724, 0.0
    %2729 = vmatprep.subr.mxu0 0.0
    %2730 = vmatpush1.msra.mxu0 %v2727
    %2731 = vmatprep.subr.mxu0 0.0
    %2732 = vmatpush1.msra.mxu0 %v2728
    %2733 = vmatprep.subr.mxu0 0.0
    %2734 = vmatpush1.msra.mxu0 0.0
    %2735 = vmatprep.subr.mxu0 0.0
    %2736 = vmatpush1.msra.mxu0 0.0
    %2737 = vmatprep.subr.mxu0 0.0
    %2738 = vmatpush1.msra.mxu0 0.0
    %2739 = vmatprep.subr.mxu0 0.0
    %2740 = vmatpush1.msra.mxu0 0.0
    %2741 = vmatprep.subr.mxu0 0.0
    %2742 = vmatpush1.msra.mxu0 0.0
    %2743 = vmatprep.subr.mxu0 0.0
    %2744 = vmatpush1.msra.mxu0 0.0
    %2745 = vmatprep.subr.mxu0 0.0
    %2746 = vmatpush1.msra.mxu0 0.0
    %2747 = vmatprep.subr.mxu0 0.0
    %2748 = vmatpush1.msra.mxu0 0.0
    %2749 = vmatprep.subr.mxu0 0.0
    %2750 = vmatpush1.msra.mxu0 0.0
    %2751 = vmatprep.subr.mxu0 0.0
    %2752 = vmatpush1.msra.mxu0 0.0
    %2753 = vmatprep.subr.mxu0 0.0
    %2754 = vmatpush1.msra.mxu0 0.0
    %2755 = vmatprep.subr.mxu0 0.0
    %2756 = vmatpush1.msra.mxu0 0.0
    %2757 = vmatprep.subr.mxu0 0.0
    %2758 = vmatpush1.msra.mxu0 0.0
    %2759 = vmatprep.subr.mxu0 0.0
    %2760 = vmatpush1.msra.mxu0 0.0
    %2761 = vmatprep.subr.mxu0 0.0
    %2762 = vmatpush1.msra.mxu0 0.0
    %2763 = vmatprep.subr.mxu0 0.0
    %2764 = vmatpush1.msra.mxu0 0.0
    %2765 = vmatprep.subr.mxu0 0.0
    %2766 = vmatpush1.msra.mxu0 0.0
    %2767 = vmatprep.subr.mxu0 0.0
    %2768 = vmatpush1.msra.mxu0 0.0
    %2769 = vmatprep.subr.mxu0 0.0
    %2770 = vmatpush1.msra.mxu0 0.0
    %2771 = vmatprep.subr.mxu0 0.0
    %2772 = vmatpush1.msra.mxu0 0.0
    %2773 = vmatprep.subr.mxu0 0.0
    %2774 = vmatpush1.msra.mxu0 0.0
    %2775 = vmatprep.subr.mxu0 0.0
    %2776 = vmatpush1.msra.mxu0 0.0
    %2777 = vmatprep.subr.mxu0 0.0
    %2778 = vmatpush1.msra.mxu0 0.0
    %2779 = vmatprep.subr.mxu0 0.0
    %2780 = vmatpush1.msra.mxu0 0.0
    %2781 = vmatprep.subr.mxu0 0.0
    %2782 = vmatpush1.msra.mxu0 0.0
    %2783 = vmatprep.subr.mxu0 0.0
    %2784 = vmatpush1.msra.mxu0 0.0
    %2785 = vmatprep.subr.mxu0 0.0
    %2786 = vmatpush1.msra.mxu0 0.0
    %2787 = vmatprep.subr.mxu0 0.0
    %2788 = vmatpush1.msra.mxu0 0.0
    %2789 = vmatprep.subr.mxu0 0.0
    %2790 = vmatpush1.msra.mxu0 0.0
    %2791 = vmatprep.subr.mxu0 0.0
    %2792 = vmatpush1.msra.mxu0 0.0
    %2793 = vmatprep.mubr.f32.mxu0 0.0
    %2794 = vmatmul.mubr.f32.gmra.mrb[0].mxu0 %v1522
    %v2795 = vpop.f32.mrb[0].mxu0
    %v2796 = vadd.f32 %v1517, %v2795
    %v2797 = vpop.f32.mrb[0].mxu0
    %2798 = vdwg.mxu0
    %v2799 = vmax.f32 %v2796, 0.0
    %2800 = vmatprep.subr.mxu0 0.0
    %2801 = vmatpush1.msra.mxu0 %v2799
    %2802 = vmatprep.subr.mxu0 0.0
    %2803 = vmatpush1.msra.mxu0 0.0
    %2804 = vmatprep.subr.mxu0 0.0
    %2805 = vmatpush1.msra.mxu0 0.0
    %2806 = vmatprep.subr.mxu0 0.0
    %2807 = vmatpush1.msra.mxu0 0.0
    %2808 = vmatprep.subr.mxu0 0.0
    %2809 = vmatpush1.msra.mxu0 0.0
    %2810 = vmatprep.subr.mxu0 0.0
    %2811 = vmatpush1.msra.mxu0 0.0
    %2812 = vmatprep.subr.mxu0 0.0
    %2813 = vmatpush1.msra.mxu0 0.0
    %2814 = vmatprep.subr.mxu0 0.0
    %2815 = vmatpush1.msra.mxu0 0.0
    %2816 = vmatprep.subr.mxu0 0.0
    %2817 = vmatpush1.msra.mxu0 0.0
    %2818 = vmatprep.subr.mxu0 0.0
    %2819 = vmatpush1.msra.mxu0 0.0
    %2820 = vmatprep.subr.mxu0 0.0
    %2821 = vmatpush1.msra.mxu0 0.0
    %2822 = vmatprep.subr.mxu0 0.0
    %2823 = vmatpush1.msra.mxu0 0.0
    %2824 = vmatprep.subr.mxu0 0.0
    %2825 = vmatpush1.msra.mxu0 0.0
    %2826 = vmatprep.subr.mxu0 0.0
    %2827 = vmatpush1.msra.mxu0 0.0
    %2828 = vmatprep.subr.mxu0 0.0
    %2829 = vmatpush1.msra.mxu0 0.0
    %2830 = vmatprep.subr.mxu0 0.0
    %2831 = vmatpush1.msra.mxu0 0.0
    %2832 = vmatprep.subr.mxu0 0.0
    %2833 = vmatpush1.msra.mxu0 0.0
    %2834 = vmatprep.subr.mxu0 0.0
    %2835 = vmatpush1.msra.mxu0 0.0
    %2836 = vmatprep.subr.mxu0 0.0
    %2837 = vmatpush1.msra.mxu0 0.0
    %2838 = vmatprep.subr.mxu0 0.0
    %2839 = vmatpush1.msra.mxu0 0.0
    %2840 = vmatprep.subr.mxu0 0.0
    %2841 = vmatpush1.msra.mxu0 0.0
    %2842 = vmatprep.subr.mxu0 0.0
    %2843 = vmatpush1.msra.mxu0 0.0
    %2844 = vmatprep.subr.mxu0 0.0
    %2845 = vmatpush1.msra.mxu0 0.0
    %2846 = vmatprep.subr.mxu0 0.0
    %2847 = vmatpush1.msra.mxu0 0.0
    %2848 = vmatprep.subr.mxu0 0.0
    %2849 = vmatpush1.msra.mxu0 0.0
    %2850 = vmatprep.subr.mxu0 0.0
    %2851 = vmatpush1.msra.mxu0 0.0
    %2852 = vmatprep.subr.mxu0 0.0
    %2853 = vmatpush1.msra.mxu0 0.0
    %2854 = vmatprep.subr.mxu0 0.0
    %2855 = vmatpush1.msra.mxu0 0.0
    %2856 = vmatprep.subr.mxu0 0.0
    %2857 = vmatpush1.msra.mxu0 0.0
    %2858 = vmatprep.subr.mxu0 0.0
    %2859 = vmatpush1.msra.mxu0 0.0
    %2860 = vmatprep.subr.mxu0 0.0
    %2861 = vmatpush1.msra.mxu0 0.0
    %2862 = vmatprep.subr.mxu0 0.0
    %2863 = vmatpush1.msra.mxu0 0.0
    %2864 = vmatprep.mubr.f32.mxu0 0.0
    %2865 = vmatmul.mubr.f32.gmra.mrb[0].mxu0 %v1604
    %v2866 = vpop.f32.mrb[0].mxu0
    %v2867 = vadd.f32 %v1598, %v2866
    %v2868 = vpop.f32.mrb[0].mxu0
    %2869 = vdwg.mxu0
    %v2870 = vxor.u32 %v2867, 2147483648
    %v2871 = vmul.f32 %v2870, 1.442695
    %v2872 = vpow.pop %v2871
    %v2873 = vadd.f32 %v2872, 1.0
    %v2874 = vrcp.pop %v2873
    %v2875 = vmul.f32 1.0, %v2874
    %vm2876 = vcmp.eq.s32.totalorder %v148, 1
    %v2877 = vsel %vm2876, 1, 0
    %v2878 = vcvt.s32.f32 %v2877
    %v2879 = vsel %vm1685, %v2875, 0.0
    %2880 = vadd.xlane.f32.xlu0 %v2879
    %v2881 = vpop.xlane.xlu0 %2880
    %v2882 = vmul.f32 %v2881, %v2878
    %v2883 = vadd.f32 %v1690, %v2882
    %v2884 = vlaneseq
    %v2885 = vshrl.u32 %v2884, 7
    %v2886 = vsub.s32 0, %v2885
    %v2887 = vrot.slane %v2875, %v2886
    %v2888 = vmul.f32 %v139, %v2887
    %v2889 = vmul.f32 %v140, %v2887
    %v2890 = vmul.f32 %v141, %v2887
    %v2891 = vmul.f32 %v142, %v2887
    %v2892 = vmul.f32 %v143, %v2887
    %v2893 = vmul.f32 %v144, %v2887
    %v2894 = vmul.f32 %v145, %v2887
    %v2895 = vmul.f32 %v146, %v2887
    %v2896 = vsel %vm1433, %v2888, 0.0
    %2897 = vadd.xlane.f32.xlu0 %v2896
    %v2898 = vpop.xlane.xlu0 %2897
    %v2899 = vsel %vm1433, %v2889, 0.0
    %2900 = vadd.xlane.f32.xlu0 %v2899
    %v2901 = vpop.xlane.xlu0 %2900
    %v2902 = vsel %vm1433, %v2890, 0.0
    %2903 = vadd.xlane.f32.xlu0 %v2902
    %v2904 = vpop.xlane.xlu0 %2903
    %v2905 = vsel %vm1433, %v2891, 0.0
    %2906 = vadd.xlane.f32.xlu0 %v2905
    %v2907 = vpop.xlane.xlu0 %2906
    %v2908 = vsel %vm1433, %v2892, 0.0
    %2909 = vadd.xlane.f32.xlu0 %v2908
    %v2910 = vpop.xlane.xlu0 %2909
    %v2911 = vsel %vm1433, %v2893, 0.0
    %2912 = vadd.xlane.f32.xlu0 %v2911
    %v2913 = vpop.xlane.xlu0 %2912
    %v2914 = vsel %vm1433, %v2894, 0.0
    %2915 = vadd.xlane.f32.xlu0 %v2914
    %v2916 = vpop.xlane.xlu0 %2915
    %v2917 = vsel %vm1433, %v2895, 0.0
    %2918 = vadd.xlane.f32.xlu0 %v2917
    %v2919 = vpop.xlane.xlu0 %2918
    %v2920 = vmul.f32 %v2898, %v2878
    %v2921 = vmul.f32 %v2901, %v2878
    %v2922 = vmul.f32 %v2904, %v2878
    %v2923 = vmul.f32 %v2907, %v2878
    %v2924 = vmul.f32 %v2910, %v2878
    %v2925 = vmul.f32 %v2913, %v2878
    %v2926 = vmul.f32 %v2916, %v2878
    %v2927 = vmul.f32 %v2919, %v2878
    %v2928 = vpack.c.bf16 %v2921, %v2920
    %v2929 = vpack.c.bf16 %v2923, %v2922
    %v2930 = vpack.c.bf16 %v2925, %v2924
    %v2931 = vpack.c.bf16 %v2927, %v2926
    %v2933 = vsel %vm1433, %v1996, 0
    %v2936 = vsel %vm1433, %v1997, 0
    %v2939 = vsel %vm1433, %v1998, 0
    %v2942 = vsel %vm1433, %v1999, 0
    %v2945 = vsel %vm1433, %v2000, 0
    %v2948 = vsel %vm1433, %v2001, 0
    %v2951 = vsel %vm1433, %v2002, 0
    %v2954 = vsel %vm1433, %v2003, 0
    %v2957 = vsel %vm1433, %v2004, 0
    %v2960 = vsel %vm1433, %v2005, 0
    %v2963 = vsel %vm1433, %v2006, 0
    %v2966 = vsel %vm1433, %v2007, 0
    %v2969 = vsel %vm1433, %v2008, 0
    %v2972 = vsel %vm1433, %v2009, 0
    %v2975 = vsel %vm1433, %v2010, 0
    %v2978 = vsel %vm1433, %v2011, 0
    %v2981 = vsel %vm1433, %v2012, 0
    %v2984 = vsel %vm1433, %v2013, 0
    %v2987 = vsel %vm1433, %v2014, 0
    %v2990 = vsel %vm1433, %v2015, 0
    %v2993 = vsel %vm1433, %v2016, 0
    %v2996 = vsel %vm1433, %v2017, 0
    %v2999 = vsel %vm1433, %v2018, 0
    %v3002 = vsel %vm1433, %v2019, 0
    %v3005 = vsel %vm1433, %v2020, 0
    %v3008 = vsel %vm1433, %v2021, 0
    %v3011 = vsel %vm1433, %v2022, 0
    %v3014 = vsel %vm1433, %v2023, 0
    %v3017 = vsel %vm1433, %v2024, 0
    %v3020 = vsel %vm1433, %v2025, 0
    %v3023 = vsel %vm1433, %v2026, 0
    %v3026 = vsel %vm1433, %v2027, 0
    %v3029 = vsel %vm1433, %v2028, 0
    %v3032 = vsel %vm1433, %v2029, 0
    %v3035 = vsel %vm1433, %v2030, 0
    %v3038 = vsel %vm1433, %v2031, 0
    %v3041 = vsel %vm1433, %v2032, 0
    %v3044 = vsel %vm1433, %v2033, 0
    %v3047 = vsel %vm1433, %v2034, 0
    %v3050 = vsel %vm1433, %v2035, 0
    %v3053 = vsel %vm1433, %v2036, 0
    %v3056 = vsel %vm1433, %v2037, 0
    %v3059 = vsel %vm1433, %v2038, 0
    %v3062 = vsel %vm1433, %v2039, 0
    %v3065 = vsel %vm1433, %v2040, 0
    %v3068 = vsel %vm1433, %v2041, 0
    %v3071 = vsel %vm1433, %v2042, 0
    %v3074 = vsel %vm1433, %v2043, 0
    %v3077 = vsel %vm1433, %v2044, 0
    %v3080 = vsel %vm1433, %v2045, 0
    %v3083 = vsel %vm1433, %v2046, 0
    %v3086 = vsel %vm1433, %v2047, 0
    %v3089 = vsel %vm1433, %v2048, 0
    %v3092 = vsel %vm1433, %v2049, 0
    %v3095 = vsel %vm1433, %v2050, 0
    %v3098 = vsel %vm1433, %v2051, 0
    %v3101 = vsel %vm1433, %v2052, 0
    %v3104 = vsel %vm1433, %v2053, 0
    %v3107 = vsel %vm1433, %v2054, 0
    %v3110 = vsel %vm1433, %v2055, 0
    %v3113 = vsel %vm1433, %v2056, 0
    %v3116 = vsel %vm1433, %v2057, 0
    %v3119 = vsel %vm1433, %v2058, 0
    %v3122 = vsel %vm1433, %v2059, 0
    %v3125 = vsel %vm1433, %v2060, 0
    %v3128 = vsel %vm1433, %v2061, 0
    %v3131 = vsel %vm1433, %v2062, 0
    %v3134 = vsel %vm1433, %v2063, 0
    %v3137 = vsel %vm1433, %v2064, 0
    %v3140 = vsel %vm1433, %v2065, 0
    %v3143 = vsel %vm1433, %v2066, 0
    %v3146 = vsel %vm1433, %v2067, 0
    %v3149 = vsel %vm1433, %v2068, 0
    %v3152 = vsel %vm1433, %v2069, 0
    %v3155 = vsel %vm1433, %v2070, 0
    %v3158 = vsel %vm1433, %v2071, 0
    %v3161 = vsel %vm1433, %v2072, 0
    %v3164 = vsel %vm1433, %v2073, 0
    %v3167 = vsel %vm1433, %v2074, 0
    %v3170 = vsel %vm1433, %v2075, 0
    %v3173 = vsel %vm1433, %v2076, 0
    %v3176 = vsel %vm1433, %v2077, 0
    %v3179 = vsel %vm1433, %v2078, 0
    %v3182 = vsel %vm1433, %v2079, 0
    %v3185 = vsel %vm1433, %v2080, 0
    %v3188 = vsel %vm1433, %v2081, 0
    %v3191 = vsel %vm1433, %v2082, 0
    %v3194 = vsel %vm1433, %v2083, 0
    %v3197 = vsel %vm1433, %v2084, 0
    %v3200 = vsel %vm1433, %v2085, 0
    %v3203 = vsel %vm1433, %v2086, 0
    %v3206 = vsel %vm1433, %v2087, 0
    %v3209 = vsel %vm1433, %v2088, 0
    %v3212 = vsel %vm1433, %v2089, 0
    %v3215 = vsel %vm1433, %v2090, 0
    %v3218 = vsel %vm1433, %v2091, 0
    %v3221 = vsel %vm1433, %v2092, 0
    %v3224 = vsel %vm1433, %v2093, 0
    %v3227 = vsel %vm1433, %v2094, 0
    %v3230 = vsel %vm1433, %v2095, 0
    %v3233 = vsel %vm1433, %v2096, 0
    %v3236 = vsel %vm1433, %v2097, 0
    %v3239 = vsel %vm1433, %v2098, 0
    %v3242 = vsel %vm1433, %v2099, 0
    %v3245 = vsel %vm1433, %v2100, 0
    %v3248 = vsel %vm1433, %v2101, 0
    %v3251 = vsel %vm1433, %v2102, 0
    %v3254 = vsel %vm1433, %v2103, 0
    %v3257 = vsel %vm1433, %v2104, 0
    %v3260 = vsel %vm1433, %v2105, 0
    %v3263 = vsel %vm1433, %v2106, 0
    %v3266 = vsel %vm1433, %v2107, 0
    %v3269 = vsel %vm1433, %v2108, 0
    %v3272 = vsel %vm1433, %v2109, 0
    %v3275 = vsel %vm1433, %v2110, 0
    %v3278 = vsel %vm1433, %v2111, 0
    %v3281 = vsel %vm1433, %v2112, 0
    %v3284 = vsel %vm1433, %v2113, 0
    %v3287 = vsel %vm1433, %v2114, 0
    %v3290 = vsel %vm1433, %v2115, 0
    %v3293 = vsel %vm1433, %v2116, 0
    %v3296 = vsel %vm1433, %v2117, 0
    %v3299 = vsel %vm1433, %v2118, 0
    %v3302 = vsel %vm1433, %v2119, 0
    %v3305 = vsel %vm1433, %v2120, 0
    %v3308 = vsel %vm1433, %v2121, 0
    %v3311 = vsel %vm1433, %v2122, 0
    %v3314 = vsel %vm1433, %v2123, 0
    %3316 = vmatprep.subr.bf16.mxu0 0
    %3317 = vmatpush1.bf16.msra.mxu0 %v2928
    %3318 = vmatprep.subr.bf16.mxu0 0
    %3319 = vmatpush1.bf16.msra.mxu0 %v2929
    %3320 = vmatprep.subr.bf16.mxu0 0
    %3321 = vmatpush1.bf16.msra.mxu0 %v2930
    %3322 = vmatprep.subr.bf16.mxu0 0
    %3323 = vmatpush1.bf16.msra.mxu0 %v2931
    %3324 = vmatprep.subr.bf16.mxu0 0
    %3325 = vmatpush1.bf16.msra.mxu0 0
    %3326 = vmatprep.subr.bf16.mxu0 0
    %3327 = vmatpush1.bf16.msra.mxu0 0
    %3328 = vmatprep.subr.bf16.mxu0 0
    %3329 = vmatpush1.bf16.msra.mxu0 0
    %3330 = vmatprep.subr.bf16.mxu0 0
    %3331 = vmatpush1.bf16.msra.mxu0 0
    %3332 = vmatprep.subr.bf16.mxu0 0
    %3333 = vmatpush1.bf16.msra.mxu0 0
    %3334 = vmatprep.subr.bf16.mxu0 0
    %3335 = vmatpush1.bf16.msra.mxu0 0
    %3336 = vmatprep.subr.bf16.mxu0 0
    %3337 = vmatpush1.bf16.msra.mxu0 0
    %3338 = vmatprep.subr.bf16.mxu0 0
    %3339 = vmatpush1.bf16.msra.mxu0 0
    %3340 = vmatprep.subr.bf16.mxu0 0
    %3341 = vmatpush1.bf16.msra.mxu0 0
    %3342 = vmatprep.subr.bf16.mxu0 0
    %3343 = vmatpush1.bf16.msra.mxu0 0
    %3344 = vmatprep.subr.bf16.mxu0 0
    %3345 = vmatpush1.bf16.msra.mxu0 0
    %3346 = vmatprep.subr.bf16.mxu0 0
    %3347 = vmatpush1.bf16.msra.mxu0 0
    %3348 = vmatprep.mubr.bf16.mxu0 0
    %3349 = vmatmul.mubr.bf16.gmra.mrb[0].mxu0 %v2933
    %v3350 = vpop.f32.mrb[0].mxu0
    %v3351 = vadd.f32 0.0, %v3350
    %v3352 = vpop.f32.mrb[0].mxu0
    %v3353 = vpop.f32.mrb[0].mxu0
    %v3354 = vadd.f32 0.0, %v3353
    %v3355 = vpop.f32.mrb[0].mxu0
    %3356 = vmatprep.mubr.bf16.mxu0 0
    %3357 = vmatmul.mubr.bf16.gmra.mrb[0].mxu0 %v2936
    %v3358 = vpop.f32.mrb[0].mxu0
    %v3359 = vadd.f32 0.0, %v3358
    %v3360 = vpop.f32.mrb[0].mxu0
    %v3361 = vpop.f32.mrb[0].mxu0
    %v3362 = vadd.f32 0.0, %v3361
    %v3363 = vpop.f32.mrb[0].mxu0
    %3364 = vmatprep.mubr.bf16.mxu0 0
    %3365 = vmatmul.mubr.bf16.gmra.mrb[0].mxu0 %v2939
    %v3366 = vpop.f32.mrb[0].mxu0
    %v3367 = vadd.f32 0.0, %v3366
    %v3368 = vpop.f32.mrb[0].mxu0
    %v3369 = vpop.f32.mrb[0].mxu0
    %v3370 = vadd.f32 0.0, %v3369
    %v3371 = vpop.f32.mrb[0].mxu0
    %3372 = vmatprep.mubr.bf16.mxu0 0
    %3373 = vmatmul.mubr.bf16.gmra.mrb[0].mxu0 %v2942
    %v3374 = vpop.f32.mrb[0].mxu0
    %v3375 = vadd.f32 0.0, %v3374
    %v3376 = vpop.f32.mrb[0].mxu0
    %v3377 = vpop.f32.mrb[0].mxu0
    %v3378 = vadd.f32 0.0, %v3377
    %v3379 = vpop.f32.mrb[0].mxu0
    %3380 = vmatprep.mubr.bf16.mxu0 0
    %3381 = vmatmul.mubr.bf16.gmra.mrb[0].mxu0 %v2945
    %v3382 = vpop.f32.mrb[0].mxu0
    %v3383 = vadd.f32 0.0, %v3382
    %v3384 = vpop.f32.mrb[0].mxu0
    %v3385 = vpop.f32.mrb[0].mxu0
    %v3386 = vadd.f32 0.0, %v3385
    %v3387 = vpop.f32.mrb[0].mxu0
    %3388 = vmatprep.mubr.bf16.mxu0 0
    %3389 = vmatmul.mubr.bf16.gmra.mrb[0].mxu0 %v2948
    %v3390 = vpop.f32.mrb[0].mxu0
    %v3391 = vadd.f32 0.0, %v3390
    %v3392 = vpop.f32.mrb[0].mxu0
    %v3393 = vpop.f32.mrb[0].mxu0
    %v3394 = vadd.f32 0.0, %v3393
    %v3395 = vpop.f32.mrb[0].mxu0
    %3396 = vmatprep.mubr.bf16.mxu0 0
    %3397 = vmatmul.mubr.bf16.gmra.mrb[0].mxu0 %v2951
    %v3398 = vpop.f32.mrb[0].mxu0
    %v3399 = vadd.f32 0.0, %v3398
    %v3400 = vpop.f32.mrb[0].mxu0
    %v3401 = vpop.f32.mrb[0].mxu0
    %v3402 = vadd.f32 0.0, %v3401
    %v3403 = vpop.f32.mrb[0].mxu0
    %3404 = vmatprep.mubr.bf16.mxu0 0
    %3405 = vmatmul.mubr.bf16.gmra.mrb[0].mxu0 %v2954
    %v3406 = vpop.f32.mrb[0].mxu0
    %v3407 = vadd.f32 0.0, %v3406
    %v3408 = vpop.f32.mrb[0].mxu0
    %v3409 = vpop.f32.mrb[0].mxu0
    %v3410 = vadd.f32 0.0, %v3409
    %v3411 = vpop.f32.mrb[0].mxu0
    %3412 = vmatprep.mubr.bf16.mxu0 0
    %3413 = vmatmul.mubr.bf16.gmra.mrb[0].mxu0 %v2957
    %v3414 = vpop.f32.mrb[0].mxu0
    %v3415 = vadd.f32 0.0, %v3414
    %v3416 = vpop.f32.mrb[0].mxu0
    %v3417 = vpop.f32.mrb[0].mxu0
    %v3418 = vadd.f32 0.0, %v3417
    %v3419 = vpop.f32.mrb[0].mxu0
    %3420 = vmatprep.mubr.bf16.mxu0 0
    %3421 = vmatmul.mubr.bf16.gmra.mrb[0].mxu0 %v2960
    %v3422 = vpop.f32.mrb[0].mxu0
    %v3423 = vadd.f32 0.0, %v3422
    %v3424 = vpop.f32.mrb[0].mxu0
    %v3425 = vpop.f32.mrb[0].mxu0
    %v3426 = vadd.f32 0.0, %v3425
    %v3427 = vpop.f32.mrb[0].mxu0
    %3428 = vmatprep.mubr.bf16.mxu0 0
    %3429 = vmatmul.mubr.bf16.gmra.mrb[0].mxu0 %v2963
    %v3430 = vpop.f32.mrb[0].mxu0
    %v3431 = vadd.f32 0.0, %v3430
    %v3432 = vpop.f32.mrb[0].mxu0
    %v3433 = vpop.f32.mrb[0].mxu0
    %v3434 = vadd.f32 0.0, %v3433
    %v3435 = vpop.f32.mrb[0].mxu0
    %3436 = vmatprep.mubr.bf16.mxu0 0
    %3437 = vmatmul.mubr.bf16.gmra.mrb[0].mxu0 %v2966
    %v3438 = vpop.f32.mrb[0].mxu0
    %v3439 = vadd.f32 0.0, %v3438
    %v3440 = vpop.f32.mrb[0].mxu0
    %v3441 = vpop.f32.mrb[0].mxu0
    %v3442 = vadd.f32 0.0, %v3441
    %v3443 = vpop.f32.mrb[0].mxu0
    %3444 = vmatprep.mubr.bf16.mxu0 0
    %3445 = vmatmul.mubr.bf16.gmra.mrb[0].mxu0 %v2969
    %v3446 = vpop.f32.mrb[0].mxu0
    %v3447 = vadd.f32 0.0, %v3446
    %v3448 = vpop.f32.mrb[0].mxu0
    %v3449 = vpop.f32.mrb[0].mxu0
    %v3450 = vadd.f32 0.0, %v3449
    %v3451 = vpop.f32.mrb[0].mxu0
    %3452 = vmatprep.mubr.bf16.mxu0 0
    %3453 = vmatmul.mubr.bf16.gmra.mrb[0].mxu0 %v2972
    %v3454 = vpop.f32.mrb[0].mxu0
    %v3455 = vadd.f32 0.0, %v3454
    %v3456 = vpop.f32.mrb[0].mxu0
    %v3457 = vpop.f32.mrb[0].mxu0
    %v3458 = vadd.f32 0.0, %v3457
    %v3459 = vpop.f32.mrb[0].mxu0
    %3460 = vmatprep.mubr.bf16.mxu0 0
    %3461 = vmatmul.mubr.bf16.gmra.mrb[0].mxu0 %v2975
    %v3462 = vpop.f32.mrb[0].mxu0
    %v3463 = vadd.f32 0.0, %v3462
    %v3464 = vpop.f32.mrb[0].mxu0
    %v3465 = vpop.f32.mrb[0].mxu0
    %v3466 = vadd.f32 0.0, %v3465
    %v3467 = vpop.f32.mrb[0].mxu0
    %3468 = vmatprep.mubr.bf16.mxu0 0
    %3469 = vmatmul.mubr.bf16.gmra.mrb[0].mxu0 %v2978
    %v3470 = vpop.f32.mrb[0].mxu0
    %v3471 = vadd.f32 0.0, %v3470
    %v3472 = vpop.f32.mrb[0].mxu0
    %v3473 = vpop.f32.mrb[0].mxu0
    %v3474 = vadd.f32 0.0, %v3473
    %v3475 = vpop.f32.mrb[0].mxu0
    %3476 = vmatprep.mubr.bf16.mxu0 0
    %3477 = vmatmul.mubr.bf16.gmra.mrb[0].mxu0 %v2981
    %v3478 = vpop.f32.mrb[0].mxu0
    %v3479 = vadd.f32 0.0, %v3478
    %v3480 = vpop.f32.mrb[0].mxu0
    %v3481 = vpop.f32.mrb[0].mxu0
    %v3482 = vadd.f32 0.0, %v3481
    %v3483 = vpop.f32.mrb[0].mxu0
    %3484 = vmatprep.mubr.bf16.mxu0 0
    %3485 = vmatmul.mubr.bf16.gmra.mrb[0].mxu0 %v2984
    %v3486 = vpop.f32.mrb[0].mxu0
    %v3487 = vadd.f32 0.0, %v3486
    %v3488 = vpop.f32.mrb[0].mxu0
    %v3489 = vpop.f32.mrb[0].mxu0
    %v3490 = vadd.f32 0.0, %v3489
    %v3491 = vpop.f32.mrb[0].mxu0
    %3492 = vmatprep.mubr.bf16.mxu0 0
    %3493 = vmatmul.mubr.bf16.gmra.mrb[0].mxu0 %v2987
    %v3494 = vpop.f32.mrb[0].mxu0
    %v3495 = vadd.f32 0.0, %v3494
    %v3496 = vpop.f32.mrb[0].mxu0
    %v3497 = vpop.f32.mrb[0].mxu0
    %v3498 = vadd.f32 0.0, %v3497
    %v3499 = vpop.f32.mrb[0].mxu0
    %3500 = vmatprep.mubr.bf16.mxu0 0
    %3501 = vmatmul.mubr.bf16.gmra.mrb[0].mxu0 %v2990
    %v3502 = vpop.f32.mrb[0].mxu0
    %v3503 = vadd.f32 0.0, %v3502
    %v3504 = vpop.f32.mrb[0].mxu0
    %v3505 = vpop.f32.mrb[0].mxu0
    %v3506 = vadd.f32 0.0, %v3505
    %v3507 = vpop.f32.mrb[0].mxu0
    %3508 = vmatprep.mubr.bf16.mxu0 0
    %3509 = vmatmul.mubr.bf16.gmra.mrb[0].mxu0 %v2993
    %v3510 = vpop.f32.mrb[0].mxu0
    %v3511 = vadd.f32 0.0, %v3510
    %v3512 = vpop.f32.mrb[0].mxu0
    %v3513 = vpop.f32.mrb[0].mxu0
    %v3514 = vadd.f32 0.0, %v3513
    %v3515 = vpop.f32.mrb[0].mxu0
    %3516 = vmatprep.mubr.bf16.mxu0 0
    %3517 = vmatmul.mubr.bf16.gmra.mrb[0].mxu0 %v2996
    %v3518 = vpop.f32.mrb[0].mxu0
    %v3519 = vadd.f32 0.0, %v3518
    %v3520 = vpop.f32.mrb[0].mxu0
    %v3521 = vpop.f32.mrb[0].mxu0
    %v3522 = vadd.f32 0.0, %v3521
    %v3523 = vpop.f32.mrb[0].mxu0
    %3524 = vmatprep.mubr.bf16.mxu0 0
    %3525 = vmatmul.mubr.bf16.gmra.mrb[0].mxu0 %v2999
    %v3526 = vpop.f32.mrb[0].mxu0
    %v3527 = vadd.f32 0.0, %v3526
    %v3528 = vpop.f32.mrb[0].mxu0
    %v3529 = vpop.f32.mrb[0].mxu0
    %v3530 = vadd.f32 0.0, %v3529
    %v3531 = vpop.f32.mrb[0].mxu0
    %3532 = vmatprep.mubr.bf16.mxu0 0
    %3533 = vmatmul.mubr.bf16.gmra.mrb[0].mxu0 %v3002
    %v3534 = vpop.f32.mrb[0].mxu0
    %v3535 = vadd.f32 0.0, %v3534
    %v3536 = vpop.f32.mrb[0].mxu0
    %v3537 = vpop.f32.mrb[0].mxu0
    %v3538 = vadd.f32 0.0, %v3537
    %v3539 = vpop.f32.mrb[0].mxu0
    %3540 = vmatprep.mubr.bf16.mxu0 0
    %3541 = vmatmul.mubr.bf16.gmra.mrb[0].mxu0 %v3005
    %v3542 = vpop.f32.mrb[0].mxu0
    %v3543 = vadd.f32 0.0, %v3542
    %v3544 = vpop.f32.mrb[0].mxu0
    %v3545 = vpop.f32.mrb[0].mxu0
    %v3546 = vadd.f32 0.0, %v3545
    %v3547 = vpop.f32.mrb[0].mxu0
    %3548 = vmatprep.mubr.bf16.mxu0 0
    %3549 = vmatmul.mubr.bf16.gmra.mrb[0].mxu0 %v3008
    %v3550 = vpop.f32.mrb[0].mxu0
    %v3551 = vadd.f32 0.0, %v3550
    %v3552 = vpop.f32.mrb[0].mxu0
    %v3553 = vpop.f32.mrb[0].mxu0
    %v3554 = vadd.f32 0.0, %v3553
    %v3555 = vpop.f32.mrb[0].mxu0
    %3556 = vmatprep.mubr.bf16.mxu0 0
    %3557 = vmatmul.mubr.bf16.gmra.mrb[0].mxu0 %v3011
    %v3558 = vpop.f32.mrb[0].mxu0
    %v3559 = vadd.f32 0.0, %v3558
    %v3560 = vpop.f32.mrb[0].mxu0
    %v3561 = vpop.f32.mrb[0].mxu0
    %v3562 = vadd.f32 0.0, %v3561
    %v3563 = vpop.f32.mrb[0].mxu0
    %3564 = vmatprep.mubr.bf16.mxu0 0
    %3565 = vmatmul.mubr.bf16.gmra.mrb[0].mxu0 %v3014
    %v3566 = vpop.f32.mrb[0].mxu0
    %v3567 = vadd.f32 0.0, %v3566
    %v3568 = vpop.f32.mrb[0].mxu0
    %v3569 = vpop.f32.mrb[0].mxu0
    %v3570 = vadd.f32 0.0, %v3569
    %v3571 = vpop.f32.mrb[0].mxu0
    %3572 = vmatprep.mubr.bf16.mxu0 0
    %3573 = vmatmul.mubr.bf16.gmra.mrb[0].mxu0 %v3017
    %v3574 = vpop.f32.mrb[0].mxu0
    %v3575 = vadd.f32 0.0, %v3574
    %v3576 = vpop.f32.mrb[0].mxu0
    %v3577 = vpop.f32.mrb[0].mxu0
    %v3578 = vadd.f32 0.0, %v3577
    %v3579 = vpop.f32.mrb[0].mxu0
    %3580 = vmatprep.mubr.bf16.mxu0 0
    %3581 = vmatmul.mubr.bf16.gmra.mrb[0].mxu0 %v3020
    %v3582 = vpop.f32.mrb[0].mxu0
    %v3583 = vadd.f32 0.0, %v3582
    %v3584 = vpop.f32.mrb[0].mxu0
    %v3585 = vpop.f32.mrb[0].mxu0
    %v3586 = vadd.f32 0.0, %v3585
    %v3587 = vpop.f32.mrb[0].mxu0
    %3588 = vmatprep.mubr.bf16.mxu0 0
    %3589 = vmatmul.mubr.bf16.gmra.mrb[0].mxu0 %v3023
    %v3590 = vpop.f32.mrb[0].mxu0
    %v3591 = vadd.f32 0.0, %v3590
    %v3592 = vpop.f32.mrb[0].mxu0
    %v3593 = vpop.f32.mrb[0].mxu0
    %v3594 = vadd.f32 0.0, %v3593
    %v3595 = vpop.f32.mrb[0].mxu0
    %3596 = vmatprep.mubr.bf16.mxu0 0
    %3597 = vmatmul.mubr.bf16.gmra.mrb[0].mxu0 %v3026
    %v3598 = vpop.f32.mrb[0].mxu0
    %v3599 = vadd.f32 0.0, %v3598
    %v3600 = vpop.f32.mrb[0].mxu0
    %v3601 = vpop.f32.mrb[0].mxu0
    %v3602 = vadd.f32 0.0, %v3601
    %v3603 = vpop.f32.mrb[0].mxu0
    %3604 = vmatprep.mubr.bf16.mxu0 0
    %3605 = vmatmul.mubr.bf16.gmra.mrb[0].mxu0 %v3029
    %v3606 = vpop.f32.mrb[0].mxu0
    %v3607 = vadd.f32 0.0, %v3606
    %v3608 = vpop.f32.mrb[0].mxu0
    %v3609 = vpop.f32.mrb[0].mxu0
    %v3610 = vadd.f32 0.0, %v3609
    %v3611 = vpop.f32.mrb[0].mxu0
    %3612 = vmatprep.mubr.bf16.mxu0 0
    %3613 = vmatmul.mubr.bf16.gmra.mrb[0].mxu0 %v3032
    %v3614 = vpop.f32.mrb[0].mxu0
    %v3615 = vadd.f32 0.0, %v3614
    %v3616 = vpop.f32.mrb[0].mxu0
    %v3617 = vpop.f32.mrb[0].mxu0
    %v3618 = vadd.f32 0.0, %v3617
    %v3619 = vpop.f32.mrb[0].mxu0
    %3620 = vmatprep.mubr.bf16.mxu0 0
    %3621 = vmatmul.mubr.bf16.gmra.mrb[0].mxu0 %v3035
    %v3622 = vpop.f32.mrb[0].mxu0
    %v3623 = vadd.f32 0.0, %v3622
    %v3624 = vpop.f32.mrb[0].mxu0
    %v3625 = vpop.f32.mrb[0].mxu0
    %v3626 = vadd.f32 0.0, %v3625
    %v3627 = vpop.f32.mrb[0].mxu0
    %3628 = vmatprep.mubr.bf16.mxu0 0
    %3629 = vmatmul.mubr.bf16.gmra.mrb[0].mxu0 %v3038
    %v3630 = vpop.f32.mrb[0].mxu0
    %v3631 = vadd.f32 0.0, %v3630
    %v3632 = vpop.f32.mrb[0].mxu0
    %v3633 = vpop.f32.mrb[0].mxu0
    %v3634 = vadd.f32 0.0, %v3633
    %v3635 = vpop.f32.mrb[0].mxu0
    %3636 = vmatprep.mubr.bf16.mxu0 0
    %3637 = vmatmul.mubr.bf16.gmra.mrb[0].mxu0 %v3041
    %v3638 = vpop.f32.mrb[0].mxu0
    %v3639 = vadd.f32 0.0, %v3638
    %v3640 = vpop.f32.mrb[0].mxu0
    %v3641 = vpop.f32.mrb[0].mxu0
    %v3642 = vadd.f32 0.0, %v3641
    %v3643 = vpop.f32.mrb[0].mxu0
    %3644 = vmatprep.mubr.bf16.mxu0 0
    %3645 = vmatmul.mubr.bf16.gmra.mrb[0].mxu0 %v3044
    %v3646 = vpop.f32.mrb[0].mxu0
    %v3647 = vadd.f32 0.0, %v3646
    %v3648 = vpop.f32.mrb[0].mxu0
    %v3649 = vpop.f32.mrb[0].mxu0
    %v3650 = vadd.f32 0.0, %v3649
    %v3651 = vpop.f32.mrb[0].mxu0
    %3652 = vmatprep.mubr.bf16.mxu0 0
    %3653 = vmatmul.mubr.bf16.gmra.mrb[0].mxu0 %v3047
    %v3654 = vpop.f32.mrb[0].mxu0
    %v3655 = vadd.f32 0.0, %v3654
    %v3656 = vpop.f32.mrb[0].mxu0
    %v3657 = vpop.f32.mrb[0].mxu0
    %v3658 = vadd.f32 0.0, %v3657
    %v3659 = vpop.f32.mrb[0].mxu0
    %3660 = vmatprep.mubr.bf16.mxu0 0
    %3661 = vmatmul.mubr.bf16.gmra.mrb[0].mxu0 %v3050
    %v3662 = vpop.f32.mrb[0].mxu0
    %v3663 = vadd.f32 0.0, %v3662
    %v3664 = vpop.f32.mrb[0].mxu0
    %v3665 = vpop.f32.mrb[0].mxu0
    %v3666 = vadd.f32 0.0, %v3665
    %v3667 = vpop.f32.mrb[0].mxu0
    %3668 = vmatprep.mubr.bf16.mxu0 0
    %3669 = vmatmul.mubr.bf16.gmra.mrb[0].mxu0 %v3053
    %v3670 = vpop.f32.mrb[0].mxu0
    %v3671 = vadd.f32 0.0, %v3670
    %v3672 = vpop.f32.mrb[0].mxu0
    %v3673 = vpop.f32.mrb[0].mxu0
    %v3674 = vadd.f32 0.0, %v3673
    %v3675 = vpop.f32.mrb[0].mxu0
    %3676 = vmatprep.mubr.bf16.mxu0 0
    %3677 = vmatmul.mubr.bf16.gmra.mrb[0].mxu0 %v3056
    %v3678 = vpop.f32.mrb[0].mxu0
    %v3679 = vadd.f32 0.0, %v3678
    %v3680 = vpop.f32.mrb[0].mxu0
    %v3681 = vpop.f32.mrb[0].mxu0
    %v3682 = vadd.f32 0.0, %v3681
    %v3683 = vpop.f32.mrb[0].mxu0
    %3684 = vmatprep.mubr.bf16.mxu0 0
    %3685 = vmatmul.mubr.bf16.gmra.mrb[0].mxu0 %v3059
    %v3686 = vpop.f32.mrb[0].mxu0
    %v3687 = vadd.f32 0.0, %v3686
    %v3688 = vpop.f32.mrb[0].mxu0
    %v3689 = vpop.f32.mrb[0].mxu0
    %v3690 = vadd.f32 0.0, %v3689
    %v3691 = vpop.f32.mrb[0].mxu0
    %3692 = vmatprep.mubr.bf16.mxu0 0
    %3693 = vmatmul.mubr.bf16.gmra.mrb[0].mxu0 %v3062
    %v3694 = vpop.f32.mrb[0].mxu0
    %v3695 = vadd.f32 0.0, %v3694
    %v3696 = vpop.f32.mrb[0].mxu0
    %v3697 = vpop.f32.mrb[0].mxu0
    %v3698 = vadd.f32 0.0, %v3697
    %v3699 = vpop.f32.mrb[0].mxu0
    %3700 = vmatprep.mubr.bf16.mxu0 0
    %3701 = vmatmul.mubr.bf16.gmra.mrb[0].mxu0 %v3065
    %v3702 = vpop.f32.mrb[0].mxu0
    %v3703 = vadd.f32 0.0, %v3702
    %v3704 = vpop.f32.mrb[0].mxu0
    %v3705 = vpop.f32.mrb[0].mxu0
    %v3706 = vadd.f32 0.0, %v3705
    %v3707 = vpop.f32.mrb[0].mxu0
    %3708 = vmatprep.mubr.bf16.mxu0 0
    %3709 = vmatmul.mubr.bf16.gmra.mrb[0].mxu0 %v3068
    %v3710 = vpop.f32.mrb[0].mxu0
    %v3711 = vadd.f32 0.0, %v3710
    %v3712 = vpop.f32.mrb[0].mxu0
    %v3713 = vpop.f32.mrb[0].mxu0
    %v3714 = vadd.f32 0.0, %v3713
    %v3715 = vpop.f32.mrb[0].mxu0
    %3716 = vmatprep.mubr.bf16.mxu0 0
    %3717 = vmatmul.mubr.bf16.gmra.mrb[0].mxu0 %v3071
    %v3718 = vpop.f32.mrb[0].mxu0
    %v3719 = vadd.f32 0.0, %v3718
    %v3720 = vpop.f32.mrb[0].mxu0
    %v3721 = vpop.f32.mrb[0].mxu0
    %v3722 = vadd.f32 0.0, %v3721
    %v3723 = vpop.f32.mrb[0].mxu0
    %3724 = vmatprep.mubr.bf16.mxu0 0
    %3725 = vmatmul.mubr.bf16.gmra.mrb[0].mxu0 %v3074
    %v3726 = vpop.f32.mrb[0].mxu0
    %v3727 = vadd.f32 0.0, %v3726
    %v3728 = vpop.f32.mrb[0].mxu0
    %v3729 = vpop.f32.mrb[0].mxu0
    %v3730 = vadd.f32 0.0, %v3729
    %v3731 = vpop.f32.mrb[0].mxu0
    %3732 = vmatprep.mubr.bf16.mxu0 0
    %3733 = vmatmul.mubr.bf16.gmra.mrb[0].mxu0 %v3077
    %v3734 = vpop.f32.mrb[0].mxu0
    %v3735 = vadd.f32 0.0, %v3734
    %v3736 = vpop.f32.mrb[0].mxu0
    %v3737 = vpop.f32.mrb[0].mxu0
    %v3738 = vadd.f32 0.0, %v3737
    %v3739 = vpop.f32.mrb[0].mxu0
    %3740 = vmatprep.mubr.bf16.mxu0 0
    %3741 = vmatmul.mubr.bf16.gmra.mrb[0].mxu0 %v3080
    %v3742 = vpop.f32.mrb[0].mxu0
    %v3743 = vadd.f32 0.0, %v3742
    %v3744 = vpop.f32.mrb[0].mxu0
    %v3745 = vpop.f32.mrb[0].mxu0
    %v3746 = vadd.f32 0.0, %v3745
    %v3747 = vpop.f32.mrb[0].mxu0
    %3748 = vmatprep.mubr.bf16.mxu0 0
    %3749 = vmatmul.mubr.bf16.gmra.mrb[0].mxu0 %v3083
    %v3750 = vpop.f32.mrb[0].mxu0
    %v3751 = vadd.f32 0.0, %v3750
    %v3752 = vpop.f32.mrb[0].mxu0
    %v3753 = vpop.f32.mrb[0].mxu0
    %v3754 = vadd.f32 0.0, %v3753
    %v3755 = vpop.f32.mrb[0].mxu0
    %3756 = vmatprep.mubr.bf16.mxu0 0
    %3757 = vmatmul.mubr.bf16.gmra.mrb[0].mxu0 %v3086
    %v3758 = vpop.f32.mrb[0].mxu0
    %v3759 = vadd.f32 0.0, %v3758
    %v3760 = vpop.f32.mrb[0].mxu0
    %v3761 = vpop.f32.mrb[0].mxu0
    %v3762 = vadd.f32 0.0, %v3761
    %v3763 = vpop.f32.mrb[0].mxu0
    %3764 = vmatprep.mubr.bf16.mxu0 0
    %3765 = vmatmul.mubr.bf16.gmra.mrb[0].mxu0 %v3089
    %v3766 = vpop.f32.mrb[0].mxu0
    %v3767 = vadd.f32 0.0, %v3766
    %v3768 = vpop.f32.mrb[0].mxu0
    %v3769 = vpop.f32.mrb[0].mxu0
    %v3770 = vadd.f32 0.0, %v3769
    %v3771 = vpop.f32.mrb[0].mxu0
    %3772 = vmatprep.mubr.bf16.mxu0 0
    %3773 = vmatmul.mubr.bf16.gmra.mrb[0].mxu0 %v3092
    %v3774 = vpop.f32.mrb[0].mxu0
    %v3775 = vadd.f32 0.0, %v3774
    %v3776 = vpop.f32.mrb[0].mxu0
    %v3777 = vpop.f32.mrb[0].mxu0
    %v3778 = vadd.f32 0.0, %v3777
    %v3779 = vpop.f32.mrb[0].mxu0
    %3780 = vmatprep.mubr.bf16.mxu0 0
    %3781 = vmatmul.mubr.bf16.gmra.mrb[0].mxu0 %v3095
    %v3782 = vpop.f32.mrb[0].mxu0
    %v3783 = vadd.f32 0.0, %v3782
    %v3784 = vpop.f32.mrb[0].mxu0
    %v3785 = vpop.f32.mrb[0].mxu0
    %v3786 = vadd.f32 0.0, %v3785
    %v3787 = vpop.f32.mrb[0].mxu0
    %3788 = vmatprep.mubr.bf16.mxu0 0
    %3789 = vmatmul.mubr.bf16.gmra.mrb[0].mxu0 %v3098
    %v3790 = vpop.f32.mrb[0].mxu0
    %v3791 = vadd.f32 0.0, %v3790
    %v3792 = vpop.f32.mrb[0].mxu0
    %v3793 = vpop.f32.mrb[0].mxu0
    %v3794 = vadd.f32 0.0, %v3793
    %v3795 = vpop.f32.mrb[0].mxu0
    %3796 = vmatprep.mubr.bf16.mxu0 0
    %3797 = vmatmul.mubr.bf16.gmra.mrb[0].mxu0 %v3101
    %v3798 = vpop.f32.mrb[0].mxu0
    %v3799 = vadd.f32 0.0, %v3798
    %v3800 = vpop.f32.mrb[0].mxu0
    %v3801 = vpop.f32.mrb[0].mxu0
    %v3802 = vadd.f32 0.0, %v3801
    %v3803 = vpop.f32.mrb[0].mxu0
    %3804 = vmatprep.mubr.bf16.mxu0 0
    %3805 = vmatmul.mubr.bf16.gmra.mrb[0].mxu0 %v3104
    %v3806 = vpop.f32.mrb[0].mxu0
    %v3807 = vadd.f32 0.0, %v3806
    %v3808 = vpop.f32.mrb[0].mxu0
    %v3809 = vpop.f32.mrb[0].mxu0
    %v3810 = vadd.f32 0.0, %v3809
    %v3811 = vpop.f32.mrb[0].mxu0
    %3812 = vmatprep.mubr.bf16.mxu0 0
    %3813 = vmatmul.mubr.bf16.gmra.mrb[0].mxu0 %v3107
    %v3814 = vpop.f32.mrb[0].mxu0
    %v3815 = vadd.f32 0.0, %v3814
    %v3816 = vpop.f32.mrb[0].mxu0
    %v3817 = vpop.f32.mrb[0].mxu0
    %v3818 = vadd.f32 0.0, %v3817
    %v3819 = vpop.f32.mrb[0].mxu0
    %3820 = vmatprep.mubr.bf16.mxu0 0
    %3821 = vmatmul.mubr.bf16.gmra.mrb[0].mxu0 %v3110
    %v3822 = vpop.f32.mrb[0].mxu0
    %v3823 = vadd.f32 0.0, %v3822
    %v3824 = vpop.f32.mrb[0].mxu0
    %v3825 = vpop.f32.mrb[0].mxu0
    %v3826 = vadd.f32 0.0, %v3825
    %v3827 = vpop.f32.mrb[0].mxu0
    %3828 = vmatprep.mubr.bf16.mxu0 0
    %3829 = vmatmul.mubr.bf16.gmra.mrb[0].mxu0 %v3113
    %v3830 = vpop.f32.mrb[0].mxu0
    %v3831 = vadd.f32 0.0, %v3830
    %v3832 = vpop.f32.mrb[0].mxu0
    %v3833 = vpop.f32.mrb[0].mxu0
    %v3834 = vadd.f32 0.0, %v3833
    %v3835 = vpop.f32.mrb[0].mxu0
    %3836 = vmatprep.mubr.bf16.mxu0 0
    %3837 = vmatmul.mubr.bf16.gmra.mrb[0].mxu0 %v3116
    %v3838 = vpop.f32.mrb[0].mxu0
    %v3839 = vadd.f32 0.0, %v3838
    %v3840 = vpop.f32.mrb[0].mxu0
    %v3841 = vpop.f32.mrb[0].mxu0
    %v3842 = vadd.f32 0.0, %v3841
    %v3843 = vpop.f32.mrb[0].mxu0
    %3844 = vmatprep.mubr.bf16.mxu0 0
    %3845 = vmatmul.mubr.bf16.gmra.mrb[0].mxu0 %v3119
    %v3846 = vpop.f32.mrb[0].mxu0
    %v3847 = vadd.f32 0.0, %v3846
    %v3848 = vpop.f32.mrb[0].mxu0
    %v3849 = vpop.f32.mrb[0].mxu0
    %v3850 = vadd.f32 0.0, %v3849
    %v3851 = vpop.f32.mrb[0].mxu0
    %3852 = vmatprep.mubr.bf16.mxu0 0
    %3853 = vmatmul.mubr.bf16.gmra.mrb[0].mxu0 %v3122
    %v3854 = vpop.f32.mrb[0].mxu0
    %v3855 = vadd.f32 0.0, %v3854
    %v3856 = vpop.f32.mrb[0].mxu0
    %v3857 = vpop.f32.mrb[0].mxu0
    %v3858 = vadd.f32 0.0, %v3857
    %v3859 = vpop.f32.mrb[0].mxu0
    %3860 = vmatprep.mubr.bf16.mxu0 0
    %3861 = vmatmul.mubr.bf16.gmra.mrb[0].mxu0 %v3125
    %v3862 = vpop.f32.mrb[0].mxu0
    %v3863 = vadd.f32 0.0, %v3862
    %v3864 = vpop.f32.mrb[0].mxu0
    %v3865 = vpop.f32.mrb[0].mxu0
    %v3866 = vadd.f32 0.0, %v3865
    %v3867 = vpop.f32.mrb[0].mxu0
    %3868 = vmatprep.mubr.bf16.mxu0 0
    %3869 = vmatmul.mubr.bf16.gmra.mrb[0].mxu0 %v3128
    %v3870 = vpop.f32.mrb[0].mxu0
    %v3871 = vadd.f32 0.0, %v3870
    %v3872 = vpop.f32.mrb[0].mxu0
    %v3873 = vpop.f32.mrb[0].mxu0
    %v3874 = vadd.f32 0.0, %v3873
    %v3875 = vpop.f32.mrb[0].mxu0
    %3876 = vmatprep.mubr.bf16.mxu0 0
    %3877 = vmatmul.mubr.bf16.gmra.mrb[0].mxu0 %v3131
    %v3878 = vpop.f32.mrb[0].mxu0
    %v3879 = vadd.f32 0.0, %v3878
    %v3880 = vpop.f32.mrb[0].mxu0
    %v3881 = vpop.f32.mrb[0].mxu0
    %v3882 = vadd.f32 0.0, %v3881
    %v3883 = vpop.f32.mrb[0].mxu0
    %3884 = vmatprep.mubr.bf16.mxu0 0
    %3885 = vmatmul.mubr.bf16.gmra.mrb[0].mxu0 %v3134
    %v3886 = vpop.f32.mrb[0].mxu0
    %v3887 = vadd.f32 0.0, %v3886
    %v3888 = vpop.f32.mrb[0].mxu0
    %v3889 = vpop.f32.mrb[0].mxu0
    %v3890 = vadd.f32 0.0, %v3889
    %v3891 = vpop.f32.mrb[0].mxu0
    %3892 = vmatprep.mubr.bf16.mxu0 0
    %3893 = vmatmul.mubr.bf16.gmra.mrb[0].mxu0 %v3137
    %v3894 = vpop.f32.mrb[0].mxu0
    %v3895 = vadd.f32 0.0, %v3894
    %v3896 = vpop.f32.mrb[0].mxu0
    %v3897 = vpop.f32.mrb[0].mxu0
    %v3898 = vadd.f32 0.0, %v3897
    %v3899 = vpop.f32.mrb[0].mxu0
    %3900 = vmatprep.mubr.bf16.mxu0 0
    %3901 = vmatmul.mubr.bf16.gmra.mrb[0].mxu0 %v3140
    %v3902 = vpop.f32.mrb[0].mxu0
    %v3903 = vadd.f32 0.0, %v3902
    %v3904 = vpop.f32.mrb[0].mxu0
    %v3905 = vpop.f32.mrb[0].mxu0
    %v3906 = vadd.f32 0.0, %v3905
    %v3907 = vpop.f32.mrb[0].mxu0
    %3908 = vmatprep.mubr.bf16.mxu0 0
    %3909 = vmatmul.mubr.bf16.gmra.mrb[0].mxu0 %v3143
    %v3910 = vpop.f32.mrb[0].mxu0
    %v3911 = vadd.f32 0.0, %v3910
    %v3912 = vpop.f32.mrb[0].mxu0
    %v3913 = vpop.f32.mrb[0].mxu0
    %v3914 = vadd.f32 0.0, %v3913
    %v3915 = vpop.f32.mrb[0].mxu0
    %3916 = vmatprep.mubr.bf16.mxu0 0
    %3917 = vmatmul.mubr.bf16.gmra.mrb[0].mxu0 %v3146
    %v3918 = vpop.f32.mrb[0].mxu0
    %v3919 = vadd.f32 0.0, %v3918
    %v3920 = vpop.f32.mrb[0].mxu0
    %v3921 = vpop.f32.mrb[0].mxu0
    %v3922 = vadd.f32 0.0, %v3921
    %v3923 = vpop.f32.mrb[0].mxu0
    %3924 = vmatprep.mubr.bf16.mxu0 0
    %3925 = vmatmul.mubr.bf16.gmra.mrb[0].mxu0 %v3149
    %v3926 = vpop.f32.mrb[0].mxu0
    %v3927 = vadd.f32 0.0, %v3926
    %v3928 = vpop.f32.mrb[0].mxu0
    %v3929 = vpop.f32.mrb[0].mxu0
    %v3930 = vadd.f32 0.0, %v3929
    %v3931 = vpop.f32.mrb[0].mxu0
    %3932 = vmatprep.mubr.bf16.mxu0 0
    %3933 = vmatmul.mubr.bf16.gmra.mrb[0].mxu0 %v3152
    %v3934 = vpop.f32.mrb[0].mxu0
    %v3935 = vadd.f32 0.0, %v3934
    %v3936 = vpop.f32.mrb[0].mxu0
    %v3937 = vpop.f32.mrb[0].mxu0
    %v3938 = vadd.f32 0.0, %v3937
    %v3939 = vpop.f32.mrb[0].mxu0
    %3940 = vmatprep.mubr.bf16.mxu0 0
    %3941 = vmatmul.mubr.bf16.gmra.mrb[0].mxu0 %v3155
    %v3942 = vpop.f32.mrb[0].mxu0
    %v3943 = vadd.f32 0.0, %v3942
    %v3944 = vpop.f32.mrb[0].mxu0
    %v3945 = vpop.f32.mrb[0].mxu0
    %v3946 = vadd.f32 0.0, %v3945
    %v3947 = vpop.f32.mrb[0].mxu0
    %3948 = vmatprep.mubr.bf16.mxu0 0
    %3949 = vmatmul.mubr.bf16.gmra.mrb[0].mxu0 %v3158
    %v3950 = vpop.f32.mrb[0].mxu0
    %v3951 = vadd.f32 0.0, %v3950
    %v3952 = vpop.f32.mrb[0].mxu0
    %v3953 = vpop.f32.mrb[0].mxu0
    %v3954 = vadd.f32 0.0, %v3953
    %v3955 = vpop.f32.mrb[0].mxu0
    %3956 = vmatprep.mubr.bf16.mxu0 0
    %3957 = vmatmul.mubr.bf16.gmra.mrb[0].mxu0 %v3161
    %v3958 = vpop.f32.mrb[0].mxu0
    %v3959 = vadd.f32 0.0, %v3958
    %v3960 = vpop.f32.mrb[0].mxu0
    %v3961 = vpop.f32.mrb[0].mxu0
    %v3962 = vadd.f32 0.0, %v3961
    %v3963 = vpop.f32.mrb[0].mxu0
    %3964 = vmatprep.mubr.bf16.mxu0 0
    %3965 = vmatmul.mubr.bf16.gmra.mrb[0].mxu0 %v3164
    %v3966 = vpop.f32.mrb[0].mxu0
    %v3967 = vadd.f32 0.0, %v3966
    %v3968 = vpop.f32.mrb[0].mxu0
    %v3969 = vpop.f32.mrb[0].mxu0
    %v3970 = vadd.f32 0.0, %v3969
    %v3971 = vpop.f32.mrb[0].mxu0
    %3972 = vmatprep.mubr.bf16.mxu0 0
    %3973 = vmatmul.mubr.bf16.gmra.mrb[0].mxu0 %v3167
    %v3974 = vpop.f32.mrb[0].mxu0
    %v3975 = vadd.f32 0.0, %v3974
    %v3976 = vpop.f32.mrb[0].mxu0
    %v3977 = vpop.f32.mrb[0].mxu0
    %v3978 = vadd.f32 0.0, %v3977
    %v3979 = vpop.f32.mrb[0].mxu0
    %3980 = vmatprep.mubr.bf16.mxu0 0
    %3981 = vmatmul.mubr.bf16.gmra.mrb[0].mxu0 %v3170
    %v3982 = vpop.f32.mrb[0].mxu0
    %v3983 = vadd.f32 0.0, %v3982
    %v3984 = vpop.f32.mrb[0].mxu0
    %v3985 = vpop.f32.mrb[0].mxu0
    %v3986 = vadd.f32 0.0, %v3985
    %v3987 = vpop.f32.mrb[0].mxu0
    %3988 = vmatprep.mubr.bf16.mxu0 0
    %3989 = vmatmul.mubr.bf16.gmra.mrb[0].mxu0 %v3173
    %v3990 = vpop.f32.mrb[0].mxu0
    %v3991 = vadd.f32 0.0, %v3990
    %v3992 = vpop.f32.mrb[0].mxu0
    %v3993 = vpop.f32.mrb[0].mxu0
    %v3994 = vadd.f32 0.0, %v3993
    %v3995 = vpop.f32.mrb[0].mxu0
    %3996 = vmatprep.mubr.bf16.mxu0 0
    %3997 = vmatmul.mubr.bf16.gmra.mrb[0].mxu0 %v3176
    %v3998 = vpop.f32.mrb[0].mxu0
    %v3999 = vadd.f32 0.0, %v3998
    %v4000 = vpop.f32.mrb[0].mxu0
    %v4001 = vpop.f32.mrb[0].mxu0
    %v4002 = vadd.f32 0.0, %v4001
    %v4003 = vpop.f32.mrb[0].mxu0
    %4004 = vmatprep.mubr.bf16.mxu0 0
    %4005 = vmatmul.mubr.bf16.gmra.mrb[0].mxu0 %v3179
    %v4006 = vpop.f32.mrb[0].mxu0
    %v4007 = vadd.f32 0.0, %v4006
    %v4008 = vpop.f32.mrb[0].mxu0
    %v4009 = vpop.f32.mrb[0].mxu0
    %v4010 = vadd.f32 0.0, %v4009
    %v4011 = vpop.f32.mrb[0].mxu0
    %4012 = vmatprep.mubr.bf16.mxu0 0
    %4013 = vmatmul.mubr.bf16.gmra.mrb[0].mxu0 %v3182
    %v4014 = vpop.f32.mrb[0].mxu0
    %v4015 = vadd.f32 0.0, %v4014
    %v4016 = vpop.f32.mrb[0].mxu0
    %v4017 = vpop.f32.mrb[0].mxu0
    %v4018 = vadd.f32 0.0, %v4017
    %v4019 = vpop.f32.mrb[0].mxu0
    %4020 = vmatprep.mubr.bf16.mxu0 0
    %4021 = vmatmul.mubr.bf16.gmra.mrb[0].mxu0 %v3185
    %v4022 = vpop.f32.mrb[0].mxu0
    %v4023 = vadd.f32 0.0, %v4022
    %v4024 = vpop.f32.mrb[0].mxu0
    %v4025 = vpop.f32.mrb[0].mxu0
    %v4026 = vadd.f32 0.0, %v4025
    %v4027 = vpop.f32.mrb[0].mxu0
    %4028 = vmatprep.mubr.bf16.mxu0 0
    %4029 = vmatmul.mubr.bf16.gmra.mrb[0].mxu0 %v3188
    %v4030 = vpop.f32.mrb[0].mxu0
    %v4031 = vadd.f32 0.0, %v4030
    %v4032 = vpop.f32.mrb[0].mxu0
    %v4033 = vpop.f32.mrb[0].mxu0
    %v4034 = vadd.f32 0.0, %v4033
    %v4035 = vpop.f32.mrb[0].mxu0
    %4036 = vmatprep.mubr.bf16.mxu0 0
    %4037 = vmatmul.mubr.bf16.gmra.mrb[0].mxu0 %v3191
    %v4038 = vpop.f32.mrb[0].mxu0
    %v4039 = vadd.f32 0.0, %v4038
    %v4040 = vpop.f32.mrb[0].mxu0
    %v4041 = vpop.f32.mrb[0].mxu0
    %v4042 = vadd.f32 0.0, %v4041
    %v4043 = vpop.f32.mrb[0].mxu0
    %4044 = vmatprep.mubr.bf16.mxu0 0
    %4045 = vmatmul.mubr.bf16.gmra.mrb[0].mxu0 %v3194
    %v4046 = vpop.f32.mrb[0].mxu0
    %v4047 = vadd.f32 0.0, %v4046
    %v4048 = vpop.f32.mrb[0].mxu0
    %v4049 = vpop.f32.mrb[0].mxu0
    %v4050 = vadd.f32 0.0, %v4049
    %v4051 = vpop.f32.mrb[0].mxu0
    %4052 = vmatprep.mubr.bf16.mxu0 0
    %4053 = vmatmul.mubr.bf16.gmra.mrb[0].mxu0 %v3197
    %v4054 = vpop.f32.mrb[0].mxu0
    %v4055 = vadd.f32 0.0, %v4054
    %v4056 = vpop.f32.mrb[0].mxu0
    %v4057 = vpop.f32.mrb[0].mxu0
    %v4058 = vadd.f32 0.0, %v4057
    %v4059 = vpop.f32.mrb[0].mxu0
    %4060 = vmatprep.mubr.bf16.mxu0 0
    %4061 = vmatmul.mubr.bf16.gmra.mrb[0].mxu0 %v3200
    %v4062 = vpop.f32.mrb[0].mxu0
    %v4063 = vadd.f32 0.0, %v4062
    %v4064 = vpop.f32.mrb[0].mxu0
    %v4065 = vpop.f32.mrb[0].mxu0
    %v4066 = vadd.f32 0.0, %v4065
    %v4067 = vpop.f32.mrb[0].mxu0
    %4068 = vmatprep.mubr.bf16.mxu0 0
    %4069 = vmatmul.mubr.bf16.gmra.mrb[0].mxu0 %v3203
    %v4070 = vpop.f32.mrb[0].mxu0
    %v4071 = vadd.f32 0.0, %v4070
    %v4072 = vpop.f32.mrb[0].mxu0
    %v4073 = vpop.f32.mrb[0].mxu0
    %v4074 = vadd.f32 0.0, %v4073
    %v4075 = vpop.f32.mrb[0].mxu0
    %4076 = vmatprep.mubr.bf16.mxu0 0
    %4077 = vmatmul.mubr.bf16.gmra.mrb[0].mxu0 %v3206
    %v4078 = vpop.f32.mrb[0].mxu0
    %v4079 = vadd.f32 0.0, %v4078
    %v4080 = vpop.f32.mrb[0].mxu0
    %v4081 = vpop.f32.mrb[0].mxu0
    %v4082 = vadd.f32 0.0, %v4081
    %v4083 = vpop.f32.mrb[0].mxu0
    %4084 = vmatprep.mubr.bf16.mxu0 0
    %4085 = vmatmul.mubr.bf16.gmra.mrb[0].mxu0 %v3209
    %v4086 = vpop.f32.mrb[0].mxu0
    %v4087 = vadd.f32 0.0, %v4086
    %v4088 = vpop.f32.mrb[0].mxu0
    %v4089 = vpop.f32.mrb[0].mxu0
    %v4090 = vadd.f32 0.0, %v4089
    %v4091 = vpop.f32.mrb[0].mxu0
    %4092 = vmatprep.mubr.bf16.mxu0 0
    %4093 = vmatmul.mubr.bf16.gmra.mrb[0].mxu0 %v3212
    %v4094 = vpop.f32.mrb[0].mxu0
    %v4095 = vadd.f32 0.0, %v4094
    %v4096 = vpop.f32.mrb[0].mxu0
    %v4097 = vpop.f32.mrb[0].mxu0
    %v4098 = vadd.f32 0.0, %v4097
    %v4099 = vpop.f32.mrb[0].mxu0
    %4100 = vmatprep.mubr.bf16.mxu0 0
    %4101 = vmatmul.mubr.bf16.gmra.mrb[0].mxu0 %v3215
    %v4102 = vpop.f32.mrb[0].mxu0
    %v4103 = vadd.f32 0.0, %v4102
    %v4104 = vpop.f32.mrb[0].mxu0
    %v4105 = vpop.f32.mrb[0].mxu0
    %v4106 = vadd.f32 0.0, %v4105
    %v4107 = vpop.f32.mrb[0].mxu0
    %4108 = vmatprep.mubr.bf16.mxu0 0
    %4109 = vmatmul.mubr.bf16.gmra.mrb[0].mxu0 %v3218
    %v4110 = vpop.f32.mrb[0].mxu0
    %v4111 = vadd.f32 0.0, %v4110
    %v4112 = vpop.f32.mrb[0].mxu0
    %v4113 = vpop.f32.mrb[0].mxu0
    %v4114 = vadd.f32 0.0, %v4113
    %v4115 = vpop.f32.mrb[0].mxu0
    %4116 = vmatprep.mubr.bf16.mxu0 0
    %4117 = vmatmul.mubr.bf16.gmra.mrb[0].mxu0 %v3221
    %v4118 = vpop.f32.mrb[0].mxu0
    %v4119 = vadd.f32 0.0, %v4118
    %v4120 = vpop.f32.mrb[0].mxu0
    %v4121 = vpop.f32.mrb[0].mxu0
    %v4122 = vadd.f32 0.0, %v4121
    %v4123 = vpop.f32.mrb[0].mxu0
    %4124 = vmatprep.mubr.bf16.mxu0 0
    %4125 = vmatmul.mubr.bf16.gmra.mrb[0].mxu0 %v3224
    %v4126 = vpop.f32.mrb[0].mxu0
    %v4127 = vadd.f32 0.0, %v4126
    %v4128 = vpop.f32.mrb[0].mxu0
    %v4129 = vpop.f32.mrb[0].mxu0
    %v4130 = vadd.f32 0.0, %v4129
    %v4131 = vpop.f32.mrb[0].mxu0
    %4132 = vmatprep.mubr.bf16.mxu0 0
    %4133 = vmatmul.mubr.bf16.gmra.mrb[0].mxu0 %v3227
    %v4134 = vpop.f32.mrb[0].mxu0
    %v4135 = vadd.f32 0.0, %v4134
    %v4136 = vpop.f32.mrb[0].mxu0
    %v4137 = vpop.f32.mrb[0].mxu0
    %v4138 = vadd.f32 0.0, %v4137
    %v4139 = vpop.f32.mrb[0].mxu0
    %4140 = vmatprep.mubr.bf16.mxu0 0
    %4141 = vmatmul.mubr.bf16.gmra.mrb[0].mxu0 %v3230
    %v4142 = vpop.f32.mrb[0].mxu0
    %v4143 = vadd.f32 0.0, %v4142
    %v4144 = vpop.f32.mrb[0].mxu0
    %v4145 = vpop.f32.mrb[0].mxu0
    %v4146 = vadd.f32 0.0, %v4145
    %v4147 = vpop.f32.mrb[0].mxu0
    %4148 = vmatprep.mubr.bf16.mxu0 0
    %4149 = vmatmul.mubr.bf16.gmra.mrb[0].mxu0 %v3233
    %v4150 = vpop.f32.mrb[0].mxu0
    %v4151 = vadd.f32 0.0, %v4150
    %v4152 = vpop.f32.mrb[0].mxu0
    %v4153 = vpop.f32.mrb[0].mxu0
    %v4154 = vadd.f32 0.0, %v4153
    %v4155 = vpop.f32.mrb[0].mxu0
    %4156 = vmatprep.mubr.bf16.mxu0 0
    %4157 = vmatmul.mubr.bf16.gmra.mrb[0].mxu0 %v3236
    %v4158 = vpop.f32.mrb[0].mxu0
    %v4159 = vadd.f32 0.0, %v4158
    %v4160 = vpop.f32.mrb[0].mxu0
    %v4161 = vpop.f32.mrb[0].mxu0
    %v4162 = vadd.f32 0.0, %v4161
    %v4163 = vpop.f32.mrb[0].mxu0
    %4164 = vmatprep.mubr.bf16.mxu0 0
    %4165 = vmatmul.mubr.bf16.gmra.mrb[0].mxu0 %v3239
    %v4166 = vpop.f32.mrb[0].mxu0
    %v4167 = vadd.f32 0.0, %v4166
    %v4168 = vpop.f32.mrb[0].mxu0
    %v4169 = vpop.f32.mrb[0].mxu0
    %v4170 = vadd.f32 0.0, %v4169
    %v4171 = vpop.f32.mrb[0].mxu0
    %4172 = vmatprep.mubr.bf16.mxu0 0
    %4173 = vmatmul.mubr.bf16.gmra.mrb[0].mxu0 %v3242
    %v4174 = vpop.f32.mrb[0].mxu0
    %v4175 = vadd.f32 0.0, %v4174
    %v4176 = vpop.f32.mrb[0].mxu0
    %v4177 = vpop.f32.mrb[0].mxu0
    %v4178 = vadd.f32 0.0, %v4177
    %v4179 = vpop.f32.mrb[0].mxu0
    %4180 = vmatprep.mubr.bf16.mxu0 0
    %4181 = vmatmul.mubr.bf16.gmra.mrb[0].mxu0 %v3245
    %v4182 = vpop.f32.mrb[0].mxu0
    %v4183 = vadd.f32 0.0, %v4182
    %v4184 = vpop.f32.mrb[0].mxu0
    %v4185 = vpop.f32.mrb[0].mxu0
    %v4186 = vadd.f32 0.0, %v4185
    %v4187 = vpop.f32.mrb[0].mxu0
    %4188 = vmatprep.mubr.bf16.mxu0 0
    %4189 = vmatmul.mubr.bf16.gmra.mrb[0].mxu0 %v3248
    %v4190 = vpop.f32.mrb[0].mxu0
    %v4191 = vadd.f32 0.0, %v4190
    %v4192 = vpop.f32.mrb[0].mxu0
    %v4193 = vpop.f32.mrb[0].mxu0
    %v4194 = vadd.f32 0.0, %v4193
    %v4195 = vpop.f32.mrb[0].mxu0
    %4196 = vmatprep.mubr.bf16.mxu0 0
    %4197 = vmatmul.mubr.bf16.gmra.mrb[0].mxu0 %v3251
    %v4198 = vpop.f32.mrb[0].mxu0
    %v4199 = vadd.f32 0.0, %v4198
    %v4200 = vpop.f32.mrb[0].mxu0
    %v4201 = vpop.f32.mrb[0].mxu0
    %v4202 = vadd.f32 0.0, %v4201
    %v4203 = vpop.f32.mrb[0].mxu0
    %4204 = vmatprep.mubr.bf16.mxu0 0
    %4205 = vmatmul.mubr.bf16.gmra.mrb[0].mxu0 %v3254
    %v4206 = vpop.f32.mrb[0].mxu0
    %v4207 = vadd.f32 0.0, %v4206
    %v4208 = vpop.f32.mrb[0].mxu0
    %v4209 = vpop.f32.mrb[0].mxu0
    %v4210 = vadd.f32 0.0, %v4209
    %v4211 = vpop.f32.mrb[0].mxu0
    %4212 = vmatprep.mubr.bf16.mxu0 0
    %4213 = vmatmul.mubr.bf16.gmra.mrb[0].mxu0 %v3257
    %v4214 = vpop.f32.mrb[0].mxu0
    %v4215 = vadd.f32 0.0, %v4214
    %v4216 = vpop.f32.mrb[0].mxu0
    %v4217 = vpop.f32.mrb[0].mxu0
    %v4218 = vadd.f32 0.0, %v4217
    %v4219 = vpop.f32.mrb[0].mxu0
    %4220 = vmatprep.mubr.bf16.mxu0 0
    %4221 = vmatmul.mubr.bf16.gmra.mrb[0].mxu0 %v3260
    %v4222 = vpop.f32.mrb[0].mxu0
    %v4223 = vadd.f32 0.0, %v4222
    %v4224 = vpop.f32.mrb[0].mxu0
    %v4225 = vpop.f32.mrb[0].mxu0
    %v4226 = vadd.f32 0.0, %v4225
    %v4227 = vpop.f32.mrb[0].mxu0
    %4228 = vmatprep.mubr.bf16.mxu0 0
    %4229 = vmatmul.mubr.bf16.gmra.mrb[0].mxu0 %v3263
    %v4230 = vpop.f32.mrb[0].mxu0
    %v4231 = vadd.f32 0.0, %v4230
    %v4232 = vpop.f32.mrb[0].mxu0
    %v4233 = vpop.f32.mrb[0].mxu0
    %v4234 = vadd.f32 0.0, %v4233
    %v4235 = vpop.f32.mrb[0].mxu0
    %4236 = vmatprep.mubr.bf16.mxu0 0
    %4237 = vmatmul.mubr.bf16.gmra.mrb[0].mxu0 %v3266
    %v4238 = vpop.f32.mrb[0].mxu0
    %v4239 = vadd.f32 0.0, %v4238
    %v4240 = vpop.f32.mrb[0].mxu0
    %v4241 = vpop.f32.mrb[0].mxu0
    %v4242 = vadd.f32 0.0, %v4241
    %v4243 = vpop.f32.mrb[0].mxu0
    %4244 = vmatprep.mubr.bf16.mxu0 0
    %4245 = vmatmul.mubr.bf16.gmra.mrb[0].mxu0 %v3269
    %v4246 = vpop.f32.mrb[0].mxu0
    %v4247 = vadd.f32 0.0, %v4246
    %v4248 = vpop.f32.mrb[0].mxu0
    %v4249 = vpop.f32.mrb[0].mxu0
    %v4250 = vadd.f32 0.0, %v4249
    %v4251 = vpop.f32.mrb[0].mxu0
    %4252 = vmatprep.mubr.bf16.mxu0 0
    %4253 = vmatmul.mubr.bf16.gmra.mrb[0].mxu0 %v3272
    %v4254 = vpop.f32.mrb[0].mxu0
    %v4255 = vadd.f32 0.0, %v4254
    %v4256 = vpop.f32.mrb[0].mxu0
    %v4257 = vpop.f32.mrb[0].mxu0
    %v4258 = vadd.f32 0.0, %v4257
    %v4259 = vpop.f32.mrb[0].mxu0
    %4260 = vmatprep.mubr.bf16.mxu0 0
    %4261 = vmatmul.mubr.bf16.gmra.mrb[0].mxu0 %v3275
    %v4262 = vpop.f32.mrb[0].mxu0
    %v4263 = vadd.f32 0.0, %v4262
    %v4264 = vpop.f32.mrb[0].mxu0
    %v4265 = vpop.f32.mrb[0].mxu0
    %v4266 = vadd.f32 0.0, %v4265
    %v4267 = vpop.f32.mrb[0].mxu0
    %4268 = vmatprep.mubr.bf16.mxu0 0
    %4269 = vmatmul.mubr.bf16.gmra.mrb[0].mxu0 %v3278
    %v4270 = vpop.f32.mrb[0].mxu0
    %v4271 = vadd.f32 0.0, %v4270
    %v4272 = vpop.f32.mrb[0].mxu0
    %v4273 = vpop.f32.mrb[0].mxu0
    %v4274 = vadd.f32 0.0, %v4273
    %v4275 = vpop.f32.mrb[0].mxu0
    %4276 = vmatprep.mubr.bf16.mxu0 0
    %4277 = vmatmul.mubr.bf16.gmra.mrb[0].mxu0 %v3281
    %v4278 = vpop.f32.mrb[0].mxu0
    %v4279 = vadd.f32 0.0, %v4278
    %v4280 = vpop.f32.mrb[0].mxu0
    %v4281 = vpop.f32.mrb[0].mxu0
    %v4282 = vadd.f32 0.0, %v4281
    %v4283 = vpop.f32.mrb[0].mxu0
    %4284 = vmatprep.mubr.bf16.mxu0 0
    %4285 = vmatmul.mubr.bf16.gmra.mrb[0].mxu0 %v3284
    %v4286 = vpop.f32.mrb[0].mxu0
    %v4287 = vadd.f32 0.0, %v4286
    %v4288 = vpop.f32.mrb[0].mxu0
    %v4289 = vpop.f32.mrb[0].mxu0
    %v4290 = vadd.f32 0.0, %v4289
    %v4291 = vpop.f32.mrb[0].mxu0
    %4292 = vmatprep.mubr.bf16.mxu0 0
    %4293 = vmatmul.mubr.bf16.gmra.mrb[0].mxu0 %v3287
    %v4294 = vpop.f32.mrb[0].mxu0
    %v4295 = vadd.f32 0.0, %v4294
    %v4296 = vpop.f32.mrb[0].mxu0
    %v4297 = vpop.f32.mrb[0].mxu0
    %v4298 = vadd.f32 0.0, %v4297
    %v4299 = vpop.f32.mrb[0].mxu0
    %4300 = vmatprep.mubr.bf16.mxu0 0
    %4301 = vmatmul.mubr.bf16.gmra.mrb[0].mxu0 %v3290
    %v4302 = vpop.f32.mrb[0].mxu0
    %v4303 = vadd.f32 0.0, %v4302
    %v4304 = vpop.f32.mrb[0].mxu0
    %v4305 = vpop.f32.mrb[0].mxu0
    %v4306 = vadd.f32 0.0, %v4305
    %v4307 = vpop.f32.mrb[0].mxu0
    %4308 = vmatprep.mubr.bf16.mxu0 0
    %4309 = vmatmul.mubr.bf16.gmra.mrb[0].mxu0 %v3293
    %v4310 = vpop.f32.mrb[0].mxu0
    %v4311 = vadd.f32 0.0, %v4310
    %v4312 = vpop.f32.mrb[0].mxu0
    %v4313 = vpop.f32.mrb[0].mxu0
    %v4314 = vadd.f32 0.0, %v4313
    %v4315 = vpop.f32.mrb[0].mxu0
    %4316 = vmatprep.mubr.bf16.mxu0 0
    %4317 = vmatmul.mubr.bf16.gmra.mrb[0].mxu0 %v3296
    %v4318 = vpop.f32.mrb[0].mxu0
    %v4319 = vadd.f32 0.0, %v4318
    %v4320 = vpop.f32.mrb[0].mxu0
    %v4321 = vpop.f32.mrb[0].mxu0
    %v4322 = vadd.f32 0.0, %v4321
    %v4323 = vpop.f32.mrb[0].mxu0
    %4324 = vmatprep.mubr.bf16.mxu0 0
    %4325 = vmatmul.mubr.bf16.gmra.mrb[0].mxu0 %v3299
    %v4326 = vpop.f32.mrb[0].mxu0
    %v4327 = vadd.f32 0.0, %v4326
    %v4328 = vpop.f32.mrb[0].mxu0
    %v4329 = vpop.f32.mrb[0].mxu0
    %v4330 = vadd.f32 0.0, %v4329
    %v4331 = vpop.f32.mrb[0].mxu0
    %4332 = vmatprep.mubr.bf16.mxu0 0
    %4333 = vmatmul.mubr.bf16.gmra.mrb[0].mxu0 %v3302
    %v4334 = vpop.f32.mrb[0].mxu0
    %v4335 = vadd.f32 0.0, %v4334
    %v4336 = vpop.f32.mrb[0].mxu0
    %v4337 = vpop.f32.mrb[0].mxu0
    %v4338 = vadd.f32 0.0, %v4337
    %v4339 = vpop.f32.mrb[0].mxu0
    %4340 = vmatprep.mubr.bf16.mxu0 0
    %4341 = vmatmul.mubr.bf16.gmra.mrb[0].mxu0 %v3305
    %v4342 = vpop.f32.mrb[0].mxu0
    %v4343 = vadd.f32 0.0, %v4342
    %v4344 = vpop.f32.mrb[0].mxu0
    %v4345 = vpop.f32.mrb[0].mxu0
    %v4346 = vadd.f32 0.0, %v4345
    %v4347 = vpop.f32.mrb[0].mxu0
    %4348 = vmatprep.mubr.bf16.mxu0 0
    %4349 = vmatmul.mubr.bf16.gmra.mrb[0].mxu0 %v3308
    %v4350 = vpop.f32.mrb[0].mxu0
    %v4351 = vadd.f32 0.0, %v4350
    %v4352 = vpop.f32.mrb[0].mxu0
    %v4353 = vpop.f32.mrb[0].mxu0
    %v4354 = vadd.f32 0.0, %v4353
    %v4355 = vpop.f32.mrb[0].mxu0
    %4356 = vmatprep.mubr.bf16.mxu0 0
    %4357 = vmatmul.mubr.bf16.gmra.mrb[0].mxu0 %v3311
    %v4358 = vpop.f32.mrb[0].mxu0
    %v4359 = vadd.f32 0.0, %v4358
    %v4360 = vpop.f32.mrb[0].mxu0
    %v4361 = vpop.f32.mrb[0].mxu0
    %v4362 = vadd.f32 0.0, %v4361
    %v4363 = vpop.f32.mrb[0].mxu0
    %4364 = vmatprep.mubr.bf16.mxu0 0
    %4365 = vmatmul.mubr.bf16.gmra.mrb[0].mxu0 %v3314
    %v4366 = vpop.f32.mrb[0].mxu0
    %v4367 = vadd.f32 0.0, %v4366
    %v4368 = vpop.f32.mrb[0].mxu0
    %v4369 = vpop.f32.mrb[0].mxu0
    %v4370 = vadd.f32 0.0, %v4369
    %v4371 = vpop.f32.mrb[0].mxu0
    %4372 = vdwg.mxu0
    %v4374 = vsel %vm1433, %v405, 0
    %v4377 = vsel %vm1433, %v406, 0
    %v4380 = vsel %vm1433, %v407, 0
    %v4383 = vsel %vm1433, %v408, 0
    %v4386 = vsel %vm1433, %v409, 0
    %v4389 = vsel %vm1433, %v410, 0
    %v4392 = vsel %vm1433, %v411, 0
    %v4395 = vsel %vm1433, %v412, 0
    %v4398 = vsel %vm1433, %v413, 0
    %v4401 = vsel %vm1433, %v414, 0
    %v4404 = vsel %vm1433, %v415, 0
    %v4407 = vsel %vm1433, %v416, 0
    %v4410 = vsel %vm1433, %v417, 0
    %v4413 = vsel %vm1433, %v418, 0
    %v4416 = vsel %vm1433, %v419, 0
    %v4419 = vsel %vm1433, %v420, 0
    %v4422 = vsel %vm1433, %v421, 0
    %v4425 = vsel %vm1433, %v422, 0
    %v4428 = vsel %vm1433, %v423, 0
    %v4431 = vsel %vm1433, %v424, 0
    %v4434 = vsel %vm1433, %v425, 0
    %v4437 = vsel %vm1433, %v426, 0
    %v4440 = vsel %vm1433, %v427, 0
    %v4443 = vsel %vm1433, %v428, 0
    %v4446 = vsel %vm1433, %v429, 0
    %v4449 = vsel %vm1433, %v430, 0
    %v4452 = vsel %vm1433, %v431, 0
    %v4455 = vsel %vm1433, %v432, 0
    %v4458 = vsel %vm1433, %v433, 0
    %v4461 = vsel %vm1433, %v434, 0
    %v4464 = vsel %vm1433, %v435, 0
    %v4467 = vsel %vm1433, %v436, 0
    %v4470 = vsel %vm1433, %v437, 0
    %v4473 = vsel %vm1433, %v438, 0
    %v4476 = vsel %vm1433, %v439, 0
    %v4479 = vsel %vm1433, %v440, 0
    %v4482 = vsel %vm1433, %v441, 0
    %v4485 = vsel %vm1433, %v442, 0
    %v4488 = vsel %vm1433, %v443, 0
    %v4491 = vsel %vm1433, %v444, 0
    %v4494 = vsel %vm1433, %v445, 0
    %v4497 = vsel %vm1433, %v446, 0
    %v4500 = vsel %vm1433, %v447, 0
    %v4503 = vsel %vm1433, %v448, 0
    %v4506 = vsel %vm1433, %v449, 0
    %v4509 = vsel %vm1433, %v450, 0
    %v4512 = vsel %vm1433, %v451, 0
    %v4515 = vsel %vm1433, %v452, 0
    %v4518 = vsel %vm1433, %v453, 0
    %v4521 = vsel %vm1433, %v454, 0
    %v4524 = vsel %vm1433, %v455, 0
    %v4527 = vsel %vm1433, %v456, 0
    %v4530 = vsel %vm1433, %v457, 0
    %v4533 = vsel %vm1433, %v458, 0
    %v4536 = vsel %vm1433, %v459, 0
    %v4539 = vsel %vm1433, %v460, 0
    %v4542 = vsel %vm1433, %v461, 0
    %v4545 = vsel %vm1433, %v462, 0
    %v4548 = vsel %vm1433, %v463, 0
    %v4551 = vsel %vm1433, %v464, 0
    %v4554 = vsel %vm1433, %v465, 0
    %v4557 = vsel %vm1433, %v466, 0
    %v4560 = vsel %vm1433, %v467, 0
    %v4563 = vsel %vm1433, %v468, 0
    %v4566 = vsel %vm1433, %v469, 0
    %v4569 = vsel %vm1433, %v470, 0
    %v4572 = vsel %vm1433, %v471, 0
    %v4575 = vsel %vm1433, %v472, 0
    %v4578 = vsel %vm1433, %v473, 0
    %v4581 = vsel %vm1433, %v474, 0
    %v4584 = vsel %vm1433, %v475, 0
    %v4587 = vsel %vm1433, %v476, 0
    %v4590 = vsel %vm1433, %v477, 0
    %v4593 = vsel %vm1433, %v478, 0
    %v4596 = vsel %vm1433, %v479, 0
    %v4599 = vsel %vm1433, %v480, 0
    %v4602 = vsel %vm1433, %v481, 0
    %v4605 = vsel %vm1433, %v482, 0
    %v4608 = vsel %vm1433, %v483, 0
    %v4611 = vsel %vm1433, %v484, 0
    %v4614 = vsel %vm1433, %v485, 0
    %v4617 = vsel %vm1433, %v486, 0
    %v4620 = vsel %vm1433, %v487, 0
    %v4623 = vsel %vm1433, %v488, 0
    %v4626 = vsel %vm1433, %v489, 0
    %v4629 = vsel %vm1433, %v490, 0
    %v4632 = vsel %vm1433, %v491, 0
    %v4635 = vsel %vm1433, %v492, 0
    %v4638 = vsel %vm1433, %v493, 0
    %v4641 = vsel %vm1433, %v494, 0
    %v4644 = vsel %vm1433, %v495, 0
    %v4647 = vsel %vm1433, %v496, 0
    %v4650 = vsel %vm1433, %v497, 0
    %v4653 = vsel %vm1433, %v498, 0
    %v4656 = vsel %vm1433, %v499, 0
    %v4659 = vsel %vm1433, %v500, 0
    %v4662 = vsel %vm1433, %v501, 0
    %v4665 = vsel %vm1433, %v502, 0
    %v4668 = vsel %vm1433, %v503, 0
    %v4671 = vsel %vm1433, %v504, 0
    %v4674 = vsel %vm1433, %v505, 0
    %v4677 = vsel %vm1433, %v506, 0
    %v4680 = vsel %vm1433, %v507, 0
    %v4683 = vsel %vm1433, %v508, 0
    %v4686 = vsel %vm1433, %v509, 0
    %v4689 = vsel %vm1433, %v510, 0
    %v4692 = vsel %vm1433, %v511, 0
    %v4695 = vsel %vm1433, %v512, 0
    %v4698 = vsel %vm1433, %v513, 0
    %v4701 = vsel %vm1433, %v514, 0
    %v4704 = vsel %vm1433, %v515, 0
    %v4707 = vsel %vm1433, %v516, 0
    %v4710 = vsel %vm1433, %v517, 0
    %v4713 = vsel %vm1433, %v518, 0
    %v4716 = vsel %vm1433, %v519, 0
    %v4719 = vsel %vm1433, %v520, 0
    %v4722 = vsel %vm1433, %v521, 0
    %v4725 = vsel %vm1433, %v522, 0
    %v4728 = vsel %vm1433, %v523, 0
    %v4731 = vsel %vm1433, %v524, 0
    %v4734 = vsel %vm1433, %v525, 0
    %v4737 = vsel %vm1433, %v526, 0
    %v4740 = vsel %vm1433, %v527, 0
    %v4743 = vsel %vm1433, %v528, 0
    %v4746 = vsel %vm1433, %v529, 0
    %v4749 = vsel %vm1433, %v530, 0
    %v4752 = vsel %vm1433, %v531, 0
    %v4755 = vsel %vm1433, %v532, 0
    %4757 = vmatprep.subr.bf16.mxu0 0
    %4758 = vmatpush1.bf16.msra.mxu0 %v1735
    %4759 = vmatprep.subr.bf16.mxu0 0
    %4760 = vmatpush1.bf16.msra.mxu0 %v1736
    %4761 = vmatprep.subr.bf16.mxu0 0
    %4762 = vmatpush1.bf16.msra.mxu0 %v1737
    %4763 = vmatprep.subr.bf16.mxu0 0
    %4764 = vmatpush1.bf16.msra.mxu0 %v1738
    %4765 = vmatprep.subr.bf16.mxu0 0
    %4766 = vmatpush1.bf16.msra.mxu0 0
    %4767 = vmatprep.subr.bf16.mxu0 0
    %4768 = vmatpush1.bf16.msra.mxu0 0
    %4769 = vmatprep.subr.bf16.mxu0 0
    %4770 = vmatpush1.bf16.msra.mxu0 0
    %4771 = vmatprep.subr.bf16.mxu0 0
    %4772 = vmatpush1.bf16.msra.mxu0 0
    %4773 = vmatprep.subr.bf16.mxu0 0
    %4774 = vmatpush1.bf16.msra.mxu0 0
    %4775 = vmatprep.subr.bf16.mxu0 0
    %4776 = vmatpush1.bf16.msra.mxu0 0
    %4777 = vmatprep.subr.bf16.mxu0 0
    %4778 = vmatpush1.bf16.msra.mxu0 0
    %4779 = vmatprep.subr.bf16.mxu0 0
    %4780 = vmatpush1.bf16.msra.mxu0 0
    %4781 = vmatprep.subr.bf16.mxu0 0
    %4782 = vmatpush1.bf16.msra.mxu0 0
    %4783 = vmatprep.subr.bf16.mxu0 0
    %4784 = vmatpush1.bf16.msra.mxu0 0
    %4785 = vmatprep.subr.bf16.mxu0 0
    %4786 = vmatpush1.bf16.msra.mxu0 0
    %4787 = vmatprep.subr.bf16.mxu0 0
    %4788 = vmatpush1.bf16.msra.mxu0 0
    %4789 = vmatprep.mubr.bf16.mxu0 0
    %4790 = vmatmul.mubr.bf16.gmra.mrb[0].mxu0 %v4374
    %v4791 = vpop.f32.mrb[0].mxu0
    %v4792 = vadd.f32 %v3351, %v4791
    %v4793 = vpop.f32.mrb[0].mxu0
    %v4794 = vpop.f32.mrb[0].mxu0
    %v4795 = vadd.f32 %v3354, %v4794
    %v4796 = vpop.f32.mrb[0].mxu0
    %4797 = vmatprep.mubr.bf16.mxu0 0
    %4798 = vmatmul.mubr.bf16.gmra.mrb[0].mxu0 %v4377
    %v4799 = vpop.f32.mrb[0].mxu0
    %v4800 = vadd.f32 %v3359, %v4799
    %v4801 = vpop.f32.mrb[0].mxu0
    %v4802 = vpop.f32.mrb[0].mxu0
    %v4803 = vadd.f32 %v3362, %v4802
    %v4804 = vpop.f32.mrb[0].mxu0
    %4805 = vmatprep.mubr.bf16.mxu0 0
    %4806 = vmatmul.mubr.bf16.gmra.mrb[0].mxu0 %v4380
    %v4807 = vpop.f32.mrb[0].mxu0
    %v4808 = vadd.f32 %v3367, %v4807
    %v4809 = vpop.f32.mrb[0].mxu0
    %v4810 = vpop.f32.mrb[0].mxu0
    %v4811 = vadd.f32 %v3370, %v4810
    %v4812 = vpop.f32.mrb[0].mxu0
    %4813 = vmatprep.mubr.bf16.mxu0 0
    %4814 = vmatmul.mubr.bf16.gmra.mrb[0].mxu0 %v4383
    %v4815 = vpop.f32.mrb[0].mxu0
    %v4816 = vadd.f32 %v3375, %v4815
    %v4817 = vpop.f32.mrb[0].mxu0
    %v4818 = vpop.f32.mrb[0].mxu0
    %v4819 = vadd.f32 %v3378, %v4818
    %v4820 = vpop.f32.mrb[0].mxu0
    %4821 = vmatprep.mubr.bf16.mxu0 0
    %4822 = vmatmul.mubr.bf16.gmra.mrb[0].mxu0 %v4386
    %v4823 = vpop.f32.mrb[0].mxu0
    %v4824 = vadd.f32 %v3383, %v4823
    %v4825 = vpop.f32.mrb[0].mxu0
    %v4826 = vpop.f32.mrb[0].mxu0
    %v4827 = vadd.f32 %v3386, %v4826
    %v4828 = vpop.f32.mrb[0].mxu0
    %4829 = vmatprep.mubr.bf16.mxu0 0
    %4830 = vmatmul.mubr.bf16.gmra.mrb[0].mxu0 %v4389
    %v4831 = vpop.f32.mrb[0].mxu0
    %v4832 = vadd.f32 %v3391, %v4831
    %v4833 = vpop.f32.mrb[0].mxu0
    %v4834 = vpop.f32.mrb[0].mxu0
    %v4835 = vadd.f32 %v3394, %v4834
    %v4836 = vpop.f32.mrb[0].mxu0
    %4837 = vmatprep.mubr.bf16.mxu0 0
    %4838 = vmatmul.mubr.bf16.gmra.mrb[0].mxu0 %v4392
    %v4839 = vpop.f32.mrb[0].mxu0
    %v4840 = vadd.f32 %v3399, %v4839
    %v4841 = vpop.f32.mrb[0].mxu0
    %v4842 = vpop.f32.mrb[0].mxu0
    %v4843 = vadd.f32 %v3402, %v4842
    %v4844 = vpop.f32.mrb[0].mxu0
    %4845 = vmatprep.mubr.bf16.mxu0 0
    %4846 = vmatmul.mubr.bf16.gmra.mrb[0].mxu0 %v4395
    %v4847 = vpop.f32.mrb[0].mxu0
    %v4848 = vadd.f32 %v3407, %v4847
    %v4849 = vpop.f32.mrb[0].mxu0
    %v4850 = vpop.f32.mrb[0].mxu0
    %v4851 = vadd.f32 %v3410, %v4850
    %v4852 = vpop.f32.mrb[0].mxu0
    %4853 = vmatprep.mubr.bf16.mxu0 0
    %4854 = vmatmul.mubr.bf16.gmra.mrb[0].mxu0 %v4398
    %v4855 = vpop.f32.mrb[0].mxu0
    %v4856 = vadd.f32 %v3415, %v4855
    %v4857 = vpop.f32.mrb[0].mxu0
    %v4858 = vpop.f32.mrb[0].mxu0
    %v4859 = vadd.f32 %v3418, %v4858
    %v4860 = vpop.f32.mrb[0].mxu0
    %4861 = vmatprep.mubr.bf16.mxu0 0
    %4862 = vmatmul.mubr.bf16.gmra.mrb[0].mxu0 %v4401
    %v4863 = vpop.f32.mrb[0].mxu0
    %v4864 = vadd.f32 %v3423, %v4863
    %v4865 = vpop.f32.mrb[0].mxu0
    %v4866 = vpop.f32.mrb[0].mxu0
    %v4867 = vadd.f32 %v3426, %v4866
    %v4868 = vpop.f32.mrb[0].mxu0
    %4869 = vmatprep.mubr.bf16.mxu0 0
    %4870 = vmatmul.mubr.bf16.gmra.mrb[0].mxu0 %v4404
    %v4871 = vpop.f32.mrb[0].mxu0
    %v4872 = vadd.f32 %v3431, %v4871
    %v4873 = vpop.f32.mrb[0].mxu0
    %v4874 = vpop.f32.mrb[0].mxu0
    %v4875 = vadd.f32 %v3434, %v4874
    %v4876 = vpop.f32.mrb[0].mxu0
    %4877 = vmatprep.mubr.bf16.mxu0 0
    %4878 = vmatmul.mubr.bf16.gmra.mrb[0].mxu0 %v4407
    %v4879 = vpop.f32.mrb[0].mxu0
    %v4880 = vadd.f32 %v3439, %v4879
    %v4881 = vpop.f32.mrb[0].mxu0
    %v4882 = vpop.f32.mrb[0].mxu0
    %v4883 = vadd.f32 %v3442, %v4882
    %v4884 = vpop.f32.mrb[0].mxu0
    %4885 = vmatprep.mubr.bf16.mxu0 0
    %4886 = vmatmul.mubr.bf16.gmra.mrb[0].mxu0 %v4410
    %v4887 = vpop.f32.mrb[0].mxu0
    %v4888 = vadd.f32 %v3447, %v4887
    %v4889 = vpop.f32.mrb[0].mxu0
    %v4890 = vpop.f32.mrb[0].mxu0
    %v4891 = vadd.f32 %v3450, %v4890
    %v4892 = vpop.f32.mrb[0].mxu0
    %4893 = vmatprep.mubr.bf16.mxu0 0
    %4894 = vmatmul.mubr.bf16.gmra.mrb[0].mxu0 %v4413
    %v4895 = vpop.f32.mrb[0].mxu0
    %v4896 = vadd.f32 %v3455, %v4895
    %v4897 = vpop.f32.mrb[0].mxu0
    %v4898 = vpop.f32.mrb[0].mxu0
    %v4899 = vadd.f32 %v3458, %v4898
    %v4900 = vpop.f32.mrb[0].mxu0
    %4901 = vmatprep.mubr.bf16.mxu0 0
    %4902 = vmatmul.mubr.bf16.gmra.mrb[0].mxu0 %v4416
    %v4903 = vpop.f32.mrb[0].mxu0
    %v4904 = vadd.f32 %v3463, %v4903
    %v4905 = vpop.f32.mrb[0].mxu0
    %v4906 = vpop.f32.mrb[0].mxu0
    %v4907 = vadd.f32 %v3466, %v4906
    %v4908 = vpop.f32.mrb[0].mxu0
    %4909 = vmatprep.mubr.bf16.mxu0 0
    %4910 = vmatmul.mubr.bf16.gmra.mrb[0].mxu0 %v4419
    %v4911 = vpop.f32.mrb[0].mxu0
    %v4912 = vadd.f32 %v3471, %v4911
    %v4913 = vpop.f32.mrb[0].mxu0
    %v4914 = vpop.f32.mrb[0].mxu0
    %v4915 = vadd.f32 %v3474, %v4914
    %v4916 = vpop.f32.mrb[0].mxu0
    %4917 = vmatprep.mubr.bf16.mxu0 0
    %4918 = vmatmul.mubr.bf16.gmra.mrb[0].mxu0 %v4422
    %v4919 = vpop.f32.mrb[0].mxu0
    %v4920 = vadd.f32 %v3479, %v4919
    %v4921 = vpop.f32.mrb[0].mxu0
    %v4922 = vpop.f32.mrb[0].mxu0
    %v4923 = vadd.f32 %v3482, %v4922
    %v4924 = vpop.f32.mrb[0].mxu0
    %4925 = vmatprep.mubr.bf16.mxu0 0
    %4926 = vmatmul.mubr.bf16.gmra.mrb[0].mxu0 %v4425
    %v4927 = vpop.f32.mrb[0].mxu0
    %v4928 = vadd.f32 %v3487, %v4927
    %v4929 = vpop.f32.mrb[0].mxu0
    %v4930 = vpop.f32.mrb[0].mxu0
    %v4931 = vadd.f32 %v3490, %v4930
    %v4932 = vpop.f32.mrb[0].mxu0
    %4933 = vmatprep.mubr.bf16.mxu0 0
    %4934 = vmatmul.mubr.bf16.gmra.mrb[0].mxu0 %v4428
    %v4935 = vpop.f32.mrb[0].mxu0
    %v4936 = vadd.f32 %v3495, %v4935
    %v4937 = vpop.f32.mrb[0].mxu0
    %v4938 = vpop.f32.mrb[0].mxu0
    %v4939 = vadd.f32 %v3498, %v4938
    %v4940 = vpop.f32.mrb[0].mxu0
    %4941 = vmatprep.mubr.bf16.mxu0 0
    %4942 = vmatmul.mubr.bf16.gmra.mrb[0].mxu0 %v4431
    %v4943 = vpop.f32.mrb[0].mxu0
    %v4944 = vadd.f32 %v3503, %v4943
    %v4945 = vpop.f32.mrb[0].mxu0
    %v4946 = vpop.f32.mrb[0].mxu0
    %v4947 = vadd.f32 %v3506, %v4946
    %v4948 = vpop.f32.mrb[0].mxu0
    %4949 = vmatprep.mubr.bf16.mxu0 0
    %4950 = vmatmul.mubr.bf16.gmra.mrb[0].mxu0 %v4434
    %v4951 = vpop.f32.mrb[0].mxu0
    %v4952 = vadd.f32 %v3511, %v4951
    %v4953 = vpop.f32.mrb[0].mxu0
    %v4954 = vpop.f32.mrb[0].mxu0
    %v4955 = vadd.f32 %v3514, %v4954
    %v4956 = vpop.f32.mrb[0].mxu0
    %4957 = vmatprep.mubr.bf16.mxu0 0
    %4958 = vmatmul.mubr.bf16.gmra.mrb[0].mxu0 %v4437
    %v4959 = vpop.f32.mrb[0].mxu0
    %v4960 = vadd.f32 %v3519, %v4959
    %v4961 = vpop.f32.mrb[0].mxu0
    %v4962 = vpop.f32.mrb[0].mxu0
    %v4963 = vadd.f32 %v3522, %v4962
    %v4964 = vpop.f32.mrb[0].mxu0
    %4965 = vmatprep.mubr.bf16.mxu0 0
    %4966 = vmatmul.mubr.bf16.gmra.mrb[0].mxu0 %v4440
    %v4967 = vpop.f32.mrb[0].mxu0
    %v4968 = vadd.f32 %v3527, %v4967
    %v4969 = vpop.f32.mrb[0].mxu0
    %v4970 = vpop.f32.mrb[0].mxu0
    %v4971 = vadd.f32 %v3530, %v4970
    %v4972 = vpop.f32.mrb[0].mxu0
    %4973 = vmatprep.mubr.bf16.mxu0 0
    %4974 = vmatmul.mubr.bf16.gmra.mrb[0].mxu0 %v4443
    %v4975 = vpop.f32.mrb[0].mxu0
    %v4976 = vadd.f32 %v3535, %v4975
    %v4977 = vpop.f32.mrb[0].mxu0
    %v4978 = vpop.f32.mrb[0].mxu0
    %v4979 = vadd.f32 %v3538, %v4978
    %v4980 = vpop.f32.mrb[0].mxu0
    %4981 = vmatprep.mubr.bf16.mxu0 0
    %4982 = vmatmul.mubr.bf16.gmra.mrb[0].mxu0 %v4446
    %v4983 = vpop.f32.mrb[0].mxu0
    %v4984 = vadd.f32 %v3543, %v4983
    %v4985 = vpop.f32.mrb[0].mxu0
    %v4986 = vpop.f32.mrb[0].mxu0
    %v4987 = vadd.f32 %v3546, %v4986
    %v4988 = vpop.f32.mrb[0].mxu0
    %4989 = vmatprep.mubr.bf16.mxu0 0
    %4990 = vmatmul.mubr.bf16.gmra.mrb[0].mxu0 %v4449
    %v4991 = vpop.f32.mrb[0].mxu0
    %v4992 = vadd.f32 %v3551, %v4991
    %v4993 = vpop.f32.mrb[0].mxu0
    %v4994 = vpop.f32.mrb[0].mxu0
    %v4995 = vadd.f32 %v3554, %v4994
    %v4996 = vpop.f32.mrb[0].mxu0
    %4997 = vmatprep.mubr.bf16.mxu0 0
    %4998 = vmatmul.mubr.bf16.gmra.mrb[0].mxu0 %v4452
    %v4999 = vpop.f32.mrb[0].mxu0
    %v5000 = vadd.f32 %v3559, %v4999
    %v5001 = vpop.f32.mrb[0].mxu0
    %v5002 = vpop.f32.mrb[0].mxu0
    %v5003 = vadd.f32 %v3562, %v5002
    %v5004 = vpop.f32.mrb[0].mxu0
    %5005 = vmatprep.mubr.bf16.mxu0 0
    %5006 = vmatmul.mubr.bf16.gmra.mrb[0].mxu0 %v4455
    %v5007 = vpop.f32.mrb[0].mxu0
    %v5008 = vadd.f32 %v3567, %v5007
    %v5009 = vpop.f32.mrb[0].mxu0
    %v5010 = vpop.f32.mrb[0].mxu0
    %v5011 = vadd.f32 %v3570, %v5010
    %v5012 = vpop.f32.mrb[0].mxu0
    %5013 = vmatprep.mubr.bf16.mxu0 0
    %5014 = vmatmul.mubr.bf16.gmra.mrb[0].mxu0 %v4458
    %v5015 = vpop.f32.mrb[0].mxu0
    %v5016 = vadd.f32 %v3575, %v5015
    %v5017 = vpop.f32.mrb[0].mxu0
    %v5018 = vpop.f32.mrb[0].mxu0
    %v5019 = vadd.f32 %v3578, %v5018
    %v5020 = vpop.f32.mrb[0].mxu0
    %5021 = vmatprep.mubr.bf16.mxu0 0
    %5022 = vmatmul.mubr.bf16.gmra.mrb[0].mxu0 %v4461
    %v5023 = vpop.f32.mrb[0].mxu0
    %v5024 = vadd.f32 %v3583, %v5023
    %v5025 = vpop.f32.mrb[0].mxu0
    %v5026 = vpop.f32.mrb[0].mxu0
    %v5027 = vadd.f32 %v3586, %v5026
    %v5028 = vpop.f32.mrb[0].mxu0
    %5029 = vmatprep.mubr.bf16.mxu0 0
    %5030 = vmatmul.mubr.bf16.gmra.mrb[0].mxu0 %v4464
    %v5031 = vpop.f32.mrb[0].mxu0
    %v5032 = vadd.f32 %v3591, %v5031
    %v5033 = vpop.f32.mrb[0].mxu0
    %v5034 = vpop.f32.mrb[0].mxu0
    %v5035 = vadd.f32 %v3594, %v5034
    %v5036 = vpop.f32.mrb[0].mxu0
    %5037 = vmatprep.mubr.bf16.mxu0 0
    %5038 = vmatmul.mubr.bf16.gmra.mrb[0].mxu0 %v4467
    %v5039 = vpop.f32.mrb[0].mxu0
    %v5040 = vadd.f32 %v3599, %v5039
    %v5041 = vpop.f32.mrb[0].mxu0
    %v5042 = vpop.f32.mrb[0].mxu0
    %v5043 = vadd.f32 %v3602, %v5042
    %v5044 = vpop.f32.mrb[0].mxu0
    %5045 = vmatprep.mubr.bf16.mxu0 0
    %5046 = vmatmul.mubr.bf16.gmra.mrb[0].mxu0 %v4470
    %v5047 = vpop.f32.mrb[0].mxu0
    %v5048 = vadd.f32 %v3607, %v5047
    %v5049 = vpop.f32.mrb[0].mxu0
    %v5050 = vpop.f32.mrb[0].mxu0
    %v5051 = vadd.f32 %v3610, %v5050
    %v5052 = vpop.f32.mrb[0].mxu0
    %5053 = vmatprep.mubr.bf16.mxu0 0
    %5054 = vmatmul.mubr.bf16.gmra.mrb[0].mxu0 %v4473
    %v5055 = vpop.f32.mrb[0].mxu0
    %v5056 = vadd.f32 %v3615, %v5055
    %v5057 = vpop.f32.mrb[0].mxu0
    %v5058 = vpop.f32.mrb[0].mxu0
    %v5059 = vadd.f32 %v3618, %v5058
    %v5060 = vpop.f32.mrb[0].mxu0
    %5061 = vmatprep.mubr.bf16.mxu0 0
    %5062 = vmatmul.mubr.bf16.gmra.mrb[0].mxu0 %v4476
    %v5063 = vpop.f32.mrb[0].mxu0
    %v5064 = vadd.f32 %v3623, %v5063
    %v5065 = vpop.f32.mrb[0].mxu0
    %v5066 = vpop.f32.mrb[0].mxu0
    %v5067 = vadd.f32 %v3626, %v5066
    %v5068 = vpop.f32.mrb[0].mxu0
    %5069 = vmatprep.mubr.bf16.mxu0 0
    %5070 = vmatmul.mubr.bf16.gmra.mrb[0].mxu0 %v4479
    %v5071 = vpop.f32.mrb[0].mxu0
    %v5072 = vadd.f32 %v3631, %v5071
    %v5073 = vpop.f32.mrb[0].mxu0
    %v5074 = vpop.f32.mrb[0].mxu0
    %v5075 = vadd.f32 %v3634, %v5074
    %v5076 = vpop.f32.mrb[0].mxu0
    %5077 = vmatprep.mubr.bf16.mxu0 0
    %5078 = vmatmul.mubr.bf16.gmra.mrb[0].mxu0 %v4482
    %v5079 = vpop.f32.mrb[0].mxu0
    %v5080 = vadd.f32 %v3639, %v5079
    %v5081 = vpop.f32.mrb[0].mxu0
    %v5082 = vpop.f32.mrb[0].mxu0
    %v5083 = vadd.f32 %v3642, %v5082
    %v5084 = vpop.f32.mrb[0].mxu0
    %5085 = vmatprep.mubr.bf16.mxu0 0
    %5086 = vmatmul.mubr.bf16.gmra.mrb[0].mxu0 %v4485
    %v5087 = vpop.f32.mrb[0].mxu0
    %v5088 = vadd.f32 %v3647, %v5087
    %v5089 = vpop.f32.mrb[0].mxu0
    %v5090 = vpop.f32.mrb[0].mxu0
    %v5091 = vadd.f32 %v3650, %v5090
    %v5092 = vpop.f32.mrb[0].mxu0
    %5093 = vmatprep.mubr.bf16.mxu0 0
    %5094 = vmatmul.mubr.bf16.gmra.mrb[0].mxu0 %v4488
    %v5095 = vpop.f32.mrb[0].mxu0
    %v5096 = vadd.f32 %v3655, %v5095
    %v5097 = vpop.f32.mrb[0].mxu0
    %v5098 = vpop.f32.mrb[0].mxu0
    %v5099 = vadd.f32 %v3658, %v5098
    %v5100 = vpop.f32.mrb[0].mxu0
    %5101 = vmatprep.mubr.bf16.mxu0 0
    %5102 = vmatmul.mubr.bf16.gmra.mrb[0].mxu0 %v4491
    %v5103 = vpop.f32.mrb[0].mxu0
    %v5104 = vadd.f32 %v3663, %v5103
    %v5105 = vpop.f32.mrb[0].mxu0
    %v5106 = vpop.f32.mrb[0].mxu0
    %v5107 = vadd.f32 %v3666, %v5106
    %v5108 = vpop.f32.mrb[0].mxu0
    %5109 = vmatprep.mubr.bf16.mxu0 0
    %5110 = vmatmul.mubr.bf16.gmra.mrb[0].mxu0 %v4494
    %v5111 = vpop.f32.mrb[0].mxu0
    %v5112 = vadd.f32 %v3671, %v5111
    %v5113 = vpop.f32.mrb[0].mxu0
    %v5114 = vpop.f32.mrb[0].mxu0
    %v5115 = vadd.f32 %v3674, %v5114
    %v5116 = vpop.f32.mrb[0].mxu0
    %5117 = vmatprep.mubr.bf16.mxu0 0
    %5118 = vmatmul.mubr.bf16.gmra.mrb[0].mxu0 %v4497
    %v5119 = vpop.f32.mrb[0].mxu0
    %v5120 = vadd.f32 %v3679, %v5119
    %v5121 = vpop.f32.mrb[0].mxu0
    %v5122 = vpop.f32.mrb[0].mxu0
    %v5123 = vadd.f32 %v3682, %v5122
    %v5124 = vpop.f32.mrb[0].mxu0
    %5125 = vmatprep.mubr.bf16.mxu0 0
    %5126 = vmatmul.mubr.bf16.gmra.mrb[0].mxu0 %v4500
    %v5127 = vpop.f32.mrb[0].mxu0
    %v5128 = vadd.f32 %v3687, %v5127
    %v5129 = vpop.f32.mrb[0].mxu0
    %v5130 = vpop.f32.mrb[0].mxu0
    %v5131 = vadd.f32 %v3690, %v5130
    %v5132 = vpop.f32.mrb[0].mxu0
    %5133 = vmatprep.mubr.bf16.mxu0 0
    %5134 = vmatmul.mubr.bf16.gmra.mrb[0].mxu0 %v4503
    %v5135 = vpop.f32.mrb[0].mxu0
    %v5136 = vadd.f32 %v3695, %v5135
    %v5137 = vpop.f32.mrb[0].mxu0
    %v5138 = vpop.f32.mrb[0].mxu0
    %v5139 = vadd.f32 %v3698, %v5138
    %v5140 = vpop.f32.mrb[0].mxu0
    %5141 = vmatprep.mubr.bf16.mxu0 0
    %5142 = vmatmul.mubr.bf16.gmra.mrb[0].mxu0 %v4506
    %v5143 = vpop.f32.mrb[0].mxu0
    %v5144 = vadd.f32 %v3703, %v5143
    %v5145 = vpop.f32.mrb[0].mxu0
    %v5146 = vpop.f32.mrb[0].mxu0
    %v5147 = vadd.f32 %v3706, %v5146
    %v5148 = vpop.f32.mrb[0].mxu0
    %5149 = vmatprep.mubr.bf16.mxu0 0
    %5150 = vmatmul.mubr.bf16.gmra.mrb[0].mxu0 %v4509
    %v5151 = vpop.f32.mrb[0].mxu0
    %v5152 = vadd.f32 %v3711, %v5151
    %v5153 = vpop.f32.mrb[0].mxu0
    %v5154 = vpop.f32.mrb[0].mxu0
    %v5155 = vadd.f32 %v3714, %v5154
    %v5156 = vpop.f32.mrb[0].mxu0
    %5157 = vmatprep.mubr.bf16.mxu0 0
    %5158 = vmatmul.mubr.bf16.gmra.mrb[0].mxu0 %v4512
    %v5159 = vpop.f32.mrb[0].mxu0
    %v5160 = vadd.f32 %v3719, %v5159
    %v5161 = vpop.f32.mrb[0].mxu0
    %v5162 = vpop.f32.mrb[0].mxu0
    %v5163 = vadd.f32 %v3722, %v5162
    %v5164 = vpop.f32.mrb[0].mxu0
    %5165 = vmatprep.mubr.bf16.mxu0 0
    %5166 = vmatmul.mubr.bf16.gmra.mrb[0].mxu0 %v4515
    %v5167 = vpop.f32.mrb[0].mxu0
    %v5168 = vadd.f32 %v3727, %v5167
    %v5169 = vpop.f32.mrb[0].mxu0
    %v5170 = vpop.f32.mrb[0].mxu0
    %v5171 = vadd.f32 %v3730, %v5170
    %v5172 = vpop.f32.mrb[0].mxu0
    %5173 = vmatprep.mubr.bf16.mxu0 0
    %5174 = vmatmul.mubr.bf16.gmra.mrb[0].mxu0 %v4518
    %v5175 = vpop.f32.mrb[0].mxu0
    %v5176 = vadd.f32 %v3735, %v5175
    %v5177 = vpop.f32.mrb[0].mxu0
    %v5178 = vpop.f32.mrb[0].mxu0
    %v5179 = vadd.f32 %v3738, %v5178
    %v5180 = vpop.f32.mrb[0].mxu0
    %5181 = vmatprep.mubr.bf16.mxu0 0
    %5182 = vmatmul.mubr.bf16.gmra.mrb[0].mxu0 %v4521
    %v5183 = vpop.f32.mrb[0].mxu0
    %v5184 = vadd.f32 %v3743, %v5183
    %v5185 = vpop.f32.mrb[0].mxu0
    %v5186 = vpop.f32.mrb[0].mxu0
    %v5187 = vadd.f32 %v3746, %v5186
    %v5188 = vpop.f32.mrb[0].mxu0
    %5189 = vmatprep.mubr.bf16.mxu0 0
    %5190 = vmatmul.mubr.bf16.gmra.mrb[0].mxu0 %v4524
    %v5191 = vpop.f32.mrb[0].mxu0
    %v5192 = vadd.f32 %v3751, %v5191
    %v5193 = vpop.f32.mrb[0].mxu0
    %v5194 = vpop.f32.mrb[0].mxu0
    %v5195 = vadd.f32 %v3754, %v5194
    %v5196 = vpop.f32.mrb[0].mxu0
    %5197 = vmatprep.mubr.bf16.mxu0 0
    %5198 = vmatmul.mubr.bf16.gmra.mrb[0].mxu0 %v4527
    %v5199 = vpop.f32.mrb[0].mxu0
    %v5200 = vadd.f32 %v3759, %v5199
    %v5201 = vpop.f32.mrb[0].mxu0
    %v5202 = vpop.f32.mrb[0].mxu0
    %v5203 = vadd.f32 %v3762, %v5202
    %v5204 = vpop.f32.mrb[0].mxu0
    %5205 = vmatprep.mubr.bf16.mxu0 0
    %5206 = vmatmul.mubr.bf16.gmra.mrb[0].mxu0 %v4530
    %v5207 = vpop.f32.mrb[0].mxu0
    %v5208 = vadd.f32 %v3767, %v5207
    %v5209 = vpop.f32.mrb[0].mxu0
    %v5210 = vpop.f32.mrb[0].mxu0
    %v5211 = vadd.f32 %v3770, %v5210
    %v5212 = vpop.f32.mrb[0].mxu0
    %5213 = vmatprep.mubr.bf16.mxu0 0
    %5214 = vmatmul.mubr.bf16.gmra.mrb[0].mxu0 %v4533
    %v5215 = vpop.f32.mrb[0].mxu0
    %v5216 = vadd.f32 %v3775, %v5215
    %v5217 = vpop.f32.mrb[0].mxu0
    %v5218 = vpop.f32.mrb[0].mxu0
    %v5219 = vadd.f32 %v3778, %v5218
    %v5220 = vpop.f32.mrb[0].mxu0
    %5221 = vmatprep.mubr.bf16.mxu0 0
    %5222 = vmatmul.mubr.bf16.gmra.mrb[0].mxu0 %v4536
    %v5223 = vpop.f32.mrb[0].mxu0
    %v5224 = vadd.f32 %v3783, %v5223
    %v5225 = vpop.f32.mrb[0].mxu0
    %v5226 = vpop.f32.mrb[0].mxu0
    %v5227 = vadd.f32 %v3786, %v5226
    %v5228 = vpop.f32.mrb[0].mxu0
    %5229 = vmatprep.mubr.bf16.mxu0 0
    %5230 = vmatmul.mubr.bf16.gmra.mrb[0].mxu0 %v4539
    %v5231 = vpop.f32.mrb[0].mxu0
    %v5232 = vadd.f32 %v3791, %v5231
    %v5233 = vpop.f32.mrb[0].mxu0
    %v5234 = vpop.f32.mrb[0].mxu0
    %v5235 = vadd.f32 %v3794, %v5234
    %v5236 = vpop.f32.mrb[0].mxu0
    %5237 = vmatprep.mubr.bf16.mxu0 0
    %5238 = vmatmul.mubr.bf16.gmra.mrb[0].mxu0 %v4542
    %v5239 = vpop.f32.mrb[0].mxu0
    %v5240 = vadd.f32 %v3799, %v5239
    %v5241 = vpop.f32.mrb[0].mxu0
    %v5242 = vpop.f32.mrb[0].mxu0
    %v5243 = vadd.f32 %v3802, %v5242
    %v5244 = vpop.f32.mrb[0].mxu0
    %5245 = vmatprep.mubr.bf16.mxu0 0
    %5246 = vmatmul.mubr.bf16.gmra.mrb[0].mxu0 %v4545
    %v5247 = vpop.f32.mrb[0].mxu0
    %v5248 = vadd.f32 %v3807, %v5247
    %v5249 = vpop.f32.mrb[0].mxu0
    %v5250 = vpop.f32.mrb[0].mxu0
    %v5251 = vadd.f32 %v3810, %v5250
    %v5252 = vpop.f32.mrb[0].mxu0
    %5253 = vmatprep.mubr.bf16.mxu0 0
    %5254 = vmatmul.mubr.bf16.gmra.mrb[0].mxu0 %v4548
    %v5255 = vpop.f32.mrb[0].mxu0
    %v5256 = vadd.f32 %v3815, %v5255
    %v5257 = vpop.f32.mrb[0].mxu0
    %v5258 = vpop.f32.mrb[0].mxu0
    %v5259 = vadd.f32 %v3818, %v5258
    %v5260 = vpop.f32.mrb[0].mxu0
    %5261 = vmatprep.mubr.bf16.mxu0 0
    %5262 = vmatmul.mubr.bf16.gmra.mrb[0].mxu0 %v4551
    %v5263 = vpop.f32.mrb[0].mxu0
    %v5264 = vadd.f32 %v3823, %v5263
    %v5265 = vpop.f32.mrb[0].mxu0
    %v5266 = vpop.f32.mrb[0].mxu0
    %v5267 = vadd.f32 %v3826, %v5266
    %v5268 = vpop.f32.mrb[0].mxu0
    %5269 = vmatprep.mubr.bf16.mxu0 0
    %5270 = vmatmul.mubr.bf16.gmra.mrb[0].mxu0 %v4554
    %v5271 = vpop.f32.mrb[0].mxu0
    %v5272 = vadd.f32 %v3831, %v5271
    %v5273 = vpop.f32.mrb[0].mxu0
    %v5274 = vpop.f32.mrb[0].mxu0
    %v5275 = vadd.f32 %v3834, %v5274
    %v5276 = vpop.f32.mrb[0].mxu0
    %5277 = vmatprep.mubr.bf16.mxu0 0
    %5278 = vmatmul.mubr.bf16.gmra.mrb[0].mxu0 %v4557
    %v5279 = vpop.f32.mrb[0].mxu0
    %v5280 = vadd.f32 %v3839, %v5279
    %v5281 = vpop.f32.mrb[0].mxu0
    %v5282 = vpop.f32.mrb[0].mxu0
    %v5283 = vadd.f32 %v3842, %v5282
    %v5284 = vpop.f32.mrb[0].mxu0
    %5285 = vmatprep.mubr.bf16.mxu0 0
    %5286 = vmatmul.mubr.bf16.gmra.mrb[0].mxu0 %v4560
    %v5287 = vpop.f32.mrb[0].mxu0
    %v5288 = vadd.f32 %v3847, %v5287
    %v5289 = vpop.f32.mrb[0].mxu0
    %v5290 = vpop.f32.mrb[0].mxu0
    %v5291 = vadd.f32 %v3850, %v5290
    %v5292 = vpop.f32.mrb[0].mxu0
    %5293 = vmatprep.mubr.bf16.mxu0 0
    %5294 = vmatmul.mubr.bf16.gmra.mrb[0].mxu0 %v4563
    %v5295 = vpop.f32.mrb[0].mxu0
    %v5296 = vadd.f32 %v3855, %v5295
    %v5297 = vpop.f32.mrb[0].mxu0
    %v5298 = vpop.f32.mrb[0].mxu0
    %v5299 = vadd.f32 %v3858, %v5298
    %v5300 = vpop.f32.mrb[0].mxu0
    %5301 = vmatprep.mubr.bf16.mxu0 0
    %5302 = vmatmul.mubr.bf16.gmra.mrb[0].mxu0 %v4566
    %v5303 = vpop.f32.mrb[0].mxu0
    %v5304 = vadd.f32 %v3863, %v5303
    %v5305 = vpop.f32.mrb[0].mxu0
    %v5306 = vpop.f32.mrb[0].mxu0
    %v5307 = vadd.f32 %v3866, %v5306
    %v5308 = vpop.f32.mrb[0].mxu0
    %5309 = vmatprep.mubr.bf16.mxu0 0
    %5310 = vmatmul.mubr.bf16.gmra.mrb[0].mxu0 %v4569
    %v5311 = vpop.f32.mrb[0].mxu0
    %v5312 = vadd.f32 %v3871, %v5311
    %v5313 = vpop.f32.mrb[0].mxu0
    %v5314 = vpop.f32.mrb[0].mxu0
    %v5315 = vadd.f32 %v3874, %v5314
    %v5316 = vpop.f32.mrb[0].mxu0
    %5317 = vmatprep.mubr.bf16.mxu0 0
    %5318 = vmatmul.mubr.bf16.gmra.mrb[0].mxu0 %v4572
    %v5319 = vpop.f32.mrb[0].mxu0
    %v5320 = vadd.f32 %v3879, %v5319
    %v5321 = vpop.f32.mrb[0].mxu0
    %v5322 = vpop.f32.mrb[0].mxu0
    %v5323 = vadd.f32 %v3882, %v5322
    %v5324 = vpop.f32.mrb[0].mxu0
    %5325 = vmatprep.mubr.bf16.mxu0 0
    %5326 = vmatmul.mubr.bf16.gmra.mrb[0].mxu0 %v4575
    %v5327 = vpop.f32.mrb[0].mxu0
    %v5328 = vadd.f32 %v3887, %v5327
    %v5329 = vpop.f32.mrb[0].mxu0
    %v5330 = vpop.f32.mrb[0].mxu0
    %v5331 = vadd.f32 %v3890, %v5330
    %v5332 = vpop.f32.mrb[0].mxu0
    %5333 = vmatprep.mubr.bf16.mxu0 0
    %5334 = vmatmul.mubr.bf16.gmra.mrb[0].mxu0 %v4578
    %v5335 = vpop.f32.mrb[0].mxu0
    %v5336 = vadd.f32 %v3895, %v5335
    %v5337 = vpop.f32.mrb[0].mxu0
    %v5338 = vpop.f32.mrb[0].mxu0
    %v5339 = vadd.f32 %v3898, %v5338
    %v5340 = vpop.f32.mrb[0].mxu0
    %5341 = vmatprep.mubr.bf16.mxu0 0
    %5342 = vmatmul.mubr.bf16.gmra.mrb[0].mxu0 %v4581
    %v5343 = vpop.f32.mrb[0].mxu0
    %v5344 = vadd.f32 %v3903, %v5343
    %v5345 = vpop.f32.mrb[0].mxu0
    %v5346 = vpop.f32.mrb[0].mxu0
    %v5347 = vadd.f32 %v3906, %v5346
    %v5348 = vpop.f32.mrb[0].mxu0
    %5349 = vmatprep.mubr.bf16.mxu0 0
    %5350 = vmatmul.mubr.bf16.gmra.mrb[0].mxu0 %v4584
    %v5351 = vpop.f32.mrb[0].mxu0
    %v5352 = vadd.f32 %v3911, %v5351
    %v5353 = vpop.f32.mrb[0].mxu0
    %v5354 = vpop.f32.mrb[0].mxu0
    %v5355 = vadd.f32 %v3914, %v5354
    %v5356 = vpop.f32.mrb[0].mxu0
    %5357 = vmatprep.mubr.bf16.mxu0 0
    %5358 = vmatmul.mubr.bf16.gmra.mrb[0].mxu0 %v4587
    %v5359 = vpop.f32.mrb[0].mxu0
    %v5360 = vadd.f32 %v3919, %v5359
    %v5361 = vpop.f32.mrb[0].mxu0
    %v5362 = vpop.f32.mrb[0].mxu0
    %v5363 = vadd.f32 %v3922, %v5362
    %v5364 = vpop.f32.mrb[0].mxu0
    %5365 = vmatprep.mubr.bf16.mxu0 0
    %5366 = vmatmul.mubr.bf16.gmra.mrb[0].mxu0 %v4590
    %v5367 = vpop.f32.mrb[0].mxu0
    %v5368 = vadd.f32 %v3927, %v5367
    %v5369 = vpop.f32.mrb[0].mxu0
    %v5370 = vpop.f32.mrb[0].mxu0
    %v5371 = vadd.f32 %v3930, %v5370
    %v5372 = vpop.f32.mrb[0].mxu0
    %5373 = vmatprep.mubr.bf16.mxu0 0
    %5374 = vmatmul.mubr.bf16.gmra.mrb[0].mxu0 %v4593
    %v5375 = vpop.f32.mrb[0].mxu0
    %v5376 = vadd.f32 %v3935, %v5375
    %v5377 = vpop.f32.mrb[0].mxu0
    %v5378 = vpop.f32.mrb[0].mxu0
    %v5379 = vadd.f32 %v3938, %v5378
    %v5380 = vpop.f32.mrb[0].mxu0
    %5381 = vmatprep.mubr.bf16.mxu0 0
    %5382 = vmatmul.mubr.bf16.gmra.mrb[0].mxu0 %v4596
    %v5383 = vpop.f32.mrb[0].mxu0
    %v5384 = vadd.f32 %v3943, %v5383
    %v5385 = vpop.f32.mrb[0].mxu0
    %v5386 = vpop.f32.mrb[0].mxu0
    %v5387 = vadd.f32 %v3946, %v5386
    %v5388 = vpop.f32.mrb[0].mxu0
    %5389 = vmatprep.mubr.bf16.mxu0 0
    %5390 = vmatmul.mubr.bf16.gmra.mrb[0].mxu0 %v4599
    %v5391 = vpop.f32.mrb[0].mxu0
    %v5392 = vadd.f32 %v3951, %v5391
    %v5393 = vpop.f32.mrb[0].mxu0
    %v5394 = vpop.f32.mrb[0].mxu0
    %v5395 = vadd.f32 %v3954, %v5394
    %v5396 = vpop.f32.mrb[0].mxu0
    %5397 = vmatprep.mubr.bf16.mxu0 0
    %5398 = vmatmul.mubr.bf16.gmra.mrb[0].mxu0 %v4602
    %v5399 = vpop.f32.mrb[0].mxu0
    %v5400 = vadd.f32 %v3959, %v5399
    %v5401 = vpop.f32.mrb[0].mxu0
    %v5402 = vpop.f32.mrb[0].mxu0
    %v5403 = vadd.f32 %v3962, %v5402
    %v5404 = vpop.f32.mrb[0].mxu0
    %5405 = vmatprep.mubr.bf16.mxu0 0
    %5406 = vmatmul.mubr.bf16.gmra.mrb[0].mxu0 %v4605
    %v5407 = vpop.f32.mrb[0].mxu0
    %v5408 = vadd.f32 %v3967, %v5407
    %v5409 = vpop.f32.mrb[0].mxu0
    %v5410 = vpop.f32.mrb[0].mxu0
    %v5411 = vadd.f32 %v3970, %v5410
    %v5412 = vpop.f32.mrb[0].mxu0
    %5413 = vmatprep.mubr.bf16.mxu0 0
    %5414 = vmatmul.mubr.bf16.gmra.mrb[0].mxu0 %v4608
    %v5415 = vpop.f32.mrb[0].mxu0
    %v5416 = vadd.f32 %v3975, %v5415
    %v5417 = vpop.f32.mrb[0].mxu0
    %v5418 = vpop.f32.mrb[0].mxu0
    %v5419 = vadd.f32 %v3978, %v5418
    %v5420 = vpop.f32.mrb[0].mxu0
    %5421 = vmatprep.mubr.bf16.mxu0 0
    %5422 = vmatmul.mubr.bf16.gmra.mrb[0].mxu0 %v4611
    %v5423 = vpop.f32.mrb[0].mxu0
    %v5424 = vadd.f32 %v3983, %v5423
    %v5425 = vpop.f32.mrb[0].mxu0
    %v5426 = vpop.f32.mrb[0].mxu0
    %v5427 = vadd.f32 %v3986, %v5426
    %v5428 = vpop.f32.mrb[0].mxu0
    %5429 = vmatprep.mubr.bf16.mxu0 0
    %5430 = vmatmul.mubr.bf16.gmra.mrb[0].mxu0 %v4614
    %v5431 = vpop.f32.mrb[0].mxu0
    %v5432 = vadd.f32 %v3991, %v5431
    %v5433 = vpop.f32.mrb[0].mxu0
    %v5434 = vpop.f32.mrb[0].mxu0
    %v5435 = vadd.f32 %v3994, %v5434
    %v5436 = vpop.f32.mrb[0].mxu0
    %5437 = vmatprep.mubr.bf16.mxu0 0
    %5438 = vmatmul.mubr.bf16.gmra.mrb[0].mxu0 %v4617
    %v5439 = vpop.f32.mrb[0].mxu0
    %v5440 = vadd.f32 %v3999, %v5439
    %v5441 = vpop.f32.mrb[0].mxu0
    %v5442 = vpop.f32.mrb[0].mxu0
    %v5443 = vadd.f32 %v4002, %v5442
    %v5444 = vpop.f32.mrb[0].mxu0
    %5445 = vmatprep.mubr.bf16.mxu0 0
    %5446 = vmatmul.mubr.bf16.gmra.mrb[0].mxu0 %v4620
    %v5447 = vpop.f32.mrb[0].mxu0
    %v5448 = vadd.f32 %v4007, %v5447
    %v5449 = vpop.f32.mrb[0].mxu0
    %v5450 = vpop.f32.mrb[0].mxu0
    %v5451 = vadd.f32 %v4010, %v5450
    %v5452 = vpop.f32.mrb[0].mxu0
    %5453 = vmatprep.mubr.bf16.mxu0 0
    %5454 = vmatmul.mubr.bf16.gmra.mrb[0].mxu0 %v4623
    %v5455 = vpop.f32.mrb[0].mxu0
    %v5456 = vadd.f32 %v4015, %v5455
    %v5457 = vpop.f32.mrb[0].mxu0
    %v5458 = vpop.f32.mrb[0].mxu0
    %v5459 = vadd.f32 %v4018, %v5458
    %v5460 = vpop.f32.mrb[0].mxu0
    %5461 = vmatprep.mubr.bf16.mxu0 0
    %5462 = vmatmul.mubr.bf16.gmra.mrb[0].mxu0 %v4626
    %v5463 = vpop.f32.mrb[0].mxu0
    %v5464 = vadd.f32 %v4023, %v5463
    %v5465 = vpop.f32.mrb[0].mxu0
    %v5466 = vpop.f32.mrb[0].mxu0
    %v5467 = vadd.f32 %v4026, %v5466
    %v5468 = vpop.f32.mrb[0].mxu0
    %5469 = vmatprep.mubr.bf16.mxu0 0
    %5470 = vmatmul.mubr.bf16.gmra.mrb[0].mxu0 %v4629
    %v5471 = vpop.f32.mrb[0].mxu0
    %v5472 = vadd.f32 %v4031, %v5471
    %v5473 = vpop.f32.mrb[0].mxu0
    %v5474 = vpop.f32.mrb[0].mxu0
    %v5475 = vadd.f32 %v4034, %v5474
    %v5476 = vpop.f32.mrb[0].mxu0
    %5477 = vmatprep.mubr.bf16.mxu0 0
    %5478 = vmatmul.mubr.bf16.gmra.mrb[0].mxu0 %v4632
    %v5479 = vpop.f32.mrb[0].mxu0
    %v5480 = vadd.f32 %v4039, %v5479
    %v5481 = vpop.f32.mrb[0].mxu0
    %v5482 = vpop.f32.mrb[0].mxu0
    %v5483 = vadd.f32 %v4042, %v5482
    %v5484 = vpop.f32.mrb[0].mxu0
    %5485 = vmatprep.mubr.bf16.mxu0 0
    %5486 = vmatmul.mubr.bf16.gmra.mrb[0].mxu0 %v4635
    %v5487 = vpop.f32.mrb[0].mxu0
    %v5488 = vadd.f32 %v4047, %v5487
    %v5489 = vpop.f32.mrb[0].mxu0
    %v5490 = vpop.f32.mrb[0].mxu0
    %v5491 = vadd.f32 %v4050, %v5490
    %v5492 = vpop.f32.mrb[0].mxu0
    %5493 = vmatprep.mubr.bf16.mxu0 0
    %5494 = vmatmul.mubr.bf16.gmra.mrb[0].mxu0 %v4638
    %v5495 = vpop.f32.mrb[0].mxu0
    %v5496 = vadd.f32 %v4055, %v5495
    %v5497 = vpop.f32.mrb[0].mxu0
    %v5498 = vpop.f32.mrb[0].mxu0
    %v5499 = vadd.f32 %v4058, %v5498
    %v5500 = vpop.f32.mrb[0].mxu0
    %5501 = vmatprep.mubr.bf16.mxu0 0
    %5502 = vmatmul.mubr.bf16.gmra.mrb[0].mxu0 %v4641
    %v5503 = vpop.f32.mrb[0].mxu0
    %v5504 = vadd.f32 %v4063, %v5503
    %v5505 = vpop.f32.mrb[0].mxu0
    %v5506 = vpop.f32.mrb[0].mxu0
    %v5507 = vadd.f32 %v4066, %v5506
    %v5508 = vpop.f32.mrb[0].mxu0
    %5509 = vmatprep.mubr.bf16.mxu0 0
    %5510 = vmatmul.mubr.bf16.gmra.mrb[0].mxu0 %v4644
    %v5511 = vpop.f32.mrb[0].mxu0
    %v5512 = vadd.f32 %v4071, %v5511
    %v5513 = vpop.f32.mrb[0].mxu0
    %v5514 = vpop.f32.mrb[0].mxu0
    %v5515 = vadd.f32 %v4074, %v5514
    %v5516 = vpop.f32.mrb[0].mxu0
    %5517 = vmatprep.mubr.bf16.mxu0 0
    %5518 = vmatmul.mubr.bf16.gmra.mrb[0].mxu0 %v4647
    %v5519 = vpop.f32.mrb[0].mxu0
    %v5520 = vadd.f32 %v4079, %v5519
    %v5521 = vpop.f32.mrb[0].mxu0
    %v5522 = vpop.f32.mrb[0].mxu0
    %v5523 = vadd.f32 %v4082, %v5522
    %v5524 = vpop.f32.mrb[0].mxu0
    %5525 = vmatprep.mubr.bf16.mxu0 0
    %5526 = vmatmul.mubr.bf16.gmra.mrb[0].mxu0 %v4650
    %v5527 = vpop.f32.mrb[0].mxu0
    %v5528 = vadd.f32 %v4087, %v5527
    %v5529 = vpop.f32.mrb[0].mxu0
    %v5530 = vpop.f32.mrb[0].mxu0
    %v5531 = vadd.f32 %v4090, %v5530
    %v5532 = vpop.f32.mrb[0].mxu0
    %5533 = vmatprep.mubr.bf16.mxu0 0
    %5534 = vmatmul.mubr.bf16.gmra.mrb[0].mxu0 %v4653
    %v5535 = vpop.f32.mrb[0].mxu0
    %v5536 = vadd.f32 %v4095, %v5535
    %v5537 = vpop.f32.mrb[0].mxu0
    %v5538 = vpop.f32.mrb[0].mxu0
    %v5539 = vadd.f32 %v4098, %v5538
    %v5540 = vpop.f32.mrb[0].mxu0
    %5541 = vmatprep.mubr.bf16.mxu0 0
    %5542 = vmatmul.mubr.bf16.gmra.mrb[0].mxu0 %v4656
    %v5543 = vpop.f32.mrb[0].mxu0
    %v5544 = vadd.f32 %v4103, %v5543
    %v5545 = vpop.f32.mrb[0].mxu0
    %v5546 = vpop.f32.mrb[0].mxu0
    %v5547 = vadd.f32 %v4106, %v5546
    %v5548 = vpop.f32.mrb[0].mxu0
    %5549 = vmatprep.mubr.bf16.mxu0 0
    %5550 = vmatmul.mubr.bf16.gmra.mrb[0].mxu0 %v4659
    %v5551 = vpop.f32.mrb[0].mxu0
    %v5552 = vadd.f32 %v4111, %v5551
    %v5553 = vpop.f32.mrb[0].mxu0
    %v5554 = vpop.f32.mrb[0].mxu0
    %v5555 = vadd.f32 %v4114, %v5554
    %v5556 = vpop.f32.mrb[0].mxu0
    %5557 = vmatprep.mubr.bf16.mxu0 0
    %5558 = vmatmul.mubr.bf16.gmra.mrb[0].mxu0 %v4662
    %v5559 = vpop.f32.mrb[0].mxu0
    %v5560 = vadd.f32 %v4119, %v5559
    %v5561 = vpop.f32.mrb[0].mxu0
    %v5562 = vpop.f32.mrb[0].mxu0
    %v5563 = vadd.f32 %v4122, %v5562
    %v5564 = vpop.f32.mrb[0].mxu0
    %5565 = vmatprep.mubr.bf16.mxu0 0
    %5566 = vmatmul.mubr.bf16.gmra.mrb[0].mxu0 %v4665
    %v5567 = vpop.f32.mrb[0].mxu0
    %v5568 = vadd.f32 %v4127, %v5567
    %v5569 = vpop.f32.mrb[0].mxu0
    %v5570 = vpop.f32.mrb[0].mxu0
    %v5571 = vadd.f32 %v4130, %v5570
    %v5572 = vpop.f32.mrb[0].mxu0
    %5573 = vmatprep.mubr.bf16.mxu0 0
    %5574 = vmatmul.mubr.bf16.gmra.mrb[0].mxu0 %v4668
    %v5575 = vpop.f32.mrb[0].mxu0
    %v5576 = vadd.f32 %v4135, %v5575
    %v5577 = vpop.f32.mrb[0].mxu0
    %v5578 = vpop.f32.mrb[0].mxu0
    %v5579 = vadd.f32 %v4138, %v5578
    %v5580 = vpop.f32.mrb[0].mxu0
    %5581 = vmatprep.mubr.bf16.mxu0 0
    %5582 = vmatmul.mubr.bf16.gmra.mrb[0].mxu0 %v4671
    %v5583 = vpop.f32.mrb[0].mxu0
    %v5584 = vadd.f32 %v4143, %v5583
    %v5585 = vpop.f32.mrb[0].mxu0
    %v5586 = vpop.f32.mrb[0].mxu0
    %v5587 = vadd.f32 %v4146, %v5586
    %v5588 = vpop.f32.mrb[0].mxu0
    %5589 = vmatprep.mubr.bf16.mxu0 0
    %5590 = vmatmul.mubr.bf16.gmra.mrb[0].mxu0 %v4674
    %v5591 = vpop.f32.mrb[0].mxu0
    %v5592 = vadd.f32 %v4151, %v5591
    %v5593 = vpop.f32.mrb[0].mxu0
    %v5594 = vpop.f32.mrb[0].mxu0
    %v5595 = vadd.f32 %v4154, %v5594
    %v5596 = vpop.f32.mrb[0].mxu0
    %5597 = vmatprep.mubr.bf16.mxu0 0
    %5598 = vmatmul.mubr.bf16.gmra.mrb[0].mxu0 %v4677
    %v5599 = vpop.f32.mrb[0].mxu0
    %v5600 = vadd.f32 %v4159, %v5599
    %v5601 = vpop.f32.mrb[0].mxu0
    %v5602 = vpop.f32.mrb[0].mxu0
    %v5603 = vadd.f32 %v4162, %v5602
    %v5604 = vpop.f32.mrb[0].mxu0
    %5605 = vmatprep.mubr.bf16.mxu0 0
    %5606 = vmatmul.mubr.bf16.gmra.mrb[0].mxu0 %v4680
    %v5607 = vpop.f32.mrb[0].mxu0
    %v5608 = vadd.f32 %v4167, %v5607
    %v5609 = vpop.f32.mrb[0].mxu0
    %v5610 = vpop.f32.mrb[0].mxu0
    %v5611 = vadd.f32 %v4170, %v5610
    %v5612 = vpop.f32.mrb[0].mxu0
    %5613 = vmatprep.mubr.bf16.mxu0 0
    %5614 = vmatmul.mubr.bf16.gmra.mrb[0].mxu0 %v4683
    %v5615 = vpop.f32.mrb[0].mxu0
    %v5616 = vadd.f32 %v4175, %v5615
    %v5617 = vpop.f32.mrb[0].mxu0
    %v5618 = vpop.f32.mrb[0].mxu0
    %v5619 = vadd.f32 %v4178, %v5618
    %v5620 = vpop.f32.mrb[0].mxu0
    %5621 = vmatprep.mubr.bf16.mxu0 0
    %5622 = vmatmul.mubr.bf16.gmra.mrb[0].mxu0 %v4686
    %v5623 = vpop.f32.mrb[0].mxu0
    %v5624 = vadd.f32 %v4183, %v5623
    %v5625 = vpop.f32.mrb[0].mxu0
    %v5626 = vpop.f32.mrb[0].mxu0
    %v5627 = vadd.f32 %v4186, %v5626
    %v5628 = vpop.f32.mrb[0].mxu0
    %5629 = vmatprep.mubr.bf16.mxu0 0
    %5630 = vmatmul.mubr.bf16.gmra.mrb[0].mxu0 %v4689
    %v5631 = vpop.f32.mrb[0].mxu0
    %v5632 = vadd.f32 %v4191, %v5631
    %v5633 = vpop.f32.mrb[0].mxu0
    %v5634 = vpop.f32.mrb[0].mxu0
    %v5635 = vadd.f32 %v4194, %v5634
    %v5636 = vpop.f32.mrb[0].mxu0
    %5637 = vmatprep.mubr.bf16.mxu0 0
    %5638 = vmatmul.mubr.bf16.gmra.mrb[0].mxu0 %v4692
    %v5639 = vpop.f32.mrb[0].mxu0
    %v5640 = vadd.f32 %v4199, %v5639
    %v5641 = vpop.f32.mrb[0].mxu0
    %v5642 = vpop.f32.mrb[0].mxu0
    %v5643 = vadd.f32 %v4202, %v5642
    %v5644 = vpop.f32.mrb[0].mxu0
    %5645 = vmatprep.mubr.bf16.mxu0 0
    %5646 = vmatmul.mubr.bf16.gmra.mrb[0].mxu0 %v4695
    %v5647 = vpop.f32.mrb[0].mxu0
    %v5648 = vadd.f32 %v4207, %v5647
    %v5649 = vpop.f32.mrb[0].mxu0
    %v5650 = vpop.f32.mrb[0].mxu0
    %v5651 = vadd.f32 %v4210, %v5650
    %v5652 = vpop.f32.mrb[0].mxu0
    %5653 = vmatprep.mubr.bf16.mxu0 0
    %5654 = vmatmul.mubr.bf16.gmra.mrb[0].mxu0 %v4698
    %v5655 = vpop.f32.mrb[0].mxu0
    %v5656 = vadd.f32 %v4215, %v5655
    %v5657 = vpop.f32.mrb[0].mxu0
    %v5658 = vpop.f32.mrb[0].mxu0
    %v5659 = vadd.f32 %v4218, %v5658
    %v5660 = vpop.f32.mrb[0].mxu0
    %5661 = vmatprep.mubr.bf16.mxu0 0
    %5662 = vmatmul.mubr.bf16.gmra.mrb[0].mxu0 %v4701
    %v5663 = vpop.f32.mrb[0].mxu0
    %v5664 = vadd.f32 %v4223, %v5663
    %v5665 = vpop.f32.mrb[0].mxu0
    %v5666 = vpop.f32.mrb[0].mxu0
    %v5667 = vadd.f32 %v4226, %v5666
    %v5668 = vpop.f32.mrb[0].mxu0
    %5669 = vmatprep.mubr.bf16.mxu0 0
    %5670 = vmatmul.mubr.bf16.gmra.mrb[0].mxu0 %v4704
    %v5671 = vpop.f32.mrb[0].mxu0
    %v5672 = vadd.f32 %v4231, %v5671
    %v5673 = vpop.f32.mrb[0].mxu0
    %v5674 = vpop.f32.mrb[0].mxu0
    %v5675 = vadd.f32 %v4234, %v5674
    %v5676 = vpop.f32.mrb[0].mxu0
    %5677 = vmatprep.mubr.bf16.mxu0 0
    %5678 = vmatmul.mubr.bf16.gmra.mrb[0].mxu0 %v4707
    %v5679 = vpop.f32.mrb[0].mxu0
    %v5680 = vadd.f32 %v4239, %v5679
    %v5681 = vpop.f32.mrb[0].mxu0
    %v5682 = vpop.f32.mrb[0].mxu0
    %v5683 = vadd.f32 %v4242, %v5682
    %v5684 = vpop.f32.mrb[0].mxu0
    %5685 = vmatprep.mubr.bf16.mxu0 0
    %5686 = vmatmul.mubr.bf16.gmra.mrb[0].mxu0 %v4710
    %v5687 = vpop.f32.mrb[0].mxu0
    %v5688 = vadd.f32 %v4247, %v5687
    %v5689 = vpop.f32.mrb[0].mxu0
    %v5690 = vpop.f32.mrb[0].mxu0
    %v5691 = vadd.f32 %v4250, %v5690
    %v5692 = vpop.f32.mrb[0].mxu0
    %5693 = vmatprep.mubr.bf16.mxu0 0
    %5694 = vmatmul.mubr.bf16.gmra.mrb[0].mxu0 %v4713
    %v5695 = vpop.f32.mrb[0].mxu0
    %v5696 = vadd.f32 %v4255, %v5695
    %v5697 = vpop.f32.mrb[0].mxu0
    %v5698 = vpop.f32.mrb[0].mxu0
    %v5699 = vadd.f32 %v4258, %v5698
    %v5700 = vpop.f32.mrb[0].mxu0
    %5701 = vmatprep.mubr.bf16.mxu0 0
    %5702 = vmatmul.mubr.bf16.gmra.mrb[0].mxu0 %v4716
    %v5703 = vpop.f32.mrb[0].mxu0
    %v5704 = vadd.f32 %v4263, %v5703
    %v5705 = vpop.f32.mrb[0].mxu0
    %v5706 = vpop.f32.mrb[0].mxu0
    %v5707 = vadd.f32 %v4266, %v5706
    %v5708 = vpop.f32.mrb[0].mxu0
    %5709 = vmatprep.mubr.bf16.mxu0 0
    %5710 = vmatmul.mubr.bf16.gmra.mrb[0].mxu0 %v4719
    %v5711 = vpop.f32.mrb[0].mxu0
    %v5712 = vadd.f32 %v4271, %v5711
    %v5713 = vpop.f32.mrb[0].mxu0
    %v5714 = vpop.f32.mrb[0].mxu0
    %v5715 = vadd.f32 %v4274, %v5714
    %v5716 = vpop.f32.mrb[0].mxu0
    %5717 = vmatprep.mubr.bf16.mxu0 0
    %5718 = vmatmul.mubr.bf16.gmra.mrb[0].mxu0 %v4722
    %v5719 = vpop.f32.mrb[0].mxu0
    %v5720 = vadd.f32 %v4279, %v5719
    %v5721 = vpop.f32.mrb[0].mxu0
    %v5722 = vpop.f32.mrb[0].mxu0
    %v5723 = vadd.f32 %v4282, %v5722
    %v5724 = vpop.f32.mrb[0].mxu0
    %5725 = vmatprep.mubr.bf16.mxu0 0
    %5726 = vmatmul.mubr.bf16.gmra.mrb[0].mxu0 %v4725
    %v5727 = vpop.f32.mrb[0].mxu0
    %v5728 = vadd.f32 %v4287, %v5727
    %v5729 = vpop.f32.mrb[0].mxu0
    %v5730 = vpop.f32.mrb[0].mxu0
    %v5731 = vadd.f32 %v4290, %v5730
    %v5732 = vpop.f32.mrb[0].mxu0
    %5733 = vmatprep.mubr.bf16.mxu0 0
    %5734 = vmatmul.mubr.bf16.gmra.mrb[0].mxu0 %v4728
    %v5735 = vpop.f32.mrb[0].mxu0
    %v5736 = vadd.f32 %v4295, %v5735
    %v5737 = vpop.f32.mrb[0].mxu0
    %v5738 = vpop.f32.mrb[0].mxu0
    %v5739 = vadd.f32 %v4298, %v5738
    %v5740 = vpop.f32.mrb[0].mxu0
    %5741 = vmatprep.mubr.bf16.mxu0 0
    %5742 = vmatmul.mubr.bf16.gmra.mrb[0].mxu0 %v4731
    %v5743 = vpop.f32.mrb[0].mxu0
    %v5744 = vadd.f32 %v4303, %v5743
    %v5745 = vpop.f32.mrb[0].mxu0
    %v5746 = vpop.f32.mrb[0].mxu0
    %v5747 = vadd.f32 %v4306, %v5746
    %v5748 = vpop.f32.mrb[0].mxu0
    %5749 = vmatprep.mubr.bf16.mxu0 0
    %5750 = vmatmul.mubr.bf16.gmra.mrb[0].mxu0 %v4734
    %v5751 = vpop.f32.mrb[0].mxu0
    %v5752 = vadd.f32 %v4311, %v5751
    %v5753 = vpop.f32.mrb[0].mxu0
    %v5754 = vpop.f32.mrb[0].mxu0
    %v5755 = vadd.f32 %v4314, %v5754
    %v5756 = vpop.f32.mrb[0].mxu0
    %5757 = vmatprep.mubr.bf16.mxu0 0
    %5758 = vmatmul.mubr.bf16.gmra.mrb[0].mxu0 %v4737
    %v5759 = vpop.f32.mrb[0].mxu0
    %v5760 = vadd.f32 %v4319, %v5759
    %v5761 = vpop.f32.mrb[0].mxu0
    %v5762 = vpop.f32.mrb[0].mxu0
    %v5763 = vadd.f32 %v4322, %v5762
    %v5764 = vpop.f32.mrb[0].mxu0
    %5765 = vmatprep.mubr.bf16.mxu0 0
    %5766 = vmatmul.mubr.bf16.gmra.mrb[0].mxu0 %v4740
    %v5767 = vpop.f32.mrb[0].mxu0
    %v5768 = vadd.f32 %v4327, %v5767
    %v5769 = vpop.f32.mrb[0].mxu0
    %v5770 = vpop.f32.mrb[0].mxu0
    %v5771 = vadd.f32 %v4330, %v5770
    %v5772 = vpop.f32.mrb[0].mxu0
    %5773 = vmatprep.mubr.bf16.mxu0 0
    %5774 = vmatmul.mubr.bf16.gmra.mrb[0].mxu0 %v4743
    %v5775 = vpop.f32.mrb[0].mxu0
    %v5776 = vadd.f32 %v4335, %v5775
    %v5777 = vpop.f32.mrb[0].mxu0
    %v5778 = vpop.f32.mrb[0].mxu0
    %v5779 = vadd.f32 %v4338, %v5778
    %v5780 = vpop.f32.mrb[0].mxu0
    %5781 = vmatprep.mubr.bf16.mxu0 0
    %5782 = vmatmul.mubr.bf16.gmra.mrb[0].mxu0 %v4746
    %v5783 = vpop.f32.mrb[0].mxu0
    %v5784 = vadd.f32 %v4343, %v5783
    %v5785 = vpop.f32.mrb[0].mxu0
    %v5786 = vpop.f32.mrb[0].mxu0
    %v5787 = vadd.f32 %v4346, %v5786
    %v5788 = vpop.f32.mrb[0].mxu0
    %5789 = vmatprep.mubr.bf16.mxu0 0
    %5790 = vmatmul.mubr.bf16.gmra.mrb[0].mxu0 %v4749
    %v5791 = vpop.f32.mrb[0].mxu0
    %v5792 = vadd.f32 %v4351, %v5791
    %v5793 = vpop.f32.mrb[0].mxu0
    %v5794 = vpop.f32.mrb[0].mxu0
    %v5795 = vadd.f32 %v4354, %v5794
    %v5796 = vpop.f32.mrb[0].mxu0
    %5797 = vmatprep.mubr.bf16.mxu0 0
    %5798 = vmatmul.mubr.bf16.gmra.mrb[0].mxu0 %v4752
    %v5799 = vpop.f32.mrb[0].mxu0
    %v5800 = vadd.f32 %v4359, %v5799
    %v5801 = vpop.f32.mrb[0].mxu0
    %v5802 = vpop.f32.mrb[0].mxu0
    %v5803 = vadd.f32 %v4362, %v5802
    %v5804 = vpop.f32.mrb[0].mxu0
    %5805 = vmatprep.mubr.bf16.mxu0 0
    %5806 = vmatmul.mubr.bf16.gmra.mrb[0].mxu0 %v4755
    %v5807 = vpop.f32.mrb[0].mxu0
    %v5808 = vadd.f32 %v4367, %v5807
    %v5809 = vpop.f32.mrb[0].mxu0
    %v5810 = vpop.f32.mrb[0].mxu0
    %v5811 = vadd.f32 %v4370, %v5810
    %v5812 = vpop.f32.mrb[0].mxu0
    %5813 = vdwg.mxu0
    %v5814 = vlaneseq
    %v5815 = vshrl.u32 %v5814, 7
    %v5816 = vsub.s32 0, %v5815
    %v5817 = vrot.slane %v2883, %v5816
    %v5818 = vrcp.pop %v5817
    %v5819 = vmul.f32 %v4792, %v5818
    %v5820 = vmul.f32 %v4795, %v5818
    %v5821 = vmul.f32 %v4800, %v5818
    %v5822 = vmul.f32 %v4803, %v5818
    %v5823 = vmul.f32 %v4808, %v5818
    %v5824 = vmul.f32 %v4811, %v5818
    %v5825 = vmul.f32 %v4816, %v5818
    %v5826 = vmul.f32 %v4819, %v5818
    %v5827 = vmul.f32 %v4824, %v5818
    %v5828 = vmul.f32 %v4827, %v5818
    %v5829 = vmul.f32 %v4832, %v5818
    %v5830 = vmul.f32 %v4835, %v5818
    %v5831 = vmul.f32 %v4840, %v5818
    %v5832 = vmul.f32 %v4843, %v5818
    %v5833 = vmul.f32 %v4848, %v5818
    %v5834 = vmul.f32 %v4851, %v5818
    %v5835 = vmul.f32 %v4856, %v5818
    %v5836 = vmul.f32 %v4859, %v5818
    %v5837 = vmul.f32 %v4864, %v5818
    %v5838 = vmul.f32 %v4867, %v5818
    %v5839 = vmul.f32 %v4872, %v5818
    %v5840 = vmul.f32 %v4875, %v5818
    %v5841 = vmul.f32 %v4880, %v5818
    %v5842 = vmul.f32 %v4883, %v5818
    %v5843 = vmul.f32 %v4888, %v5818
    %v5844 = vmul.f32 %v4891, %v5818
    %v5845 = vmul.f32 %v4896, %v5818
    %v5846 = vmul.f32 %v4899, %v5818
    %v5847 = vmul.f32 %v4904, %v5818
    %v5848 = vmul.f32 %v4907, %v5818
    %v5849 = vmul.f32 %v4912, %v5818
    %v5850 = vmul.f32 %v4915, %v5818
    %v5851 = vmul.f32 %v4920, %v5818
    %v5852 = vmul.f32 %v4923, %v5818
    %v5853 = vmul.f32 %v4928, %v5818
    %v5854 = vmul.f32 %v4931, %v5818
    %v5855 = vmul.f32 %v4936, %v5818
    %v5856 = vmul.f32 %v4939, %v5818
    %v5857 = vmul.f32 %v4944, %v5818
    %v5858 = vmul.f32 %v4947, %v5818
    %v5859 = vmul.f32 %v4952, %v5818
    %v5860 = vmul.f32 %v4955, %v5818
    %v5861 = vmul.f32 %v4960, %v5818
    %v5862 = vmul.f32 %v4963, %v5818
    %v5863 = vmul.f32 %v4968, %v5818
    %v5864 = vmul.f32 %v4971, %v5818
    %v5865 = vmul.f32 %v4976, %v5818
    %v5866 = vmul.f32 %v4979, %v5818
    %v5867 = vmul.f32 %v4984, %v5818
    %v5868 = vmul.f32 %v4987, %v5818
    %v5869 = vmul.f32 %v4992, %v5818
    %v5870 = vmul.f32 %v4995, %v5818
    %v5871 = vmul.f32 %v5000, %v5818
    %v5872 = vmul.f32 %v5003, %v5818
    %v5873 = vmul.f32 %v5008, %v5818
    %v5874 = vmul.f32 %v5011, %v5818
    %v5875 = vmul.f32 %v5016, %v5818
    %v5876 = vmul.f32 %v5019, %v5818
    %v5877 = vmul.f32 %v5024, %v5818
    %v5878 = vmul.f32 %v5027, %v5818
    %v5879 = vmul.f32 %v5032, %v5818
    %v5880 = vmul.f32 %v5035, %v5818
    %v5881 = vmul.f32 %v5040, %v5818
    %v5882 = vmul.f32 %v5043, %v5818
    %v5883 = vmul.f32 %v5048, %v5818
    %v5884 = vmul.f32 %v5051, %v5818
    %v5885 = vmul.f32 %v5056, %v5818
    %v5886 = vmul.f32 %v5059, %v5818
    %v5887 = vmul.f32 %v5064, %v5818
    %v5888 = vmul.f32 %v5067, %v5818
    %v5889 = vmul.f32 %v5072, %v5818
    %v5890 = vmul.f32 %v5075, %v5818
    %v5891 = vmul.f32 %v5080, %v5818
    %v5892 = vmul.f32 %v5083, %v5818
    %v5893 = vmul.f32 %v5088, %v5818
    %v5894 = vmul.f32 %v5091, %v5818
    %v5895 = vmul.f32 %v5096, %v5818
    %v5896 = vmul.f32 %v5099, %v5818
    %v5897 = vmul.f32 %v5104, %v5818
    %v5898 = vmul.f32 %v5107, %v5818
    %v5899 = vmul.f32 %v5112, %v5818
    %v5900 = vmul.f32 %v5115, %v5818
    %v5901 = vmul.f32 %v5120, %v5818
    %v5902 = vmul.f32 %v5123, %v5818
    %v5903 = vmul.f32 %v5128, %v5818
    %v5904 = vmul.f32 %v5131, %v5818
    %v5905 = vmul.f32 %v5136, %v5818
    %v5906 = vmul.f32 %v5139, %v5818
    %v5907 = vmul.f32 %v5144, %v5818
    %v5908 = vmul.f32 %v5147, %v5818
    %v5909 = vmul.f32 %v5152, %v5818
    %v5910 = vmul.f32 %v5155, %v5818
    %v5911 = vmul.f32 %v5160, %v5818
    %v5912 = vmul.f32 %v5163, %v5818
    %v5913 = vmul.f32 %v5168, %v5818
    %v5914 = vmul.f32 %v5171, %v5818
    %v5915 = vmul.f32 %v5176, %v5818
    %v5916 = vmul.f32 %v5179, %v5818
    %v5917 = vmul.f32 %v5184, %v5818
    %v5918 = vmul.f32 %v5187, %v5818
    %v5919 = vmul.f32 %v5192, %v5818
    %v5920 = vmul.f32 %v5195, %v5818
    %v5921 = vmul.f32 %v5200, %v5818
    %v5922 = vmul.f32 %v5203, %v5818
    %v5923 = vmul.f32 %v5208, %v5818
    %v5924 = vmul.f32 %v5211, %v5818
    %v5925 = vmul.f32 %v5216, %v5818
    %v5926 = vmul.f32 %v5219, %v5818
    %v5927 = vmul.f32 %v5224, %v5818
    %v5928 = vmul.f32 %v5227, %v5818
    %v5929 = vmul.f32 %v5232, %v5818
    %v5930 = vmul.f32 %v5235, %v5818
    %v5931 = vmul.f32 %v5240, %v5818
    %v5932 = vmul.f32 %v5243, %v5818
    %v5933 = vmul.f32 %v5248, %v5818
    %v5934 = vmul.f32 %v5251, %v5818
    %v5935 = vmul.f32 %v5256, %v5818
    %v5936 = vmul.f32 %v5259, %v5818
    %v5937 = vmul.f32 %v5264, %v5818
    %v5938 = vmul.f32 %v5267, %v5818
    %v5939 = vmul.f32 %v5272, %v5818
    %v5940 = vmul.f32 %v5275, %v5818
    %v5941 = vmul.f32 %v5280, %v5818
    %v5942 = vmul.f32 %v5283, %v5818
    %v5943 = vmul.f32 %v5288, %v5818
    %v5944 = vmul.f32 %v5291, %v5818
    %v5945 = vmul.f32 %v5296, %v5818
    %v5946 = vmul.f32 %v5299, %v5818
    %v5947 = vmul.f32 %v5304, %v5818
    %v5948 = vmul.f32 %v5307, %v5818
    %v5949 = vmul.f32 %v5312, %v5818
    %v5950 = vmul.f32 %v5315, %v5818
    %v5951 = vmul.f32 %v5320, %v5818
    %v5952 = vmul.f32 %v5323, %v5818
    %v5953 = vmul.f32 %v5328, %v5818
    %v5954 = vmul.f32 %v5331, %v5818
    %v5955 = vmul.f32 %v5336, %v5818
    %v5956 = vmul.f32 %v5339, %v5818
    %v5957 = vmul.f32 %v5344, %v5818
    %v5958 = vmul.f32 %v5347, %v5818
    %v5959 = vmul.f32 %v5352, %v5818
    %v5960 = vmul.f32 %v5355, %v5818
    %v5961 = vmul.f32 %v5360, %v5818
    %v5962 = vmul.f32 %v5363, %v5818
    %v5963 = vmul.f32 %v5368, %v5818
    %v5964 = vmul.f32 %v5371, %v5818
    %v5965 = vmul.f32 %v5376, %v5818
    %v5966 = vmul.f32 %v5379, %v5818
    %v5967 = vmul.f32 %v5384, %v5818
    %v5968 = vmul.f32 %v5387, %v5818
    %v5969 = vmul.f32 %v5392, %v5818
    %v5970 = vmul.f32 %v5395, %v5818
    %v5971 = vmul.f32 %v5400, %v5818
    %v5972 = vmul.f32 %v5403, %v5818
    %v5973 = vmul.f32 %v5408, %v5818
    %v5974 = vmul.f32 %v5411, %v5818
    %v5975 = vmul.f32 %v5416, %v5818
    %v5976 = vmul.f32 %v5419, %v5818
    %v5977 = vmul.f32 %v5424, %v5818
    %v5978 = vmul.f32 %v5427, %v5818
    %v5979 = vmul.f32 %v5432, %v5818
    %v5980 = vmul.f32 %v5435, %v5818
    %v5981 = vmul.f32 %v5440, %v5818
    %v5982 = vmul.f32 %v5443, %v5818
    %v5983 = vmul.f32 %v5448, %v5818
    %v5984 = vmul.f32 %v5451, %v5818
    %v5985 = vmul.f32 %v5456, %v5818
    %v5986 = vmul.f32 %v5459, %v5818
    %v5987 = vmul.f32 %v5464, %v5818
    %v5988 = vmul.f32 %v5467, %v5818
    %v5989 = vmul.f32 %v5472, %v5818
    %v5990 = vmul.f32 %v5475, %v5818
    %v5991 = vmul.f32 %v5480, %v5818
    %v5992 = vmul.f32 %v5483, %v5818
    %v5993 = vmul.f32 %v5488, %v5818
    %v5994 = vmul.f32 %v5491, %v5818
    %v5995 = vmul.f32 %v5496, %v5818
    %v5996 = vmul.f32 %v5499, %v5818
    %v5997 = vmul.f32 %v5504, %v5818
    %v5998 = vmul.f32 %v5507, %v5818
    %v5999 = vmul.f32 %v5512, %v5818
    %v6000 = vmul.f32 %v5515, %v5818
    %v6001 = vmul.f32 %v5520, %v5818
    %v6002 = vmul.f32 %v5523, %v5818
    %v6003 = vmul.f32 %v5528, %v5818
    %v6004 = vmul.f32 %v5531, %v5818
    %v6005 = vmul.f32 %v5536, %v5818
    %v6006 = vmul.f32 %v5539, %v5818
    %v6007 = vmul.f32 %v5544, %v5818
    %v6008 = vmul.f32 %v5547, %v5818
    %v6009 = vmul.f32 %v5552, %v5818
    %v6010 = vmul.f32 %v5555, %v5818
    %v6011 = vmul.f32 %v5560, %v5818
    %v6012 = vmul.f32 %v5563, %v5818
    %v6013 = vmul.f32 %v5568, %v5818
    %v6014 = vmul.f32 %v5571, %v5818
    %v6015 = vmul.f32 %v5576, %v5818
    %v6016 = vmul.f32 %v5579, %v5818
    %v6017 = vmul.f32 %v5584, %v5818
    %v6018 = vmul.f32 %v5587, %v5818
    %v6019 = vmul.f32 %v5592, %v5818
    %v6020 = vmul.f32 %v5595, %v5818
    %v6021 = vmul.f32 %v5600, %v5818
    %v6022 = vmul.f32 %v5603, %v5818
    %v6023 = vmul.f32 %v5608, %v5818
    %v6024 = vmul.f32 %v5611, %v5818
    %v6025 = vmul.f32 %v5616, %v5818
    %v6026 = vmul.f32 %v5619, %v5818
    %v6027 = vmul.f32 %v5624, %v5818
    %v6028 = vmul.f32 %v5627, %v5818
    %v6029 = vmul.f32 %v5632, %v5818
    %v6030 = vmul.f32 %v5635, %v5818
    %v6031 = vmul.f32 %v5640, %v5818
    %v6032 = vmul.f32 %v5643, %v5818
    %v6033 = vmul.f32 %v5648, %v5818
    %v6034 = vmul.f32 %v5651, %v5818
    %v6035 = vmul.f32 %v5656, %v5818
    %v6036 = vmul.f32 %v5659, %v5818
    %v6037 = vmul.f32 %v5664, %v5818
    %v6038 = vmul.f32 %v5667, %v5818
    %v6039 = vmul.f32 %v5672, %v5818
    %v6040 = vmul.f32 %v5675, %v5818
    %v6041 = vmul.f32 %v5680, %v5818
    %v6042 = vmul.f32 %v5683, %v5818
    %v6043 = vmul.f32 %v5688, %v5818
    %v6044 = vmul.f32 %v5691, %v5818
    %v6045 = vmul.f32 %v5696, %v5818
    %v6046 = vmul.f32 %v5699, %v5818
    %v6047 = vmul.f32 %v5704, %v5818
    %v6048 = vmul.f32 %v5707, %v5818
    %v6049 = vmul.f32 %v5712, %v5818
    %v6050 = vmul.f32 %v5715, %v5818
    %v6051 = vmul.f32 %v5720, %v5818
    %v6052 = vmul.f32 %v5723, %v5818
    %v6053 = vmul.f32 %v5728, %v5818
    %v6054 = vmul.f32 %v5731, %v5818
    %v6055 = vmul.f32 %v5736, %v5818
    %v6056 = vmul.f32 %v5739, %v5818
    %v6057 = vmul.f32 %v5744, %v5818
    %v6058 = vmul.f32 %v5747, %v5818
    %v6059 = vmul.f32 %v5752, %v5818
    %v6060 = vmul.f32 %v5755, %v5818
    %v6061 = vmul.f32 %v5760, %v5818
    %v6062 = vmul.f32 %v5763, %v5818
    %v6063 = vmul.f32 %v5768, %v5818
    %v6064 = vmul.f32 %v5771, %v5818
    %v6065 = vmul.f32 %v5776, %v5818
    %v6066 = vmul.f32 %v5779, %v5818
    %v6067 = vmul.f32 %v5784, %v5818
    %v6068 = vmul.f32 %v5787, %v5818
    %v6069 = vmul.f32 %v5792, %v5818
    %v6070 = vmul.f32 %v5795, %v5818
    %v6071 = vmul.f32 %v5800, %v5818
    %v6072 = vmul.f32 %v5803, %v5818
    %v6073 = vmul.f32 %v5808, %v5818
    %v6074 = vmul.f32 %v5811, %v5818
    %v6075 = vld [vmem:[%s2] sm:$0xff]
    %v6076 = vld [vmem:[%s2 + $0x8] sm:$0xff]
    %v6077 = vld [vmem:[%s2 + $0x10] sm:$0xff]
    %v6078 = vld [vmem:[%s2 + $0x18] sm:$0xff]
    %v6079 = vld [vmem:[%s2 + $0x20] sm:$0xff]
    %v6080 = vld [vmem:[%s2 + $0x28] sm:$0xff]
    %v6081 = vld [vmem:[%s2 + $0x30] sm:$0xff]
    %v6082 = vld [vmem:[%s2 + $0x38] sm:$0xff]
    %v6083 = vld [vmem:[%s2 + $0x40] sm:$0xff]
    %v6084 = vld [vmem:[%s2 + $0x48] sm:$0xff]
    %v6085 = vld [vmem:[%s2 + $0x50] sm:$0xff]
    %v6086 = vld [vmem:[%s2 + $0x58] sm:$0xff]
    %v6087 = vld [vmem:[%s2 + $0x60] sm:$0xff]
    %v6088 = vld [vmem:[%s2 + $0x68] sm:$0xff]
    %v6089 = vld [vmem:[%s2 + $0x70] sm:$0xff]
    %v6090 = vld [vmem:[%s2 + $0x78] sm:$0xff]
    %v6091 = vld [vmem:[%s2 + $0x80] sm:$0xff]
    %v6092 = vld [vmem:[%s2 + $0x88] sm:$0xff]
    %v6093 = vld [vmem:[%s2 + $0x90] sm:$0xff]
    %v6094 = vld [vmem:[%s2 + $0x98] sm:$0xff]
    %v6095 = vld [vmem:[%s2 + $0xa0] sm:$0xff]
    %v6096 = vld [vmem:[%s2 + $0xa8] sm:$0xff]
    %v6097 = vld [vmem:[%s2 + $0xb0] sm:$0xff]
    %v6098 = vld [vmem:[%s2 + $0xb8] sm:$0xff]
    %v6099 = vld [vmem:[%s2 + $0xc0] sm:$0xff]
    %v6100 = vld [vmem:[%s2 + $0xc8] sm:$0xff]
    %v6101 = vld [vmem:[%s2 + $0xd0] sm:$0xff]
    %v6102 = vld [vmem:[%s2 + $0xd8] sm:$0xff]
    %v6103 = vld [vmem:[%s2 + $0xe0] sm:$0xff]
    %v6104 = vld [vmem:[%s2 + $0xe8] sm:$0xff]
    %v6105 = vld [vmem:[%s2 + $0xf0] sm:$0xff]
    %v6106 = vld [vmem:[%s2 + $0xf8] sm:$0xff]
    %v6107 = vld [vmem:[%s2 + $0x100] sm:$0xff]
    %v6108 = vld [vmem:[%s2 + $0x108] sm:$0xff]
    %v6109 = vld [vmem:[%s2 + $0x110] sm:$0xff]
    %v6110 = vld [vmem:[%s2 + $0x118] sm:$0xff]
    %v6111 = vld [vmem:[%s2 + $0x120] sm:$0xff]
    %v6112 = vld [vmem:[%s2 + $0x128] sm:$0xff]
    %v6113 = vld [vmem:[%s2 + $0x130] sm:$0xff]
    %v6114 = vld [vmem:[%s2 + $0x138] sm:$0xff]
    %v6115 = vld [vmem:[%s2 + $0x140] sm:$0xff]
    %v6116 = vld [vmem:[%s2 + $0x148] sm:$0xff]
    %v6117 = vld [vmem:[%s2 + $0x150] sm:$0xff]
    %v6118 = vld [vmem:[%s2 + $0x158] sm:$0xff]
    %v6119 = vld [vmem:[%s2 + $0x160] sm:$0xff]
    %v6120 = vld [vmem:[%s2 + $0x168] sm:$0xff]
    %v6121 = vld [vmem:[%s2 + $0x170] sm:$0xff]
    %v6122 = vld [vmem:[%s2 + $0x178] sm:$0xff]
    %v6123 = vld [vmem:[%s2 + $0x180] sm:$0xff]
    %v6124 = vld [vmem:[%s2 + $0x188] sm:$0xff]
    %v6125 = vld [vmem:[%s2 + $0x190] sm:$0xff]
    %v6126 = vld [vmem:[%s2 + $0x198] sm:$0xff]
    %v6127 = vld [vmem:[%s2 + $0x1a0] sm:$0xff]
    %v6128 = vld [vmem:[%s2 + $0x1a8] sm:$0xff]
    %v6129 = vld [vmem:[%s2 + $0x1b0] sm:$0xff]
    %v6130 = vld [vmem:[%s2 + $0x1b8] sm:$0xff]
    %v6131 = vld [vmem:[%s2 + $0x1c0] sm:$0xff]
    %v6132 = vld [vmem:[%s2 + $0x1c8] sm:$0xff]
    %v6133 = vld [vmem:[%s2 + $0x1d0] sm:$0xff]
    %v6134 = vld [vmem:[%s2 + $0x1d8] sm:$0xff]
    %v6135 = vld [vmem:[%s2 + $0x1e0] sm:$0xff]
    %v6136 = vld [vmem:[%s2 + $0x1e8] sm:$0xff]
    %v6137 = vld [vmem:[%s2 + $0x1f0] sm:$0xff]
    %v6138 = vld [vmem:[%s2 + $0x1f8] sm:$0xff]
    %v6139 = vld [vmem:[%s2 + $0x200] sm:$0xff]
    %v6140 = vld [vmem:[%s2 + $0x208] sm:$0xff]
    %v6141 = vld [vmem:[%s2 + $0x210] sm:$0xff]
    %v6142 = vld [vmem:[%s2 + $0x218] sm:$0xff]
    %v6143 = vld [vmem:[%s2 + $0x220] sm:$0xff]
    %v6144 = vld [vmem:[%s2 + $0x228] sm:$0xff]
    %v6145 = vld [vmem:[%s2 + $0x230] sm:$0xff]
    %v6146 = vld [vmem:[%s2 + $0x238] sm:$0xff]
    %v6147 = vld [vmem:[%s2 + $0x240] sm:$0xff]
    %v6148 = vld [vmem:[%s2 + $0x248] sm:$0xff]
    %v6149 = vld [vmem:[%s2 + $0x250] sm:$0xff]
    %v6150 = vld [vmem:[%s2 + $0x258] sm:$0xff]
    %v6151 = vld [vmem:[%s2 + $0x260] sm:$0xff]
    %v6152 = vld [vmem:[%s2 + $0x268] sm:$0xff]
    %v6153 = vld [vmem:[%s2 + $0x270] sm:$0xff]
    %v6154 = vld [vmem:[%s2 + $0x278] sm:$0xff]
    %v6155 = vld [vmem:[%s2 + $0x280] sm:$0xff]
    %v6156 = vld [vmem:[%s2 + $0x288] sm:$0xff]
    %v6157 = vld [vmem:[%s2 + $0x290] sm:$0xff]
    %v6158 = vld [vmem:[%s2 + $0x298] sm:$0xff]
    %v6159 = vld [vmem:[%s2 + $0x2a0] sm:$0xff]
    %v6160 = vld [vmem:[%s2 + $0x2a8] sm:$0xff]
    %v6161 = vld [vmem:[%s2 + $0x2b0] sm:$0xff]
    %v6162 = vld [vmem:[%s2 + $0x2b8] sm:$0xff]
    %v6163 = vld [vmem:[%s2 + $0x2c0] sm:$0xff]
    %v6164 = vld [vmem:[%s2 + $0x2c8] sm:$0xff]
    %v6165 = vld [vmem:[%s2 + $0x2d0] sm:$0xff]
    %v6166 = vld [vmem:[%s2 + $0x2d8] sm:$0xff]
    %v6167 = vld [vmem:[%s2 + $0x2e0] sm:$0xff]
    %v6168 = vld [vmem:[%s2 + $0x2e8] sm:$0xff]
    %v6169 = vld [vmem:[%s2 + $0x2f0] sm:$0xff]
    %v6170 = vld [vmem:[%s2 + $0x2f8] sm:$0xff]
    %v6171 = vld [vmem:[%s2 + $0x300] sm:$0xff]
    %v6172 = vld [vmem:[%s2 + $0x308] sm:$0xff]
    %v6173 = vld [vmem:[%s2 + $0x310] sm:$0xff]
    %v6174 = vld [vmem:[%s2 + $0x318] sm:$0xff]
    %v6175 = vld [vmem:[%s2 + $0x320] sm:$0xff]
    %v6176 = vld [vmem:[%s2 + $0x328] sm:$0xff]
    %v6177 = vld [vmem:[%s2 + $0x330] sm:$0xff]
    %v6178 = vld [vmem:[%s2 + $0x338] sm:$0xff]
    %v6179 = vld [vmem:[%s2 + $0x340] sm:$0xff]
    %v6180 = vld [vmem:[%s2 + $0x348] sm:$0xff]
    %v6181 = vld [vmem:[%s2 + $0x350] sm:$0xff]
    %v6182 = vld [vmem:[%s2 + $0x358] sm:$0xff]
    %v6183 = vld [vmem:[%s2 + $0x360] sm:$0xff]
    %v6184 = vld [vmem:[%s2 + $0x368] sm:$0xff]
    %v6185 = vld [vmem:[%s2 + $0x370] sm:$0xff]
    %v6186 = vld [vmem:[%s2 + $0x378] sm:$0xff]
    %v6187 = vld [vmem:[%s2 + $0x380] sm:$0xff]
    %v6188 = vld [vmem:[%s2 + $0x388] sm:$0xff]
    %v6189 = vld [vmem:[%s2 + $0x390] sm:$0xff]
    %v6190 = vld [vmem:[%s2 + $0x398] sm:$0xff]
    %v6191 = vld [vmem:[%s2 + $0x3a0] sm:$0xff]
    %v6192 = vld [vmem:[%s2 + $0x3a8] sm:$0xff]
    %v6193 = vld [vmem:[%s2 + $0x3b0] sm:$0xff]
    %v6194 = vld [vmem:[%s2 + $0x3b8] sm:$0xff]
    %v6195 = vld [vmem:[%s2 + $0x3c0] sm:$0xff]
    %v6196 = vld [vmem:[%s2 + $0x3c8] sm:$0xff]
    %v6197 = vld [vmem:[%s2 + $0x3d0] sm:$0xff]
    %v6198 = vld [vmem:[%s2 + $0x3d8] sm:$0xff]
    %v6199 = vld [vmem:[%s2 + $0x3e0] sm:$0xff]
    %v6200 = vld [vmem:[%s2 + $0x3e8] sm:$0xff]
    %v6201 = vld [vmem:[%s2 + $0x3f0] sm:$0xff]
    %v6202 = vld [vmem:[%s2 + $0x3f8] sm:$0xff]
    %v6203 = vld [vmem:[%s2 + $0x400] sm:$0xff]
    %v6204 = vld [vmem:[%s2 + $0x408] sm:$0xff]
    %v6205 = vld [vmem:[%s2 + $0x410] sm:$0xff]
    %v6206 = vld [vmem:[%s2 + $0x418] sm:$0xff]
    %v6207 = vld [vmem:[%s2 + $0x420] sm:$0xff]
    %v6208 = vld [vmem:[%s2 + $0x428] sm:$0xff]
    %v6209 = vld [vmem:[%s2 + $0x430] sm:$0xff]
    %v6210 = vld [vmem:[%s2 + $0x438] sm:$0xff]
    %v6211 = vld [vmem:[%s2 + $0x440] sm:$0xff]
    %v6212 = vld [vmem:[%s2 + $0x448] sm:$0xff]
    %v6213 = vld [vmem:[%s2 + $0x450] sm:$0xff]
    %v6214 = vld [vmem:[%s2 + $0x458] sm:$0xff]
    %v6215 = vld [vmem:[%s2 + $0x460] sm:$0xff]
    %v6216 = vld [vmem:[%s2 + $0x468] sm:$0xff]
    %v6217 = vld [vmem:[%s2 + $0x470] sm:$0xff]
    %v6218 = vld [vmem:[%s2 + $0x478] sm:$0xff]
    %v6219 = vld [vmem:[%s2 + $0x480] sm:$0xff]
    %v6220 = vld [vmem:[%s2 + $0x488] sm:$0xff]
    %v6221 = vld [vmem:[%s2 + $0x490] sm:$0xff]
    %v6222 = vld [vmem:[%s2 + $0x498] sm:$0xff]
    %v6223 = vld [vmem:[%s2 + $0x4a0] sm:$0xff]
    %v6224 = vld [vmem:[%s2 + $0x4a8] sm:$0xff]
    %v6225 = vld [vmem:[%s2 + $0x4b0] sm:$0xff]
    %v6226 = vld [vmem:[%s2 + $0x4b8] sm:$0xff]
    %v6227 = vld [vmem:[%s2 + $0x4c0] sm:$0xff]
    %v6228 = vld [vmem:[%s2 + $0x4c8] sm:$0xff]
    %v6229 = vld [vmem:[%s2 + $0x4d0] sm:$0xff]
    %v6230 = vld [vmem:[%s2 + $0x4d8] sm:$0xff]
    %v6231 = vld [vmem:[%s2 + $0x4e0] sm:$0xff]
    %v6232 = vld [vmem:[%s2 + $0x4e8] sm:$0xff]
    %v6233 = vld [vmem:[%s2 + $0x4f0] sm:$0xff]
    %v6234 = vld [vmem:[%s2 + $0x4f8] sm:$0xff]
    %v6235 = vld [vmem:[%s2 + $0x500] sm:$0xff]
    %v6236 = vld [vmem:[%s2 + $0x508] sm:$0xff]
    %v6237 = vld [vmem:[%s2 + $0x510] sm:$0xff]
    %v6238 = vld [vmem:[%s2 + $0x518] sm:$0xff]
    %v6239 = vld [vmem:[%s2 + $0x520] sm:$0xff]
    %v6240 = vld [vmem:[%s2 + $0x528] sm:$0xff]
    %v6241 = vld [vmem:[%s2 + $0x530] sm:$0xff]
    %v6242 = vld [vmem:[%s2 + $0x538] sm:$0xff]
    %v6243 = vld [vmem:[%s2 + $0x540] sm:$0xff]
    %v6244 = vld [vmem:[%s2 + $0x548] sm:$0xff]
    %v6245 = vld [vmem:[%s2 + $0x550] sm:$0xff]
    %v6246 = vld [vmem:[%s2 + $0x558] sm:$0xff]
    %v6247 = vld [vmem:[%s2 + $0x560] sm:$0xff]
    %v6248 = vld [vmem:[%s2 + $0x568] sm:$0xff]
    %v6249 = vld [vmem:[%s2 + $0x570] sm:$0xff]
    %v6250 = vld [vmem:[%s2 + $0x578] sm:$0xff]
    %v6251 = vld [vmem:[%s2 + $0x580] sm:$0xff]
    %v6252 = vld [vmem:[%s2 + $0x588] sm:$0xff]
    %v6253 = vld [vmem:[%s2 + $0x590] sm:$0xff]
    %v6254 = vld [vmem:[%s2 + $0x598] sm:$0xff]
    %v6255 = vld [vmem:[%s2 + $0x5a0] sm:$0xff]
    %v6256 = vld [vmem:[%s2 + $0x5a8] sm:$0xff]
    %v6257 = vld [vmem:[%s2 + $0x5b0] sm:$0xff]
    %v6258 = vld [vmem:[%s2 + $0x5b8] sm:$0xff]
    %v6259 = vld [vmem:[%s2 + $0x5c0] sm:$0xff]
    %v6260 = vld [vmem:[%s2 + $0x5c8] sm:$0xff]
    %v6261 = vld [vmem:[%s2 + $0x5d0] sm:$0xff]
    %v6262 = vld [vmem:[%s2 + $0x5d8] sm:$0xff]
    %v6263 = vld [vmem:[%s2 + $0x5e0] sm:$0xff]
    %v6264 = vld [vmem:[%s2 + $0x5e8] sm:$0xff]
    %v6265 = vld [vmem:[%s2 + $0x5f0] sm:$0xff]
    %v6266 = vld [vmem:[%s2 + $0x5f8] sm:$0xff]
    %v6267 = vld [vmem:[%s2 + $0x600] sm:$0xff]
    %v6268 = vld [vmem:[%s2 + $0x608] sm:$0xff]
    %v6269 = vld [vmem:[%s2 + $0x610] sm:$0xff]
    %v6270 = vld [vmem:[%s2 + $0x618] sm:$0xff]
    %v6271 = vld [vmem:[%s2 + $0x620] sm:$0xff]
    %v6272 = vld [vmem:[%s2 + $0x628] sm:$0xff]
    %v6273 = vld [vmem:[%s2 + $0x630] sm:$0xff]
    %v6274 = vld [vmem:[%s2 + $0x638] sm:$0xff]
    %v6275 = vld [vmem:[%s2 + $0x640] sm:$0xff]
    %v6276 = vld [vmem:[%s2 + $0x648] sm:$0xff]
    %v6277 = vld [vmem:[%s2 + $0x650] sm:$0xff]
    %v6278 = vld [vmem:[%s2 + $0x658] sm:$0xff]
    %v6279 = vld [vmem:[%s2 + $0x660] sm:$0xff]
    %v6280 = vld [vmem:[%s2 + $0x668] sm:$0xff]
    %v6281 = vld [vmem:[%s2 + $0x670] sm:$0xff]
    %v6282 = vld [vmem:[%s2 + $0x678] sm:$0xff]
    %v6283 = vld [vmem:[%s2 + $0x680] sm:$0xff]
    %v6284 = vld [vmem:[%s2 + $0x688] sm:$0xff]
    %v6285 = vld [vmem:[%s2 + $0x690] sm:$0xff]
    %v6286 = vld [vmem:[%s2 + $0x698] sm:$0xff]
    %v6287 = vld [vmem:[%s2 + $0x6a0] sm:$0xff]
    %v6288 = vld [vmem:[%s2 + $0x6a8] sm:$0xff]
    %v6289 = vld [vmem:[%s2 + $0x6b0] sm:$0xff]
    %v6290 = vld [vmem:[%s2 + $0x6b8] sm:$0xff]
    %v6291 = vld [vmem:[%s2 + $0x6c0] sm:$0xff]
    %v6292 = vld [vmem:[%s2 + $0x6c8] sm:$0xff]
    %v6293 = vld [vmem:[%s2 + $0x6d0] sm:$0xff]
    %v6294 = vld [vmem:[%s2 + $0x6d8] sm:$0xff]
    %v6295 = vld [vmem:[%s2 + $0x6e0] sm:$0xff]
    %v6296 = vld [vmem:[%s2 + $0x6e8] sm:$0xff]
    %v6297 = vld [vmem:[%s2 + $0x6f0] sm:$0xff]
    %v6298 = vld [vmem:[%s2 + $0x6f8] sm:$0xff]
    %v6299 = vld [vmem:[%s2 + $0x700] sm:$0xff]
    %v6300 = vld [vmem:[%s2 + $0x708] sm:$0xff]
    %v6301 = vld [vmem:[%s2 + $0x710] sm:$0xff]
    %v6302 = vld [vmem:[%s2 + $0x718] sm:$0xff]
    %v6303 = vld [vmem:[%s2 + $0x720] sm:$0xff]
    %v6304 = vld [vmem:[%s2 + $0x728] sm:$0xff]
    %v6305 = vld [vmem:[%s2 + $0x730] sm:$0xff]
    %v6306 = vld [vmem:[%s2 + $0x738] sm:$0xff]
    %v6307 = vld [vmem:[%s2 + $0x740] sm:$0xff]
    %v6308 = vld [vmem:[%s2 + $0x748] sm:$0xff]
    %v6309 = vld [vmem:[%s2 + $0x750] sm:$0xff]
    %v6310 = vld [vmem:[%s2 + $0x758] sm:$0xff]
    %v6311 = vld [vmem:[%s2 + $0x760] sm:$0xff]
    %v6312 = vld [vmem:[%s2 + $0x768] sm:$0xff]
    %v6313 = vld [vmem:[%s2 + $0x770] sm:$0xff]
    %v6314 = vld [vmem:[%s2 + $0x778] sm:$0xff]
    %v6315 = vld [vmem:[%s2 + $0x780] sm:$0xff]
    %v6316 = vld [vmem:[%s2 + $0x788] sm:$0xff]
    %v6317 = vld [vmem:[%s2 + $0x790] sm:$0xff]
    %v6318 = vld [vmem:[%s2 + $0x798] sm:$0xff]
    %v6319 = vld [vmem:[%s2 + $0x7a0] sm:$0xff]
    %v6320 = vld [vmem:[%s2 + $0x7a8] sm:$0xff]
    %v6321 = vld [vmem:[%s2 + $0x7b0] sm:$0xff]
    %v6322 = vld [vmem:[%s2 + $0x7b8] sm:$0xff]
    %v6323 = vld [vmem:[%s2 + $0x7c0] sm:$0xff]
    %v6324 = vld [vmem:[%s2 + $0x7c8] sm:$0xff]
    %v6325 = vld [vmem:[%s2 + $0x7d0] sm:$0xff]
    %v6326 = vld [vmem:[%s2 + $0x7d8] sm:$0xff]
    %v6327 = vld [vmem:[%s2 + $0x7e0] sm:$0xff]
    %v6328 = vld [vmem:[%s2 + $0x7e8] sm:$0xff]
    %v6329 = vld [vmem:[%s2 + $0x7f0] sm:$0xff]
    %v6330 = vld [vmem:[%s2 + $0x7f8] sm:$0xff]
    %v6331 = vpack.c.bf16 %v5820, %v5819
    %v6332 = vpack.c.bf16 %v5822, %v5821
    %v6333 = vpack.c.bf16 %v5824, %v5823
    %v6334 = vpack.c.bf16 %v5826, %v5825
    %v6335 = vpack.c.bf16 %v5828, %v5827
    %v6336 = vpack.c.bf16 %v5830, %v5829
    %v6337 = vpack.c.bf16 %v5832, %v5831
    %v6338 = vpack.c.bf16 %v5834, %v5833
    %v6339 = vpack.c.bf16 %v5836, %v5835
    %v6340 = vpack.c.bf16 %v5838, %v5837
    %v6341 = vpack.c.bf16 %v5840, %v5839
    %v6342 = vpack.c.bf16 %v5842, %v5841
    %v6343 = vpack.c.bf16 %v5844, %v5843
    %v6344 = vpack.c.bf16 %v5846, %v5845
    %v6345 = vpack.c.bf16 %v5848, %v5847
    %v6346 = vpack.c.bf16 %v5850, %v5849
    %v6347 = vpack.c.bf16 %v5852, %v5851
    %v6348 = vpack.c.bf16 %v5854, %v5853
    %v6349 = vpack.c.bf16 %v5856, %v5855
    %v6350 = vpack.c.bf16 %v5858, %v5857
    %v6351 = vpack.c.bf16 %v5860, %v5859
    %v6352 = vpack.c.bf16 %v5862, %v5861
    %v6353 = vpack.c.bf16 %v5864, %v5863
    %v6354 = vpack.c.bf16 %v5866, %v5865
    %v6355 = vpack.c.bf16 %v5868, %v5867
    %v6356 = vpack.c.bf16 %v5870, %v5869
    %v6357 = vpack.c.bf16 %v5872, %v5871
    %v6358 = vpack.c.bf16 %v5874, %v5873
    %v6359 = vpack.c.bf16 %v5876, %v5875
    %v6360 = vpack.c.bf16 %v5878, %v5877
    %v6361 = vpack.c.bf16 %v5880, %v5879
    %v6362 = vpack.c.bf16 %v5882, %v5881
    %v6363 = vpack.c.bf16 %v5884, %v5883
    %v6364 = vpack.c.bf16 %v5886, %v5885
    %v6365 = vpack.c.bf16 %v5888, %v5887
    %v6366 = vpack.c.bf16 %v5890, %v5889
    %v6367 = vpack.c.bf16 %v5892, %v5891
    %v6368 = vpack.c.bf16 %v5894, %v5893
    %v6369 = vpack.c.bf16 %v5896, %v5895
    %v6370 = vpack.c.bf16 %v5898, %v5897
    %v6371 = vpack.c.bf16 %v5900, %v5899
    %v6372 = vpack.c.bf16 %v5902, %v5901
    %v6373 = vpack.c.bf16 %v5904, %v5903
    %v6374 = vpack.c.bf16 %v5906, %v5905
    %v6375 = vpack.c.bf16 %v5908, %v5907
    %v6376 = vpack.c.bf16 %v5910, %v5909
    %v6377 = vpack.c.bf16 %v5912, %v5911
    %v6378 = vpack.c.bf16 %v5914, %v5913
    %v6379 = vpack.c.bf16 %v5916, %v5915
    %v6380 = vpack.c.bf16 %v5918, %v5917
    %v6381 = vpack.c.bf16 %v5920, %v5919
    %v6382 = vpack.c.bf16 %v5922, %v5921
    %v6383 = vpack.c.bf16 %v5924, %v5923
    %v6384 = vpack.c.bf16 %v5926, %v5925
    %v6385 = vpack.c.bf16 %v5928, %v5927
    %v6386 = vpack.c.bf16 %v5930, %v5929
    %v6387 = vpack.c.bf16 %v5932, %v5931
    %v6388 = vpack.c.bf16 %v5934, %v5933
    %v6389 = vpack.c.bf16 %v5936, %v5935
    %v6390 = vpack.c.bf16 %v5938, %v5937
    %v6391 = vpack.c.bf16 %v5940, %v5939
    %v6392 = vpack.c.bf16 %v5942, %v5941
    %v6393 = vpack.c.bf16 %v5944, %v5943
    %v6394 = vpack.c.bf16 %v5946, %v5945
    %v6395 = vpack.c.bf16 %v5948, %v5947
    %v6396 = vpack.c.bf16 %v5950, %v5949
    %v6397 = vpack.c.bf16 %v5952, %v5951
    %v6398 = vpack.c.bf16 %v5954, %v5953
    %v6399 = vpack.c.bf16 %v5956, %v5955
    %v6400 = vpack.c.bf16 %v5958, %v5957
    %v6401 = vpack.c.bf16 %v5960, %v5959
    %v6402 = vpack.c.bf16 %v5962, %v5961
    %v6403 = vpack.c.bf16 %v5964, %v5963
    %v6404 = vpack.c.bf16 %v5966, %v5965
    %v6405 = vpack.c.bf16 %v5968, %v5967
    %v6406 = vpack.c.bf16 %v5970, %v5969
    %v6407 = vpack.c.bf16 %v5972, %v5971
    %v6408 = vpack.c.bf16 %v5974, %v5973
    %v6409 = vpack.c.bf16 %v5976, %v5975
    %v6410 = vpack.c.bf16 %v5978, %v5977
    %v6411 = vpack.c.bf16 %v5980, %v5979
    %v6412 = vpack.c.bf16 %v5982, %v5981
    %v6413 = vpack.c.bf16 %v5984, %v5983
    %v6414 = vpack.c.bf16 %v5986, %v5985
    %v6415 = vpack.c.bf16 %v5988, %v5987
    %v6416 = vpack.c.bf16 %v5990, %v5989
    %v6417 = vpack.c.bf16 %v5992, %v5991
    %v6418 = vpack.c.bf16 %v5994, %v5993
    %v6419 = vpack.c.bf16 %v5996, %v5995
    %v6420 = vpack.c.bf16 %v5998, %v5997
    %v6421 = vpack.c.bf16 %v6000, %v5999
    %v6422 = vpack.c.bf16 %v6002, %v6001
    %v6423 = vpack.c.bf16 %v6004, %v6003
    %v6424 = vpack.c.bf16 %v6006, %v6005
    %v6425 = vpack.c.bf16 %v6008, %v6007
    %v6426 = vpack.c.bf16 %v6010, %v6009
    %v6427 = vpack.c.bf16 %v6012, %v6011
    %v6428 = vpack.c.bf16 %v6014, %v6013
    %v6429 = vpack.c.bf16 %v6016, %v6015
    %v6430 = vpack.c.bf16 %v6018, %v6017
    %v6431 = vpack.c.bf16 %v6020, %v6019
    %v6432 = vpack.c.bf16 %v6022, %v6021
    %v6433 = vpack.c.bf16 %v6024, %v6023
    %v6434 = vpack.c.bf16 %v6026, %v6025
    %v6435 = vpack.c.bf16 %v6028, %v6027
    %v6436 = vpack.c.bf16 %v6030, %v6029
    %v6437 = vpack.c.bf16 %v6032, %v6031
    %v6438 = vpack.c.bf16 %v6034, %v6033
    %v6439 = vpack.c.bf16 %v6036, %v6035
    %v6440 = vpack.c.bf16 %v6038, %v6037
    %v6441 = vpack.c.bf16 %v6040, %v6039
    %v6442 = vpack.c.bf16 %v6042, %v6041
    %v6443 = vpack.c.bf16 %v6044, %v6043
    %v6444 = vpack.c.bf16 %v6046, %v6045
    %v6445 = vpack.c.bf16 %v6048, %v6047
    %v6446 = vpack.c.bf16 %v6050, %v6049
    %v6447 = vpack.c.bf16 %v6052, %v6051
    %v6448 = vpack.c.bf16 %v6054, %v6053
    %v6449 = vpack.c.bf16 %v6056, %v6055
    %v6450 = vpack.c.bf16 %v6058, %v6057
    %v6451 = vpack.c.bf16 %v6060, %v6059
    %v6452 = vpack.c.bf16 %v6062, %v6061
    %v6453 = vpack.c.bf16 %v6064, %v6063
    %v6454 = vpack.c.bf16 %v6066, %v6065
    %v6455 = vpack.c.bf16 %v6068, %v6067
    %v6456 = vpack.c.bf16 %v6070, %v6069
    %v6457 = vpack.c.bf16 %v6072, %v6071
    %v6458 = vpack.c.bf16 %v6074, %v6073
    %6460 = vset.pattern.permute.xlu0 0
    %6461 = vperm.xlu0 %6460, %v25
    %v6462 = vpop.permute.xlu0 %6461
    %6465 = vset.pattern.permute.xlu0 0
    %6466 = vperm.xlu0 %6465, %v26
    %v6467 = vpop.permute.xlu0 %6466
    %6470 = vset.pattern.permute.xlu0 0
    %6471 = vperm.xlu0 %6470, %v27
    %v6472 = vpop.permute.xlu0 %6471
    %6475 = vset.pattern.permute.xlu0 0
    %6476 = vperm.xlu0 %6475, %v28
    %v6477 = vpop.permute.xlu0 %6476
    %6480 = vset.pattern.permute.xlu0 0
    %6481 = vperm.xlu0 %6480, %v29
    %v6482 = vpop.permute.xlu0 %6481
    %6485 = vset.pattern.permute.xlu0 0
    %6486 = vperm.xlu0 %6485, %v30
    %v6487 = vpop.permute.xlu0 %6486
    %6490 = vset.pattern.permute.xlu0 0
    %6491 = vperm.xlu0 %6490, %v31
    %v6492 = vpop.permute.xlu0 %6491
    %6495 = vset.pattern.permute.xlu0 0
    %6496 = vperm.xlu0 %6495, %v32
    %v6497 = vpop.permute.xlu0 %6496
    %6500 = vset.pattern.permute.xlu0 0
    %6501 = vperm.xlu0 %6500, %v33
    %v6502 = vpop.permute.xlu0 %6501
    %6505 = vset.pattern.permute.xlu0 0
    %6506 = vperm.xlu0 %6505, %v34
    %v6507 = vpop.permute.xlu0 %6506
    %6510 = vset.pattern.permute.xlu0 0
    %6511 = vperm.xlu0 %6510, %v35
    %v6512 = vpop.permute.xlu0 %6511
    %6515 = vset.pattern.permute.xlu0 0
    %6516 = vperm.xlu0 %6515, %v36
    %v6517 = vpop.permute.xlu0 %6516
    %6520 = vset.pattern.permute.xlu0 0
    %6521 = vperm.xlu0 %6520, %v37
    %v6522 = vpop.permute.xlu0 %6521
    %6525 = vset.pattern.permute.xlu0 0
    %6526 = vperm.xlu0 %6525, %v38
    %v6527 = vpop.permute.xlu0 %6526
    %6530 = vset.pattern.permute.xlu0 0
    %6531 = vperm.xlu0 %6530, %v39
    %v6532 = vpop.permute.xlu0 %6531
    %6535 = vset.pattern.permute.xlu0 0
    %6536 = vperm.xlu0 %6535, %v40
    %v6537 = vpop.permute.xlu0 %6536
    %6540 = vset.pattern.permute.xlu0 0
    %6541 = vperm.xlu0 %6540, %v41
    %v6542 = vpop.permute.xlu0 %6541
    %6545 = vset.pattern.permute.xlu0 0
    %6546 = vperm.xlu0 %6545, %v42
    %v6547 = vpop.permute.xlu0 %6546
    %6550 = vset.pattern.permute.xlu0 0
    %6551 = vperm.xlu0 %6550, %v43
    %v6552 = vpop.permute.xlu0 %6551
    %6555 = vset.pattern.permute.xlu0 0
    %6556 = vperm.xlu0 %6555, %v44
    %v6557 = vpop.permute.xlu0 %6556
    %6560 = vset.pattern.permute.xlu0 0
    %6561 = vperm.xlu0 %6560, %v45
    %v6562 = vpop.permute.xlu0 %6561
    %6565 = vset.pattern.permute.xlu0 0
    %6566 = vperm.xlu0 %6565, %v46
    %v6567 = vpop.permute.xlu0 %6566
    %6570 = vset.pattern.permute.xlu0 0
    %6571 = vperm.xlu0 %6570, %v47
    %v6572 = vpop.permute.xlu0 %6571
    %6575 = vset.pattern.permute.xlu0 0
    %6576 = vperm.xlu0 %6575, %v48
    %v6577 = vpop.permute.xlu0 %6576
    %6580 = vset.pattern.permute.xlu0 0
    %6581 = vperm.xlu0 %6580, %v49
    %v6582 = vpop.permute.xlu0 %6581
    %6585 = vset.pattern.permute.xlu0 0
    %6586 = vperm.xlu0 %6585, %v50
    %v6587 = vpop.permute.xlu0 %6586
    %6590 = vset.pattern.permute.xlu0 0
    %6591 = vperm.xlu0 %6590, %v51
    %v6592 = vpop.permute.xlu0 %6591
    %6595 = vset.pattern.permute.xlu0 0
    %6596 = vperm.xlu0 %6595, %v52
    %v6597 = vpop.permute.xlu0 %6596
    %6600 = vset.pattern.permute.xlu0 0
    %6601 = vperm.xlu0 %6600, %v53
    %v6602 = vpop.permute.xlu0 %6601
    %6605 = vset.pattern.permute.xlu0 0
    %6606 = vperm.xlu0 %6605, %v54
    %v6607 = vpop.permute.xlu0 %6606
    %6610 = vset.pattern.permute.xlu0 0
    %6611 = vperm.xlu0 %6610, %v55
    %v6612 = vpop.permute.xlu0 %6611
    %6615 = vset.pattern.permute.xlu0 0
    %6616 = vperm.xlu0 %6615, %v56
    %v6617 = vpop.permute.xlu0 %6616
    %v6875 = vunpack.c.l.b16 %v6075
    %v6876 = vunpack.c.h.b16 %v6075
    %v6877 = vunpack.c.l.b16 %v6076
    %v6878 = vunpack.c.h.b16 %v6076
    %v6879 = vunpack.c.l.b16 %v6077
    %v6880 = vunpack.c.h.b16 %v6077
    %v6881 = vunpack.c.l.b16 %v6078
    %v6882 = vunpack.c.h.b16 %v6078
    %v6883 = vunpack.c.l.b16 %v6079
    %v6884 = vunpack.c.h.b16 %v6079
    %v6885 = vunpack.c.l.b16 %v6080
    %v6886 = vunpack.c.h.b16 %v6080
    %v6887 = vunpack.c.l.b16 %v6081
    %v6888 = vunpack.c.h.b16 %v6081
    %v6889 = vunpack.c.l.b16 %v6082
    %v6890 = vunpack.c.h.b16 %v6082
    %v6891 = vunpack.c.l.b16 %v6083
    %v6892 = vunpack.c.h.b16 %v6083
    %v6893 = vunpack.c.l.b16 %v6084
    %v6894 = vunpack.c.h.b16 %v6084
    %v6895 = vunpack.c.l.b16 %v6085
    %v6896 = vunpack.c.h.b16 %v6085
    %v6897 = vunpack.c.l.b16 %v6086
    %v6898 = vunpack.c.h.b16 %v6086
    %v6899 = vunpack.c.l.b16 %v6087
    %v6900 = vunpack.c.h.b16 %v6087
    %v6901 = vunpack.c.l.b16 %v6088
    %v6902 = vunpack.c.h.b16 %v6088
    %v6903 = vunpack.c.l.b16 %v6089
    %v6904 = vunpack.c.h.b16 %v6089
    %v6905 = vunpack.c.l.b16 %v6090
    %v6906 = vunpack.c.h.b16 %v6090
    %v6907 = vunpack.c.l.b16 %v6091
    %v6908 = vunpack.c.h.b16 %v6091
    %v6909 = vunpack.c.l.b16 %v6092
    %v6910 = vunpack.c.h.b16 %v6092
    %v6911 = vunpack.c.l.b16 %v6093
    %v6912 = vunpack.c.h.b16 %v6093
    %v6913 = vunpack.c.l.b16 %v6094
    %v6914 = vunpack.c.h.b16 %v6094
    %v6915 = vunpack.c.l.b16 %v6095
    %v6916 = vunpack.c.h.b16 %v6095
    %v6917 = vunpack.c.l.b16 %v6096
    %v6918 = vunpack.c.h.b16 %v6096
    %v6919 = vunpack.c.l.b16 %v6097
    %v6920 = vunpack.c.h.b16 %v6097
    %v6921 = vunpack.c.l.b16 %v6098
    %v6922 = vunpack.c.h.b16 %v6098
    %v6923 = vunpack.c.l.b16 %v6099
    %v6924 = vunpack.c.h.b16 %v6099
    %v6925 = vunpack.c.l.b16 %v6100
    %v6926 = vunpack.c.h.b16 %v6100
    %v6927 = vunpack.c.l.b16 %v6101
    %v6928 = vunpack.c.h.b16 %v6101
    %v6929 = vunpack.c.l.b16 %v6102
    %v6930 = vunpack.c.h.b16 %v6102
    %v6931 = vunpack.c.l.b16 %v6103
    %v6932 = vunpack.c.h.b16 %v6103
    %v6933 = vunpack.c.l.b16 %v6104
    %v6934 = vunpack.c.h.b16 %v6104
    %v6935 = vunpack.c.l.b16 %v6105
    %v6936 = vunpack.c.h.b16 %v6105
    %v6937 = vunpack.c.l.b16 %v6106
    %v6938 = vunpack.c.h.b16 %v6106
    %v6939 = vunpack.c.l.b16 %v6107
    %v6940 = vunpack.c.h.b16 %v6107
    %v6941 = vunpack.c.l.b16 %v6108
    %v6942 = vunpack.c.h.b16 %v6108
    %v6943 = vunpack.c.l.b16 %v6109
    %v6944 = vunpack.c.h.b16 %v6109
    %v6945 = vunpack.c.l.b16 %v6110
    %v6946 = vunpack.c.h.b16 %v6110
    %v6947 = vunpack.c.l.b16 %v6111
    %v6948 = vunpack.c.h.b16 %v6111
    %v6949 = vunpack.c.l.b16 %v6112
    %v6950 = vunpack.c.h.b16 %v6112
    %v6951 = vunpack.c.l.b16 %v6113
    %v6952 = vunpack.c.h.b16 %v6113
    %v6953 = vunpack.c.l.b16 %v6114
    %v6954 = vunpack.c.h.b16 %v6114
    %v6955 = vunpack.c.l.b16 %v6115
    %v6956 = vunpack.c.h.b16 %v6115
    %v6957 = vunpack.c.l.b16 %v6116
    %v6958 = vunpack.c.h.b16 %v6116
    %v6959 = vunpack.c.l.b16 %v6117
    %v6960 = vunpack.c.h.b16 %v6117
    %v6961 = vunpack.c.l.b16 %v6118
    %v6962 = vunpack.c.h.b16 %v6118
    %v6963 = vunpack.c.l.b16 %v6119
    %v6964 = vunpack.c.h.b16 %v6119
    %v6965 = vunpack.c.l.b16 %v6120
    %v6966 = vunpack.c.h.b16 %v6120
    %v6967 = vunpack.c.l.b16 %v6121
    %v6968 = vunpack.c.h.b16 %v6121
    %v6969 = vunpack.c.l.b16 %v6122
    %v6970 = vunpack.c.h.b16 %v6122
    %v6971 = vunpack.c.l.b16 %v6123
    %v6972 = vunpack.c.h.b16 %v6123
    %v6973 = vunpack.c.l.b16 %v6124
    %v6974 = vunpack.c.h.b16 %v6124
    %v6975 = vunpack.c.l.b16 %v6125
    %v6976 = vunpack.c.h.b16 %v6125
    %v6977 = vunpack.c.l.b16 %v6126
    %v6978 = vunpack.c.h.b16 %v6126
    %v6979 = vunpack.c.l.b16 %v6127
    %v6980 = vunpack.c.h.b16 %v6127
    %v6981 = vunpack.c.l.b16 %v6128
    %v6982 = vunpack.c.h.b16 %v6128
    %v6983 = vunpack.c.l.b16 %v6129
    %v6984 = vunpack.c.h.b16 %v6129
    %v6985 = vunpack.c.l.b16 %v6130
    %v6986 = vunpack.c.h.b16 %v6130
    %v6987 = vunpack.c.l.b16 %v6131
    %v6988 = vunpack.c.h.b16 %v6131
    %v6989 = vunpack.c.l.b16 %v6132
    %v6990 = vunpack.c.h.b16 %v6132
    %v6991 = vunpack.c.l.b16 %v6133
    %v6992 = vunpack.c.h.b16 %v6133
    %v6993 = vunpack.c.l.b16 %v6134
    %v6994 = vunpack.c.h.b16 %v6134
    %v6995 = vunpack.c.l.b16 %v6135
    %v6996 = vunpack.c.h.b16 %v6135
    %v6997 = vunpack.c.l.b16 %v6136
    %v6998 = vunpack.c.h.b16 %v6136
    %v6999 = vunpack.c.l.b16 %v6137
    %v7000 = vunpack.c.h.b16 %v6137
    %v7001 = vunpack.c.l.b16 %v6138
    %v7002 = vunpack.c.h.b16 %v6138
    %v7003 = vunpack.c.l.b16 %v6139
    %v7004 = vunpack.c.h.b16 %v6139
    %v7005 = vunpack.c.l.b16 %v6140
    %v7006 = vunpack.c.h.b16 %v6140
    %v7007 = vunpack.c.l.b16 %v6141
    %v7008 = vunpack.c.h.b16 %v6141
    %v7009 = vunpack.c.l.b16 %v6142
    %v7010 = vunpack.c.h.b16 %v6142
    %v7011 = vunpack.c.l.b16 %v6143
    %v7012 = vunpack.c.h.b16 %v6143
    %v7013 = vunpack.c.l.b16 %v6144
    %v7014 = vunpack.c.h.b16 %v6144
    %v7015 = vunpack.c.l.b16 %v6145
    %v7016 = vunpack.c.h.b16 %v6145
    %v7017 = vunpack.c.l.b16 %v6146
    %v7018 = vunpack.c.h.b16 %v6146
    %v7019 = vunpack.c.l.b16 %v6147
    %v7020 = vunpack.c.h.b16 %v6147
    %v7021 = vunpack.c.l.b16 %v6148
    %v7022 = vunpack.c.h.b16 %v6148
    %v7023 = vunpack.c.l.b16 %v6149
    %v7024 = vunpack.c.h.b16 %v6149
    %v7025 = vunpack.c.l.b16 %v6150
    %v7026 = vunpack.c.h.b16 %v6150
    %v7027 = vunpack.c.l.b16 %v6151
    %v7028 = vunpack.c.h.b16 %v6151
    %v7029 = vunpack.c.l.b16 %v6152
    %v7030 = vunpack.c.h.b16 %v6152
    %v7031 = vunpack.c.l.b16 %v6153
    %v7032 = vunpack.c.h.b16 %v6153
    %v7033 = vunpack.c.l.b16 %v6154
    %v7034 = vunpack.c.h.b16 %v6154
    %v7035 = vunpack.c.l.b16 %v6155
    %v7036 = vunpack.c.h.b16 %v6155
    %v7037 = vunpack.c.l.b16 %v6156
    %v7038 = vunpack.c.h.b16 %v6156
    %v7039 = vunpack.c.l.b16 %v6157
    %v7040 = vunpack.c.h.b16 %v6157
    %v7041 = vunpack.c.l.b16 %v6158
    %v7042 = vunpack.c.h.b16 %v6158
    %v7043 = vunpack.c.l.b16 %v6159
    %v7044 = vunpack.c.h.b16 %v6159
    %v7045 = vunpack.c.l.b16 %v6160
    %v7046 = vunpack.c.h.b16 %v6160
    %v7047 = vunpack.c.l.b16 %v6161
    %v7048 = vunpack.c.h.b16 %v6161
    %v7049 = vunpack.c.l.b16 %v6162
    %v7050 = vunpack.c.h.b16 %v6162
    %v7051 = vunpack.c.l.b16 %v6163
    %v7052 = vunpack.c.h.b16 %v6163
    %v7053 = vunpack.c.l.b16 %v6164
    %v7054 = vunpack.c.h.b16 %v6164
    %v7055 = vunpack.c.l.b16 %v6165
    %v7056 = vunpack.c.h.b16 %v6165
    %v7057 = vunpack.c.l.b16 %v6166
    %v7058 = vunpack.c.h.b16 %v6166
    %v7059 = vunpack.c.l.b16 %v6167
    %v7060 = vunpack.c.h.b16 %v6167
    %v7061 = vunpack.c.l.b16 %v6168
    %v7062 = vunpack.c.h.b16 %v6168
    %v7063 = vunpack.c.l.b16 %v6169
    %v7064 = vunpack.c.h.b16 %v6169
    %v7065 = vunpack.c.l.b16 %v6170
    %v7066 = vunpack.c.h.b16 %v6170
    %v7067 = vunpack.c.l.b16 %v6171
    %v7068 = vunpack.c.h.b16 %v6171
    %v7069 = vunpack.c.l.b16 %v6172
    %v7070 = vunpack.c.h.b16 %v6172
    %v7071 = vunpack.c.l.b16 %v6173
    %v7072 = vunpack.c.h.b16 %v6173
    %v7073 = vunpack.c.l.b16 %v6174
    %v7074 = vunpack.c.h.b16 %v6174
    %v7075 = vunpack.c.l.b16 %v6175
    %v7076 = vunpack.c.h.b16 %v6175
    %v7077 = vunpack.c.l.b16 %v6176
    %v7078 = vunpack.c.h.b16 %v6176
    %v7079 = vunpack.c.l.b16 %v6177
    %v7080 = vunpack.c.h.b16 %v6177
    %v7081 = vunpack.c.l.b16 %v6178
    %v7082 = vunpack.c.h.b16 %v6178
    %v7083 = vunpack.c.l.b16 %v6179
    %v7084 = vunpack.c.h.b16 %v6179
    %v7085 = vunpack.c.l.b16 %v6180
    %v7086 = vunpack.c.h.b16 %v6180
    %v7087 = vunpack.c.l.b16 %v6181
    %v7088 = vunpack.c.h.b16 %v6181
    %v7089 = vunpack.c.l.b16 %v6182
    %v7090 = vunpack.c.h.b16 %v6182
    %v7091 = vunpack.c.l.b16 %v6183
    %v7092 = vunpack.c.h.b16 %v6183
    %v7093 = vunpack.c.l.b16 %v6184
    %v7094 = vunpack.c.h.b16 %v6184
    %v7095 = vunpack.c.l.b16 %v6185
    %v7096 = vunpack.c.h.b16 %v6185
    %v7097 = vunpack.c.l.b16 %v6186
    %v7098 = vunpack.c.h.b16 %v6186
    %v7099 = vunpack.c.l.b16 %v6187
    %v7100 = vunpack.c.h.b16 %v6187
    %v7101 = vunpack.c.l.b16 %v6188
    %v7102 = vunpack.c.h.b16 %v6188
    %v7103 = vunpack.c.l.b16 %v6189
    %v7104 = vunpack.c.h.b16 %v6189
    %v7105 = vunpack.c.l.b16 %v6190
    %v7106 = vunpack.c.h.b16 %v6190
    %v7107 = vunpack.c.l.b16 %v6191
    %v7108 = vunpack.c.h.b16 %v6191
    %v7109 = vunpack.c.l.b16 %v6192
    %v7110 = vunpack.c.h.b16 %v6192
    %v7111 = vunpack.c.l.b16 %v6193
    %v7112 = vunpack.c.h.b16 %v6193
    %v7113 = vunpack.c.l.b16 %v6194
    %v7114 = vunpack.c.h.b16 %v6194
    %v7115 = vunpack.c.l.b16 %v6195
    %v7116 = vunpack.c.h.b16 %v6195
    %v7117 = vunpack.c.l.b16 %v6196
    %v7118 = vunpack.c.h.b16 %v6196
    %v7119 = vunpack.c.l.b16 %v6197
    %v7120 = vunpack.c.h.b16 %v6197
    %v7121 = vunpack.c.l.b16 %v6198
    %v7122 = vunpack.c.h.b16 %v6198
    %v7123 = vunpack.c.l.b16 %v6199
    %v7124 = vunpack.c.h.b16 %v6199
    %v7125 = vunpack.c.l.b16 %v6200
    %v7126 = vunpack.c.h.b16 %v6200
    %v7127 = vunpack.c.l.b16 %v6201
    %v7128 = vunpack.c.h.b16 %v6201
    %v7129 = vunpack.c.l.b16 %v6202
    %v7130 = vunpack.c.h.b16 %v6202
    %v7131 = vunpack.c.l.b16 %v6203
    %v7132 = vunpack.c.h.b16 %v6203
    %v7133 = vunpack.c.l.b16 %v6204
    %v7134 = vunpack.c.h.b16 %v6204
    %v7135 = vunpack.c.l.b16 %v6205
    %v7136 = vunpack.c.h.b16 %v6205
    %v7137 = vunpack.c.l.b16 %v6206
    %v7138 = vunpack.c.h.b16 %v6206
    %v7139 = vunpack.c.l.b16 %v6207
    %v7140 = vunpack.c.h.b16 %v6207
    %v7141 = vunpack.c.l.b16 %v6208
    %v7142 = vunpack.c.h.b16 %v6208
    %v7143 = vunpack.c.l.b16 %v6209
    %v7144 = vunpack.c.h.b16 %v6209
    %v7145 = vunpack.c.l.b16 %v6210
    %v7146 = vunpack.c.h.b16 %v6210
    %v7147 = vunpack.c.l.b16 %v6211
    %v7148 = vunpack.c.h.b16 %v6211
    %v7149 = vunpack.c.l.b16 %v6212
    %v7150 = vunpack.c.h.b16 %v6212
    %v7151 = vunpack.c.l.b16 %v6213
    %v7152 = vunpack.c.h.b16 %v6213
    %v7153 = vunpack.c.l.b16 %v6214
    %v7154 = vunpack.c.h.b16 %v6214
    %v7155 = vunpack.c.l.b16 %v6215
    %v7156 = vunpack.c.h.b16 %v6215
    %v7157 = vunpack.c.l.b16 %v6216
    %v7158 = vunpack.c.h.b16 %v6216
    %v7159 = vunpack.c.l.b16 %v6217
    %v7160 = vunpack.c.h.b16 %v6217
    %v7161 = vunpack.c.l.b16 %v6218
    %v7162 = vunpack.c.h.b16 %v6218
    %v7163 = vunpack.c.l.b16 %v6219
    %v7164 = vunpack.c.h.b16 %v6219
    %v7165 = vunpack.c.l.b16 %v6220
    %v7166 = vunpack.c.h.b16 %v6220
    %v7167 = vunpack.c.l.b16 %v6221
    %v7168 = vunpack.c.h.b16 %v6221
    %v7169 = vunpack.c.l.b16 %v6222
    %v7170 = vunpack.c.h.b16 %v6222
    %v7171 = vunpack.c.l.b16 %v6223
    %v7172 = vunpack.c.h.b16 %v6223
    %v7173 = vunpack.c.l.b16 %v6224
    %v7174 = vunpack.c.h.b16 %v6224
    %v7175 = vunpack.c.l.b16 %v6225
    %v7176 = vunpack.c.h.b16 %v6225
    %v7177 = vunpack.c.l.b16 %v6226
    %v7178 = vunpack.c.h.b16 %v6226
    %v7179 = vunpack.c.l.b16 %v6227
    %v7180 = vunpack.c.h.b16 %v6227
    %v7181 = vunpack.c.l.b16 %v6228
    %v7182 = vunpack.c.h.b16 %v6228
    %v7183 = vunpack.c.l.b16 %v6229
    %v7184 = vunpack.c.h.b16 %v6229
    %v7185 = vunpack.c.l.b16 %v6230
    %v7186 = vunpack.c.h.b16 %v6230
    %v7187 = vunpack.c.l.b16 %v6231
    %v7188 = vunpack.c.h.b16 %v6231
    %v7189 = vunpack.c.l.b16 %v6232
    %v7190 = vunpack.c.h.b16 %v6232
    %v7191 = vunpack.c.l.b16 %v6233
    %v7192 = vunpack.c.h.b16 %v6233
    %v7193 = vunpack.c.l.b16 %v6234
    %v7194 = vunpack.c.h.b16 %v6234
    %v7195 = vunpack.c.l.b16 %v6235
    %v7196 = vunpack.c.h.b16 %v6235
    %v7197 = vunpack.c.l.b16 %v6236
    %v7198 = vunpack.c.h.b16 %v6236
    %v7199 = vunpack.c.l.b16 %v6237
    %v7200 = vunpack.c.h.b16 %v6237
    %v7201 = vunpack.c.l.b16 %v6238
    %v7202 = vunpack.c.h.b16 %v6238
    %v7203 = vunpack.c.l.b16 %v6239
    %v7204 = vunpack.c.h.b16 %v6239
    %v7205 = vunpack.c.l.b16 %v6240
    %v7206 = vunpack.c.h.b16 %v6240
    %v7207 = vunpack.c.l.b16 %v6241
    %v7208 = vunpack.c.h.b16 %v6241
    %v7209 = vunpack.c.l.b16 %v6242
    %v7210 = vunpack.c.h.b16 %v6242
    %v7211 = vunpack.c.l.b16 %v6243
    %v7212 = vunpack.c.h.b16 %v6243
    %v7213 = vunpack.c.l.b16 %v6244
    %v7214 = vunpack.c.h.b16 %v6244
    %v7215 = vunpack.c.l.b16 %v6245
    %v7216 = vunpack.c.h.b16 %v6245
    %v7217 = vunpack.c.l.b16 %v6246
    %v7218 = vunpack.c.h.b16 %v6246
    %v7219 = vunpack.c.l.b16 %v6247
    %v7220 = vunpack.c.h.b16 %v6247
    %v7221 = vunpack.c.l.b16 %v6248
    %v7222 = vunpack.c.h.b16 %v6248
    %v7223 = vunpack.c.l.b16 %v6249
    %v7224 = vunpack.c.h.b16 %v6249
    %v7225 = vunpack.c.l.b16 %v6250
    %v7226 = vunpack.c.h.b16 %v6250
    %v7227 = vunpack.c.l.b16 %v6251
    %v7228 = vunpack.c.h.b16 %v6251
    %v7229 = vunpack.c.l.b16 %v6252
    %v7230 = vunpack.c.h.b16 %v6252
    %v7231 = vunpack.c.l.b16 %v6253
    %v7232 = vunpack.c.h.b16 %v6253
    %v7233 = vunpack.c.l.b16 %v6254
    %v7234 = vunpack.c.h.b16 %v6254
    %v7235 = vunpack.c.l.b16 %v6255
    %v7236 = vunpack.c.h.b16 %v6255
    %v7237 = vunpack.c.l.b16 %v6256
    %v7238 = vunpack.c.h.b16 %v6256
    %v7239 = vunpack.c.l.b16 %v6257
    %v7240 = vunpack.c.h.b16 %v6257
    %v7241 = vunpack.c.l.b16 %v6258
    %v7242 = vunpack.c.h.b16 %v6258
    %v7243 = vunpack.c.l.b16 %v6259
    %v7244 = vunpack.c.h.b16 %v6259
    %v7245 = vunpack.c.l.b16 %v6260
    %v7246 = vunpack.c.h.b16 %v6260
    %v7247 = vunpack.c.l.b16 %v6261
    %v7248 = vunpack.c.h.b16 %v6261
    %v7249 = vunpack.c.l.b16 %v6262
    %v7250 = vunpack.c.h.b16 %v6262
    %v7251 = vunpack.c.l.b16 %v6263
    %v7252 = vunpack.c.h.b16 %v6263
    %v7253 = vunpack.c.l.b16 %v6264
    %v7254 = vunpack.c.h.b16 %v6264
    %v7255 = vunpack.c.l.b16 %v6265
    %v7256 = vunpack.c.h.b16 %v6265
    %v7257 = vunpack.c.l.b16 %v6266
    %v7258 = vunpack.c.h.b16 %v6266
    %v7259 = vunpack.c.l.b16 %v6267
    %v7260 = vunpack.c.h.b16 %v6267
    %v7261 = vunpack.c.l.b16 %v6268
    %v7262 = vunpack.c.h.b16 %v6268
    %v7263 = vunpack.c.l.b16 %v6269
    %v7264 = vunpack.c.h.b16 %v6269
    %v7265 = vunpack.c.l.b16 %v6270
    %v7266 = vunpack.c.h.b16 %v6270
    %v7267 = vunpack.c.l.b16 %v6271
    %v7268 = vunpack.c.h.b16 %v6271
    %v7269 = vunpack.c.l.b16 %v6272
    %v7270 = vunpack.c.h.b16 %v6272
    %v7271 = vunpack.c.l.b16 %v6273
    %v7272 = vunpack.c.h.b16 %v6273
    %v7273 = vunpack.c.l.b16 %v6274
    %v7274 = vunpack.c.h.b16 %v6274
    %v7275 = vunpack.c.l.b16 %v6275
    %v7276 = vunpack.c.h.b16 %v6275
    %v7277 = vunpack.c.l.b16 %v6276
    %v7278 = vunpack.c.h.b16 %v6276
    %v7279 = vunpack.c.l.b16 %v6277
    %v7280 = vunpack.c.h.b16 %v6277
    %v7281 = vunpack.c.l.b16 %v6278
    %v7282 = vunpack.c.h.b16 %v6278
    %v7283 = vunpack.c.l.b16 %v6279
    %v7284 = vunpack.c.h.b16 %v6279
    %v7285 = vunpack.c.l.b16 %v6280
    %v7286 = vunpack.c.h.b16 %v6280
    %v7287 = vunpack.c.l.b16 %v6281
    %v7288 = vunpack.c.h.b16 %v6281
    %v7289 = vunpack.c.l.b16 %v6282
    %v7290 = vunpack.c.h.b16 %v6282
    %v7291 = vunpack.c.l.b16 %v6283
    %v7292 = vunpack.c.h.b16 %v6283
    %v7293 = vunpack.c.l.b16 %v6284
    %v7294 = vunpack.c.h.b16 %v6284
    %v7295 = vunpack.c.l.b16 %v6285
    %v7296 = vunpack.c.h.b16 %v6285
    %v7297 = vunpack.c.l.b16 %v6286
    %v7298 = vunpack.c.h.b16 %v6286
    %v7299 = vunpack.c.l.b16 %v6287
    %v7300 = vunpack.c.h.b16 %v6287
    %v7301 = vunpack.c.l.b16 %v6288
    %v7302 = vunpack.c.h.b16 %v6288
    %v7303 = vunpack.c.l.b16 %v6289
    %v7304 = vunpack.c.h.b16 %v6289
    %v7305 = vunpack.c.l.b16 %v6290
    %v7306 = vunpack.c.h.b16 %v6290
    %v7307 = vunpack.c.l.b16 %v6291
    %v7308 = vunpack.c.h.b16 %v6291
    %v7309 = vunpack.c.l.b16 %v6292
    %v7310 = vunpack.c.h.b16 %v6292
    %v7311 = vunpack.c.l.b16 %v6293
    %v7312 = vunpack.c.h.b16 %v6293
    %v7313 = vunpack.c.l.b16 %v6294
    %v7314 = vunpack.c.h.b16 %v6294
    %v7315 = vunpack.c.l.b16 %v6295
    %v7316 = vunpack.c.h.b16 %v6295
    %v7317 = vunpack.c.l.b16 %v6296
    %v7318 = vunpack.c.h.b16 %v6296
    %v7319 = vunpack.c.l.b16 %v6297
    %v7320 = vunpack.c.h.b16 %v6297
    %v7321 = vunpack.c.l.b16 %v6298
    %v7322 = vunpack.c.h.b16 %v6298
    %v7323 = vunpack.c.l.b16 %v6299
    %v7324 = vunpack.c.h.b16 %v6299
    %v7325 = vunpack.c.l.b16 %v6300
    %v7326 = vunpack.c.h.b16 %v6300
    %v7327 = vunpack.c.l.b16 %v6301
    %v7328 = vunpack.c.h.b16 %v6301
    %v7329 = vunpack.c.l.b16 %v6302
    %v7330 = vunpack.c.h.b16 %v6302
    %v7331 = vunpack.c.l.b16 %v6303
    %v7332 = vunpack.c.h.b16 %v6303
    %v7333 = vunpack.c.l.b16 %v6304
    %v7334 = vunpack.c.h.b16 %v6304
    %v7335 = vunpack.c.l.b16 %v6305
    %v7336 = vunpack.c.h.b16 %v6305
    %v7337 = vunpack.c.l.b16 %v6306
    %v7338 = vunpack.c.h.b16 %v6306
    %v7339 = vunpack.c.l.b16 %v6307
    %v7340 = vunpack.c.h.b16 %v6307
    %v7341 = vunpack.c.l.b16 %v6308
    %v7342 = vunpack.c.h.b16 %v6308
    %v7343 = vunpack.c.l.b16 %v6309
    %v7344 = vunpack.c.h.b16 %v6309
    %v7345 = vunpack.c.l.b16 %v6310
    %v7346 = vunpack.c.h.b16 %v6310
    %v7347 = vunpack.c.l.b16 %v6311
    %v7348 = vunpack.c.h.b16 %v6311
    %v7349 = vunpack.c.l.b16 %v6312
    %v7350 = vunpack.c.h.b16 %v6312
    %v7351 = vunpack.c.l.b16 %v6313
    %v7352 = vunpack.c.h.b16 %v6313
    %v7353 = vunpack.c.l.b16 %v6314
    %v7354 = vunpack.c.h.b16 %v6314
    %v7355 = vunpack.c.l.b16 %v6315
    %v7356 = vunpack.c.h.b16 %v6315
    %v7357 = vunpack.c.l.b16 %v6316
    %v7358 = vunpack.c.h.b16 %v6316
    %v7359 = vunpack.c.l.b16 %v6317
    %v7360 = vunpack.c.h.b16 %v6317
    %v7361 = vunpack.c.l.b16 %v6318
    %v7362 = vunpack.c.h.b16 %v6318
    %v7363 = vunpack.c.l.b16 %v6319
    %v7364 = vunpack.c.h.b16 %v6319
    %v7365 = vunpack.c.l.b16 %v6320
    %v7366 = vunpack.c.h.b16 %v6320
    %v7367 = vunpack.c.l.b16 %v6321
    %v7368 = vunpack.c.h.b16 %v6321
    %v7369 = vunpack.c.l.b16 %v6322
    %v7370 = vunpack.c.h.b16 %v6322
    %v7371 = vunpack.c.l.b16 %v6323
    %v7372 = vunpack.c.h.b16 %v6323
    %v7373 = vunpack.c.l.b16 %v6324
    %v7374 = vunpack.c.h.b16 %v6324
    %v7375 = vunpack.c.l.b16 %v6325
    %v7376 = vunpack.c.h.b16 %v6325
    %v7377 = vunpack.c.l.b16 %v6326
    %v7378 = vunpack.c.h.b16 %v6326
    %v7379 = vunpack.c.l.b16 %v6327
    %v7380 = vunpack.c.h.b16 %v6327
    %v7381 = vunpack.c.l.b16 %v6328
    %v7382 = vunpack.c.h.b16 %v6328
    %v7383 = vunpack.c.l.b16 %v6329
    %v7384 = vunpack.c.h.b16 %v6329
    %v7385 = vunpack.c.l.b16 %v6330
    %v7386 = vunpack.c.h.b16 %v6330
    %v7387 = vpack.c.b16 %v6891, %v6875
    %v7388 = vpack.c.b16 %v6892, %v6876
    %v7389 = vpack.c.b16 %v6893, %v6877
    %v7390 = vpack.c.b16 %v6894, %v6878
    %v7391 = vpack.c.b16 %v6895, %v6879
    %v7392 = vpack.c.b16 %v6896, %v6880
    %v7393 = vpack.c.b16 %v6897, %v6881
    %v7394 = vpack.c.b16 %v6898, %v6882
    %v7395 = vpack.c.b16 %v6899, %v6883
    %v7396 = vpack.c.b16 %v6900, %v6884
    %v7397 = vpack.c.b16 %v6901, %v6885
    %v7398 = vpack.c.b16 %v6902, %v6886
    %v7399 = vpack.c.b16 %v6903, %v6887
    %v7400 = vpack.c.b16 %v6904, %v6888
    %v7401 = vpack.c.b16 %v6905, %v6889
    %v7402 = vpack.c.b16 %v6906, %v6890
    %v7403 = vpack.c.b16 %v6923, %v6907
    %v7404 = vpack.c.b16 %v6924, %v6908
    %v7405 = vpack.c.b16 %v6925, %v6909
    %v7406 = vpack.c.b16 %v6926, %v6910
    %v7407 = vpack.c.b16 %v6927, %v6911
    %v7408 = vpack.c.b16 %v6928, %v6912
    %v7409 = vpack.c.b16 %v6929, %v6913
    %v7410 = vpack.c.b16 %v6930, %v6914
    %v7411 = vpack.c.b16 %v6931, %v6915
    %v7412 = vpack.c.b16 %v6932, %v6916
    %v7413 = vpack.c.b16 %v6933, %v6917
    %v7414 = vpack.c.b16 %v6934, %v6918
    %v7415 = vpack.c.b16 %v6935, %v6919
    %v7416 = vpack.c.b16 %v6936, %v6920
    %v7417 = vpack.c.b16 %v6937, %v6921
    %v7418 = vpack.c.b16 %v6938, %v6922
    %v7419 = vpack.c.b16 %v6955, %v6939
    %v7420 = vpack.c.b16 %v6956, %v6940
    %v7421 = vpack.c.b16 %v6957, %v6941
    %v7422 = vpack.c.b16 %v6958, %v6942
    %v7423 = vpack.c.b16 %v6959, %v6943
    %v7424 = vpack.c.b16 %v6960, %v6944
    %v7425 = vpack.c.b16 %v6961, %v6945
    %v7426 = vpack.c.b16 %v6962, %v6946
    %v7427 = vpack.c.b16 %v6963, %v6947
    %v7428 = vpack.c.b16 %v6964, %v6948
    %v7429 = vpack.c.b16 %v6965, %v6949
    %v7430 = vpack.c.b16 %v6966, %v6950
    %v7431 = vpack.c.b16 %v6967, %v6951
    %v7432 = vpack.c.b16 %v6968, %v6952
    %v7433 = vpack.c.b16 %v6969, %v6953
    %v7434 = vpack.c.b16 %v6970, %v6954
    %v7435 = vpack.c.b16 %v6987, %v6971
    %v7436 = vpack.c.b16 %v6988, %v6972
    %v7437 = vpack.c.b16 %v6989, %v6973
    %v7438 = vpack.c.b16 %v6990, %v6974
    %v7439 = vpack.c.b16 %v6991, %v6975
    %v7440 = vpack.c.b16 %v6992, %v6976
    %v7441 = vpack.c.b16 %v6993, %v6977
    %v7442 = vpack.c.b16 %v6994, %v6978
    %v7443 = vpack.c.b16 %v6995, %v6979
    %v7444 = vpack.c.b16 %v6996, %v6980
    %v7445 = vpack.c.b16 %v6997, %v6981
    %v7446 = vpack.c.b16 %v6998, %v6982
    %v7447 = vpack.c.b16 %v6999, %v6983
    %v7448 = vpack.c.b16 %v7000, %v6984
    %v7449 = vpack.c.b16 %v7001, %v6985
    %v7450 = vpack.c.b16 %v7002, %v6986
    %v7451 = vpack.c.b16 %v7019, %v7003
    %v7452 = vpack.c.b16 %v7020, %v7004
    %v7453 = vpack.c.b16 %v7021, %v7005
    %v7454 = vpack.c.b16 %v7022, %v7006
    %v7455 = vpack.c.b16 %v7023, %v7007
    %v7456 = vpack.c.b16 %v7024, %v7008
    %v7457 = vpack.c.b16 %v7025, %v7009
    %v7458 = vpack.c.b16 %v7026, %v7010
    %v7459 = vpack.c.b16 %v7027, %v7011
    %v7460 = vpack.c.b16 %v7028, %v7012
    %v7461 = vpack.c.b16 %v7029, %v7013
    %v7462 = vpack.c.b16 %v7030, %v7014
    %v7463 = vpack.c.b16 %v7031, %v7015
    %v7464 = vpack.c.b16 %v7032, %v7016
    %v7465 = vpack.c.b16 %v7033, %v7017
    %v7466 = vpack.c.b16 %v7034, %v7018
    %v7467 = vpack.c.b16 %v7051, %v7035
    %v7468 = vpack.c.b16 %v7052, %v7036
    %v7469 = vpack.c.b16 %v7053, %v7037
    %v7470 = vpack.c.b16 %v7054, %v7038
    %v7471 = vpack.c.b16 %v7055, %v7039
    %v7472 = vpack.c.b16 %v7056, %v7040
    %v7473 = vpack.c.b16 %v7057, %v7041
    %v7474 = vpack.c.b16 %v7058, %v7042
    %v7475 = vpack.c.b16 %v7059, %v7043
    %v7476 = vpack.c.b16 %v7060, %v7044
    %v7477 = vpack.c.b16 %v7061, %v7045
    %v7478 = vpack.c.b16 %v7062, %v7046
    %v7479 = vpack.c.b16 %v7063, %v7047
    %v7480 = vpack.c.b16 %v7064, %v7048
    %v7481 = vpack.c.b16 %v7065, %v7049
    %v7482 = vpack.c.b16 %v7066, %v7050
    %v7483 = vpack.c.b16 %v7083, %v7067
    %v7484 = vpack.c.b16 %v7084, %v7068
    %v7485 = vpack.c.b16 %v7085, %v7069
    %v7486 = vpack.c.b16 %v7086, %v7070
    %v7487 = vpack.c.b16 %v7087, %v7071
    %v7488 = vpack.c.b16 %v7088, %v7072
    %v7489 = vpack.c.b16 %v7089, %v7073
    %v7490 = vpack.c.b16 %v7090, %v7074
    %v7491 = vpack.c.b16 %v7091, %v7075
    %v7492 = vpack.c.b16 %v7092, %v7076
    %v7493 = vpack.c.b16 %v7093, %v7077
    %v7494 = vpack.c.b16 %v7094, %v7078
    %v7495 = vpack.c.b16 %v7095, %v7079
    %v7496 = vpack.c.b16 %v7096, %v7080
    %v7497 = vpack.c.b16 %v7097, %v7081
    %v7498 = vpack.c.b16 %v7098, %v7082
    %v7499 = vpack.c.b16 %v7115, %v7099
    %v7500 = vpack.c.b16 %v7116, %v7100
    %v7501 = vpack.c.b16 %v7117, %v7101
    %v7502 = vpack.c.b16 %v7118, %v7102
    %v7503 = vpack.c.b16 %v7119, %v7103
    %v7504 = vpack.c.b16 %v7120, %v7104
    %v7505 = vpack.c.b16 %v7121, %v7105
    %v7506 = vpack.c.b16 %v7122, %v7106
    %v7507 = vpack.c.b16 %v7123, %v7107
    %v7508 = vpack.c.b16 %v7124, %v7108
    %v7509 = vpack.c.b16 %v7125, %v7109
    %v7510 = vpack.c.b16 %v7126, %v7110
    %v7511 = vpack.c.b16 %v7127, %v7111
    %v7512 = vpack.c.b16 %v7128, %v7112
    %v7513 = vpack.c.b16 %v7129, %v7113
    %v7514 = vpack.c.b16 %v7130, %v7114
    %v7515 = vpack.c.b16 %v7147, %v7131
    %v7516 = vpack.c.b16 %v7148, %v7132
    %v7517 = vpack.c.b16 %v7149, %v7133
    %v7518 = vpack.c.b16 %v7150, %v7134
    %v7519 = vpack.c.b16 %v7151, %v7135
    %v7520 = vpack.c.b16 %v7152, %v7136
    %v7521 = vpack.c.b16 %v7153, %v7137
    %v7522 = vpack.c.b16 %v7154, %v7138
    %v7523 = vpack.c.b16 %v7155, %v7139
    %v7524 = vpack.c.b16 %v7156, %v7140
    %v7525 = vpack.c.b16 %v7157, %v7141
    %v7526 = vpack.c.b16 %v7158, %v7142
    %v7527 = vpack.c.b16 %v7159, %v7143
    %v7528 = vpack.c.b16 %v7160, %v7144
    %v7529 = vpack.c.b16 %v7161, %v7145
    %v7530 = vpack.c.b16 %v7162, %v7146
    %v7531 = vpack.c.b16 %v7179, %v7163
    %v7532 = vpack.c.b16 %v7180, %v7164
    %v7533 = vpack.c.b16 %v7181, %v7165
    %v7534 = vpack.c.b16 %v7182, %v7166
    %v7535 = vpack.c.b16 %v7183, %v7167
    %v7536 = vpack.c.b16 %v7184, %v7168
    %v7537 = vpack.c.b16 %v7185, %v7169
    %v7538 = vpack.c.b16 %v7186, %v7170
    %v7539 = vpack.c.b16 %v7187, %v7171
    %v7540 = vpack.c.b16 %v7188, %v7172
    %v7541 = vpack.c.b16 %v7189, %v7173
    %v7542 = vpack.c.b16 %v7190, %v7174
    %v7543 = vpack.c.b16 %v7191, %v7175
    %v7544 = vpack.c.b16 %v7192, %v7176
    %v7545 = vpack.c.b16 %v7193, %v7177
    %v7546 = vpack.c.b16 %v7194, %v7178
    %v7547 = vpack.c.b16 %v7211, %v7195
    %v7548 = vpack.c.b16 %v7212, %v7196
    %v7549 = vpack.c.b16 %v7213, %v7197
    %v7550 = vpack.c.b16 %v7214, %v7198
    %v7551 = vpack.c.b16 %v7215, %v7199
    %v7552 = vpack.c.b16 %v7216, %v7200
    %v7553 = vpack.c.b16 %v7217, %v7201
    %v7554 = vpack.c.b16 %v7218, %v7202
    %v7555 = vpack.c.b16 %v7219, %v7203
    %v7556 = vpack.c.b16 %v7220, %v7204
    %v7557 = vpack.c.b16 %v7221, %v7205
    %v7558 = vpack.c.b16 %v7222, %v7206
    %v7559 = vpack.c.b16 %v7223, %v7207
    %v7560 = vpack.c.b16 %v7224, %v7208
    %v7561 = vpack.c.b16 %v7225, %v7209
    %v7562 = vpack.c.b16 %v7226, %v7210
    %v7563 = vpack.c.b16 %v7243, %v7227
    %v7564 = vpack.c.b16 %v7244, %v7228
    %v7565 = vpack.c.b16 %v7245, %v7229
    %v7566 = vpack.c.b16 %v7246, %v7230
    %v7567 = vpack.c.b16 %v7247, %v7231
    %v7568 = vpack.c.b16 %v7248, %v7232
    %v7569 = vpack.c.b16 %v7249, %v7233
    %v7570 = vpack.c.b16 %v7250, %v7234
    %v7571 = vpack.c.b16 %v7251, %v7235
    %v7572 = vpack.c.b16 %v7252, %v7236
    %v7573 = vpack.c.b16 %v7253, %v7237
    %v7574 = vpack.c.b16 %v7254, %v7238
    %v7575 = vpack.c.b16 %v7255, %v7239
    %v7576 = vpack.c.b16 %v7256, %v7240
    %v7577 = vpack.c.b16 %v7257, %v7241
    %v7578 = vpack.c.b16 %v7258, %v7242
    %v7579 = vpack.c.b16 %v7275, %v7259
    %v7580 = vpack.c.b16 %v7276, %v7260
    %v7581 = vpack.c.b16 %v7277, %v7261
    %v7582 = vpack.c.b16 %v7278, %v7262
    %v7583 = vpack.c.b16 %v7279, %v7263
    %v7584 = vpack.c.b16 %v7280, %v7264
    %v7585 = vpack.c.b16 %v7281, %v7265
    %v7586 = vpack.c.b16 %v7282, %v7266
    %v7587 = vpack.c.b16 %v7283, %v7267
    %v7588 = vpack.c.b16 %v7284, %v7268
    %v7589 = vpack.c.b16 %v7285, %v7269
    %v7590 = vpack.c.b16 %v7286, %v7270
    %v7591 = vpack.c.b16 %v7287, %v7271
    %v7592 = vpack.c.b16 %v7288, %v7272
    %v7593 = vpack.c.b16 %v7289, %v7273
    %v7594 = vpack.c.b16 %v7290, %v7274
    %v7595 = vpack.c.b16 %v7307, %v7291
    %v7596 = vpack.c.b16 %v7308, %v7292
    %v7597 = vpack.c.b16 %v7309, %v7293
    %v7598 = vpack.c.b16 %v7310, %v7294
    %v7599 = vpack.c.b16 %v7311, %v7295
    %v7600 = vpack.c.b16 %v7312, %v7296
    %v7601 = vpack.c.b16 %v7313, %v7297
    %v7602 = vpack.c.b16 %v7314, %v7298
    %v7603 = vpack.c.b16 %v7315, %v7299
    %v7604 = vpack.c.b16 %v7316, %v7300
    %v7605 = vpack.c.b16 %v7317, %v7301
    %v7606 = vpack.c.b16 %v7318, %v7302
    %v7607 = vpack.c.b16 %v7319, %v7303
    %v7608 = vpack.c.b16 %v7320, %v7304
    %v7609 = vpack.c.b16 %v7321, %v7305
    %v7610 = vpack.c.b16 %v7322, %v7306
    %v7611 = vpack.c.b16 %v7339, %v7323
    %v7612 = vpack.c.b16 %v7340, %v7324
    %v7613 = vpack.c.b16 %v7341, %v7325
    %v7614 = vpack.c.b16 %v7342, %v7326
    %v7615 = vpack.c.b16 %v7343, %v7327
    %v7616 = vpack.c.b16 %v7344, %v7328
    %v7617 = vpack.c.b16 %v7345, %v7329
    %v7618 = vpack.c.b16 %v7346, %v7330
    %v7619 = vpack.c.b16 %v7347, %v7331
    %v7620 = vpack.c.b16 %v7348, %v7332
    %v7621 = vpack.c.b16 %v7349, %v7333
    %v7622 = vpack.c.b16 %v7350, %v7334
    %v7623 = vpack.c.b16 %v7351, %v7335
    %v7624 = vpack.c.b16 %v7352, %v7336
    %v7625 = vpack.c.b16 %v7353, %v7337
    %v7626 = vpack.c.b16 %v7354, %v7338
    %v7627 = vpack.c.b16 %v7371, %v7355
    %v7628 = vpack.c.b16 %v7372, %v7356
    %v7629 = vpack.c.b16 %v7373, %v7357
    %v7630 = vpack.c.b16 %v7374, %v7358
    %v7631 = vpack.c.b16 %v7375, %v7359
    %v7632 = vpack.c.b16 %v7376, %v7360
    %v7633 = vpack.c.b16 %v7377, %v7361
    %v7634 = vpack.c.b16 %v7378, %v7362
    %v7635 = vpack.c.b16 %v7379, %v7363
    %v7636 = vpack.c.b16 %v7380, %v7364
    %v7637 = vpack.c.b16 %v7381, %v7365
    %v7638 = vpack.c.b16 %v7382, %v7366
    %v7639 = vpack.c.b16 %v7383, %v7367
    %v7640 = vpack.c.b16 %v7384, %v7368
    %v7641 = vpack.c.b16 %v7385, %v7369
    %v7642 = vpack.c.b16 %v7386, %v7370
    %7899 = vmatprep.subr.bf16.mxu0 0
    %7900 = vmatpush1.bf16.msra.mxu0 %v6331
    %7901 = vmatprep.subr.bf16.mxu0 0
    %7902 = vmatpush1.bf16.msra.mxu0 %v6332
    %7903 = vmatprep.subr.bf16.mxu0 0
    %7904 = vmatpush1.bf16.msra.mxu0 %v6333
    %7905 = vmatprep.subr.bf16.mxu0 0
    %7906 = vmatpush1.bf16.msra.mxu0 %v6334
    %7907 = vmatprep.subr.bf16.mxu0 0
    %7908 = vmatpush1.bf16.msra.mxu0 %v6335
    %7909 = vmatprep.subr.bf16.mxu0 0
    %7910 = vmatpush1.bf16.msra.mxu0 %v6336
    %7911 = vmatprep.subr.bf16.mxu0 0
    %7912 = vmatpush1.bf16.msra.mxu0 %v6337
    %7913 = vmatprep.subr.bf16.mxu0 0
    %7914 = vmatpush1.bf16.msra.mxu0 %v6338
    %7915 = vmatprep.subr.bf16.mxu0 0
    %7916 = vmatpush1.bf16.msra.mxu0 %v6339
    %7917 = vmatprep.subr.bf16.mxu0 0
    %7918 = vmatpush1.bf16.msra.mxu0 %v6340
    %7919 = vmatprep.subr.bf16.mxu0 0
    %7920 = vmatpush1.bf16.msra.mxu0 %v6341
    %7921 = vmatprep.subr.bf16.mxu0 0
    %7922 = vmatpush1.bf16.msra.mxu0 %v6342
    %7923 = vmatprep.subr.bf16.mxu0 0
    %7924 = vmatpush1.bf16.msra.mxu0 %v6343
    %7925 = vmatprep.subr.bf16.mxu0 0
    %7926 = vmatpush1.bf16.msra.mxu0 %v6344
    %7927 = vmatprep.subr.bf16.mxu0 0
    %7928 = vmatpush1.bf16.msra.mxu0 %v6345
    %7929 = vmatprep.subr.bf16.mxu0 0
    %7930 = vmatpush1.bf16.msra.mxu0 %v6346
    %7931 = vmatprep.mubr.bf16.mxu0 %v7388
    %7932 = vmatmul.mubr.bf16.gmra.mrb[0].mxu0 %v7387
    %v7933 = vpop.f32.mrb[0].mxu0
    %v7934 = vadd.f32 %v6462, %v7933
    %v7935 = vpop.f32.mrb[0].mxu0
    %v7936 = vpop.f32.mrb[0].mxu0
    %v7937 = vadd.f32 %v6467, %v7936
    %v7938 = vpop.f32.mrb[0].mxu0
    %7939 = vmatprep.mubr.bf16.mxu0 %v7404
    %7940 = vmatmul.mubr.bf16.gmra.mrb[0].mxu0 %v7403
    %v7941 = vpop.f32.mrb[0].mxu0
    %v7942 = vadd.f32 %v6472, %v7941
    %v7943 = vpop.f32.mrb[0].mxu0
    %v7944 = vpop.f32.mrb[0].mxu0
    %v7945 = vadd.f32 %v6477, %v7944
    %v7946 = vpop.f32.mrb[0].mxu0
    %7947 = vmatprep.mubr.bf16.mxu0 %v7420
    %7948 = vmatmul.mubr.bf16.gmra.mrb[0].mxu0 %v7419
    %v7949 = vpop.f32.mrb[0].mxu0
    %v7950 = vadd.f32 %v6482, %v7949
    %v7951 = vpop.f32.mrb[0].mxu0
    %v7952 = vpop.f32.mrb[0].mxu0
    %v7953 = vadd.f32 %v6487, %v7952
    %v7954 = vpop.f32.mrb[0].mxu0
    %7955 = vmatprep.mubr.bf16.mxu0 %v7436
    %7956 = vmatmul.mubr.bf16.gmra.mrb[0].mxu0 %v7435
    %v7957 = vpop.f32.mrb[0].mxu0
    %v7958 = vadd.f32 %v6492, %v7957
    %v7959 = vpop.f32.mrb[0].mxu0
    %v7960 = vpop.f32.mrb[0].mxu0
    %v7961 = vadd.f32 %v6497, %v7960
    %v7962 = vpop.f32.mrb[0].mxu0
    %7963 = vmatprep.mubr.bf16.mxu0 %v7452
    %7964 = vmatmul.mubr.bf16.gmra.mrb[0].mxu0 %v7451
    %v7965 = vpop.f32.mrb[0].mxu0
    %v7966 = vadd.f32 %v6502, %v7965
    %v7967 = vpop.f32.mrb[0].mxu0
    %v7968 = vpop.f32.mrb[0].mxu0
    %v7969 = vadd.f32 %v6507, %v7968
    %v7970 = vpop.f32.mrb[0].mxu0
    %7971 = vmatprep.mubr.bf16.mxu0 %v7468
    %7972 = vmatmul.mubr.bf16.gmra.mrb[0].mxu0 %v7467
    %v7973 = vpop.f32.mrb[0].mxu0
    %v7974 = vadd.f32 %v6512, %v7973
    %v7975 = vpop.f32.mrb[0].mxu0
    %v7976 = vpop.f32.mrb[0].mxu0
    %v7977 = vadd.f32 %v6517, %v7976
    %v7978 = vpop.f32.mrb[0].mxu0
    %7979 = vmatprep.mubr.bf16.mxu0 %v7484
    %7980 = vmatmul.mubr.bf16.gmra.mrb[0].mxu0 %v7483
    %v7981 = vpop.f32.mrb[0].mxu0
    %v7982 = vadd.f32 %v6522, %v7981
    %v7983 = vpop.f32.mrb[0].mxu0
    %v7984 = vpop.f32.mrb[0].mxu0
    %v7985 = vadd.f32 %v6527, %v7984
    %v7986 = vpop.f32.mrb[0].mxu0
    %7987 = vmatprep.mubr.bf16.mxu0 %v7500
    %7988 = vmatmul.mubr.bf16.gmra.mrb[0].mxu0 %v7499
    %v7989 = vpop.f32.mrb[0].mxu0
    %v7990 = vadd.f32 %v6532, %v7989
    %v7991 = vpop.f32.mrb[0].mxu0
    %v7992 = vpop.f32.mrb[0].mxu0
    %v7993 = vadd.f32 %v6537, %v7992
    %v7994 = vpop.f32.mrb[0].mxu0
    %7995 = vmatprep.mubr.bf16.mxu0 %v7516
    %7996 = vmatmul.mubr.bf16.gmra.mrb[0].mxu0 %v7515
    %v7997 = vpop.f32.mrb[0].mxu0
    %v7998 = vadd.f32 %v6542, %v7997
    %v7999 = vpop.f32.mrb[0].mxu0
    %v8000 = vpop.f32.mrb[0].mxu0
    %v8001 = vadd.f32 %v6547, %v8000
    %v8002 = vpop.f32.mrb[0].mxu0
    %8003 = vmatprep.mubr.bf16.mxu0 %v7532
    %8004 = vmatmul.mubr.bf16.gmra.mrb[0].mxu0 %v7531
    %v8005 = vpop.f32.mrb[0].mxu0
    %v8006 = vadd.f32 %v6552, %v8005
    %v8007 = vpop.f32.mrb[0].mxu0
    %v8008 = vpop.f32.mrb[0].mxu0
    %v8009 = vadd.f32 %v6557, %v8008
    %v8010 = vpop.f32.mrb[0].mxu0
    %8011 = vmatprep.mubr.bf16.mxu0 %v7548
    %8012 = vmatmul.mubr.bf16.gmra.mrb[0].mxu0 %v7547
    %v8013 = vpop.f32.mrb[0].mxu0
    %v8014 = vadd.f32 %v6562, %v8013
    %v8015 = vpop.f32.mrb[0].mxu0
    %v8016 = vpop.f32.mrb[0].mxu0
    %v8017 = vadd.f32 %v6567, %v8016
    %v8018 = vpop.f32.mrb[0].mxu0
    %8019 = vmatprep.mubr.bf16.mxu0 %v7564
    %8020 = vmatmul.mubr.bf16.gmra.mrb[0].mxu0 %v7563
    %v8021 = vpop.f32.mrb[0].mxu0
    %v8022 = vadd.f32 %v6572, %v8021
    %v8023 = vpop.f32.mrb[0].mxu0
    %v8024 = vpop.f32.mrb[0].mxu0
    %v8025 = vadd.f32 %v6577, %v8024
    %v8026 = vpop.f32.mrb[0].mxu0
    %8027 = vmatprep.mubr.bf16.mxu0 %v7580
    %8028 = vmatmul.mubr.bf16.gmra.mrb[0].mxu0 %v7579
    %v8029 = vpop.f32.mrb[0].mxu0
    %v8030 = vadd.f32 %v6582, %v8029
    %v8031 = vpop.f32.mrb[0].mxu0
    %v8032 = vpop.f32.mrb[0].mxu0
    %v8033 = vadd.f32 %v6587, %v8032
    %v8034 = vpop.f32.mrb[0].mxu0
    %8035 = vmatprep.mubr.bf16.mxu0 %v7596
    %8036 = vmatmul.mubr.bf16.gmra.mrb[0].mxu0 %v7595
    %v8037 = vpop.f32.mrb[0].mxu0
    %v8038 = vadd.f32 %v6592, %v8037
    %v8039 = vpop.f32.mrb[0].mxu0
    %v8040 = vpop.f32.mrb[0].mxu0
    %v8041 = vadd.f32 %v6597, %v8040
    %v8042 = vpop.f32.mrb[0].mxu0
    %8043 = vmatprep.mubr.bf16.mxu0 %v7612
    %8044 = vmatmul.mubr.bf16.gmra.mrb[0].mxu0 %v7611
    %v8045 = vpop.f32.mrb[0].mxu0
    %v8046 = vadd.f32 %v6602, %v8045
    %v8047 = vpop.f32.mrb[0].mxu0
    %v8048 = vpop.f32.mrb[0].mxu0
    %v8049 = vadd.f32 %v6607, %v8048
    %v8050 = vpop.f32.mrb[0].mxu0
    %8051 = vmatprep.mubr.bf16.mxu0 %v7628
    %8052 = vmatmul.mubr.bf16.gmra.mrb[0].mxu0 %v7627
    %v8053 = vpop.f32.mrb[0].mxu0
    %v8054 = vadd.f32 %v6612, %v8053
    %v8055 = vpop.f32.mrb[0].mxu0
    %v8056 = vpop.f32.mrb[0].mxu0
    %v8057 = vadd.f32 %v6617, %v8056
    %v8058 = vpop.f32.mrb[0].mxu0
    %8059 = vdwg.mxu0
    %8060 = vmatprep.subr.bf16.mxu0 0
    %8061 = vmatpush1.bf16.msra.mxu0 %v6347
    %8062 = vmatprep.subr.bf16.mxu0 0
    %8063 = vmatpush1.bf16.msra.mxu0 %v6348
    %8064 = vmatprep.subr.bf16.mxu0 0
    %8065 = vmatpush1.bf16.msra.mxu0 %v6349
    %8066 = vmatprep.subr.bf16.mxu0 0
    %8067 = vmatpush1.bf16.msra.mxu0 %v6350
    %8068 = vmatprep.subr.bf16.mxu0 0
    %8069 = vmatpush1.bf16.msra.mxu0 %v6351
    %8070 = vmatprep.subr.bf16.mxu0 0
    %8071 = vmatpush1.bf16.msra.mxu0 %v6352
    %8072 = vmatprep.subr.bf16.mxu0 0
    %8073 = vmatpush1.bf16.msra.mxu0 %v6353
    %8074 = vmatprep.subr.bf16.mxu0 0
    %8075 = vmatpush1.bf16.msra.mxu0 %v6354
    %8076 = vmatprep.subr.bf16.mxu0 0
    %8077 = vmatpush1.bf16.msra.mxu0 %v6355
    %8078 = vmatprep.subr.bf16.mxu0 0
    %8079 = vmatpush1.bf16.msra.mxu0 %v6356
    %8080 = vmatprep.subr.bf16.mxu0 0
    %8081 = vmatpush1.bf16.msra.mxu0 %v6357
    %8082 = vmatprep.subr.bf16.mxu0 0
    %8083 = vmatpush1.bf16.msra.mxu0 %v6358
    %8084 = vmatprep.subr.bf16.mxu0 0
    %8085 = vmatpush1.bf16.msra.mxu0 %v6359
    %8086 = vmatprep.subr.bf16.mxu0 0
    %8087 = vmatpush1.bf16.msra.mxu0 %v6360
    %8088 = vmatprep.subr.bf16.mxu0 0
    %8089 = vmatpush1.bf16.msra.mxu0 %v6361
    %8090 = vmatprep.subr.bf16.mxu0 0
    %8091 = vmatpush1.bf16.msra.mxu0 %v6362
    %8092 = vmatprep.mubr.bf16.mxu0 %v7390
    %8093 = vmatmul.mubr.bf16.gmra.mrb[0].mxu0 %v7389
    %v8094 = vpop.f32.mrb[0].mxu0
    %v8095 = vadd.f32 %v7934, %v8094
    %v8096 = vpop.f32.mrb[0].mxu0
    %v8097 = vpop.f32.mrb[0].mxu0
    %v8098 = vadd.f32 %v7937, %v8097
    %v8099 = vpop.f32.mrb[0].mxu0
    %8100 = vmatprep.mubr.bf16.mxu0 %v7406
    %8101 = vmatmul.mubr.bf16.gmra.mrb[0].mxu0 %v7405
    %v8102 = vpop.f32.mrb[0].mxu0
    %v8103 = vadd.f32 %v7942, %v8102
    %v8104 = vpop.f32.mrb[0].mxu0
    %v8105 = vpop.f32.mrb[0].mxu0
    %v8106 = vadd.f32 %v7945, %v8105
    %v8107 = vpop.f32.mrb[0].mxu0
    %8108 = vmatprep.mubr.bf16.mxu0 %v7422
    %8109 = vmatmul.mubr.bf16.gmra.mrb[0].mxu0 %v7421
    %v8110 = vpop.f32.mrb[0].mxu0
    %v8111 = vadd.f32 %v7950, %v8110
    %v8112 = vpop.f32.mrb[0].mxu0
    %v8113 = vpop.f32.mrb[0].mxu0
    %v8114 = vadd.f32 %v7953, %v8113
    %v8115 = vpop.f32.mrb[0].mxu0
    %8116 = vmatprep.mubr.bf16.mxu0 %v7438
    %8117 = vmatmul.mubr.bf16.gmra.mrb[0].mxu0 %v7437
    %v8118 = vpop.f32.mrb[0].mxu0
    %v8119 = vadd.f32 %v7958, %v8118
    %v8120 = vpop.f32.mrb[0].mxu0
    %v8121 = vpop.f32.mrb[0].mxu0
    %v8122 = vadd.f32 %v7961, %v8121
    %v8123 = vpop.f32.mrb[0].mxu0
    %8124 = vmatprep.mubr.bf16.mxu0 %v7454
    %8125 = vmatmul.mubr.bf16.gmra.mrb[0].mxu0 %v7453
    %v8126 = vpop.f32.mrb[0].mxu0
    %v8127 = vadd.f32 %v7966, %v8126
    %v8128 = vpop.f32.mrb[0].mxu0
    %v8129 = vpop.f32.mrb[0].mxu0
    %v8130 = vadd.f32 %v7969, %v8129
    %v8131 = vpop.f32.mrb[0].mxu0
    %8132 = vmatprep.mubr.bf16.mxu0 %v7470
    %8133 = vmatmul.mubr.bf16.gmra.mrb[0].mxu0 %v7469
    %v8134 = vpop.f32.mrb[0].mxu0
    %v8135 = vadd.f32 %v7974, %v8134
    %v8136 = vpop.f32.mrb[0].mxu0
    %v8137 = vpop.f32.mrb[0].mxu0
    %v8138 = vadd.f32 %v7977, %v8137
    %v8139 = vpop.f32.mrb[0].mxu0
    %8140 = vmatprep.mubr.bf16.mxu0 %v7486
    %8141 = vmatmul.mubr.bf16.gmra.mrb[0].mxu0 %v7485
    %v8142 = vpop.f32.mrb[0].mxu0
    %v8143 = vadd.f32 %v7982, %v8142
    %v8144 = vpop.f32.mrb[0].mxu0
    %v8145 = vpop.f32.mrb[0].mxu0
    %v8146 = vadd.f32 %v7985, %v8145
    %v8147 = vpop.f32.mrb[0].mxu0
    %8148 = vmatprep.mubr.bf16.mxu0 %v7502
    %8149 = vmatmul.mubr.bf16.gmra.mrb[0].mxu0 %v7501
    %v8150 = vpop.f32.mrb[0].mxu0
    %v8151 = vadd.f32 %v7990, %v8150
    %v8152 = vpop.f32.mrb[0].mxu0
    %v8153 = vpop.f32.mrb[0].mxu0
    %v8154 = vadd.f32 %v7993, %v8153
    %v8155 = vpop.f32.mrb[0].mxu0
    %8156 = vmatprep.mubr.bf16.mxu0 %v7518
    %8157 = vmatmul.mubr.bf16.gmra.mrb[0].mxu0 %v7517
    %v8158 = vpop.f32.mrb[0].mxu0
    %v8159 = vadd.f32 %v7998, %v8158
    %v8160 = vpop.f32.mrb[0].mxu0
    %v8161 = vpop.f32.mrb[0].mxu0
    %v8162 = vadd.f32 %v8001, %v8161
    %v8163 = vpop.f32.mrb[0].mxu0
    %8164 = vmatprep.mubr.bf16.mxu0 %v7534
    %8165 = vmatmul.mubr.bf16.gmra.mrb[0].mxu0 %v7533
    %v8166 = vpop.f32.mrb[0].mxu0
    %v8167 = vadd.f32 %v8006, %v8166
    %v8168 = vpop.f32.mrb[0].mxu0
    %v8169 = vpop.f32.mrb[0].mxu0
    %v8170 = vadd.f32 %v8009, %v8169
    %v8171 = vpop.f32.mrb[0].mxu0
    %8172 = vmatprep.mubr.bf16.mxu0 %v7550
    %8173 = vmatmul.mubr.bf16.gmra.mrb[0].mxu0 %v7549
    %v8174 = vpop.f32.mrb[0].mxu0
    %v8175 = vadd.f32 %v8014, %v8174
    %v8176 = vpop.f32.mrb[0].mxu0
    %v8177 = vpop.f32.mrb[0].mxu0
    %v8178 = vadd.f32 %v8017, %v8177
    %v8179 = vpop.f32.mrb[0].mxu0
    %8180 = vmatprep.mubr.bf16.mxu0 %v7566
    %8181 = vmatmul.mubr.bf16.gmra.mrb[0].mxu0 %v7565
    %v8182 = vpop.f32.mrb[0].mxu0
    %v8183 = vadd.f32 %v8022, %v8182
    %v8184 = vpop.f32.mrb[0].mxu0
    %v8185 = vpop.f32.mrb[0].mxu0
    %v8186 = vadd.f32 %v8025, %v8185
    %v8187 = vpop.f32.mrb[0].mxu0
    %8188 = vmatprep.mubr.bf16.mxu0 %v7582
    %8189 = vmatmul.mubr.bf16.gmra.mrb[0].mxu0 %v7581
    %v8190 = vpop.f32.mrb[0].mxu0
    %v8191 = vadd.f32 %v8030, %v8190
    %v8192 = vpop.f32.mrb[0].mxu0
    %v8193 = vpop.f32.mrb[0].mxu0
    %v8194 = vadd.f32 %v8033, %v8193
    %v8195 = vpop.f32.mrb[0].mxu0
    %8196 = vmatprep.mubr.bf16.mxu0 %v7598
    %8197 = vmatmul.mubr.bf16.gmra.mrb[0].mxu0 %v7597
    %v8198 = vpop.f32.mrb[0].mxu0
    %v8199 = vadd.f32 %v8038, %v8198
    %v8200 = vpop.f32.mrb[0].mxu0
    %v8201 = vpop.f32.mrb[0].mxu0
    %v8202 = vadd.f32 %v8041, %v8201
    %v8203 = vpop.f32.mrb[0].mxu0
    %8204 = vmatprep.mubr.bf16.mxu0 %v7614
    %8205 = vmatmul.mubr.bf16.gmra.mrb[0].mxu0 %v7613
    %v8206 = vpop.f32.mrb[0].mxu0
    %v8207 = vadd.f32 %v8046, %v8206
    %v8208 = vpop.f32.mrb[0].mxu0
    %v8209 = vpop.f32.mrb[0].mxu0
    %v8210 = vadd.f32 %v8049, %v8209
    %v8211 = vpop.f32.mrb[0].mxu0
    %8212 = vmatprep.mubr.bf16.mxu0 %v7630
    %8213 = vmatmul.mubr.bf16.gmra.mrb[0].mxu0 %v7629
    %v8214 = vpop.f32.mrb[0].mxu0
    %v8215 = vadd.f32 %v8054, %v8214
    %v8216 = vpop.f32.mrb[0].mxu0
    %v8217 = vpop.f32.mrb[0].mxu0
    %v8218 = vadd.f32 %v8057, %v8217
    %v8219 = vpop.f32.mrb[0].mxu0
    %8220 = vdwg.mxu0
    %8221 = vmatprep.subr.bf16.mxu0 0
    %8222 = vmatpush1.bf16.msra.mxu0 %v6363
    %8223 = vmatprep.subr.bf16.mxu0 0
    %8224 = vmatpush1.bf16.msra.mxu0 %v6364
    %8225 = vmatprep.subr.bf16.mxu0 0
    %8226 = vmatpush1.bf16.msra.mxu0 %v6365
    %8227 = vmatprep.subr.bf16.mxu0 0
    %8228 = vmatpush1.bf16.msra.mxu0 %v6366
    %8229 = vmatprep.subr.bf16.mxu0 0
    %8230 = vmatpush1.bf16.msra.mxu0 %v6367
    %8231 = vmatprep.subr.bf16.mxu0 0
    %8232 = vmatpush1.bf16.msra.mxu0 %v6368
    %8233 = vmatprep.subr.bf16.mxu0 0
    %8234 = vmatpush1.bf16.msra.mxu0 %v6369
    %8235 = vmatprep.subr.bf16.mxu0 0
    %8236 = vmatpush1.bf16.msra.mxu0 %v6370
    %8237 = vmatprep.subr.bf16.mxu0 0
    %8238 = vmatpush1.bf16.msra.mxu0 %v6371
    %8239 = vmatprep.subr.bf16.mxu0 0
    %8240 = vmatpush1.bf16.msra.mxu0 %v6372
    %8241 = vmatprep.subr.bf16.mxu0 0
    %8242 = vmatpush1.bf16.msra.mxu0 %v6373
    %8243 = vmatprep.subr.bf16.mxu0 0
    %8244 = vmatpush1.bf16.msra.mxu0 %v6374
    %8245 = vmatprep.subr.bf16.mxu0 0
    %8246 = vmatpush1.bf16.msra.mxu0 %v6375
    %8247 = vmatprep.subr.bf16.mxu0 0
    %8248 = vmatpush1.bf16.msra.mxu0 %v6376
    %8249 = vmatprep.subr.bf16.mxu0 0
    %8250 = vmatpush1.bf16.msra.mxu0 %v6377
    %8251 = vmatprep.subr.bf16.mxu0 0
    %8252 = vmatpush1.bf16.msra.mxu0 %v6378
    %8253 = vmatprep.mubr.bf16.mxu0 %v7392
    %8254 = vmatmul.mubr.bf16.gmra.mrb[0].mxu0 %v7391
    %v8255 = vpop.f32.mrb[0].mxu0
    %v8256 = vadd.f32 %v8095, %v8255
    %v8257 = vpop.f32.mrb[0].mxu0
    %v8258 = vpop.f32.mrb[0].mxu0
    %v8259 = vadd.f32 %v8098, %v8258
    %v8260 = vpop.f32.mrb[0].mxu0
    %8261 = vmatprep.mubr.bf16.mxu0 %v7408
    %8262 = vmatmul.mubr.bf16.gmra.mrb[0].mxu0 %v7407
    %v8263 = vpop.f32.mrb[0].mxu0
    %v8264 = vadd.f32 %v8103, %v8263
    %v8265 = vpop.f32.mrb[0].mxu0
    %v8266 = vpop.f32.mrb[0].mxu0
    %v8267 = vadd.f32 %v8106, %v8266
    %v8268 = vpop.f32.mrb[0].mxu0
    %8269 = vmatprep.mubr.bf16.mxu0 %v7424
    %8270 = vmatmul.mubr.bf16.gmra.mrb[0].mxu0 %v7423
    %v8271 = vpop.f32.mrb[0].mxu0
    %v8272 = vadd.f32 %v8111, %v8271
    %v8273 = vpop.f32.mrb[0].mxu0
    %v8274 = vpop.f32.mrb[0].mxu0
    %v8275 = vadd.f32 %v8114, %v8274
    %v8276 = vpop.f32.mrb[0].mxu0
    %8277 = vmatprep.mubr.bf16.mxu0 %v7440
    %8278 = vmatmul.mubr.bf16.gmra.mrb[0].mxu0 %v7439
    %v8279 = vpop.f32.mrb[0].mxu0
    %v8280 = vadd.f32 %v8119, %v8279
    %v8281 = vpop.f32.mrb[0].mxu0
    %v8282 = vpop.f32.mrb[0].mxu0
    %v8283 = vadd.f32 %v8122, %v8282
    %v8284 = vpop.f32.mrb[0].mxu0
    %8285 = vmatprep.mubr.bf16.mxu0 %v7456
    %8286 = vmatmul.mubr.bf16.gmra.mrb[0].mxu0 %v7455
    %v8287 = vpop.f32.mrb[0].mxu0
    %v8288 = vadd.f32 %v8127, %v8287
    %v8289 = vpop.f32.mrb[0].mxu0
    %v8290 = vpop.f32.mrb[0].mxu0
    %v8291 = vadd.f32 %v8130, %v8290
    %v8292 = vpop.f32.mrb[0].mxu0
    %8293 = vmatprep.mubr.bf16.mxu0 %v7472
    %8294 = vmatmul.mubr.bf16.gmra.mrb[0].mxu0 %v7471
    %v8295 = vpop.f32.mrb[0].mxu0
    %v8296 = vadd.f32 %v8135, %v8295
    %v8297 = vpop.f32.mrb[0].mxu0
    %v8298 = vpop.f32.mrb[0].mxu0
    %v8299 = vadd.f32 %v8138, %v8298
    %v8300 = vpop.f32.mrb[0].mxu0
    %8301 = vmatprep.mubr.bf16.mxu0 %v7488
    %8302 = vmatmul.mubr.bf16.gmra.mrb[0].mxu0 %v7487
    %v8303 = vpop.f32.mrb[0].mxu0
    %v8304 = vadd.f32 %v8143, %v8303
    %v8305 = vpop.f32.mrb[0].mxu0
    %v8306 = vpop.f32.mrb[0].mxu0
    %v8307 = vadd.f32 %v8146, %v8306
    %v8308 = vpop.f32.mrb[0].mxu0
    %8309 = vmatprep.mubr.bf16.mxu0 %v7504
    %8310 = vmatmul.mubr.bf16.gmra.mrb[0].mxu0 %v7503
    %v8311 = vpop.f32.mrb[0].mxu0
    %v8312 = vadd.f32 %v8151, %v8311
    %v8313 = vpop.f32.mrb[0].mxu0
    %v8314 = vpop.f32.mrb[0].mxu0
    %v8315 = vadd.f32 %v8154, %v8314
    %v8316 = vpop.f32.mrb[0].mxu0
    %8317 = vmatprep.mubr.bf16.mxu0 %v7520
    %8318 = vmatmul.mubr.bf16.gmra.mrb[0].mxu0 %v7519
    %v8319 = vpop.f32.mrb[0].mxu0
    %v8320 = vadd.f32 %v8159, %v8319
    %v8321 = vpop.f32.mrb[0].mxu0
    %v8322 = vpop.f32.mrb[0].mxu0
    %v8323 = vadd.f32 %v8162, %v8322
    %v8324 = vpop.f32.mrb[0].mxu0
    %8325 = vmatprep.mubr.bf16.mxu0 %v7536
    %8326 = vmatmul.mubr.bf16.gmra.mrb[0].mxu0 %v7535
    %v8327 = vpop.f32.mrb[0].mxu0
    %v8328 = vadd.f32 %v8167, %v8327
    %v8329 = vpop.f32.mrb[0].mxu0
    %v8330 = vpop.f32.mrb[0].mxu0
    %v8331 = vadd.f32 %v8170, %v8330
    %v8332 = vpop.f32.mrb[0].mxu0
    %8333 = vmatprep.mubr.bf16.mxu0 %v7552
    %8334 = vmatmul.mubr.bf16.gmra.mrb[0].mxu0 %v7551
    %v8335 = vpop.f32.mrb[0].mxu0
    %v8336 = vadd.f32 %v8175, %v8335
    %v8337 = vpop.f32.mrb[0].mxu0
    %v8338 = vpop.f32.mrb[0].mxu0
    %v8339 = vadd.f32 %v8178, %v8338
    %v8340 = vpop.f32.mrb[0].mxu0
    %8341 = vmatprep.mubr.bf16.mxu0 %v7568
    %8342 = vmatmul.mubr.bf16.gmra.mrb[0].mxu0 %v7567
    %v8343 = vpop.f32.mrb[0].mxu0
    %v8344 = vadd.f32 %v8183, %v8343
    %v8345 = vpop.f32.mrb[0].mxu0
    %v8346 = vpop.f32.mrb[0].mxu0
    %v8347 = vadd.f32 %v8186, %v8346
    %v8348 = vpop.f32.mrb[0].mxu0
    %8349 = vmatprep.mubr.bf16.mxu0 %v7584
    %8350 = vmatmul.mubr.bf16.gmra.mrb[0].mxu0 %v7583
    %v8351 = vpop.f32.mrb[0].mxu0
    %v8352 = vadd.f32 %v8191, %v8351
    %v8353 = vpop.f32.mrb[0].mxu0
    %v8354 = vpop.f32.mrb[0].mxu0
    %v8355 = vadd.f32 %v8194, %v8354
    %v8356 = vpop.f32.mrb[0].mxu0
    %8357 = vmatprep.mubr.bf16.mxu0 %v7600
    %8358 = vmatmul.mubr.bf16.gmra.mrb[0].mxu0 %v7599
    %v8359 = vpop.f32.mrb[0].mxu0
    %v8360 = vadd.f32 %v8199, %v8359
    %v8361 = vpop.f32.mrb[0].mxu0
    %v8362 = vpop.f32.mrb[0].mxu0
    %v8363 = vadd.f32 %v8202, %v8362
    %v8364 = vpop.f32.mrb[0].mxu0
    %8365 = vmatprep.mubr.bf16.mxu0 %v7616
    %8366 = vmatmul.mubr.bf16.gmra.mrb[0].mxu0 %v7615
    %v8367 = vpop.f32.mrb[0].mxu0
    %v8368 = vadd.f32 %v8207, %v8367
    %v8369 = vpop.f32.mrb[0].mxu0
    %v8370 = vpop.f32.mrb[0].mxu0
    %v8371 = vadd.f32 %v8210, %v8370
    %v8372 = vpop.f32.mrb[0].mxu0
    %8373 = vmatprep.mubr.bf16.mxu0 %v7632
    %8374 = vmatmul.mubr.bf16.gmra.mrb[0].mxu0 %v7631
    %v8375 = vpop.f32.mrb[0].mxu0
    %v8376 = vadd.f32 %v8215, %v8375
    %v8377 = vpop.f32.mrb[0].mxu0
    %v8378 = vpop.f32.mrb[0].mxu0
    %v8379 = vadd.f32 %v8218, %v8378
    %v8380 = vpop.f32.mrb[0].mxu0
    %8381 = vdwg.mxu0
    %8382 = vmatprep.subr.bf16.mxu0 0
    %8383 = vmatpush1.bf16.msra.mxu0 %v6379
    %8384 = vmatprep.subr.bf16.mxu0 0
    %8385 = vmatpush1.bf16.msra.mxu0 %v6380
    %8386 = vmatprep.subr.bf16.mxu0 0
    %8387 = vmatpush1.bf16.msra.mxu0 %v6381
    %8388 = vmatprep.subr.bf16.mxu0 0
    %8389 = vmatpush1.bf16.msra.mxu0 %v6382
    %8390 = vmatprep.subr.bf16.mxu0 0
    %8391 = vmatpush1.bf16.msra.mxu0 %v6383
    %8392 = vmatprep.subr.bf16.mxu0 0
    %8393 = vmatpush1.bf16.msra.mxu0 %v6384
    %8394 = vmatprep.subr.bf16.mxu0 0
    %8395 = vmatpush1.bf16.msra.mxu0 %v6385
    %8396 = vmatprep.subr.bf16.mxu0 0
    %8397 = vmatpush1.bf16.msra.mxu0 %v6386
    %8398 = vmatprep.subr.bf16.mxu0 0
    %8399 = vmatpush1.bf16.msra.mxu0 %v6387
    %8400 = vmatprep.subr.bf16.mxu0 0
    %8401 = vmatpush1.bf16.msra.mxu0 %v6388
    %8402 = vmatprep.subr.bf16.mxu0 0
    %8403 = vmatpush1.bf16.msra.mxu0 %v6389
    %8404 = vmatprep.subr.bf16.mxu0 0
    %8405 = vmatpush1.bf16.msra.mxu0 %v6390
    %8406 = vmatprep.subr.bf16.mxu0 0
    %8407 = vmatpush1.bf16.msra.mxu0 %v6391
    %8408 = vmatprep.subr.bf16.mxu0 0
    %8409 = vmatpush1.bf16.msra.mxu0 %v6392
    %8410 = vmatprep.subr.bf16.mxu0 0
    %8411 = vmatpush1.bf16.msra.mxu0 %v6393
    %8412 = vmatprep.subr.bf16.mxu0 0
    %8413 = vmatpush1.bf16.msra.mxu0 %v6394
    %8414 = vmatprep.mubr.bf16.mxu0 %v7394
    %8415 = vmatmul.mubr.bf16.gmra.mrb[0].mxu0 %v7393
    %v8416 = vpop.f32.mrb[0].mxu0
    %v8417 = vadd.f32 %v8256, %v8416
    %v8418 = vpop.f32.mrb[0].mxu0
    %v8419 = vpop.f32.mrb[0].mxu0
    %v8420 = vadd.f32 %v8259, %v8419
    %v8421 = vpop.f32.mrb[0].mxu0
    %8422 = vmatprep.mubr.bf16.mxu0 %v7410
    %8423 = vmatmul.mubr.bf16.gmra.mrb[0].mxu0 %v7409
    %v8424 = vpop.f32.mrb[0].mxu0
    %v8425 = vadd.f32 %v8264, %v8424
    %v8426 = vpop.f32.mrb[0].mxu0
    %v8427 = vpop.f32.mrb[0].mxu0
    %v8428 = vadd.f32 %v8267, %v8427
    %v8429 = vpop.f32.mrb[0].mxu0
    %8430 = vmatprep.mubr.bf16.mxu0 %v7426
    %8431 = vmatmul.mubr.bf16.gmra.mrb[0].mxu0 %v7425
    %v8432 = vpop.f32.mrb[0].mxu0
    %v8433 = vadd.f32 %v8272, %v8432
    %v8434 = vpop.f32.mrb[0].mxu0
    %v8435 = vpop.f32.mrb[0].mxu0
    %v8436 = vadd.f32 %v8275, %v8435
    %v8437 = vpop.f32.mrb[0].mxu0
    %8438 = vmatprep.mubr.bf16.mxu0 %v7442
    %8439 = vmatmul.mubr.bf16.gmra.mrb[0].mxu0 %v7441
    %v8440 = vpop.f32.mrb[0].mxu0
    %v8441 = vadd.f32 %v8280, %v8440
    %v8442 = vpop.f32.mrb[0].mxu0
    %v8443 = vpop.f32.mrb[0].mxu0
    %v8444 = vadd.f32 %v8283, %v8443
    %v8445 = vpop.f32.mrb[0].mxu0
    %8446 = vmatprep.mubr.bf16.mxu0 %v7458
    %8447 = vmatmul.mubr.bf16.gmra.mrb[0].mxu0 %v7457
    %v8448 = vpop.f32.mrb[0].mxu0
    %v8449 = vadd.f32 %v8288, %v8448
    %v8450 = vpop.f32.mrb[0].mxu0
    %v8451 = vpop.f32.mrb[0].mxu0
    %v8452 = vadd.f32 %v8291, %v8451
    %v8453 = vpop.f32.mrb[0].mxu0
    %8454 = vmatprep.mubr.bf16.mxu0 %v7474
    %8455 = vmatmul.mubr.bf16.gmra.mrb[0].mxu0 %v7473
    %v8456 = vpop.f32.mrb[0].mxu0
    %v8457 = vadd.f32 %v8296, %v8456
    %v8458 = vpop.f32.mrb[0].mxu0
    %v8459 = vpop.f32.mrb[0].mxu0
    %v8460 = vadd.f32 %v8299, %v8459
    %v8461 = vpop.f32.mrb[0].mxu0
    %8462 = vmatprep.mubr.bf16.mxu0 %v7490
    %8463 = vmatmul.mubr.bf16.gmra.mrb[0].mxu0 %v7489
    %v8464 = vpop.f32.mrb[0].mxu0
    %v8465 = vadd.f32 %v8304, %v8464
    %v8466 = vpop.f32.mrb[0].mxu0
    %v8467 = vpop.f32.mrb[0].mxu0
    %v8468 = vadd.f32 %v8307, %v8467
    %v8469 = vpop.f32.mrb[0].mxu0
    %8470 = vmatprep.mubr.bf16.mxu0 %v7506
    %8471 = vmatmul.mubr.bf16.gmra.mrb[0].mxu0 %v7505
    %v8472 = vpop.f32.mrb[0].mxu0
    %v8473 = vadd.f32 %v8312, %v8472
    %v8474 = vpop.f32.mrb[0].mxu0
    %v8475 = vpop.f32.mrb[0].mxu0
    %v8476 = vadd.f32 %v8315, %v8475
    %v8477 = vpop.f32.mrb[0].mxu0
    %8478 = vmatprep.mubr.bf16.mxu0 %v7522
    %8479 = vmatmul.mubr.bf16.gmra.mrb[0].mxu0 %v7521
    %v8480 = vpop.f32.mrb[0].mxu0
    %v8481 = vadd.f32 %v8320, %v8480
    %v8482 = vpop.f32.mrb[0].mxu0
    %v8483 = vpop.f32.mrb[0].mxu0
    %v8484 = vadd.f32 %v8323, %v8483
    %v8485 = vpop.f32.mrb[0].mxu0
    %8486 = vmatprep.mubr.bf16.mxu0 %v7538
    %8487 = vmatmul.mubr.bf16.gmra.mrb[0].mxu0 %v7537
    %v8488 = vpop.f32.mrb[0].mxu0
    %v8489 = vadd.f32 %v8328, %v8488
    %v8490 = vpop.f32.mrb[0].mxu0
    %v8491 = vpop.f32.mrb[0].mxu0
    %v8492 = vadd.f32 %v8331, %v8491
    %v8493 = vpop.f32.mrb[0].mxu0
    %8494 = vmatprep.mubr.bf16.mxu0 %v7554
    %8495 = vmatmul.mubr.bf16.gmra.mrb[0].mxu0 %v7553
    %v8496 = vpop.f32.mrb[0].mxu0
    %v8497 = vadd.f32 %v8336, %v8496
    %v8498 = vpop.f32.mrb[0].mxu0
    %v8499 = vpop.f32.mrb[0].mxu0
    %v8500 = vadd.f32 %v8339, %v8499
    %v8501 = vpop.f32.mrb[0].mxu0
    %8502 = vmatprep.mubr.bf16.mxu0 %v7570
    %8503 = vmatmul.mubr.bf16.gmra.mrb[0].mxu0 %v7569
    %v8504 = vpop.f32.mrb[0].mxu0
    %v8505 = vadd.f32 %v8344, %v8504
    %v8506 = vpop.f32.mrb[0].mxu0
    %v8507 = vpop.f32.mrb[0].mxu0
    %v8508 = vadd.f32 %v8347, %v8507
    %v8509 = vpop.f32.mrb[0].mxu0
    %8510 = vmatprep.mubr.bf16.mxu0 %v7586
    %8511 = vmatmul.mubr.bf16.gmra.mrb[0].mxu0 %v7585
    %v8512 = vpop.f32.mrb[0].mxu0
    %v8513 = vadd.f32 %v8352, %v8512
    %v8514 = vpop.f32.mrb[0].mxu0
    %v8515 = vpop.f32.mrb[0].mxu0
    %v8516 = vadd.f32 %v8355, %v8515
    %v8517 = vpop.f32.mrb[0].mxu0
    %8518 = vmatprep.mubr.bf16.mxu0 %v7602
    %8519 = vmatmul.mubr.bf16.gmra.mrb[0].mxu0 %v7601
    %v8520 = vpop.f32.mrb[0].mxu0
    %v8521 = vadd.f32 %v8360, %v8520
    %v8522 = vpop.f32.mrb[0].mxu0
    %v8523 = vpop.f32.mrb[0].mxu0
    %v8524 = vadd.f32 %v8363, %v8523
    %v8525 = vpop.f32.mrb[0].mxu0
    %8526 = vmatprep.mubr.bf16.mxu0 %v7618
    %8527 = vmatmul.mubr.bf16.gmra.mrb[0].mxu0 %v7617
    %v8528 = vpop.f32.mrb[0].mxu0
    %v8529 = vadd.f32 %v8368, %v8528
    %v8530 = vpop.f32.mrb[0].mxu0
    %v8531 = vpop.f32.mrb[0].mxu0
    %v8532 = vadd.f32 %v8371, %v8531
    %v8533 = vpop.f32.mrb[0].mxu0
    %8534 = vmatprep.mubr.bf16.mxu0 %v7634
    %8535 = vmatmul.mubr.bf16.gmra.mrb[0].mxu0 %v7633
    %v8536 = vpop.f32.mrb[0].mxu0
    %v8537 = vadd.f32 %v8376, %v8536
    %v8538 = vpop.f32.mrb[0].mxu0
    %v8539 = vpop.f32.mrb[0].mxu0
    %v8540 = vadd.f32 %v8379, %v8539
    %v8541 = vpop.f32.mrb[0].mxu0
    %8542 = vdwg.mxu0
    %8543 = vmatprep.subr.bf16.mxu0 0
    %8544 = vmatpush1.bf16.msra.mxu0 %v6395
    %8545 = vmatprep.subr.bf16.mxu0 0
    %8546 = vmatpush1.bf16.msra.mxu0 %v6396
    %8547 = vmatprep.subr.bf16.mxu0 0
    %8548 = vmatpush1.bf16.msra.mxu0 %v6397
    %8549 = vmatprep.subr.bf16.mxu0 0
    %8550 = vmatpush1.bf16.msra.mxu0 %v6398
    %8551 = vmatprep.subr.bf16.mxu0 0
    %8552 = vmatpush1.bf16.msra.mxu0 %v6399
    %8553 = vmatprep.subr.bf16.mxu0 0
    %8554 = vmatpush1.bf16.msra.mxu0 %v6400
    %8555 = vmatprep.subr.bf16.mxu0 0
    %8556 = vmatpush1.bf16.msra.mxu0 %v6401
    %8557 = vmatprep.subr.bf16.mxu0 0
    %8558 = vmatpush1.bf16.msra.mxu0 %v6402
    %8559 = vmatprep.subr.bf16.mxu0 0
    %8560 = vmatpush1.bf16.msra.mxu0 %v6403
    %8561 = vmatprep.subr.bf16.mxu0 0
    %8562 = vmatpush1.bf16.msra.mxu0 %v6404
    %8563 = vmatprep.subr.bf16.mxu0 0
    %8564 = vmatpush1.bf16.msra.mxu0 %v6405
    %8565 = vmatprep.subr.bf16.mxu0 0
    %8566 = vmatpush1.bf16.msra.mxu0 %v6406
    %8567 = vmatprep.subr.bf16.mxu0 0
    %8568 = vmatpush1.bf16.msra.mxu0 %v6407
    %8569 = vmatprep.subr.bf16.mxu0 0
    %8570 = vmatpush1.bf16.msra.mxu0 %v6408
    %8571 = vmatprep.subr.bf16.mxu0 0
    %8572 = vmatpush1.bf16.msra.mxu0 %v6409
    %8573 = vmatprep.subr.bf16.mxu0 0
    %8574 = vmatpush1.bf16.msra.mxu0 %v6410
    %8575 = vmatprep.mubr.bf16.mxu0 %v7396
    %8576 = vmatmul.mubr.bf16.gmra.mrb[0].mxu0 %v7395
    %v8577 = vpop.f32.mrb[0].mxu0
    %v8578 = vadd.f32 %v8417, %v8577
    %v8579 = vpop.f32.mrb[0].mxu0
    %v8580 = vpop.f32.mrb[0].mxu0
    %v8581 = vadd.f32 %v8420, %v8580
    %v8582 = vpop.f32.mrb[0].mxu0
    %8583 = vmatprep.mubr.bf16.mxu0 %v7412
    %8584 = vmatmul.mubr.bf16.gmra.mrb[0].mxu0 %v7411
    %v8585 = vpop.f32.mrb[0].mxu0
    %v8586 = vadd.f32 %v8425, %v8585
    %v8587 = vpop.f32.mrb[0].mxu0
    %v8588 = vpop.f32.mrb[0].mxu0
    %v8589 = vadd.f32 %v8428, %v8588
    %v8590 = vpop.f32.mrb[0].mxu0
    %8591 = vmatprep.mubr.bf16.mxu0 %v7428
    %8592 = vmatmul.mubr.bf16.gmra.mrb[0].mxu0 %v7427
    %v8593 = vpop.f32.mrb[0].mxu0
    %v8594 = vadd.f32 %v8433, %v8593
    %v8595 = vpop.f32.mrb[0].mxu0
    %v8596 = vpop.f32.mrb[0].mxu0
    %v8597 = vadd.f32 %v8436, %v8596
    %v8598 = vpop.f32.mrb[0].mxu0
    %8599 = vmatprep.mubr.bf16.mxu0 %v7444
    %8600 = vmatmul.mubr.bf16.gmra.mrb[0].mxu0 %v7443
    %v8601 = vpop.f32.mrb[0].mxu0
    %v8602 = vadd.f32 %v8441, %v8601
    %v8603 = vpop.f32.mrb[0].mxu0
    %v8604 = vpop.f32.mrb[0].mxu0
    %v8605 = vadd.f32 %v8444, %v8604
    %v8606 = vpop.f32.mrb[0].mxu0
    %8607 = vmatprep.mubr.bf16.mxu0 %v7460
    %8608 = vmatmul.mubr.bf16.gmra.mrb[0].mxu0 %v7459
    %v8609 = vpop.f32.mrb[0].mxu0
    %v8610 = vadd.f32 %v8449, %v8609
    %v8611 = vpop.f32.mrb[0].mxu0
    %v8612 = vpop.f32.mrb[0].mxu0
    %v8613 = vadd.f32 %v8452, %v8612
    %v8614 = vpop.f32.mrb[0].mxu0
    %8615 = vmatprep.mubr.bf16.mxu0 %v7476
    %8616 = vmatmul.mubr.bf16.gmra.mrb[0].mxu0 %v7475
    %v8617 = vpop.f32.mrb[0].mxu0
    %v8618 = vadd.f32 %v8457, %v8617
    %v8619 = vpop.f32.mrb[0].mxu0
    %v8620 = vpop.f32.mrb[0].mxu0
    %v8621 = vadd.f32 %v8460, %v8620
    %v8622 = vpop.f32.mrb[0].mxu0
    %8623 = vmatprep.mubr.bf16.mxu0 %v7492
    %8624 = vmatmul.mubr.bf16.gmra.mrb[0].mxu0 %v7491
    %v8625 = vpop.f32.mrb[0].mxu0
    %v8626 = vadd.f32 %v8465, %v8625
    %v8627 = vpop.f32.mrb[0].mxu0
    %v8628 = vpop.f32.mrb[0].mxu0
    %v8629 = vadd.f32 %v8468, %v8628
    %v8630 = vpop.f32.mrb[0].mxu0
    %8631 = vmatprep.mubr.bf16.mxu0 %v7508
    %8632 = vmatmul.mubr.bf16.gmra.mrb[0].mxu0 %v7507
    %v8633 = vpop.f32.mrb[0].mxu0
    %v8634 = vadd.f32 %v8473, %v8633
    %v8635 = vpop.f32.mrb[0].mxu0
    %v8636 = vpop.f32.mrb[0].mxu0
    %v8637 = vadd.f32 %v8476, %v8636
    %v8638 = vpop.f32.mrb[0].mxu0
    %8639 = vmatprep.mubr.bf16.mxu0 %v7524
    %8640 = vmatmul.mubr.bf16.gmra.mrb[0].mxu0 %v7523
    %v8641 = vpop.f32.mrb[0].mxu0
    %v8642 = vadd.f32 %v8481, %v8641
    %v8643 = vpop.f32.mrb[0].mxu0
    %v8644 = vpop.f32.mrb[0].mxu0
    %v8645 = vadd.f32 %v8484, %v8644
    %v8646 = vpop.f32.mrb[0].mxu0
    %8647 = vmatprep.mubr.bf16.mxu0 %v7540
    %8648 = vmatmul.mubr.bf16.gmra.mrb[0].mxu0 %v7539
    %v8649 = vpop.f32.mrb[0].mxu0
    %v8650 = vadd.f32 %v8489, %v8649
    %v8651 = vpop.f32.mrb[0].mxu0
    %v8652 = vpop.f32.mrb[0].mxu0
    %v8653 = vadd.f32 %v8492, %v8652
    %v8654 = vpop.f32.mrb[0].mxu0
    %8655 = vmatprep.mubr.bf16.mxu0 %v7556
    %8656 = vmatmul.mubr.bf16.gmra.mrb[0].mxu0 %v7555
    %v8657 = vpop.f32.mrb[0].mxu0
    %v8658 = vadd.f32 %v8497, %v8657
    %v8659 = vpop.f32.mrb[0].mxu0
    %v8660 = vpop.f32.mrb[0].mxu0
    %v8661 = vadd.f32 %v8500, %v8660
    %v8662 = vpop.f32.mrb[0].mxu0
    %8663 = vmatprep.mubr.bf16.mxu0 %v7572
    %8664 = vmatmul.mubr.bf16.gmra.mrb[0].mxu0 %v7571
    %v8665 = vpop.f32.mrb[0].mxu0
    %v8666 = vadd.f32 %v8505, %v8665
    %v8667 = vpop.f32.mrb[0].mxu0
    %v8668 = vpop.f32.mrb[0].mxu0
    %v8669 = vadd.f32 %v8508, %v8668
    %v8670 = vpop.f32.mrb[0].mxu0
    %8671 = vmatprep.mubr.bf16.mxu0 %v7588
    %8672 = vmatmul.mubr.bf16.gmra.mrb[0].mxu0 %v7587
    %v8673 = vpop.f32.mrb[0].mxu0
    %v8674 = vadd.f32 %v8513, %v8673
    %v8675 = vpop.f32.mrb[0].mxu0
    %v8676 = vpop.f32.mrb[0].mxu0
    %v8677 = vadd.f32 %v8516, %v8676
    %v8678 = vpop.f32.mrb[0].mxu0
    %8679 = vmatprep.mubr.bf16.mxu0 %v7604
    %8680 = vmatmul.mubr.bf16.gmra.mrb[0].mxu0 %v7603
    %v8681 = vpop.f32.mrb[0].mxu0
    %v8682 = vadd.f32 %v8521, %v8681
    %v8683 = vpop.f32.mrb[0].mxu0
    %v8684 = vpop.f32.mrb[0].mxu0
    %v8685 = vadd.f32 %v8524, %v8684
    %v8686 = vpop.f32.mrb[0].mxu0
    %8687 = vmatprep.mubr.bf16.mxu0 %v7620
    %8688 = vmatmul.mubr.bf16.gmra.mrb[0].mxu0 %v7619
    %v8689 = vpop.f32.mrb[0].mxu0
    %v8690 = vadd.f32 %v8529, %v8689
    %v8691 = vpop.f32.mrb[0].mxu0
    %v8692 = vpop.f32.mrb[0].mxu0
    %v8693 = vadd.f32 %v8532, %v8692
    %v8694 = vpop.f32.mrb[0].mxu0
    %8695 = vmatprep.mubr.bf16.mxu0 %v7636
    %8696 = vmatmul.mubr.bf16.gmra.mrb[0].mxu0 %v7635
    %v8697 = vpop.f32.mrb[0].mxu0
    %v8698 = vadd.f32 %v8537, %v8697
    %v8699 = vpop.f32.mrb[0].mxu0
    %v8700 = vpop.f32.mrb[0].mxu0
    %v8701 = vadd.f32 %v8540, %v8700
    %v8702 = vpop.f32.mrb[0].mxu0
    %8703 = vdwg.mxu0
    %8704 = vmatprep.subr.bf16.mxu0 0
    %8705 = vmatpush1.bf16.msra.mxu0 %v6411
    %8706 = vmatprep.subr.bf16.mxu0 0
    %8707 = vmatpush1.bf16.msra.mxu0 %v6412
    %8708 = vmatprep.subr.bf16.mxu0 0
    %8709 = vmatpush1.bf16.msra.mxu0 %v6413
    %8710 = vmatprep.subr.bf16.mxu0 0
    %8711 = vmatpush1.bf16.msra.mxu0 %v6414
    %8712 = vmatprep.subr.bf16.mxu0 0
    %8713 = vmatpush1.bf16.msra.mxu0 %v6415
    %8714 = vmatprep.subr.bf16.mxu0 0
    %8715 = vmatpush1.bf16.msra.mxu0 %v6416
    %8716 = vmatprep.subr.bf16.mxu0 0
    %8717 = vmatpush1.bf16.msra.mxu0 %v6417
    %8718 = vmatprep.subr.bf16.mxu0 0
    %8719 = vmatpush1.bf16.msra.mxu0 %v6418
    %8720 = vmatprep.subr.bf16.mxu0 0
    %8721 = vmatpush1.bf16.msra.mxu0 %v6419
    %8722 = vmatprep.subr.bf16.mxu0 0
    %8723 = vmatpush1.bf16.msra.mxu0 %v6420
    %8724 = vmatprep.subr.bf16.mxu0 0
    %8725 = vmatpush1.bf16.msra.mxu0 %v6421
    %8726 = vmatprep.subr.bf16.mxu0 0
    %8727 = vmatpush1.bf16.msra.mxu0 %v6422
    %8728 = vmatprep.subr.bf16.mxu0 0
    %8729 = vmatpush1.bf16.msra.mxu0 %v6423
    %8730 = vmatprep.subr.bf16.mxu0 0
    %8731 = vmatpush1.bf16.msra.mxu0 %v6424
    %8732 = vmatprep.subr.bf16.mxu0 0
    %8733 = vmatpush1.bf16.msra.mxu0 %v6425
    %8734 = vmatprep.subr.bf16.mxu0 0
    %8735 = vmatpush1.bf16.msra.mxu0 %v6426
    %8736 = vmatprep.mubr.bf16.mxu0 %v7398
    %8737 = vmatmul.mubr.bf16.gmra.mrb[0].mxu0 %v7397
    %v8738 = vpop.f32.mrb[0].mxu0
    %v8739 = vadd.f32 %v8578, %v8738
    %v8740 = vpop.f32.mrb[0].mxu0
    %v8741 = vpop.f32.mrb[0].mxu0
    %v8742 = vadd.f32 %v8581, %v8741
    %v8743 = vpop.f32.mrb[0].mxu0
    %8744 = vmatprep.mubr.bf16.mxu0 %v7414
    %8745 = vmatmul.mubr.bf16.gmra.mrb[0].mxu0 %v7413
    %v8746 = vpop.f32.mrb[0].mxu0
    %v8747 = vadd.f32 %v8586, %v8746
    %v8748 = vpop.f32.mrb[0].mxu0
    %v8749 = vpop.f32.mrb[0].mxu0
    %v8750 = vadd.f32 %v8589, %v8749
    %v8751 = vpop.f32.mrb[0].mxu0
    %8752 = vmatprep.mubr.bf16.mxu0 %v7430
    %8753 = vmatmul.mubr.bf16.gmra.mrb[0].mxu0 %v7429
    %v8754 = vpop.f32.mrb[0].mxu0
    %v8755 = vadd.f32 %v8594, %v8754
    %v8756 = vpop.f32.mrb[0].mxu0
    %v8757 = vpop.f32.mrb[0].mxu0
    %v8758 = vadd.f32 %v8597, %v8757
    %v8759 = vpop.f32.mrb[0].mxu0
    %8760 = vmatprep.mubr.bf16.mxu0 %v7446
    %8761 = vmatmul.mubr.bf16.gmra.mrb[0].mxu0 %v7445
    %v8762 = vpop.f32.mrb[0].mxu0
    %v8763 = vadd.f32 %v8602, %v8762
    %v8764 = vpop.f32.mrb[0].mxu0
    %v8765 = vpop.f32.mrb[0].mxu0
    %v8766 = vadd.f32 %v8605, %v8765
    %v8767 = vpop.f32.mrb[0].mxu0
    %8768 = vmatprep.mubr.bf16.mxu0 %v7462
    %8769 = vmatmul.mubr.bf16.gmra.mrb[0].mxu0 %v7461
    %v8770 = vpop.f32.mrb[0].mxu0
    %v8771 = vadd.f32 %v8610, %v8770
    %v8772 = vpop.f32.mrb[0].mxu0
    %v8773 = vpop.f32.mrb[0].mxu0
    %v8774 = vadd.f32 %v8613, %v8773
    %v8775 = vpop.f32.mrb[0].mxu0
    %8776 = vmatprep.mubr.bf16.mxu0 %v7478
    %8777 = vmatmul.mubr.bf16.gmra.mrb[0].mxu0 %v7477
    %v8778 = vpop.f32.mrb[0].mxu0
    %v8779 = vadd.f32 %v8618, %v8778
    %v8780 = vpop.f32.mrb[0].mxu0
    %v8781 = vpop.f32.mrb[0].mxu0
    %v8782 = vadd.f32 %v8621, %v8781
    %v8783 = vpop.f32.mrb[0].mxu0
    %8784 = vmatprep.mubr.bf16.mxu0 %v7494
    %8785 = vmatmul.mubr.bf16.gmra.mrb[0].mxu0 %v7493
    %v8786 = vpop.f32.mrb[0].mxu0
    %v8787 = vadd.f32 %v8626, %v8786
    %v8788 = vpop.f32.mrb[0].mxu0
    %v8789 = vpop.f32.mrb[0].mxu0
    %v8790 = vadd.f32 %v8629, %v8789
    %v8791 = vpop.f32.mrb[0].mxu0
    %8792 = vmatprep.mubr.bf16.mxu0 %v7510
    %8793 = vmatmul.mubr.bf16.gmra.mrb[0].mxu0 %v7509
    %v8794 = vpop.f32.mrb[0].mxu0
    %v8795 = vadd.f32 %v8634, %v8794
    %v8796 = vpop.f32.mrb[0].mxu0
    %v8797 = vpop.f32.mrb[0].mxu0
    %v8798 = vadd.f32 %v8637, %v8797
    %v8799 = vpop.f32.mrb[0].mxu0
    %8800 = vmatprep.mubr.bf16.mxu0 %v7526
    %8801 = vmatmul.mubr.bf16.gmra.mrb[0].mxu0 %v7525
    %v8802 = vpop.f32.mrb[0].mxu0
    %v8803 = vadd.f32 %v8642, %v8802
    %v8804 = vpop.f32.mrb[0].mxu0
    %v8805 = vpop.f32.mrb[0].mxu0
    %v8806 = vadd.f32 %v8645, %v8805
    %v8807 = vpop.f32.mrb[0].mxu0
    %8808 = vmatprep.mubr.bf16.mxu0 %v7542
    %8809 = vmatmul.mubr.bf16.gmra.mrb[0].mxu0 %v7541
    %v8810 = vpop.f32.mrb[0].mxu0
    %v8811 = vadd.f32 %v8650, %v8810
    %v8812 = vpop.f32.mrb[0].mxu0
    %v8813 = vpop.f32.mrb[0].mxu0
    %v8814 = vadd.f32 %v8653, %v8813
    %v8815 = vpop.f32.mrb[0].mxu0
    %8816 = vmatprep.mubr.bf16.mxu0 %v7558
    %8817 = vmatmul.mubr.bf16.gmra.mrb[0].mxu0 %v7557
    %v8818 = vpop.f32.mrb[0].mxu0
    %v8819 = vadd.f32 %v8658, %v8818
    %v8820 = vpop.f32.mrb[0].mxu0
    %v8821 = vpop.f32.mrb[0].mxu0
    %v8822 = vadd.f32 %v8661, %v8821
    %v8823 = vpop.f32.mrb[0].mxu0
    %8824 = vmatprep.mubr.bf16.mxu0 %v7574
    %8825 = vmatmul.mubr.bf16.gmra.mrb[0].mxu0 %v7573
    %v8826 = vpop.f32.mrb[0].mxu0
    %v8827 = vadd.f32 %v8666, %v8826
    %v8828 = vpop.f32.mrb[0].mxu0
    %v8829 = vpop.f32.mrb[0].mxu0
    %v8830 = vadd.f32 %v8669, %v8829
    %v8831 = vpop.f32.mrb[0].mxu0
    %8832 = vmatprep.mubr.bf16.mxu0 %v7590
    %8833 = vmatmul.mubr.bf16.gmra.mrb[0].mxu0 %v7589
    %v8834 = vpop.f32.mrb[0].mxu0
    %v8835 = vadd.f32 %v8674, %v8834
    %v8836 = vpop.f32.mrb[0].mxu0
    %v8837 = vpop.f32.mrb[0].mxu0
    %v8838 = vadd.f32 %v8677, %v8837
    %v8839 = vpop.f32.mrb[0].mxu0
    %8840 = vmatprep.mubr.bf16.mxu0 %v7606
    %8841 = vmatmul.mubr.bf16.gmra.mrb[0].mxu0 %v7605
    %v8842 = vpop.f32.mrb[0].mxu0
    %v8843 = vadd.f32 %v8682, %v8842
    %v8844 = vpop.f32.mrb[0].mxu0
    %v8845 = vpop.f32.mrb[0].mxu0
    %v8846 = vadd.f32 %v8685, %v8845
    %v8847 = vpop.f32.mrb[0].mxu0
    %8848 = vmatprep.mubr.bf16.mxu0 %v7622
    %8849 = vmatmul.mubr.bf16.gmra.mrb[0].mxu0 %v7621
    %v8850 = vpop.f32.mrb[0].mxu0
    %v8851 = vadd.f32 %v8690, %v8850
    %v8852 = vpop.f32.mrb[0].mxu0
    %v8853 = vpop.f32.mrb[0].mxu0
    %v8854 = vadd.f32 %v8693, %v8853
    %v8855 = vpop.f32.mrb[0].mxu0
    %8856 = vmatprep.mubr.bf16.mxu0 %v7638
    %8857 = vmatmul.mubr.bf16.gmra.mrb[0].mxu0 %v7637
    %v8858 = vpop.f32.mrb[0].mxu0
    %v8859 = vadd.f32 %v8698, %v8858
    %v8860 = vpop.f32.mrb[0].mxu0
    %v8861 = vpop.f32.mrb[0].mxu0
    %v8862 = vadd.f32 %v8701, %v8861
    %v8863 = vpop.f32.mrb[0].mxu0
    %8864 = vdwg.mxu0
    %8865 = vmatprep.subr.bf16.mxu0 0
    %8866 = vmatpush1.bf16.msra.mxu0 %v6427
    %8867 = vmatprep.subr.bf16.mxu0 0
    %8868 = vmatpush1.bf16.msra.mxu0 %v6428
    %8869 = vmatprep.subr.bf16.mxu0 0
    %8870 = vmatpush1.bf16.msra.mxu0 %v6429
    %8871 = vmatprep.subr.bf16.mxu0 0
    %8872 = vmatpush1.bf16.msra.mxu0 %v6430
    %8873 = vmatprep.subr.bf16.mxu0 0
    %8874 = vmatpush1.bf16.msra.mxu0 %v6431
    %8875 = vmatprep.subr.bf16.mxu0 0
    %8876 = vmatpush1.bf16.msra.mxu0 %v6432
    %8877 = vmatprep.subr.bf16.mxu0 0
    %8878 = vmatpush1.bf16.msra.mxu0 %v6433
    %8879 = vmatprep.subr.bf16.mxu0 0
    %8880 = vmatpush1.bf16.msra.mxu0 %v6434
    %8881 = vmatprep.subr.bf16.mxu0 0
    %8882 = vmatpush1.bf16.msra.mxu0 %v6435
    %8883 = vmatprep.subr.bf16.mxu0 0
    %8884 = vmatpush1.bf16.msra.mxu0 %v6436
    %8885 = vmatprep.subr.bf16.mxu0 0
    %8886 = vmatpush1.bf16.msra.mxu0 %v6437
    %8887 = vmatprep.subr.bf16.mxu0 0
    %8888 = vmatpush1.bf16.msra.mxu0 %v6438
    %8889 = vmatprep.subr.bf16.mxu0 0
    %8890 = vmatpush1.bf16.msra.mxu0 %v6439
    %8891 = vmatprep.subr.bf16.mxu0 0
    %8892 = vmatpush1.bf16.msra.mxu0 %v6440
    %8893 = vmatprep.subr.bf16.mxu0 0
    %8894 = vmatpush1.bf16.msra.mxu0 %v6441
    %8895 = vmatprep.subr.bf16.mxu0 0
    %8896 = vmatpush1.bf16.msra.mxu0 %v6442
    %8897 = vmatprep.mubr.bf16.mxu0 %v7400
    %8898 = vmatmul.mubr.bf16.gmra.mrb[0].mxu0 %v7399
    %v8899 = vpop.f32.mrb[0].mxu0
    %v8900 = vadd.f32 %v8739, %v8899
    %v8901 = vpop.f32.mrb[0].mxu0
    %v8902 = vpop.f32.mrb[0].mxu0
    %v8903 = vadd.f32 %v8742, %v8902
    %v8904 = vpop.f32.mrb[0].mxu0
    %8905 = vmatprep.mubr.bf16.mxu0 %v7416
    %8906 = vmatmul.mubr.bf16.gmra.mrb[0].mxu0 %v7415
    %v8907 = vpop.f32.mrb[0].mxu0
    %v8908 = vadd.f32 %v8747, %v8907
    %v8909 = vpop.f32.mrb[0].mxu0
    %v8910 = vpop.f32.mrb[0].mxu0
    %v8911 = vadd.f32 %v8750, %v8910
    %v8912 = vpop.f32.mrb[0].mxu0
    %8913 = vmatprep.mubr.bf16.mxu0 %v7432
    %8914 = vmatmul.mubr.bf16.gmra.mrb[0].mxu0 %v7431
    %v8915 = vpop.f32.mrb[0].mxu0
    %v8916 = vadd.f32 %v8755, %v8915
    %v8917 = vpop.f32.mrb[0].mxu0
    %v8918 = vpop.f32.mrb[0].mxu0
    %v8919 = vadd.f32 %v8758, %v8918
    %v8920 = vpop.f32.mrb[0].mxu0
    %8921 = vmatprep.mubr.bf16.mxu0 %v7448
    %8922 = vmatmul.mubr.bf16.gmra.mrb[0].mxu0 %v7447
    %v8923 = vpop.f32.mrb[0].mxu0
    %v8924 = vadd.f32 %v8763, %v8923
    %v8925 = vpop.f32.mrb[0].mxu0
    %v8926 = vpop.f32.mrb[0].mxu0
    %v8927 = vadd.f32 %v8766, %v8926
    %v8928 = vpop.f32.mrb[0].mxu0
    %8929 = vmatprep.mubr.bf16.mxu0 %v7464
    %8930 = vmatmul.mubr.bf16.gmra.mrb[0].mxu0 %v7463
    %v8931 = vpop.f32.mrb[0].mxu0
    %v8932 = vadd.f32 %v8771, %v8931
    %v8933 = vpop.f32.mrb[0].mxu0
    %v8934 = vpop.f32.mrb[0].mxu0
    %v8935 = vadd.f32 %v8774, %v8934
    %v8936 = vpop.f32.mrb[0].mxu0
    %8937 = vmatprep.mubr.bf16.mxu0 %v7480
    %8938 = vmatmul.mubr.bf16.gmra.mrb[0].mxu0 %v7479
    %v8939 = vpop.f32.mrb[0].mxu0
    %v8940 = vadd.f32 %v8779, %v8939
    %v8941 = vpop.f32.mrb[0].mxu0
    %v8942 = vpop.f32.mrb[0].mxu0
    %v8943 = vadd.f32 %v8782, %v8942
    %v8944 = vpop.f32.mrb[0].mxu0
    %8945 = vmatprep.mubr.bf16.mxu0 %v7496
    %8946 = vmatmul.mubr.bf16.gmra.mrb[0].mxu0 %v7495
    %v8947 = vpop.f32.mrb[0].mxu0
    %v8948 = vadd.f32 %v8787, %v8947
    %v8949 = vpop.f32.mrb[0].mxu0
    %v8950 = vpop.f32.mrb[0].mxu0
    %v8951 = vadd.f32 %v8790, %v8950
    %v8952 = vpop.f32.mrb[0].mxu0
    %8953 = vmatprep.mubr.bf16.mxu0 %v7512
    %8954 = vmatmul.mubr.bf16.gmra.mrb[0].mxu0 %v7511
    %v8955 = vpop.f32.mrb[0].mxu0
    %v8956 = vadd.f32 %v8795, %v8955
    %v8957 = vpop.f32.mrb[0].mxu0
    %v8958 = vpop.f32.mrb[0].mxu0
    %v8959 = vadd.f32 %v8798, %v8958
    %v8960 = vpop.f32.mrb[0].mxu0
    %8961 = vmatprep.mubr.bf16.mxu0 %v7528
    %8962 = vmatmul.mubr.bf16.gmra.mrb[0].mxu0 %v7527
    %v8963 = vpop.f32.mrb[0].mxu0
    %v8964 = vadd.f32 %v8803, %v8963
    %v8965 = vpop.f32.mrb[0].mxu0
    %v8966 = vpop.f32.mrb[0].mxu0
    %v8967 = vadd.f32 %v8806, %v8966
    %v8968 = vpop.f32.mrb[0].mxu0
    %8969 = vmatprep.mubr.bf16.mxu0 %v7544
    %8970 = vmatmul.mubr.bf16.gmra.mrb[0].mxu0 %v7543
    %v8971 = vpop.f32.mrb[0].mxu0
    %v8972 = vadd.f32 %v8811, %v8971
    %v8973 = vpop.f32.mrb[0].mxu0
    %v8974 = vpop.f32.mrb[0].mxu0
    %v8975 = vadd.f32 %v8814, %v8974
    %v8976 = vpop.f32.mrb[0].mxu0
    %8977 = vmatprep.mubr.bf16.mxu0 %v7560
    %8978 = vmatmul.mubr.bf16.gmra.mrb[0].mxu0 %v7559
    %v8979 = vpop.f32.mrb[0].mxu0
    %v8980 = vadd.f32 %v8819, %v8979
    %v8981 = vpop.f32.mrb[0].mxu0
    %v8982 = vpop.f32.mrb[0].mxu0
    %v8983 = vadd.f32 %v8822, %v8982
    %v8984 = vpop.f32.mrb[0].mxu0
    %8985 = vmatprep.mubr.bf16.mxu0 %v7576
    %8986 = vmatmul.mubr.bf16.gmra.mrb[0].mxu0 %v7575
    %v8987 = vpop.f32.mrb[0].mxu0
    %v8988 = vadd.f32 %v8827, %v8987
    %v8989 = vpop.f32.mrb[0].mxu0
    %v8990 = vpop.f32.mrb[0].mxu0
    %v8991 = vadd.f32 %v8830, %v8990
    %v8992 = vpop.f32.mrb[0].mxu0
    %8993 = vmatprep.mubr.bf16.mxu0 %v7592
    %8994 = vmatmul.mubr.bf16.gmra.mrb[0].mxu0 %v7591
    %v8995 = vpop.f32.mrb[0].mxu0
    %v8996 = vadd.f32 %v8835, %v8995
    %v8997 = vpop.f32.mrb[0].mxu0
    %v8998 = vpop.f32.mrb[0].mxu0
    %v8999 = vadd.f32 %v8838, %v8998
    %v9000 = vpop.f32.mrb[0].mxu0
    %9001 = vmatprep.mubr.bf16.mxu0 %v7608
    %9002 = vmatmul.mubr.bf16.gmra.mrb[0].mxu0 %v7607
    %v9003 = vpop.f32.mrb[0].mxu0
    %v9004 = vadd.f32 %v8843, %v9003
    %v9005 = vpop.f32.mrb[0].mxu0
    %v9006 = vpop.f32.mrb[0].mxu0
    %v9007 = vadd.f32 %v8846, %v9006
    %v9008 = vpop.f32.mrb[0].mxu0
    %9009 = vmatprep.mubr.bf16.mxu0 %v7624
    %9010 = vmatmul.mubr.bf16.gmra.mrb[0].mxu0 %v7623
    %v9011 = vpop.f32.mrb[0].mxu0
    %v9012 = vadd.f32 %v8851, %v9011
    %v9013 = vpop.f32.mrb[0].mxu0
    %v9014 = vpop.f32.mrb[0].mxu0
    %v9015 = vadd.f32 %v8854, %v9014
    %v9016 = vpop.f32.mrb[0].mxu0
    %9017 = vmatprep.mubr.bf16.mxu0 %v7640
    %9018 = vmatmul.mubr.bf16.gmra.mrb[0].mxu0 %v7639
    %v9019 = vpop.f32.mrb[0].mxu0
    %v9020 = vadd.f32 %v8859, %v9019
    %v9021 = vpop.f32.mrb[0].mxu0
    %v9022 = vpop.f32.mrb[0].mxu0
    %v9023 = vadd.f32 %v8862, %v9022
    %v9024 = vpop.f32.mrb[0].mxu0
    %9025 = vdwg.mxu0
    %9026 = vmatprep.subr.bf16.mxu0 0
    %9027 = vmatpush1.bf16.msra.mxu0 %v6443
    %9028 = vmatprep.subr.bf16.mxu0 0
    %9029 = vmatpush1.bf16.msra.mxu0 %v6444
    %9030 = vmatprep.subr.bf16.mxu0 0
    %9031 = vmatpush1.bf16.msra.mxu0 %v6445
    %9032 = vmatprep.subr.bf16.mxu0 0
    %9033 = vmatpush1.bf16.msra.mxu0 %v6446
    %9034 = vmatprep.subr.bf16.mxu0 0
    %9035 = vmatpush1.bf16.msra.mxu0 %v6447
    %9036 = vmatprep.subr.bf16.mxu0 0
    %9037 = vmatpush1.bf16.msra.mxu0 %v6448
    %9038 = vmatprep.subr.bf16.mxu0 0
    %9039 = vmatpush1.bf16.msra.mxu0 %v6449
    %9040 = vmatprep.subr.bf16.mxu0 0
    %9041 = vmatpush1.bf16.msra.mxu0 %v6450
    %9042 = vmatprep.subr.bf16.mxu0 0
    %9043 = vmatpush1.bf16.msra.mxu0 %v6451
    %9044 = vmatprep.subr.bf16.mxu0 0
    %9045 = vmatpush1.bf16.msra.mxu0 %v6452
    %9046 = vmatprep.subr.bf16.mxu0 0
    %9047 = vmatpush1.bf16.msra.mxu0 %v6453
    %9048 = vmatprep.subr.bf16.mxu0 0
    %9049 = vmatpush1.bf16.msra.mxu0 %v6454
    %9050 = vmatprep.subr.bf16.mxu0 0
    %9051 = vmatpush1.bf16.msra.mxu0 %v6455
    %9052 = vmatprep.subr.bf16.mxu0 0
    %9053 = vmatpush1.bf16.msra.mxu0 %v6456
    %9054 = vmatprep.subr.bf16.mxu0 0
    %9055 = vmatpush1.bf16.msra.mxu0 %v6457
    %9056 = vmatprep.subr.bf16.mxu0 0
    %9057 = vmatpush1.bf16.msra.mxu0 %v6458
    %9058 = vmatprep.mubr.bf16.mxu0 %v7402
    %9059 = vmatmul.mubr.bf16.gmra.mrb[0].mxu0 %v7401
    %v9060 = vpop.f32.mrb[0].mxu0
    %v9061 = vadd.f32 %v8900, %v9060
    %v9062 = vpop.f32.mrb[0].mxu0
    %v9063 = vpop.f32.mrb[0].mxu0
    %v9064 = vadd.f32 %v8903, %v9063
    %v9065 = vpop.f32.mrb[0].mxu0
    %9066 = vmatprep.mubr.bf16.mxu0 %v7418
    %9067 = vmatmul.mubr.bf16.gmra.mrb[0].mxu0 %v7417
    %v9068 = vpop.f32.mrb[0].mxu0
    %v9069 = vadd.f32 %v8908, %v9068
    %v9070 = vpop.f32.mrb[0].mxu0
    %v9071 = vpop.f32.mrb[0].mxu0
    %v9072 = vadd.f32 %v8911, %v9071
    %v9073 = vpop.f32.mrb[0].mxu0
    %9074 = vmatprep.mubr.bf16.mxu0 %v7434
    %9075 = vmatmul.mubr.bf16.gmra.mrb[0].mxu0 %v7433
    %v9076 = vpop.f32.mrb[0].mxu0
    %v9077 = vadd.f32 %v8916, %v9076
    %v9078 = vpop.f32.mrb[0].mxu0
    %v9079 = vpop.f32.mrb[0].mxu0
    %v9080 = vadd.f32 %v8919, %v9079
    %v9081 = vpop.f32.mrb[0].mxu0
    %9082 = vmatprep.mubr.bf16.mxu0 %v7450
    %9083 = vmatmul.mubr.bf16.gmra.mrb[0].mxu0 %v7449
    %v9084 = vpop.f32.mrb[0].mxu0
    %v9085 = vadd.f32 %v8924, %v9084
    %v9086 = vpop.f32.mrb[0].mxu0
    %v9087 = vpop.f32.mrb[0].mxu0
    %v9088 = vadd.f32 %v8927, %v9087
    %v9089 = vpop.f32.mrb[0].mxu0
    %9090 = vmatprep.mubr.bf16.mxu0 %v7466
    %9091 = vmatmul.mubr.bf16.gmra.mrb[0].mxu0 %v7465
    %v9092 = vpop.f32.mrb[0].mxu0
    %v9093 = vadd.f32 %v8932, %v9092
    %v9094 = vpop.f32.mrb[0].mxu0
    %v9095 = vpop.f32.mrb[0].mxu0
    %v9096 = vadd.f32 %v8935, %v9095
    %v9097 = vpop.f32.mrb[0].mxu0
    %9098 = vmatprep.mubr.bf16.mxu0 %v7482
    %9099 = vmatmul.mubr.bf16.gmra.mrb[0].mxu0 %v7481
    %v9100 = vpop.f32.mrb[0].mxu0
    %v9101 = vadd.f32 %v8940, %v9100
    %v9102 = vpop.f32.mrb[0].mxu0
    %v9103 = vpop.f32.mrb[0].mxu0
    %v9104 = vadd.f32 %v8943, %v9103
    %v9105 = vpop.f32.mrb[0].mxu0
    %9106 = vmatprep.mubr.bf16.mxu0 %v7498
    %9107 = vmatmul.mubr.bf16.gmra.mrb[0].mxu0 %v7497
    %v9108 = vpop.f32.mrb[0].mxu0
    %v9109 = vadd.f32 %v8948, %v9108
    %v9110 = vpop.f32.mrb[0].mxu0
    %v9111 = vpop.f32.mrb[0].mxu0
    %v9112 = vadd.f32 %v8951, %v9111
    %v9113 = vpop.f32.mrb[0].mxu0
    %9114 = vmatprep.mubr.bf16.mxu0 %v7514
    %9115 = vmatmul.mubr.bf16.gmra.mrb[0].mxu0 %v7513
    %v9116 = vpop.f32.mrb[0].mxu0
    %v9117 = vadd.f32 %v8956, %v9116
    %v9118 = vpop.f32.mrb[0].mxu0
    %v9119 = vpop.f32.mrb[0].mxu0
    %v9120 = vadd.f32 %v8959, %v9119
    %v9121 = vpop.f32.mrb[0].mxu0
    %9122 = vmatprep.mubr.bf16.mxu0 %v7530
    %9123 = vmatmul.mubr.bf16.gmra.mrb[0].mxu0 %v7529
    %v9124 = vpop.f32.mrb[0].mxu0
    %v9125 = vadd.f32 %v8964, %v9124
    %v9126 = vpop.f32.mrb[0].mxu0
    %v9127 = vpop.f32.mrb[0].mxu0
    %v9128 = vadd.f32 %v8967, %v9127
    %v9129 = vpop.f32.mrb[0].mxu0
    %9130 = vmatprep.mubr.bf16.mxu0 %v7546
    %9131 = vmatmul.mubr.bf16.gmra.mrb[0].mxu0 %v7545
    %v9132 = vpop.f32.mrb[0].mxu0
    %v9133 = vadd.f32 %v8972, %v9132
    %v9134 = vpop.f32.mrb[0].mxu0
    %v9135 = vpop.f32.mrb[0].mxu0
    %v9136 = vadd.f32 %v8975, %v9135
    %v9137 = vpop.f32.mrb[0].mxu0
    %9138 = vmatprep.mubr.bf16.mxu0 %v7562
    %9139 = vmatmul.mubr.bf16.gmra.mrb[0].mxu0 %v7561
    %v9140 = vpop.f32.mrb[0].mxu0
    %v9141 = vadd.f32 %v8980, %v9140
    %v9142 = vpop.f32.mrb[0].mxu0
    %v9143 = vpop.f32.mrb[0].mxu0
    %v9144 = vadd.f32 %v8983, %v9143
    %v9145 = vpop.f32.mrb[0].mxu0
    %9146 = vmatprep.mubr.bf16.mxu0 %v7578
    %9147 = vmatmul.mubr.bf16.gmra.mrb[0].mxu0 %v7577
    %v9148 = vpop.f32.mrb[0].mxu0
    %v9149 = vadd.f32 %v8988, %v9148
    %v9150 = vpop.f32.mrb[0].mxu0
    %v9151 = vpop.f32.mrb[0].mxu0
    %v9152 = vadd.f32 %v8991, %v9151
    %v9153 = vpop.f32.mrb[0].mxu0
    %9154 = vmatprep.mubr.bf16.mxu0 %v7594
    %9155 = vmatmul.mubr.bf16.gmra.mrb[0].mxu0 %v7593
    %v9156 = vpop.f32.mrb[0].mxu0
    %v9157 = vadd.f32 %v8996, %v9156
    %v9158 = vpop.f32.mrb[0].mxu0
    %v9159 = vpop.f32.mrb[0].mxu0
    %v9160 = vadd.f32 %v8999, %v9159
    %v9161 = vpop.f32.mrb[0].mxu0
    %9162 = vmatprep.mubr.bf16.mxu0 %v7610
    %9163 = vmatmul.mubr.bf16.gmra.mrb[0].mxu0 %v7609
    %v9164 = vpop.f32.mrb[0].mxu0
    %v9165 = vadd.f32 %v9004, %v9164
    %v9166 = vpop.f32.mrb[0].mxu0
    %v9167 = vpop.f32.mrb[0].mxu0
    %v9168 = vadd.f32 %v9007, %v9167
    %v9169 = vpop.f32.mrb[0].mxu0
    %9170 = vmatprep.mubr.bf16.mxu0 %v7626
    %9171 = vmatmul.mubr.bf16.gmra.mrb[0].mxu0 %v7625
    %v9172 = vpop.f32.mrb[0].mxu0
    %v9173 = vadd.f32 %v9012, %v9172
    %v9174 = vpop.f32.mrb[0].mxu0
    %v9175 = vpop.f32.mrb[0].mxu0
    %v9176 = vadd.f32 %v9015, %v9175
    %v9177 = vpop.f32.mrb[0].mxu0
    %9178 = vmatprep.mubr.bf16.mxu0 %v7642
    %9179 = vmatmul.mubr.bf16.gmra.mrb[0].mxu0 %v7641
    %v9180 = vpop.f32.mrb[0].mxu0
    %v9181 = vadd.f32 %v9020, %v9180
    %v9182 = vpop.f32.mrb[0].mxu0
    %v9183 = vpop.f32.mrb[0].mxu0
    %v9184 = vadd.f32 %v9023, %v9183
    %v9185 = vpop.f32.mrb[0].mxu0
    %9186 = vdwg.mxu0
    %v9187 = vld [vmem:[%s3] sm:$0xff]
    %v9188 = vld [vmem:[%s3 + $0x8] sm:$0xff]
    %v9189 = vld [vmem:[%s3 + $0x10] sm:$0xff]
    %v9190 = vld [vmem:[%s3 + $0x18] sm:$0xff]
    %v9191 = vld [vmem:[%s3 + $0x20] sm:$0xff]
    %v9192 = vld [vmem:[%s3 + $0x28] sm:$0xff]
    %v9193 = vld [vmem:[%s3 + $0x30] sm:$0xff]
    %v9194 = vld [vmem:[%s3 + $0x38] sm:$0xff]
    %v9195 = vld [vmem:[%s3 + $0x40] sm:$0xff]
    %v9196 = vld [vmem:[%s3 + $0x48] sm:$0xff]
    %v9197 = vld [vmem:[%s3 + $0x50] sm:$0xff]
    %v9198 = vld [vmem:[%s3 + $0x58] sm:$0xff]
    %v9199 = vld [vmem:[%s3 + $0x60] sm:$0xff]
    %v9200 = vld [vmem:[%s3 + $0x68] sm:$0xff]
    %v9201 = vld [vmem:[%s3 + $0x70] sm:$0xff]
    %v9202 = vld [vmem:[%s3 + $0x78] sm:$0xff]
    %v9203 = vld [vmem:[%s3 + $0x80] sm:$0xff]
    %v9204 = vld [vmem:[%s3 + $0x88] sm:$0xff]
    %v9205 = vld [vmem:[%s3 + $0x90] sm:$0xff]
    %v9206 = vld [vmem:[%s3 + $0x98] sm:$0xff]
    %v9207 = vld [vmem:[%s3 + $0xa0] sm:$0xff]
    %v9208 = vld [vmem:[%s3 + $0xa8] sm:$0xff]
    %v9209 = vld [vmem:[%s3 + $0xb0] sm:$0xff]
    %v9210 = vld [vmem:[%s3 + $0xb8] sm:$0xff]
    %v9211 = vld [vmem:[%s3 + $0xc0] sm:$0xff]
    %v9212 = vld [vmem:[%s3 + $0xc8] sm:$0xff]
    %v9213 = vld [vmem:[%s3 + $0xd0] sm:$0xff]
    %v9214 = vld [vmem:[%s3 + $0xd8] sm:$0xff]
    %v9215 = vld [vmem:[%s3 + $0xe0] sm:$0xff]
    %v9216 = vld [vmem:[%s3 + $0xe8] sm:$0xff]
    %v9217 = vld [vmem:[%s3 + $0xf0] sm:$0xff]
    %v9218 = vld [vmem:[%s3 + $0xf8] sm:$0xff]
    %9219 = vset.pattern.permute.xlu0 1
    %9220 = vperm.xlu0 %9219, %v57
    %v9221 = vpop.permute.xlu0 %9220
    %9223 = vset.pattern.permute.xlu0 1
    %9224 = vperm.xlu0 %9223, %v58
    %v9225 = vpop.permute.xlu0 %9224
    %9227 = vset.pattern.permute.xlu0 1
    %9228 = vperm.xlu0 %9227, %v59
    %v9229 = vpop.permute.xlu0 %9228
    %9231 = vset.pattern.permute.xlu0 1
    %9232 = vperm.xlu0 %9231, %v60
    %v9233 = vpop.permute.xlu0 %9232
    %9235 = vset.pattern.permute.xlu0 1
    %9236 = vperm.xlu0 %9235, %v61
    %v9237 = vpop.permute.xlu0 %9236
    %9239 = vset.pattern.permute.xlu0 1
    %9240 = vperm.xlu0 %9239, %v62
    %v9241 = vpop.permute.xlu0 %9240
    %9243 = vset.pattern.permute.xlu0 1
    %9244 = vperm.xlu0 %9243, %v63
    %v9245 = vpop.permute.xlu0 %9244
    %9247 = vset.pattern.permute.xlu0 1
    %9248 = vperm.xlu0 %9247, %v64
    %v9249 = vpop.permute.xlu0 %9248
    %9252 = vset.pattern.permute.xlu0 1
    %9253 = vperm.xlu0 %9252, %v65
    %v9254 = vpop.permute.xlu0 %9253
    %9257 = vset.pattern.permute.xlu0 1
    %9258 = vperm.xlu0 %9257, %v66
    %v9259 = vpop.permute.xlu0 %9258
    %9262 = vset.pattern.permute.xlu0 1
    %9263 = vperm.xlu0 %9262, %v67
    %v9264 = vpop.permute.xlu0 %9263
    %9267 = vset.pattern.permute.xlu0 1
    %9268 = vperm.xlu0 %9267, %v68
    %v9269 = vpop.permute.xlu0 %9268
    %9272 = vset.pattern.permute.xlu0 1
    %9273 = vperm.xlu0 %9272, %v69
    %v9274 = vpop.permute.xlu0 %9273
    %9277 = vset.pattern.permute.xlu0 1
    %9278 = vperm.xlu0 %9277, %v70
    %v9279 = vpop.permute.xlu0 %9278
    %9282 = vset.pattern.permute.xlu0 1
    %9283 = vperm.xlu0 %9282, %v71
    %v9284 = vpop.permute.xlu0 %9283
    %9287 = vset.pattern.permute.xlu0 1
    %9288 = vperm.xlu0 %9287, %v72
    %v9289 = vpop.permute.xlu0 %9288
    %9291 = vmatprep.subr.mxu0 0.0
    %9292 = vmatpush1.msra.mxu0 %v9061
    %9293 = vmatprep.subr.mxu0 0.0
    %9294 = vmatpush1.msra.mxu0 %v9064
    %9295 = vmatprep.subr.mxu0 0.0
    %9296 = vmatpush1.msra.mxu0 %v9069
    %9297 = vmatprep.subr.mxu0 0.0
    %9298 = vmatpush1.msra.mxu0 %v9072
    %9299 = vmatprep.subr.mxu0 0.0
    %9300 = vmatpush1.msra.mxu0 %v9077
    %9301 = vmatprep.subr.mxu0 0.0
    %9302 = vmatpush1.msra.mxu0 %v9080
    %9303 = vmatprep.subr.mxu0 0.0
    %9304 = vmatpush1.msra.mxu0 %v9085
    %9305 = vmatprep.subr.mxu0 0.0
    %9306 = vmatpush1.msra.mxu0 %v9088
    %9307 = vmatprep.subr.mxu0 0.0
    %9308 = vmatpush1.msra.mxu0 %v9093
    %9309 = vmatprep.subr.mxu0 0.0
    %9310 = vmatpush1.msra.mxu0 %v9096
    %9311 = vmatprep.subr.mxu0 0.0
    %9312 = vmatpush1.msra.mxu0 %v9101
    %9313 = vmatprep.subr.mxu0 0.0
    %9314 = vmatpush1.msra.mxu0 %v9104
    %9315 = vmatprep.subr.mxu0 0.0
    %9316 = vmatpush1.msra.mxu0 %v9109
    %9317 = vmatprep.subr.mxu0 0.0
    %9318 = vmatpush1.msra.mxu0 %v9112
    %9319 = vmatprep.subr.mxu0 0.0
    %9320 = vmatpush1.msra.mxu0 %v9117
    %9321 = vmatprep.subr.mxu0 0.0
    %9322 = vmatpush1.msra.mxu0 %v9120
    %9323 = vmatprep.subr.mxu0 0.0
    %9324 = vmatpush1.msra.mxu0 %v9125
    %9325 = vmatprep.subr.mxu0 0.0
    %9326 = vmatpush1.msra.mxu0 %v9128
    %9327 = vmatprep.subr.mxu0 0.0
    %9328 = vmatpush1.msra.mxu0 %v9133
    %9329 = vmatprep.subr.mxu0 0.0
    %9330 = vmatpush1.msra.mxu0 %v9136
    %9331 = vmatprep.subr.mxu0 0.0
    %9332 = vmatpush1.msra.mxu0 %v9141
    %9333 = vmatprep.subr.mxu0 0.0
    %9334 = vmatpush1.msra.mxu0 %v9144
    %9335 = vmatprep.subr.mxu0 0.0
    %9336 = vmatpush1.msra.mxu0 %v9149
    %9337 = vmatprep.subr.mxu0 0.0
    %9338 = vmatpush1.msra.mxu0 %v9152
    %9339 = vmatprep.subr.mxu0 0.0
    %9340 = vmatpush1.msra.mxu0 %v9157
    %9341 = vmatprep.subr.mxu0 0.0
    %9342 = vmatpush1.msra.mxu0 %v9160
    %9343 = vmatprep.subr.mxu0 0.0
    %9344 = vmatpush1.msra.mxu0 %v9165
    %9345 = vmatprep.subr.mxu0 0.0
    %9346 = vmatpush1.msra.mxu0 %v9168
    %9347 = vmatprep.subr.mxu0 0.0
    %9348 = vmatpush1.msra.mxu0 %v9173
    %9349 = vmatprep.subr.mxu0 0.0
    %9350 = vmatpush1.msra.mxu0 %v9176
    %9351 = vmatprep.subr.mxu0 0.0
    %9352 = vmatpush1.msra.mxu0 %v9181
    %9353 = vmatprep.subr.mxu0 0.0
    %9354 = vmatpush1.msra.mxu0 %v9184
    %9355 = vmatprep.mubr.f32.mxu0 %v9188
    %9356 = vmatmul.mubr.f32.gmra.mrb[0].mxu0 %v9187
    %v9357 = vpop.f32.mrb[0].mxu0
    %v9358 = vadd.f32 %v9221, %v9357
    %v9359 = vpop.f32.mrb[0].mxu0
    %9360 = vmatprep.mubr.f32.mxu0 %v9190
    %9361 = vmatmul.mubr.f32.gmra.mrb[0].mxu0 %v9189
    %v9362 = vpop.f32.mrb[0].mxu0
    %v9363 = vadd.f32 %v9225, %v9362
    %v9364 = vpop.f32.mrb[0].mxu0
    %9365 = vmatprep.mubr.f32.mxu0 %v9192
    %9366 = vmatmul.mubr.f32.gmra.mrb[0].mxu0 %v9191
    %v9367 = vpop.f32.mrb[0].mxu0
    %v9368 = vadd.f32 %v9229, %v9367
    %v9369 = vpop.f32.mrb[0].mxu0
    %9370 = vmatprep.mubr.f32.mxu0 %v9194
    %9371 = vmatmul.mubr.f32.gmra.mrb[0].mxu0 %v9193
    %v9372 = vpop.f32.mrb[0].mxu0
    %v9373 = vadd.f32 %v9233, %v9372
    %v9374 = vpop.f32.mrb[0].mxu0
    %9375 = vmatprep.mubr.f32.mxu0 %v9196
    %9376 = vmatmul.mubr.f32.gmra.mrb[0].mxu0 %v9195
    %v9377 = vpop.f32.mrb[0].mxu0
    %v9378 = vadd.f32 %v9237, %v9377
    %v9379 = vpop.f32.mrb[0].mxu0
    %9380 = vmatprep.mubr.f32.mxu0 %v9198
    %9381 = vmatmul.mubr.f32.gmra.mrb[0].mxu0 %v9197
    %v9382 = vpop.f32.mrb[0].mxu0
    %v9383 = vadd.f32 %v9241, %v9382
    %v9384 = vpop.f32.mrb[0].mxu0
    %9385 = vmatprep.mubr.f32.mxu0 %v9200
    %9386 = vmatmul.mubr.f32.gmra.mrb[0].mxu0 %v9199
    %v9387 = vpop.f32.mrb[0].mxu0
    %v9388 = vadd.f32 %v9245, %v9387
    %v9389 = vpop.f32.mrb[0].mxu0
    %9390 = vmatprep.mubr.f32.mxu0 %v9202
    %9391 = vmatmul.mubr.f32.gmra.mrb[0].mxu0 %v9201
    %v9392 = vpop.f32.mrb[0].mxu0
    %v9393 = vadd.f32 %v9249, %v9392
    %v9394 = vpop.f32.mrb[0].mxu0
    %9395 = vmatprep.mubr.f32.mxu0 %v9204
    %9396 = vmatmul.mubr.f32.gmra.mrb[0].mxu0 %v9203
    %v9397 = vpop.f32.mrb[0].mxu0
    %v9398 = vadd.f32 %v9254, %v9397
    %v9399 = vpop.f32.mrb[0].mxu0
    %9400 = vmatprep.mubr.f32.mxu0 %v9206
    %9401 = vmatmul.mubr.f32.gmra.mrb[0].mxu0 %v9205
    %v9402 = vpop.f32.mrb[0].mxu0
    %v9403 = vadd.f32 %v9259, %v9402
    %v9404 = vpop.f32.mrb[0].mxu0
    %9405 = vmatprep.mubr.f32.mxu0 %v9208
    %9406 = vmatmul.mubr.f32.gmra.mrb[0].mxu0 %v9207
    %v9407 = vpop.f32.mrb[0].mxu0
    %v9408 = vadd.f32 %v9264, %v9407
    %v9409 = vpop.f32.mrb[0].mxu0
    %9410 = vmatprep.mubr.f32.mxu0 %v9210
    %9411 = vmatmul.mubr.f32.gmra.mrb[0].mxu0 %v9209
    %v9412 = vpop.f32.mrb[0].mxu0
    %v9413 = vadd.f32 %v9269, %v9412
    %v9414 = vpop.f32.mrb[0].mxu0
    %9415 = vmatprep.mubr.f32.mxu0 %v9212
    %9416 = vmatmul.mubr.f32.gmra.mrb[0].mxu0 %v9211
    %v9417 = vpop.f32.mrb[0].mxu0
    %v9418 = vadd.f32 %v9274, %v9417
    %v9419 = vpop.f32.mrb[0].mxu0
    %9420 = vmatprep.mubr.f32.mxu0 %v9214
    %9421 = vmatmul.mubr.f32.gmra.mrb[0].mxu0 %v9213
    %v9422 = vpop.f32.mrb[0].mxu0
    %v9423 = vadd.f32 %v9279, %v9422
    %v9424 = vpop.f32.mrb[0].mxu0
    %9425 = vmatprep.mubr.f32.mxu0 %v9216
    %9426 = vmatmul.mubr.f32.gmra.mrb[0].mxu0 %v9215
    %v9427 = vpop.f32.mrb[0].mxu0
    %v9428 = vadd.f32 %v9284, %v9427
    %v9429 = vpop.f32.mrb[0].mxu0
    %9430 = vmatprep.mubr.f32.mxu0 %v9218
    %9431 = vmatmul.mubr.f32.gmra.mrb[0].mxu0 %v9217
    %v9432 = vpop.f32.mrb[0].mxu0
    %v9433 = vadd.f32 %v9289, %v9432
    %v9434 = vpop.f32.mrb[0].mxu0
    %9435 = vdwg.mxu0
    %9436 = vxpose.xlu0.b32.start [1/16] %v9358, 128
    %9437 = vxpose.xlu0.b32.cont [2/16] %v9363, 128
    %9438 = vxpose.xlu0.b32.cont [3/16] %v9368, 128
    %9439 = vxpose.xlu0.b32.cont [4/16] %v9373, 128
    %9440 = vxpose.xlu0.b32.cont [5/16] %v9378, 128
    %9441 = vxpose.xlu0.b32.cont [6/16] %v9383, 128
    %9442 = vxpose.xlu0.b32.cont [7/16] %v9388, 128
    %9443 = vxpose.xlu0.b32.cont [8/16] %v9393, 128
    %9444 = vxpose.xlu0.b32.cont [9/16] %v9398, 128
    %9445 = vxpose.xlu0.b32.cont [10/16] %v9403, 128
    %9446 = vxpose.xlu0.b32.cont [11/16] %v9408, 128
    %9447 = vxpose.xlu0.b32.cont [12/16] %v9413, 128
    %9448 = vxpose.xlu0.b32.cont [13/16] %v9418, 128
    %9449 = vxpose.xlu0.b32.cont [14/16] %v9423, 128
    %9450 = vxpose.xlu0.b32.cont [15/16] %v9428, 128
    %9451 = vxpose.xlu0.b32.end [16/16] %v9433, 128
    %v9452 = vpop.trf.xlu0
    %v9453 = vpop.trf.xlu0
    %v9454 = vpop.trf.xlu0
    %v9455 = vpop.trf.xlu0
    %v9456 = vpop.trf.xlu0
    %v9457 = vpop.trf.xlu0
    %v9458 = vpop.trf.xlu0
    %v9459 = vpop.trf.xlu0
    %v9460 = vpop.trf.xlu0
    %v9461 = vpop.trf.xlu0
    %v9462 = vpop.trf.xlu0
    %v9463 = vpop.trf.xlu0
    %v9464 = vpop.trf.xlu0
    %v9465 = vpop.trf.xlu0
    %v9466 = vpop.trf.xlu0
    %v9467 = vpop.trf.xlu0
    %9468 = vst [vmem:[#allocation2] sm:$0x3] %v9452
    // Predicated region
    $region26: #{tpu_custom_call.1} parent=1 // pred_check
      _
    $region27: #{tpu_custom_call.1} parent=1 // pred_check_branch
      %9470 = sbr.rel (0) target = $region29
    $region28: #{tpu_custom_call.1} parent=1 // pred_region
      %s9472 = ssub.s32 32, 32
      %9473 = vsyncadd [#allocation3], %s9472
      %s9475 = sshll.u32 [#allocation2], 4
      %s9476 = int_to_ptr.vmem [resolvable:$true] %s9475
      %9478 = dma.vmem_to_hbm [thread:$0]  %s9476, 32, %s6, [#allocation3]
    $region29: #{tpu_custom_call.1} parent=1 // pred_fallthru
      _
    // Predicated region
    $region30: #{tpu_custom_call.1} parent=1 // pred_check
      _
    $region31: #{tpu_custom_call.1} parent=1 // pred_check_branch
      %9480 = sbr.rel (0) target = $region33
    $region32: #{tpu_custom_call.1} parent=1 // pred_region
      %9481 = dma.done [#allocation3], 32
    $region33: #{tpu_custom_call.1} parent=1 // pred_fallthru
      _
    %9482 = vsyncpa [#allocation3], 1

</llo_original>
